<compile_context>
chip_gen: v5e
topology: v5e:2x2
jax: 0.10.0
libtpu: 0.0.40
codegen_flags: <defaults>
</compile_context>

<pallas_src>
import functools
import math

import jax
import jax.numpy as jnp
from jax import lax
from jax.experimental import pallas as pl
from jax.experimental.pallas import tpu as pltpu


# ----------------------------------------------------------------------------
# In-kernel helpers (pure functions on values already loaded from refs)
# ----------------------------------------------------------------------------

def _layernorm(y, g, b, eps):
    mean = jnp.mean(y, axis=-1, keepdims=True)
    var = jnp.mean((y - mean) ** 2, axis=-1, keepdims=True)
    return (y - mean) * lax.rsqrt(var + eps) * g + b


def _ffn(y, w1, b1, w2, b2):
    h = jnp.maximum(jnp.dot(y, w1, preferred_element_type=jnp.float32) + b1, 0.0)
    return jnp.dot(h, w2, preferred_element_type=jnp.float32) + b2


def _attention(q_flat, k_flat, v_flat, wo, bo, n_head, n_batch, scale):
    """Multi-head attention batched over (head, batch).

    q_flat/k_flat/v_flat: (N, D) with rows ordered batch-major (N = B*S).
    wo: (D, D) pre-transposed output projection, bo: (1, D).
    """
    N, D = q_flat.shape
    B = n_batch
    S = N // B
    Dh = D // n_head

    def group_heads(xf):
        # (N, D) -> (H*B, S, Dh); group index g = h*B + b.  Contiguous reshapes only.
        return jnp.concatenate(
            [xf[:, h * Dh:(h + 1) * Dh].reshape(B, S, Dh) for h in range(n_head)],
            axis=0)

    q = group_heads(q_flat)
    k = group_heads(k_flat)
    v = group_heads(v_flat)

    # One grouped score contraction + vectorized softmax + one grouped PV contraction.
    s = jnp.einsum("gqd,gkd->gqk", q, k,
                   preferred_element_type=jnp.float32) * scale          # (H*B, S, S)
    m = jnp.max(s, axis=-1, keepdims=True)
    p = jnp.exp(s - m)
    p = p / jnp.sum(p, axis=-1, keepdims=True)
    o = jnp.einsum("gqk,gkd->gqd", p, v,
                   preferred_element_type=jnp.float32)                  # (H*B, S, Dh)

    # Re-assemble head concat (lane concatenation) and do ONE output projection.
    o_cat = jnp.concatenate(
        [o[h * B:(h + 1) * B].reshape(N, Dh) for h in range(n_head)], axis=-1)
    return jnp.dot(o_cat, wo, preferred_element_type=jnp.float32) + bo


# ----------------------------------------------------------------------------
# Parameter ordering (shared between wrapper and kernel unpack)
# ----------------------------------------------------------------------------

_PARAM_ORDER = (
    "e_qkv_w", "e_qkv_b", "e_out_w", "e_out_b", "e_ln1_g", "e_ln1_b",
    "e_ff1_w", "e_ff1_b", "e_ff2_w", "e_ff2_b", "e_ln2_g", "e_ln2_b",
    "enc_norm_g", "enc_norm_b",
    "d_sa_qkv_w", "d_sa_qkv_b", "d_sa_out_w", "d_sa_out_b", "d_ln1_g", "d_ln1_b",
    "d_ca_q_w", "d_ca_q_b", "d_ca_kv_w", "d_ca_kv_b", "d_ca_out_w", "d_ca_out_b",
    "d_ln2_g", "d_ln2_b",
    "d_ff1_w", "d_ff1_b", "d_ff2_w", "d_ff2_b", "d_ln3_g", "d_ln3_b",
    "dec_norm_g", "dec_norm_b",
    "fc1_w", "fc1_b", "fc2_w", "fc2_b",
)


# ----------------------------------------------------------------------------
# The single fused Pallas kernel (whole forward pass)
# ----------------------------------------------------------------------------

def _fused_transformer_kernel(*refs, n_head, n_enc, n_dec, eps):
    (x_ref,
     e_qkv_w, e_qkv_b, e_out_w, e_out_b, e_ln1_g, e_ln1_b,
     e_ff1_w, e_ff1_b, e_ff2_w, e_ff2_b, e_ln2_g, e_ln2_b,
     enc_g, enc_b,
     d_sa_qkv_w, d_sa_qkv_b, d_sa_out_w, d_sa_out_b, d_ln1_g, d_ln1_b,
     d_ca_q_w, d_ca_q_b, d_ca_kv_w, d_ca_kv_b, d_ca_out_w, d_ca_out_b,
     d_ln2_g, d_ln2_b,
     d_ff1_w, d_ff1_b, d_ff2_w, d_ff2_b, d_ln3_g, d_ln3_b,
     dec_g, dec_b, fc1_w, fc1_b, fc2_w, fc2_b,
     o_ref) = refs

    x = x_ref[...]                                        # (B, S, D), batch-major
    B, S, D = x.shape
    N = B * S
    Dh = D // n_head
    scale = 1.0 / math.sqrt(Dh)
    x_rows = x.reshape(N, D)

    # ---------------- encoder stack (post-norm) ----------------
    h = x_rows
    for l in range(n_enc):
        qkv = jnp.dot(h, e_qkv_w[l], preferred_element_type=jnp.float32) + e_qkv_b[l]
        attn = _attention(qkv[:, :D], qkv[:, D:2 * D], qkv[:, 2 * D:],
                          e_out_w[l], e_out_b[l], n_head, B, scale)
        y = _layernorm(h + attn, e_ln1_g[l], e_ln1_b[l], eps)
        ff = _ffn(y, e_ff1_w[l], e_ff1_b[l], e_ff2_w[l], e_ff2_b[l])
        h = _layernorm(y + ff, e_ln2_g[l], e_ln2_b[l], eps)
    mem = _layernorm(h, enc_g[...], enc_b[...], eps)       # fused final encoder norm

    # ---------------- decoder stack (post-norm) ----------------
    h = x_rows
    for l in range(n_dec):
        # Self-attention sub-block (fused QKV).
        qkv = jnp.dot(h, d_sa_qkv_w[l], preferred_element_type=jnp.float32) + d_sa_qkv_b[l]
        sa = _attention(qkv[:, :D], qkv[:, D:2 * D], qkv[:, 2 * D:],
                        d_sa_out_w[l], d_sa_out_b[l], n_head, B, scale)
        y = _layernorm(h + sa, d_ln1_g[l], d_ln1_b[l], eps)

        # Cross-attention sub-block (query from decoder, fused K/V from memory).
        qc = jnp.dot(y, d_ca_q_w[l], preferred_element_type=jnp.float32) + d_ca_q_b[l]
        kv = jnp.dot(mem, d_ca_kv_w[l], preferred_element_type=jnp.float32) + d_ca_kv_b[l]
        ca = _attention(qc, kv[:, :D], kv[:, D:],
                        d_ca_out_w[l], d_ca_out_b[l], n_head, B, scale)
        y2 = _layernorm(y + ca, d_ln2_g[l], d_ln2_b[l], eps)

        # Feed-forward sub-block.
        ff = _ffn(y2, d_ff1_w[l], d_ff1_b[l], d_ff2_w[l], d_ff2_b[l])
        h = _layernorm(y2 + ff, d_ln3_g[l], d_ln3_b[l], eps)

    # ---------------- head: dec norm + fc1/relu/fc2 + log_softmax over batch ----------
    y = _layernorm(h, dec_g[...], dec_b[...], eps)
    hid = jnp.maximum(
        jnp.dot(y, fc1_w[...], preferred_element_type=jnp.float32) + fc1_b[...], 0.0)
    logits = jnp.dot(hid, fc2_w[...], preferred_element_type=jnp.float32) + fc2_b[...]
    Cp = logits.shape[-1]                                   # lane-dense padded classes

    lg = logits.reshape(B, S, Cp)
    m = jnp.max(lg, axis=0, keepdims=True)                  # log_softmax over batch axis
    lse = jnp.log(jnp.sum(jnp.exp(lg - m), axis=0, keepdims=True)) + m
    o_ref[...] = (lg - lse).reshape(N, Cp).astype(o_ref.dtype)   # single lane-dense store


# ----------------------------------------------------------------------------
# Wrapper: one pallas_call for the whole forward pass
# ----------------------------------------------------------------------------

def transformer_forward(x_sbd, params, *, n_head, num_classes):
    # x: (S, B, D) as in PyTorch batch_first=False; internally (B, S, D) batch-major rows.
    S, B, D = x_sbd.shape
    x = jnp.transpose(x_sbd, (1, 0, 2))
    n_enc = params["e_qkv_w"].shape[0]
    n_dec = params["d_sa_qkv_w"].shape[0]
    Cp = params["fc2_w"].shape[1]
    N = B * S

    in_arrays = [x] + [params[k] for k in _PARAM_ORDER]

    def full_spec(a):
        nd = a.ndim
        return pl.BlockSpec(a.shape, lambda i, nd=nd: (0,) * nd)

    out = pl.pallas_call(
        functools.partial(_fused_transformer_kernel,
                          n_head=n_head, n_enc=n_enc, n_dec=n_dec, eps=1e-5),
        out_shape=jax.ShapeDtypeStruct((N, Cp), jnp.float32),
        grid=(1,),
        in_specs=[full_spec(a) for a in in_arrays],
        out_specs=pl.BlockSpec((N, Cp), lambda i: (0, 0)),
        compiler_params=pltpu.CompilerParams(
            dimension_semantics=("arbitrary",),
            vmem_limit_bytes=32 * 1024 * 1024),
    )(*in_arrays)

    # (B*S, Cp) -> (S, B, num_classes): PyTorch output layout, padded classes dropped.
    out = jnp.transpose(out.reshape(B, S, Cp), (1, 0, 2))[:, :, :num_classes]
    return out


# ----------------------------------------------------------------------------
# Deterministic parameter init (pre-transposed, pre-fused, stacked per layer)
# ----------------------------------------------------------------------------

def init_params(key, d_model, n_head, n_enc, n_dec, dim_ff, num_classes, c_pad=128):
    keys = iter(jax.random.split(key, 256))
    D, F = d_model, dim_ff

    def w(shape):
        return jax.random.normal(next(keys), shape, jnp.float32) * 0.02

    def zeros(shape):
        return jnp.zeros(shape, jnp.float32)

    def ones(shape):
        return jnp.ones(shape, jnp.float32)

    params = dict(
        # encoder layers (stacked over n_enc)
        e_qkv_w=w((n_enc, D, 3 * D)), e_qkv_b=zeros((n_enc, 1, 3 * D)),
        e_out_w=w((n_enc, D, D)),     e_out_b=zeros((n_enc, 1, D)),
        e_ln1_g=ones((n_enc, 1, D)),  e_ln1_b=zeros((n_enc, 1, D)),
        e_ff1_w=w((n_enc, D, F)),     e_ff1_b=zeros((n_enc, 1, F)),
        e_ff2_w=w((n_enc, F, D)),     e_ff2_b=zeros((n_enc, 1, D)),
        e_ln2_g=ones((n_enc, 1, D)),  e_ln2_b=zeros((n_enc, 1, D)),
        enc_norm_g=ones((1, D)),      enc_norm_b=zeros((1, D)),
        # decoder layers (stacked over n_dec)
        d_sa_qkv_w=w((n_dec, D, 3 * D)), d_sa_qkv_b=zeros((n_dec, 1, 3 * D)),
        d_sa_out_w=w((n_dec, D, D)),     d_sa_out_b=zeros((n_dec, 1, D)),
        d_ln1_g=ones((n_dec, 1, D)),     d_ln1_b=zeros((n_dec, 1, D)),
        d_ca_q_w=w((n_dec, D, D)),       d_ca_q_b=zeros((n_dec, 1, D)),
        d_ca_kv_w=w((n_dec, D, 2 * D)),  d_ca_kv_b=zeros((n_dec, 1, 2 * D)),
        d_ca_out_w=w((n_dec, D, D)),     d_ca_out_b=zeros((n_dec, 1, D)),
        d_ln2_g=ones((n_dec, 1, D)),     d_ln2_b=zeros((n_dec, 1, D)),
        d_ff1_w=w((n_dec, D, F)),        d_ff1_b=zeros((n_dec, 1, F)),
        d_ff2_w=w((n_dec, F, D)),        d_ff2_b=zeros((n_dec, 1, D)),
        d_ln3_g=ones((n_dec, 1, D)),     d_ln3_b=zeros((n_dec, 1, D)),
        dec_norm_g=ones((1, D)),         dec_norm_b=zeros((1, D)),
        # classifier head
        fc1_w=w((D, 128)), fc1_b=zeros((1, 128)),
    )
    # fc2 stored lane-dense: pad classes 10 -> 128 with zero weight/bias columns
    # (log_softmax is over the batch axis, so padded class columns never mix with
    #  real ones; they are sliced off outside the kernel).
    fc2_w = jnp.zeros((128, c_pad), jnp.float32).at[:, :num_classes].set(
        w((128, num_classes)))
    params["fc2_w"] = fc2_w
    params["fc2_b"] = zeros((1, c_pad))
    return params


# ----------------------------------------------------------------------------
# Main
# ----------------------------------------------------------------------------

if __name__ == "__main__":
    S, B = 8, 2
    d_model, n_head = 32, 4
    n_enc, n_dec = 2, 2
    dim_ff = 64
    num_classes = 10

    key = jax.random.PRNGKey(0)
    pkey, xkey = jax.random.split(key)
    params = init_params(pkey, d_model, n_head, n_enc, n_dec, dim_ff, num_classes)
    x = jax.random.normal(xkey, (S, B, d_model), jnp.float32)

    fwd = jax.jit(functools.partial(transformer_forward,
                                    n_head=n_head, num_classes=num_classes))
    out = jax.block_until_ready(fwd(x, params))

    assert out.shape == (S, B, num_classes), out.shape
    assert bool(jnp.all(jnp.isfinite(out)))
    # log_softmax over dim=1: exp(out) sums to 1 along the batch axis.
    assert bool(jnp.allclose(jnp.exp(out).sum(axis=1), 1.0, atol=1e-4))
    print("KERNEL_OK")
</pallas_src>

<mosaic_0001>
module attributes {stable_mosaic.version = 11 : i64} {
  func.func @_fused_transformer_kernel(%arg0: i32, %arg1: memref<2x8x32xf32, #tpu.memory_space<vmem>>, %arg2: memref<2x32x96xf32, #tpu.memory_space<vmem>>, %arg3: memref<2x1x96xf32, #tpu.memory_space<vmem>>, %arg4: memref<2x32x32xf32, #tpu.memory_space<vmem>>, %arg5: memref<2x1x32xf32, #tpu.memory_space<vmem>>, %arg6: memref<2x1x32xf32, #tpu.memory_space<vmem>>, %arg7: memref<2x1x32xf32, #tpu.memory_space<vmem>>, %arg8: memref<2x32x64xf32, #tpu.memory_space<vmem>>, %arg9: memref<2x1x64xf32, #tpu.memory_space<vmem>>, %arg10: memref<2x64x32xf32, #tpu.memory_space<vmem>>, %arg11: memref<2x1x32xf32, #tpu.memory_space<vmem>>, %arg12: memref<2x1x32xf32, #tpu.memory_space<vmem>>, %arg13: memref<2x1x32xf32, #tpu.memory_space<vmem>>, %arg14: memref<1x32xf32, #tpu.memory_space<vmem>>, %arg15: memref<1x32xf32, #tpu.memory_space<vmem>>, %arg16: memref<2x32x96xf32, #tpu.memory_space<vmem>>, %arg17: memref<2x1x96xf32, #tpu.memory_space<vmem>>, %arg18: memref<2x32x32xf32, #tpu.memory_space<vmem>>, %arg19: memref<2x1x32xf32, #tpu.memory_space<vmem>>, %arg20: memref<2x1x32xf32, #tpu.memory_space<vmem>>, %arg21: memref<2x1x32xf32, #tpu.memory_space<vmem>>, %arg22: memref<2x32x32xf32, #tpu.memory_space<vmem>>, %arg23: memref<2x1x32xf32, #tpu.memory_space<vmem>>, %arg24: memref<2x32x64xf32, #tpu.memory_space<vmem>>, %arg25: memref<2x1x64xf32, #tpu.memory_space<vmem>>, %arg26: memref<2x32x32xf32, #tpu.memory_space<vmem>>, %arg27: memref<2x1x32xf32, #tpu.memory_space<vmem>>, %arg28: memref<2x1x32xf32, #tpu.memory_space<vmem>>, %arg29: memref<2x1x32xf32, #tpu.memory_space<vmem>>, %arg30: memref<2x32x64xf32, #tpu.memory_space<vmem>>, %arg31: memref<2x1x64xf32, #tpu.memory_space<vmem>>, %arg32: memref<2x64x32xf32, #tpu.memory_space<vmem>>, %arg33: memref<2x1x32xf32, #tpu.memory_space<vmem>>, %arg34: memref<2x1x32xf32, #tpu.memory_space<vmem>>, %arg35: memref<2x1x32xf32, #tpu.memory_space<vmem>>, %arg36: memref<1x32xf32, #tpu.memory_space<vmem>>, %arg37: memref<1x32xf32, #tpu.memory_space<vmem>>, %arg38: memref<32x128xf32, #tpu.memory_space<vmem>>, %arg39: memref<1x128xf32, #tpu.memory_space<vmem>>, %arg40: memref<128x128xf32, #tpu.memory_space<vmem>>, %arg41: memref<1x128xf32, #tpu.memory_space<vmem>>, %arg42: memref<16x128xf32, #tpu.memory_space<vmem>>) attributes {dimension_semantics = [#tpu.dimension_semantics<arbitrary>], iteration_bounds = array<i64: 1>, scalar_prefetch = 0 : i64, scratch_operands = 0 : i64, tpu.core_type = #tpu.core_type<tc>, window_params = [{pipeline_mode = #tpu.pipeline_mode<synchronous>, transform_indices = @transform_0, window_bounds = array<i64: 2, 8, 32>}, {pipeline_mode = #tpu.pipeline_mode<synchronous>, transform_indices = @transform_1, window_bounds = array<i64: 2, 32, 96>}, {pipeline_mode = #tpu.pipeline_mode<synchronous>, transform_indices = @transform_2, window_bounds = array<i64: 2, 1, 96>}, {pipeline_mode = #tpu.pipeline_mode<synchronous>, transform_indices = @transform_3, window_bounds = array<i64: 2, 32, 32>}, {pipeline_mode = #tpu.pipeline_mode<synchronous>, transform_indices = @transform_4, window_bounds = array<i64: 2, 1, 32>}, {pipeline_mode = #tpu.pipeline_mode<synchronous>, transform_indices = @transform_5, window_bounds = array<i64: 2, 1, 32>}, {pipeline_mode = #tpu.pipeline_mode<synchronous>, transform_indices = @transform_6, window_bounds = array<i64: 2, 1, 32>}, {pipeline_mode = #tpu.pipeline_mode<synchronous>, transform_indices = @transform_7, window_bounds = array<i64: 2, 32, 64>}, {pipeline_mode = #tpu.pipeline_mode<synchronous>, transform_indices = @transform_8, window_bounds = array<i64: 2, 1, 64>}, {pipeline_mode = #tpu.pipeline_mode<synchronous>, transform_indices = @transform_9, window_bounds = array<i64: 2, 64, 32>}, {pipeline_mode = #tpu.pipeline_mode<synchronous>, transform_indices = @transform_10, window_bounds = array<i64: 2, 1, 32>}, {pipeline_mode = #tpu.pipeline_mode<synchronous>, transform_indices = @transform_11, window_bounds = array<i64: 2, 1, 32>}, {pipeline_mode = #tpu.pipeline_mode<synchronous>, transform_indices = @transform_12, window_bounds = array<i64: 2, 1, 32>}, {pipeline_mode = #tpu.pipeline_mode<synchronous>, transform_indices = @transform_13, window_bounds = array<i64: 1, 32>}, {pipeline_mode = #tpu.pipeline_mode<synchronous>, transform_indices = @transform_14, window_bounds = array<i64: 1, 32>}, {pipeline_mode = #tpu.pipeline_mode<synchronous>, transform_indices = @transform_15, window_bounds = array<i64: 2, 32, 96>}, {pipeline_mode = #tpu.pipeline_mode<synchronous>, transform_indices = @transform_16, window_bounds = array<i64: 2, 1, 96>}, {pipeline_mode = #tpu.pipeline_mode<synchronous>, transform_indices = @transform_17, window_bounds = array<i64: 2, 32, 32>}, {pipeline_mode = #tpu.pipeline_mode<synchronous>, transform_indices = @transform_18, window_bounds = array<i64: 2, 1, 32>}, {pipeline_mode = #tpu.pipeline_mode<synchronous>, transform_indices = @transform_19, window_bounds = array<i64: 2, 1, 32>}, {pipeline_mode = #tpu.pipeline_mode<synchronous>, transform_indices = @transform_20, window_bounds = array<i64: 2, 1, 32>}, {pipeline_mode = #tpu.pipeline_mode<synchronous>, transform_indices = @transform_21, window_bounds = array<i64: 2, 32, 32>}, {pipeline_mode = #tpu.pipeline_mode<synchronous>, transform_indices = @transform_22, window_bounds = array<i64: 2, 1, 32>}, {pipeline_mode = #tpu.pipeline_mode<synchronous>, transform_indices = @transform_23, window_bounds = array<i64: 2, 32, 64>}, {pipeline_mode = #tpu.pipeline_mode<synchronous>, transform_indices = @transform_24, window_bounds = array<i64: 2, 1, 64>}, {pipeline_mode = #tpu.pipeline_mode<synchronous>, transform_indices = @transform_25, window_bounds = array<i64: 2, 32, 32>}, {pipeline_mode = #tpu.pipeline_mode<synchronous>, transform_indices = @transform_26, window_bounds = array<i64: 2, 1, 32>}, {pipeline_mode = #tpu.pipeline_mode<synchronous>, transform_indices = @transform_27, window_bounds = array<i64: 2, 1, 32>}, {pipeline_mode = #tpu.pipeline_mode<synchronous>, transform_indices = @transform_28, window_bounds = array<i64: 2, 1, 32>}, {pipeline_mode = #tpu.pipeline_mode<synchronous>, transform_indices = @transform_29, window_bounds = array<i64: 2, 32, 64>}, {pipeline_mode = #tpu.pipeline_mode<synchronous>, transform_indices = @transform_30, window_bounds = array<i64: 2, 1, 64>}, {pipeline_mode = #tpu.pipeline_mode<synchronous>, transform_indices = @transform_31, window_bounds = array<i64: 2, 64, 32>}, {pipeline_mode = #tpu.pipeline_mode<synchronous>, transform_indices = @transform_32, window_bounds = array<i64: 2, 1, 32>}, {pipeline_mode = #tpu.pipeline_mode<synchronous>, transform_indices = @transform_33, window_bounds = array<i64: 2, 1, 32>}, {pipeline_mode = #tpu.pipeline_mode<synchronous>, transform_indices = @transform_34, window_bounds = array<i64: 2, 1, 32>}, {pipeline_mode = #tpu.pipeline_mode<synchronous>, transform_indices = @transform_35, window_bounds = array<i64: 1, 32>}, {pipeline_mode = #tpu.pipeline_mode<synchronous>, transform_indices = @transform_36, window_bounds = array<i64: 1, 32>}, {pipeline_mode = #tpu.pipeline_mode<synchronous>, transform_indices = @transform_37, window_bounds = array<i64: 32, 128>}, {pipeline_mode = #tpu.pipeline_mode<synchronous>, transform_indices = @transform_38, window_bounds = array<i64: 1, 128>}, {pipeline_mode = #tpu.pipeline_mode<synchronous>, transform_indices = @transform_39, window_bounds = array<i64: 128, 128>}, {pipeline_mode = #tpu.pipeline_mode<synchronous>, transform_indices = @transform_40, window_bounds = array<i64: 1, 128>}, {pipeline_mode = #tpu.pipeline_mode<synchronous>, transform_indices = @transform_41, window_bounds = array<i64: 16, 128>}]} {
    %c0 = arith.constant 0 : index
    %c0_0 = arith.constant 0 : index
    %c0_1 = arith.constant 0 : index
    %0 = vector.load %arg1[%c0, %c0_0, %c0_1] : memref<2x8x32xf32, #tpu.memory_space<vmem>>, vector<2x8x32xf32>
    %1 = vector.shape_cast %0 : vector<2x8x32xf32> to vector<16x32xf32>
    %c0_2 = arith.constant 0 : index
    %c0_3 = arith.constant 0 : index
    %c0_4 = arith.constant 0 : index
    %2 = vector.load %arg2[%c0_2, %c0_3, %c0_4] : memref<2x32x96xf32, #tpu.memory_space<vmem>>, vector<1x32x96xf32>
    %3 = vector.shape_cast %2 : vector<1x32x96xf32> to vector<32x96xf32>
    %cst = arith.constant dense<0.000000e+00> : vector<16x96xf32>
    %4 = tpu.matmul %1, %3, %cst {dimension_numbers = #tpu.dot_dimension_numbers<[1], [0], [0], [1], [0, 0, 1, 1], [], []>} : vector<16x32xf32>, vector<32x96xf32>, vector<16x96xf32> -> vector<16x96xf32>
    %c0_5 = arith.constant 0 : index
    %c0_6 = arith.constant 0 : index
    %c0_7 = arith.constant 0 : index
    %5 = vector.load %arg3[%c0_5, %c0_6, %c0_7] : memref<2x1x96xf32, #tpu.memory_space<vmem>>, vector<1x1x96xf32>
    %6 = vector.shape_cast %5 : vector<1x1x96xf32> to vector<1x96xf32>
    %7 = vector.broadcast %6 : vector<1x96xf32> to vector<16x96xf32>
    %8 = arith.addf %4, %7 : vector<16x96xf32>
    %9 = vector.extract_strided_slice %8 {offsets = [0, 0], sizes = [16, 32], strides = [1, 1]} : vector<16x96xf32> to vector<16x32xf32>
    %10 = vector.extract_strided_slice %8 {offsets = [0, 32], sizes = [16, 32], strides = [1, 1]} : vector<16x96xf32> to vector<16x32xf32>
    %11 = vector.extract_strided_slice %8 {offsets = [0, 64], sizes = [16, 32], strides = [1, 1]} : vector<16x96xf32> to vector<16x32xf32>
    %c0_8 = arith.constant 0 : index
    %c0_9 = arith.constant 0 : index
    %c0_10 = arith.constant 0 : index
    %12 = vector.load %arg4[%c0_8, %c0_9, %c0_10] : memref<2x32x32xf32, #tpu.memory_space<vmem>>, vector<1x32x32xf32>
    %13 = vector.shape_cast %12 : vector<1x32x32xf32> to vector<32x32xf32>
    %c0_11 = arith.constant 0 : index
    %c0_12 = arith.constant 0 : index
    %c0_13 = arith.constant 0 : index
    %14 = vector.load %arg5[%c0_11, %c0_12, %c0_13] : memref<2x1x32xf32, #tpu.memory_space<vmem>>, vector<1x1x32xf32>
    %15 = vector.shape_cast %14 : vector<1x1x32xf32> to vector<1x32xf32>
    %16 = vector.extract_strided_slice %9 {offsets = [0, 0], sizes = [16, 8], strides = [1, 1]} : vector<16x32xf32> to vector<16x8xf32>
    %17 = vector.shape_cast %16 : vector<16x8xf32> to vector<2x8x8xf32>
    %18 = vector.extract_strided_slice %9 {offsets = [0, 8], sizes = [16, 8], strides = [1, 1]} : vector<16x32xf32> to vector<16x8xf32>
    %19 = vector.shape_cast %18 : vector<16x8xf32> to vector<2x8x8xf32>
    %20 = vector.extract_strided_slice %9 {offsets = [0, 16], sizes = [16, 8], strides = [1, 1]} : vector<16x32xf32> to vector<16x8xf32>
    %21 = vector.shape_cast %20 : vector<16x8xf32> to vector<2x8x8xf32>
    %22 = vector.extract_strided_slice %9 {offsets = [0, 24], sizes = [16, 8], strides = [1, 1]} : vector<16x32xf32> to vector<16x8xf32>
    %23 = vector.shape_cast %22 : vector<16x8xf32> to vector<2x8x8xf32>
    %24 = tpu.concatenate %17, %19, %21, %23 in 0 : vector<2x8x8xf32>, vector<2x8x8xf32>, vector<2x8x8xf32>, vector<2x8x8xf32> -> vector<8x8x8xf32>
    %25 = vector.extract_strided_slice %10 {offsets = [0, 0], sizes = [16, 8], strides = [1, 1]} : vector<16x32xf32> to vector<16x8xf32>
    %26 = vector.shape_cast %25 : vector<16x8xf32> to vector<2x8x8xf32>
    %27 = vector.extract_strided_slice %10 {offsets = [0, 8], sizes = [16, 8], strides = [1, 1]} : vector<16x32xf32> to vector<16x8xf32>
    %28 = vector.shape_cast %27 : vector<16x8xf32> to vector<2x8x8xf32>
    %29 = vector.extract_strided_slice %10 {offsets = [0, 16], sizes = [16, 8], strides = [1, 1]} : vector<16x32xf32> to vector<16x8xf32>
    %30 = vector.shape_cast %29 : vector<16x8xf32> to vector<2x8x8xf32>
    %31 = vector.extract_strided_slice %10 {offsets = [0, 24], sizes = [16, 8], strides = [1, 1]} : vector<16x32xf32> to vector<16x8xf32>
    %32 = vector.shape_cast %31 : vector<16x8xf32> to vector<2x8x8xf32>
    %33 = tpu.concatenate %26, %28, %30, %32 in 0 : vector<2x8x8xf32>, vector<2x8x8xf32>, vector<2x8x8xf32>, vector<2x8x8xf32> -> vector<8x8x8xf32>
    %34 = vector.extract_strided_slice %11 {offsets = [0, 0], sizes = [16, 8], strides = [1, 1]} : vector<16x32xf32> to vector<16x8xf32>
    %35 = vector.shape_cast %34 : vector<16x8xf32> to vector<2x8x8xf32>
    %36 = vector.extract_strided_slice %11 {offsets = [0, 8], sizes = [16, 8], strides = [1, 1]} : vector<16x32xf32> to vector<16x8xf32>
    %37 = vector.shape_cast %36 : vector<16x8xf32> to vector<2x8x8xf32>
    %38 = vector.extract_strided_slice %11 {offsets = [0, 16], sizes = [16, 8], strides = [1, 1]} : vector<16x32xf32> to vector<16x8xf32>
    %39 = vector.shape_cast %38 : vector<16x8xf32> to vector<2x8x8xf32>
    %40 = vector.extract_strided_slice %11 {offsets = [0, 24], sizes = [16, 8], strides = [1, 1]} : vector<16x32xf32> to vector<16x8xf32>
    %41 = vector.shape_cast %40 : vector<16x8xf32> to vector<2x8x8xf32>
    %42 = tpu.concatenate %35, %37, %39, %41 in 0 : vector<2x8x8xf32>, vector<2x8x8xf32>, vector<2x8x8xf32>, vector<2x8x8xf32> -> vector<8x8x8xf32>
    "tpu.trace_start"() <{level = 10 : i32, message = "gqd,gkd->gqk"}> : () -> ()
    %cst_14 = arith.constant dense<0.000000e+00> : vector<8x8x8xf32>
    %43 = tpu.matmul %24, %33, %cst_14 {dimension_numbers = #tpu.dot_dimension_numbers<[2], [2], [1], [1], [0, 0, 0, 1, 1, 1], [0], [0]>} : vector<8x8x8xf32>, vector<8x8x8xf32>, vector<8x8x8xf32> -> vector<8x8x8xf32>
    "tpu.trace_stop"() : () -> ()
    %cst_15 = arith.constant 0.353553385 : f32
    %44 = vector.broadcast %cst_15 : f32 to vector<8x8x8xf32>
    %45 = arith.mulf %43, %44 : vector<8x8x8xf32>
    %cst_16 = arith.constant dense<0xFF800000> : vector<8x8xf32>
    %46 = vector.multi_reduction <maximumf>, %45, %cst_16 [2] : vector<8x8x8xf32> to vector<8x8xf32>
    %47 = vector.shape_cast %46 : vector<8x8xf32> to vector<8x8x1xf32>
    %48 = vector.broadcast %47 : vector<8x8x1xf32> to vector<8x8x8xf32>
    %49 = arith.subf %45, %48 : vector<8x8x8xf32>
    %50 = math.exp %49 : vector<8x8x8xf32>
    %cst_17 = arith.constant dense<0.000000e+00> : vector<8x8xf32>
    %51 = vector.multi_reduction <add>, %50, %cst_17 [2] : vector<8x8x8xf32> to vector<8x8xf32>
    %52 = vector.shape_cast %51 : vector<8x8xf32> to vector<8x8x1xf32>
    %53 = vector.broadcast %52 : vector<8x8x1xf32> to vector<8x8x8xf32>
    %54 = arith.divf %50, %53 : vector<8x8x8xf32>
    "tpu.trace_start"() <{level = 10 : i32, message = "gqk,gkd->gqd"}> : () -> ()
    %cst_18 = arith.constant dense<0.000000e+00> : vector<8x8x8xf32>
    %55 = tpu.matmul %54, %42, %cst_18 {dimension_numbers = #tpu.dot_dimension_numbers<[2], [1], [1], [2], [0, 0, 0, 1, 1, 2], [0], [0]>} : vector<8x8x8xf32>, vector<8x8x8xf32>, vector<8x8x8xf32> -> vector<8x8x8xf32>
    "tpu.trace_stop"() : () -> ()
    %56 = vector.extract_strided_slice %55 {offsets = [0, 0, 0], sizes = [2, 8, 8], strides = [1, 1, 1]} : vector<8x8x8xf32> to vector<2x8x8xf32>
    %57 = vector.shape_cast %56 : vector<2x8x8xf32> to vector<16x8xf32>
    %58 = vector.extract_strided_slice %55 {offsets = [2, 0, 0], sizes = [2, 8, 8], strides = [1, 1, 1]} : vector<8x8x8xf32> to vector<2x8x8xf32>
    %59 = vector.shape_cast %58 : vector<2x8x8xf32> to vector<16x8xf32>
    %60 = vector.extract_strided_slice %55 {offsets = [4, 0, 0], sizes = [2, 8, 8], strides = [1, 1, 1]} : vector<8x8x8xf32> to vector<2x8x8xf32>
    %61 = vector.shape_cast %60 : vector<2x8x8xf32> to vector<16x8xf32>
    %62 = vector.extract_strided_slice %55 {offsets = [6, 0, 0], sizes = [2, 8, 8], strides = [1, 1, 1]} : vector<8x8x8xf32> to vector<2x8x8xf32>
    %63 = vector.shape_cast %62 : vector<2x8x8xf32> to vector<16x8xf32>
    %64 = tpu.concatenate %57, %59, %61, %63 in 1 : vector<16x8xf32>, vector<16x8xf32>, vector<16x8xf32>, vector<16x8xf32> -> vector<16x32xf32>
    %cst_19 = arith.constant dense<0.000000e+00> : vector<16x32xf32>
    %65 = tpu.matmul %64, %13, %cst_19 {dimension_numbers = #tpu.dot_dimension_numbers<[1], [0], [0], [1], [0, 0, 1, 1], [], []>} : vector<16x32xf32>, vector<32x32xf32>, vector<16x32xf32> -> vector<16x32xf32>
    %66 = vector.broadcast %15 : vector<1x32xf32> to vector<16x32xf32>
    %67 = arith.addf %65, %66 : vector<16x32xf32>
    %68 = arith.addf %1, %67 : vector<16x32xf32>
    %c0_20 = arith.constant 0 : index
    %c0_21 = arith.constant 0 : index
    %c0_22 = arith.constant 0 : index
    %69 = vector.load %arg6[%c0_20, %c0_21, %c0_22] : memref<2x1x32xf32, #tpu.memory_space<vmem>>, vector<1x1x32xf32>
    %70 = vector.shape_cast %69 : vector<1x1x32xf32> to vector<1x32xf32>
    %c0_23 = arith.constant 0 : index
    %c0_24 = arith.constant 0 : index
    %c0_25 = arith.constant 0 : index
    %71 = vector.load %arg7[%c0_23, %c0_24, %c0_25] : memref<2x1x32xf32, #tpu.memory_space<vmem>>, vector<1x1x32xf32>
    %72 = vector.shape_cast %71 : vector<1x1x32xf32> to vector<1x32xf32>
    %cst_26 = arith.constant dense<0.000000e+00> : vector<16xf32>
    %73 = vector.multi_reduction <add>, %68, %cst_26 [1] : vector<16x32xf32> to vector<16xf32>
    %74 = vector.shape_cast %73 : vector<16xf32> to vector<16x1xf32>
    %cst_27 = arith.constant 3.200000e+01 : f32
    %75 = vector.broadcast %cst_27 : f32 to vector<16x1xf32>
    %76 = arith.divf %74, %75 : vector<16x1xf32>
    %77 = vector.broadcast %76 : vector<16x1xf32> to vector<16x32xf32>
    %78 = arith.subf %68, %77 : vector<16x32xf32>
    %79 = arith.mulf %78, %78 : vector<16x32xf32>
    %cst_28 = arith.constant dense<0.000000e+00> : vector<16xf32>
    %80 = vector.multi_reduction <add>, %79, %cst_28 [1] : vector<16x32xf32> to vector<16xf32>
    %81 = vector.shape_cast %80 : vector<16xf32> to vector<16x1xf32>
    %cst_29 = arith.constant 3.200000e+01 : f32
    %82 = vector.broadcast %cst_29 : f32 to vector<16x1xf32>
    %83 = arith.divf %81, %82 : vector<16x1xf32>
    %84 = vector.broadcast %76 : vector<16x1xf32> to vector<16x32xf32>
    %85 = arith.subf %68, %84 : vector<16x32xf32>
    %cst_30 = arith.constant 9.99999974E-6 : f32
    %86 = vector.broadcast %cst_30 : f32 to vector<16x1xf32>
    %87 = arith.addf %83, %86 : vector<16x1xf32>
    %88 = math.rsqrt %87 : vector<16x1xf32>
    %89 = vector.broadcast %88 : vector<16x1xf32> to vector<16x32xf32>
    %90 = arith.mulf %85, %89 : vector<16x32xf32>
    %91 = vector.broadcast %70 : vector<1x32xf32> to vector<16x32xf32>
    %92 = arith.mulf %90, %91 : vector<16x32xf32>
    %93 = vector.broadcast %72 : vector<1x32xf32> to vector<16x32xf32>
    %94 = arith.addf %92, %93 : vector<16x32xf32>
    %c0_31 = arith.constant 0 : index
    %c0_32 = arith.constant 0 : index
    %c0_33 = arith.constant 0 : index
    %95 = vector.load %arg8[%c0_31, %c0_32, %c0_33] : memref<2x32x64xf32, #tpu.memory_space<vmem>>, vector<1x32x64xf32>
    %96 = vector.shape_cast %95 : vector<1x32x64xf32> to vector<32x64xf32>
    %c0_34 = arith.constant 0 : index
    %c0_35 = arith.constant 0 : index
    %c0_36 = arith.constant 0 : index
    %97 = vector.load %arg9[%c0_34, %c0_35, %c0_36] : memref<2x1x64xf32, #tpu.memory_space<vmem>>, vector<1x1x64xf32>
    %98 = vector.shape_cast %97 : vector<1x1x64xf32> to vector<1x64xf32>
    %c0_37 = arith.constant 0 : index
    %c0_38 = arith.constant 0 : index
    %c0_39 = arith.constant 0 : index
    %99 = vector.load %arg10[%c0_37, %c0_38, %c0_39] : memref<2x64x32xf32, #tpu.memory_space<vmem>>, vector<1x64x32xf32>
    %100 = vector.shape_cast %99 : vector<1x64x32xf32> to vector<64x32xf32>
    %c0_40 = arith.constant 0 : index
    %c0_41 = arith.constant 0 : index
    %c0_42 = arith.constant 0 : index
    %101 = vector.load %arg11[%c0_40, %c0_41, %c0_42] : memref<2x1x32xf32, #tpu.memory_space<vmem>>, vector<1x1x32xf32>
    %102 = vector.shape_cast %101 : vector<1x1x32xf32> to vector<1x32xf32>
    %cst_43 = arith.constant dense<0.000000e+00> : vector<16x64xf32>
    %103 = tpu.matmul %94, %96, %cst_43 {dimension_numbers = #tpu.dot_dimension_numbers<[1], [0], [0], [1], [0, 0, 1, 1], [], []>} : vector<16x32xf32>, vector<32x64xf32>, vector<16x64xf32> -> vector<16x64xf32>
    %104 = vector.broadcast %98 : vector<1x64xf32> to vector<16x64xf32>
    %105 = arith.addf %103, %104 : vector<16x64xf32>
    %cst_44 = arith.constant 0.000000e+00 : f32
    %106 = vector.broadcast %cst_44 : f32 to vector<16x64xf32>
    %107 = arith.maximumf %105, %106 : vector<16x64xf32>
    %cst_45 = arith.constant dense<0.000000e+00> : vector<16x32xf32>
    %108 = tpu.matmul %107, %100, %cst_45 {dimension_numbers = #tpu.dot_dimension_numbers<[1], [0], [0], [1], [0, 0, 1, 1], [], []>} : vector<16x64xf32>, vector<64x32xf32>, vector<16x32xf32> -> vector<16x32xf32>
    %109 = vector.broadcast %102 : vector<1x32xf32> to vector<16x32xf32>
    %110 = arith.addf %108, %109 : vector<16x32xf32>
    %111 = arith.addf %94, %110 : vector<16x32xf32>
    %c0_46 = arith.constant 0 : index
    %c0_47 = arith.constant 0 : index
    %c0_48 = arith.constant 0 : index
    %112 = vector.load %arg12[%c0_46, %c0_47, %c0_48] : memref<2x1x32xf32, #tpu.memory_space<vmem>>, vector<1x1x32xf32>
    %113 = vector.shape_cast %112 : vector<1x1x32xf32> to vector<1x32xf32>
    %c0_49 = arith.constant 0 : index
    %c0_50 = arith.constant 0 : index
    %c0_51 = arith.constant 0 : index
    %114 = vector.load %arg13[%c0_49, %c0_50, %c0_51] : memref<2x1x32xf32, #tpu.memory_space<vmem>>, vector<1x1x32xf32>
    %115 = vector.shape_cast %114 : vector<1x1x32xf32> to vector<1x32xf32>
    %cst_52 = arith.constant dense<0.000000e+00> : vector<16xf32>
    %116 = vector.multi_reduction <add>, %111, %cst_52 [1] : vector<16x32xf32> to vector<16xf32>
    %117 = vector.shape_cast %116 : vector<16xf32> to vector<16x1xf32>
    %cst_53 = arith.constant 3.200000e+01 : f32
    %118 = vector.broadcast %cst_53 : f32 to vector<16x1xf32>
    %119 = arith.divf %117, %118 : vector<16x1xf32>
    %120 = vector.broadcast %119 : vector<16x1xf32> to vector<16x32xf32>
    %121 = arith.subf %111, %120 : vector<16x32xf32>
    %122 = arith.mulf %121, %121 : vector<16x32xf32>
    %cst_54 = arith.constant dense<0.000000e+00> : vector<16xf32>
    %123 = vector.multi_reduction <add>, %122, %cst_54 [1] : vector<16x32xf32> to vector<16xf32>
    %124 = vector.shape_cast %123 : vector<16xf32> to vector<16x1xf32>
    %cst_55 = arith.constant 3.200000e+01 : f32
    %125 = vector.broadcast %cst_55 : f32 to vector<16x1xf32>
    %126 = arith.divf %124, %125 : vector<16x1xf32>
    %127 = vector.broadcast %119 : vector<16x1xf32> to vector<16x32xf32>
    %128 = arith.subf %111, %127 : vector<16x32xf32>
    %cst_56 = arith.constant 9.99999974E-6 : f32
    %129 = vector.broadcast %cst_56 : f32 to vector<16x1xf32>
    %130 = arith.addf %126, %129 : vector<16x1xf32>
    %131 = math.rsqrt %130 : vector<16x1xf32>
    %132 = vector.broadcast %131 : vector<16x1xf32> to vector<16x32xf32>
    %133 = arith.mulf %128, %132 : vector<16x32xf32>
    %134 = vector.broadcast %113 : vector<1x32xf32> to vector<16x32xf32>
    %135 = arith.mulf %133, %134 : vector<16x32xf32>
    %136 = vector.broadcast %115 : vector<1x32xf32> to vector<16x32xf32>
    %137 = arith.addf %135, %136 : vector<16x32xf32>
    %c1 = arith.constant 1 : index
    %c0_57 = arith.constant 0 : index
    %c0_58 = arith.constant 0 : index
    %138 = vector.load %arg2[%c1, %c0_57, %c0_58] : memref<2x32x96xf32, #tpu.memory_space<vmem>>, vector<1x32x96xf32>
    %139 = vector.shape_cast %138 : vector<1x32x96xf32> to vector<32x96xf32>
    %cst_59 = arith.constant dense<0.000000e+00> : vector<16x96xf32>
    %140 = tpu.matmul %137, %139, %cst_59 {dimension_numbers = #tpu.dot_dimension_numbers<[1], [0], [0], [1], [0, 0, 1, 1], [], []>} : vector<16x32xf32>, vector<32x96xf32>, vector<16x96xf32> -> vector<16x96xf32>
    %c1_60 = arith.constant 1 : index
    %c0_61 = arith.constant 0 : index
    %c0_62 = arith.constant 0 : index
    %141 = vector.load %arg3[%c1_60, %c0_61, %c0_62] : memref<2x1x96xf32, #tpu.memory_space<vmem>>, vector<1x1x96xf32>
    %142 = vector.shape_cast %141 : vector<1x1x96xf32> to vector<1x96xf32>
    %143 = vector.broadcast %142 : vector<1x96xf32> to vector<16x96xf32>
    %144 = arith.addf %140, %143 : vector<16x96xf32>
    %145 = vector.extract_strided_slice %144 {offsets = [0, 0], sizes = [16, 32], strides = [1, 1]} : vector<16x96xf32> to vector<16x32xf32>
    %146 = vector.extract_strided_slice %144 {offsets = [0, 32], sizes = [16, 32], strides = [1, 1]} : vector<16x96xf32> to vector<16x32xf32>
    %147 = vector.extract_strided_slice %144 {offsets = [0, 64], sizes = [16, 32], strides = [1, 1]} : vector<16x96xf32> to vector<16x32xf32>
    %c1_63 = arith.constant 1 : index
    %c0_64 = arith.constant 0 : index
    %c0_65 = arith.constant 0 : index
    %148 = vector.load %arg4[%c1_63, %c0_64, %c0_65] : memref<2x32x32xf32, #tpu.memory_space<vmem>>, vector<1x32x32xf32>
    %149 = vector.shape_cast %148 : vector<1x32x32xf32> to vector<32x32xf32>
    %c1_66 = arith.constant 1 : index
    %c0_67 = arith.constant 0 : index
    %c0_68 = arith.constant 0 : index
    %150 = vector.load %arg5[%c1_66, %c0_67, %c0_68] : memref<2x1x32xf32, #tpu.memory_space<vmem>>, vector<1x1x32xf32>
    %151 = vector.shape_cast %150 : vector<1x1x32xf32> to vector<1x32xf32>
    %152 = vector.extract_strided_slice %145 {offsets = [0, 0], sizes = [16, 8], strides = [1, 1]} : vector<16x32xf32> to vector<16x8xf32>
    %153 = vector.shape_cast %152 : vector<16x8xf32> to vector<2x8x8xf32>
    %154 = vector.extract_strided_slice %145 {offsets = [0, 8], sizes = [16, 8], strides = [1, 1]} : vector<16x32xf32> to vector<16x8xf32>
    %155 = vector.shape_cast %154 : vector<16x8xf32> to vector<2x8x8xf32>
    %156 = vector.extract_strided_slice %145 {offsets = [0, 16], sizes = [16, 8], strides = [1, 1]} : vector<16x32xf32> to vector<16x8xf32>
    %157 = vector.shape_cast %156 : vector<16x8xf32> to vector<2x8x8xf32>
    %158 = vector.extract_strided_slice %145 {offsets = [0, 24], sizes = [16, 8], strides = [1, 1]} : vector<16x32xf32> to vector<16x8xf32>
    %159 = vector.shape_cast %158 : vector<16x8xf32> to vector<2x8x8xf32>
    %160 = tpu.concatenate %153, %155, %157, %159 in 0 : vector<2x8x8xf32>, vector<2x8x8xf32>, vector<2x8x8xf32>, vector<2x8x8xf32> -> vector<8x8x8xf32>
    %161 = vector.extract_strided_slice %146 {offsets = [0, 0], sizes = [16, 8], strides = [1, 1]} : vector<16x32xf32> to vector<16x8xf32>
    %162 = vector.shape_cast %161 : vector<16x8xf32> to vector<2x8x8xf32>
    %163 = vector.extract_strided_slice %146 {offsets = [0, 8], sizes = [16, 8], strides = [1, 1]} : vector<16x32xf32> to vector<16x8xf32>
    %164 = vector.shape_cast %163 : vector<16x8xf32> to vector<2x8x8xf32>
    %165 = vector.extract_strided_slice %146 {offsets = [0, 16], sizes = [16, 8], strides = [1, 1]} : vector<16x32xf32> to vector<16x8xf32>
    %166 = vector.shape_cast %165 : vector<16x8xf32> to vector<2x8x8xf32>
    %167 = vector.extract_strided_slice %146 {offsets = [0, 24], sizes = [16, 8], strides = [1, 1]} : vector<16x32xf32> to vector<16x8xf32>
    %168 = vector.shape_cast %167 : vector<16x8xf32> to vector<2x8x8xf32>
    %169 = tpu.concatenate %162, %164, %166, %168 in 0 : vector<2x8x8xf32>, vector<2x8x8xf32>, vector<2x8x8xf32>, vector<2x8x8xf32> -> vector<8x8x8xf32>
    %170 = vector.extract_strided_slice %147 {offsets = [0, 0], sizes = [16, 8], strides = [1, 1]} : vector<16x32xf32> to vector<16x8xf32>
    %171 = vector.shape_cast %170 : vector<16x8xf32> to vector<2x8x8xf32>
    %172 = vector.extract_strided_slice %147 {offsets = [0, 8], sizes = [16, 8], strides = [1, 1]} : vector<16x32xf32> to vector<16x8xf32>
    %173 = vector.shape_cast %172 : vector<16x8xf32> to vector<2x8x8xf32>
    %174 = vector.extract_strided_slice %147 {offsets = [0, 16], sizes = [16, 8], strides = [1, 1]} : vector<16x32xf32> to vector<16x8xf32>
    %175 = vector.shape_cast %174 : vector<16x8xf32> to vector<2x8x8xf32>
    %176 = vector.extract_strided_slice %147 {offsets = [0, 24], sizes = [16, 8], strides = [1, 1]} : vector<16x32xf32> to vector<16x8xf32>
    %177 = vector.shape_cast %176 : vector<16x8xf32> to vector<2x8x8xf32>
    %178 = tpu.concatenate %171, %173, %175, %177 in 0 : vector<2x8x8xf32>, vector<2x8x8xf32>, vector<2x8x8xf32>, vector<2x8x8xf32> -> vector<8x8x8xf32>
    "tpu.trace_start"() <{level = 10 : i32, message = "gqd,gkd->gqk"}> : () -> ()
    %cst_69 = arith.constant dense<0.000000e+00> : vector<8x8x8xf32>
    %179 = tpu.matmul %160, %169, %cst_69 {dimension_numbers = #tpu.dot_dimension_numbers<[2], [2], [1], [1], [0, 0, 0, 1, 1, 1], [0], [0]>} : vector<8x8x8xf32>, vector<8x8x8xf32>, vector<8x8x8xf32> -> vector<8x8x8xf32>
    "tpu.trace_stop"() : () -> ()
    %cst_70 = arith.constant 0.353553385 : f32
    %180 = vector.broadcast %cst_70 : f32 to vector<8x8x8xf32>
    %181 = arith.mulf %179, %180 : vector<8x8x8xf32>
    %cst_71 = arith.constant dense<0xFF800000> : vector<8x8xf32>
    %182 = vector.multi_reduction <maximumf>, %181, %cst_71 [2] : vector<8x8x8xf32> to vector<8x8xf32>
    %183 = vector.shape_cast %182 : vector<8x8xf32> to vector<8x8x1xf32>
    %184 = vector.broadcast %183 : vector<8x8x1xf32> to vector<8x8x8xf32>
    %185 = arith.subf %181, %184 : vector<8x8x8xf32>
    %186 = math.exp %185 : vector<8x8x8xf32>
    %cst_72 = arith.constant dense<0.000000e+00> : vector<8x8xf32>
    %187 = vector.multi_reduction <add>, %186, %cst_72 [2] : vector<8x8x8xf32> to vector<8x8xf32>
    %188 = vector.shape_cast %187 : vector<8x8xf32> to vector<8x8x1xf32>
    %189 = vector.broadcast %188 : vector<8x8x1xf32> to vector<8x8x8xf32>
    %190 = arith.divf %186, %189 : vector<8x8x8xf32>
    "tpu.trace_start"() <{level = 10 : i32, message = "gqk,gkd->gqd"}> : () -> ()
    %cst_73 = arith.constant dense<0.000000e+00> : vector<8x8x8xf32>
    %191 = tpu.matmul %190, %178, %cst_73 {dimension_numbers = #tpu.dot_dimension_numbers<[2], [1], [1], [2], [0, 0, 0, 1, 1, 2], [0], [0]>} : vector<8x8x8xf32>, vector<8x8x8xf32>, vector<8x8x8xf32> -> vector<8x8x8xf32>
    "tpu.trace_stop"() : () -> ()
    %192 = vector.extract_strided_slice %191 {offsets = [0, 0, 0], sizes = [2, 8, 8], strides = [1, 1, 1]} : vector<8x8x8xf32> to vector<2x8x8xf32>
    %193 = vector.shape_cast %192 : vector<2x8x8xf32> to vector<16x8xf32>
    %194 = vector.extract_strided_slice %191 {offsets = [2, 0, 0], sizes = [2, 8, 8], strides = [1, 1, 1]} : vector<8x8x8xf32> to vector<2x8x8xf32>
    %195 = vector.shape_cast %194 : vector<2x8x8xf32> to vector<16x8xf32>
    %196 = vector.extract_strided_slice %191 {offsets = [4, 0, 0], sizes = [2, 8, 8], strides = [1, 1, 1]} : vector<8x8x8xf32> to vector<2x8x8xf32>
    %197 = vector.shape_cast %196 : vector<2x8x8xf32> to vector<16x8xf32>
    %198 = vector.extract_strided_slice %191 {offsets = [6, 0, 0], sizes = [2, 8, 8], strides = [1, 1, 1]} : vector<8x8x8xf32> to vector<2x8x8xf32>
    %199 = vector.shape_cast %198 : vector<2x8x8xf32> to vector<16x8xf32>
    %200 = tpu.concatenate %193, %195, %197, %199 in 1 : vector<16x8xf32>, vector<16x8xf32>, vector<16x8xf32>, vector<16x8xf32> -> vector<16x32xf32>
    %cst_74 = arith.constant dense<0.000000e+00> : vector<16x32xf32>
    %201 = tpu.matmul %200, %149, %cst_74 {dimension_numbers = #tpu.dot_dimension_numbers<[1], [0], [0], [1], [0, 0, 1, 1], [], []>} : vector<16x32xf32>, vector<32x32xf32>, vector<16x32xf32> -> vector<16x32xf32>
    %202 = vector.broadcast %151 : vector<1x32xf32> to vector<16x32xf32>
    %203 = arith.addf %201, %202 : vector<16x32xf32>
    %204 = arith.addf %137, %203 : vector<16x32xf32>
    %c1_75 = arith.constant 1 : index
    %c0_76 = arith.constant 0 : index
    %c0_77 = arith.constant 0 : index
    %205 = vector.load %arg6[%c1_75, %c0_76, %c0_77] : memref<2x1x32xf32, #tpu.memory_space<vmem>>, vector<1x1x32xf32>
    %206 = vector.shape_cast %205 : vector<1x1x32xf32> to vector<1x32xf32>
    %c1_78 = arith.constant 1 : index
    %c0_79 = arith.constant 0 : index
    %c0_80 = arith.constant 0 : index
    %207 = vector.load %arg7[%c1_78, %c0_79, %c0_80] : memref<2x1x32xf32, #tpu.memory_space<vmem>>, vector<1x1x32xf32>
    %208 = vector.shape_cast %207 : vector<1x1x32xf32> to vector<1x32xf32>
    %cst_81 = arith.constant dense<0.000000e+00> : vector<16xf32>
    %209 = vector.multi_reduction <add>, %204, %cst_81 [1] : vector<16x32xf32> to vector<16xf32>
    %210 = vector.shape_cast %209 : vector<16xf32> to vector<16x1xf32>
    %cst_82 = arith.constant 3.200000e+01 : f32
    %211 = vector.broadcast %cst_82 : f32 to vector<16x1xf32>
    %212 = arith.divf %210, %211 : vector<16x1xf32>
    %213 = vector.broadcast %212 : vector<16x1xf32> to vector<16x32xf32>
    %214 = arith.subf %204, %213 : vector<16x32xf32>
    %215 = arith.mulf %214, %214 : vector<16x32xf32>
    %cst_83 = arith.constant dense<0.000000e+00> : vector<16xf32>
    %216 = vector.multi_reduction <add>, %215, %cst_83 [1] : vector<16x32xf32> to vector<16xf32>
    %217 = vector.shape_cast %216 : vector<16xf32> to vector<16x1xf32>
    %cst_84 = arith.constant 3.200000e+01 : f32
    %218 = vector.broadcast %cst_84 : f32 to vector<16x1xf32>
    %219 = arith.divf %217, %218 : vector<16x1xf32>
    %220 = vector.broadcast %212 : vector<16x1xf32> to vector<16x32xf32>
    %221 = arith.subf %204, %220 : vector<16x32xf32>
    %cst_85 = arith.constant 9.99999974E-6 : f32
    %222 = vector.broadcast %cst_85 : f32 to vector<16x1xf32>
    %223 = arith.addf %219, %222 : vector<16x1xf32>
    %224 = math.rsqrt %223 : vector<16x1xf32>
    %225 = vector.broadcast %224 : vector<16x1xf32> to vector<16x32xf32>
    %226 = arith.mulf %221, %225 : vector<16x32xf32>
    %227 = vector.broadcast %206 : vector<1x32xf32> to vector<16x32xf32>
    %228 = arith.mulf %226, %227 : vector<16x32xf32>
    %229 = vector.broadcast %208 : vector<1x32xf32> to vector<16x32xf32>
    %230 = arith.addf %228, %229 : vector<16x32xf32>
    %c1_86 = arith.constant 1 : index
    %c0_87 = arith.constant 0 : index
    %c0_88 = arith.constant 0 : index
    %231 = vector.load %arg8[%c1_86, %c0_87, %c0_88] : memref<2x32x64xf32, #tpu.memory_space<vmem>>, vector<1x32x64xf32>
    %232 = vector.shape_cast %231 : vector<1x32x64xf32> to vector<32x64xf32>
    %c1_89 = arith.constant 1 : index
    %c0_90 = arith.constant 0 : index
    %c0_91 = arith.constant 0 : index
    %233 = vector.load %arg9[%c1_89, %c0_90, %c0_91] : memref<2x1x64xf32, #tpu.memory_space<vmem>>, vector<1x1x64xf32>
    %234 = vector.shape_cast %233 : vector<1x1x64xf32> to vector<1x64xf32>
    %c1_92 = arith.constant 1 : index
    %c0_93 = arith.constant 0 : index
    %c0_94 = arith.constant 0 : index
    %235 = vector.load %arg10[%c1_92, %c0_93, %c0_94] : memref<2x64x32xf32, #tpu.memory_space<vmem>>, vector<1x64x32xf32>
    %236 = vector.shape_cast %235 : vector<1x64x32xf32> to vector<64x32xf32>
    %c1_95 = arith.constant 1 : index
    %c0_96 = arith.constant 0 : index
    %c0_97 = arith.constant 0 : index
    %237 = vector.load %arg11[%c1_95, %c0_96, %c0_97] : memref<2x1x32xf32, #tpu.memory_space<vmem>>, vector<1x1x32xf32>
    %238 = vector.shape_cast %237 : vector<1x1x32xf32> to vector<1x32xf32>
    %cst_98 = arith.constant dense<0.000000e+00> : vector<16x64xf32>
    %239 = tpu.matmul %230, %232, %cst_98 {dimension_numbers = #tpu.dot_dimension_numbers<[1], [0], [0], [1], [0, 0, 1, 1], [], []>} : vector<16x32xf32>, vector<32x64xf32>, vector<16x64xf32> -> vector<16x64xf32>
    %240 = vector.broadcast %234 : vector<1x64xf32> to vector<16x64xf32>
    %241 = arith.addf %239, %240 : vector<16x64xf32>
    %cst_99 = arith.constant 0.000000e+00 : f32
    %242 = vector.broadcast %cst_99 : f32 to vector<16x64xf32>
    %243 = arith.maximumf %241, %242 : vector<16x64xf32>
    %cst_100 = arith.constant dense<0.000000e+00> : vector<16x32xf32>
    %244 = tpu.matmul %243, %236, %cst_100 {dimension_numbers = #tpu.dot_dimension_numbers<[1], [0], [0], [1], [0, 0, 1, 1], [], []>} : vector<16x64xf32>, vector<64x32xf32>, vector<16x32xf32> -> vector<16x32xf32>
    %245 = vector.broadcast %238 : vector<1x32xf32> to vector<16x32xf32>
    %246 = arith.addf %244, %245 : vector<16x32xf32>
    %247 = arith.addf %230, %246 : vector<16x32xf32>
    %c1_101 = arith.constant 1 : index
    %c0_102 = arith.constant 0 : index
    %c0_103 = arith.constant 0 : index
    %248 = vector.load %arg12[%c1_101, %c0_102, %c0_103] : memref<2x1x32xf32, #tpu.memory_space<vmem>>, vector<1x1x32xf32>
    %249 = vector.shape_cast %248 : vector<1x1x32xf32> to vector<1x32xf32>
    %c1_104 = arith.constant 1 : index
    %c0_105 = arith.constant 0 : index
    %c0_106 = arith.constant 0 : index
    %250 = vector.load %arg13[%c1_104, %c0_105, %c0_106] : memref<2x1x32xf32, #tpu.memory_space<vmem>>, vector<1x1x32xf32>
    %251 = vector.shape_cast %250 : vector<1x1x32xf32> to vector<1x32xf32>
    %cst_107 = arith.constant dense<0.000000e+00> : vector<16xf32>
    %252 = vector.multi_reduction <add>, %247, %cst_107 [1] : vector<16x32xf32> to vector<16xf32>
    %253 = vector.shape_cast %252 : vector<16xf32> to vector<16x1xf32>
    %cst_108 = arith.constant 3.200000e+01 : f32
    %254 = vector.broadcast %cst_108 : f32 to vector<16x1xf32>
    %255 = arith.divf %253, %254 : vector<16x1xf32>
    %256 = vector.broadcast %255 : vector<16x1xf32> to vector<16x32xf32>
    %257 = arith.subf %247, %256 : vector<16x32xf32>
    %258 = arith.mulf %257, %257 : vector<16x32xf32>
    %cst_109 = arith.constant dense<0.000000e+00> : vector<16xf32>
    %259 = vector.multi_reduction <add>, %258, %cst_109 [1] : vector<16x32xf32> to vector<16xf32>
    %260 = vector.shape_cast %259 : vector<16xf32> to vector<16x1xf32>
    %cst_110 = arith.constant 3.200000e+01 : f32
    %261 = vector.broadcast %cst_110 : f32 to vector<16x1xf32>
    %262 = arith.divf %260, %261 : vector<16x1xf32>
    %263 = vector.broadcast %255 : vector<16x1xf32> to vector<16x32xf32>
    %264 = arith.subf %247, %263 : vector<16x32xf32>
    %cst_111 = arith.constant 9.99999974E-6 : f32
    %265 = vector.broadcast %cst_111 : f32 to vector<16x1xf32>
    %266 = arith.addf %262, %265 : vector<16x1xf32>
    %267 = math.rsqrt %266 : vector<16x1xf32>
    %268 = vector.broadcast %267 : vector<16x1xf32> to vector<16x32xf32>
    %269 = arith.mulf %264, %268 : vector<16x32xf32>
    %270 = vector.broadcast %249 : vector<1x32xf32> to vector<16x32xf32>
    %271 = arith.mulf %269, %270 : vector<16x32xf32>
    %272 = vector.broadcast %251 : vector<1x32xf32> to vector<16x32xf32>
    %273 = arith.addf %271, %272 : vector<16x32xf32>
    %c0_112 = arith.constant 0 : index
    %c0_113 = arith.constant 0 : index
    %274 = vector.load %arg14[%c0_112, %c0_113] : memref<1x32xf32, #tpu.memory_space<vmem>>, vector<1x32xf32>
    %c0_114 = arith.constant 0 : index
    %c0_115 = arith.constant 0 : index
    %275 = vector.load %arg15[%c0_114, %c0_115] : memref<1x32xf32, #tpu.memory_space<vmem>>, vector<1x32xf32>
    %cst_116 = arith.constant dense<0.000000e+00> : vector<16xf32>
    %276 = vector.multi_reduction <add>, %273, %cst_116 [1] : vector<16x32xf32> to vector<16xf32>
    %277 = vector.shape_cast %276 : vector<16xf32> to vector<16x1xf32>
    %cst_117 = arith.constant 3.200000e+01 : f32
    %278 = vector.broadcast %cst_117 : f32 to vector<16x1xf32>
    %279 = arith.divf %277, %278 : vector<16x1xf32>
    %280 = vector.broadcast %279 : vector<16x1xf32> to vector<16x32xf32>
    %281 = arith.subf %273, %280 : vector<16x32xf32>
    %282 = arith.mulf %281, %281 : vector<16x32xf32>
    %cst_118 = arith.constant dense<0.000000e+00> : vector<16xf32>
    %283 = vector.multi_reduction <add>, %282, %cst_118 [1] : vector<16x32xf32> to vector<16xf32>
    %284 = vector.shape_cast %283 : vector<16xf32> to vector<16x1xf32>
    %cst_119 = arith.constant 3.200000e+01 : f32
    %285 = vector.broadcast %cst_119 : f32 to vector<16x1xf32>
    %286 = arith.divf %284, %285 : vector<16x1xf32>
    %287 = vector.broadcast %279 : vector<16x1xf32> to vector<16x32xf32>
    %288 = arith.subf %273, %287 : vector<16x32xf32>
    %cst_120 = arith.constant 9.99999974E-6 : f32
    %289 = vector.broadcast %cst_120 : f32 to vector<16x1xf32>
    %290 = arith.addf %286, %289 : vector<16x1xf32>
    %291 = math.rsqrt %290 : vector<16x1xf32>
    %292 = vector.broadcast %291 : vector<16x1xf32> to vector<16x32xf32>
    %293 = arith.mulf %288, %292 : vector<16x32xf32>
    %294 = vector.broadcast %274 : vector<1x32xf32> to vector<16x32xf32>
    %295 = arith.mulf %293, %294 : vector<16x32xf32>
    %296 = vector.broadcast %275 : vector<1x32xf32> to vector<16x32xf32>
    %297 = arith.addf %295, %296 : vector<16x32xf32>
    %c0_121 = arith.constant 0 : index
    %c0_122 = arith.constant 0 : index
    %c0_123 = arith.constant 0 : index
    %298 = vector.load %arg16[%c0_121, %c0_122, %c0_123] : memref<2x32x96xf32, #tpu.memory_space<vmem>>, vector<1x32x96xf32>
    %299 = vector.shape_cast %298 : vector<1x32x96xf32> to vector<32x96xf32>
    %cst_124 = arith.constant dense<0.000000e+00> : vector<16x96xf32>
    %300 = tpu.matmul %1, %299, %cst_124 {dimension_numbers = #tpu.dot_dimension_numbers<[1], [0], [0], [1], [0, 0, 1, 1], [], []>} : vector<16x32xf32>, vector<32x96xf32>, vector<16x96xf32> -> vector<16x96xf32>
    %c0_125 = arith.constant 0 : index
    %c0_126 = arith.constant 0 : index
    %c0_127 = arith.constant 0 : index
    %301 = vector.load %arg17[%c0_125, %c0_126, %c0_127] : memref<2x1x96xf32, #tpu.memory_space<vmem>>, vector<1x1x96xf32>
    %302 = vector.shape_cast %301 : vector<1x1x96xf32> to vector<1x96xf32>
    %303 = vector.broadcast %302 : vector<1x96xf32> to vector<16x96xf32>
    %304 = arith.addf %300, %303 : vector<16x96xf32>
    %305 = vector.extract_strided_slice %304 {offsets = [0, 0], sizes = [16, 32], strides = [1, 1]} : vector<16x96xf32> to vector<16x32xf32>
    %306 = vector.extract_strided_slice %304 {offsets = [0, 32], sizes = [16, 32], strides = [1, 1]} : vector<16x96xf32> to vector<16x32xf32>
    %307 = vector.extract_strided_slice %304 {offsets = [0, 64], sizes = [16, 32], strides = [1, 1]} : vector<16x96xf32> to vector<16x32xf32>
    %c0_128 = arith.constant 0 : index
    %c0_129 = arith.constant 0 : index
    %c0_130 = arith.constant 0 : index
    %308 = vector.load %arg18[%c0_128, %c0_129, %c0_130] : memref<2x32x32xf32, #tpu.memory_space<vmem>>, vector<1x32x32xf32>
    %309 = vector.shape_cast %308 : vector<1x32x32xf32> to vector<32x32xf32>
    %c0_131 = arith.constant 0 : index
    %c0_132 = arith.constant 0 : index
    %c0_133 = arith.constant 0 : index
    %310 = vector.load %arg19[%c0_131, %c0_132, %c0_133] : memref<2x1x32xf32, #tpu.memory_space<vmem>>, vector<1x1x32xf32>
    %311 = vector.shape_cast %310 : vector<1x1x32xf32> to vector<1x32xf32>
    %312 = vector.extract_strided_slice %305 {offsets = [0, 0], sizes = [16, 8], strides = [1, 1]} : vector<16x32xf32> to vector<16x8xf32>
    %313 = vector.shape_cast %312 : vector<16x8xf32> to vector<2x8x8xf32>
    %314 = vector.extract_strided_slice %305 {offsets = [0, 8], sizes = [16, 8], strides = [1, 1]} : vector<16x32xf32> to vector<16x8xf32>
    %315 = vector.shape_cast %314 : vector<16x8xf32> to vector<2x8x8xf32>
    %316 = vector.extract_strided_slice %305 {offsets = [0, 16], sizes = [16, 8], strides = [1, 1]} : vector<16x32xf32> to vector<16x8xf32>
    %317 = vector.shape_cast %316 : vector<16x8xf32> to vector<2x8x8xf32>
    %318 = vector.extract_strided_slice %305 {offsets = [0, 24], sizes = [16, 8], strides = [1, 1]} : vector<16x32xf32> to vector<16x8xf32>
    %319 = vector.shape_cast %318 : vector<16x8xf32> to vector<2x8x8xf32>
    %320 = tpu.concatenate %313, %315, %317, %319 in 0 : vector<2x8x8xf32>, vector<2x8x8xf32>, vector<2x8x8xf32>, vector<2x8x8xf32> -> vector<8x8x8xf32>
    %321 = vector.extract_strided_slice %306 {offsets = [0, 0], sizes = [16, 8], strides = [1, 1]} : vector<16x32xf32> to vector<16x8xf32>
    %322 = vector.shape_cast %321 : vector<16x8xf32> to vector<2x8x8xf32>
    %323 = vector.extract_strided_slice %306 {offsets = [0, 8], sizes = [16, 8], strides = [1, 1]} : vector<16x32xf32> to vector<16x8xf32>
    %324 = vector.shape_cast %323 : vector<16x8xf32> to vector<2x8x8xf32>
    %325 = vector.extract_strided_slice %306 {offsets = [0, 16], sizes = [16, 8], strides = [1, 1]} : vector<16x32xf32> to vector<16x8xf32>
    %326 = vector.shape_cast %325 : vector<16x8xf32> to vector<2x8x8xf32>
    %327 = vector.extract_strided_slice %306 {offsets = [0, 24], sizes = [16, 8], strides = [1, 1]} : vector<16x32xf32> to vector<16x8xf32>
    %328 = vector.shape_cast %327 : vector<16x8xf32> to vector<2x8x8xf32>
    %329 = tpu.concatenate %322, %324, %326, %328 in 0 : vector<2x8x8xf32>, vector<2x8x8xf32>, vector<2x8x8xf32>, vector<2x8x8xf32> -> vector<8x8x8xf32>
    %330 = vector.extract_strided_slice %307 {offsets = [0, 0], sizes = [16, 8], strides = [1, 1]} : vector<16x32xf32> to vector<16x8xf32>
    %331 = vector.shape_cast %330 : vector<16x8xf32> to vector<2x8x8xf32>
    %332 = vector.extract_strided_slice %307 {offsets = [0, 8], sizes = [16, 8], strides = [1, 1]} : vector<16x32xf32> to vector<16x8xf32>
    %333 = vector.shape_cast %332 : vector<16x8xf32> to vector<2x8x8xf32>
    %334 = vector.extract_strided_slice %307 {offsets = [0, 16], sizes = [16, 8], strides = [1, 1]} : vector<16x32xf32> to vector<16x8xf32>
    %335 = vector.shape_cast %334 : vector<16x8xf32> to vector<2x8x8xf32>
    %336 = vector.extract_strided_slice %307 {offsets = [0, 24], sizes = [16, 8], strides = [1, 1]} : vector<16x32xf32> to vector<16x8xf32>
    %337 = vector.shape_cast %336 : vector<16x8xf32> to vector<2x8x8xf32>
    %338 = tpu.concatenate %331, %333, %335, %337 in 0 : vector<2x8x8xf32>, vector<2x8x8xf32>, vector<2x8x8xf32>, vector<2x8x8xf32> -> vector<8x8x8xf32>
    "tpu.trace_start"() <{level = 10 : i32, message = "gqd,gkd->gqk"}> : () -> ()
    %cst_134 = arith.constant dense<0.000000e+00> : vector<8x8x8xf32>
    %339 = tpu.matmul %320, %329, %cst_134 {dimension_numbers = #tpu.dot_dimension_numbers<[2], [2], [1], [1], [0, 0, 0, 1, 1, 1], [0], [0]>} : vector<8x8x8xf32>, vector<8x8x8xf32>, vector<8x8x8xf32> -> vector<8x8x8xf32>
    "tpu.trace_stop"() : () -> ()
    %cst_135 = arith.constant 0.353553385 : f32
    %340 = vector.broadcast %cst_135 : f32 to vector<8x8x8xf32>
    %341 = arith.mulf %339, %340 : vector<8x8x8xf32>
    %cst_136 = arith.constant dense<0xFF800000> : vector<8x8xf32>
    %342 = vector.multi_reduction <maximumf>, %341, %cst_136 [2] : vector<8x8x8xf32> to vector<8x8xf32>
    %343 = vector.shape_cast %342 : vector<8x8xf32> to vector<8x8x1xf32>
    %344 = vector.broadcast %343 : vector<8x8x1xf32> to vector<8x8x8xf32>
    %345 = arith.subf %341, %344 : vector<8x8x8xf32>
    %346 = math.exp %345 : vector<8x8x8xf32>
    %cst_137 = arith.constant dense<0.000000e+00> : vector<8x8xf32>
    %347 = vector.multi_reduction <add>, %346, %cst_137 [2] : vector<8x8x8xf32> to vector<8x8xf32>
    %348 = vector.shape_cast %347 : vector<8x8xf32> to vector<8x8x1xf32>
    %349 = vector.broadcast %348 : vector<8x8x1xf32> to vector<8x8x8xf32>
    %350 = arith.divf %346, %349 : vector<8x8x8xf32>
    "tpu.trace_start"() <{level = 10 : i32, message = "gqk,gkd->gqd"}> : () -> ()
    %cst_138 = arith.constant dense<0.000000e+00> : vector<8x8x8xf32>
    %351 = tpu.matmul %350, %338, %cst_138 {dimension_numbers = #tpu.dot_dimension_numbers<[2], [1], [1], [2], [0, 0, 0, 1, 1, 2], [0], [0]>} : vector<8x8x8xf32>, vector<8x8x8xf32>, vector<8x8x8xf32> -> vector<8x8x8xf32>
    "tpu.trace_stop"() : () -> ()
    %352 = vector.extract_strided_slice %351 {offsets = [0, 0, 0], sizes = [2, 8, 8], strides = [1, 1, 1]} : vector<8x8x8xf32> to vector<2x8x8xf32>
    %353 = vector.shape_cast %352 : vector<2x8x8xf32> to vector<16x8xf32>
    %354 = vector.extract_strided_slice %351 {offsets = [2, 0, 0], sizes = [2, 8, 8], strides = [1, 1, 1]} : vector<8x8x8xf32> to vector<2x8x8xf32>
    %355 = vector.shape_cast %354 : vector<2x8x8xf32> to vector<16x8xf32>
    %356 = vector.extract_strided_slice %351 {offsets = [4, 0, 0], sizes = [2, 8, 8], strides = [1, 1, 1]} : vector<8x8x8xf32> to vector<2x8x8xf32>
    %357 = vector.shape_cast %356 : vector<2x8x8xf32> to vector<16x8xf32>
    %358 = vector.extract_strided_slice %351 {offsets = [6, 0, 0], sizes = [2, 8, 8], strides = [1, 1, 1]} : vector<8x8x8xf32> to vector<2x8x8xf32>
    %359 = vector.shape_cast %358 : vector<2x8x8xf32> to vector<16x8xf32>
    %360 = tpu.concatenate %353, %355, %357, %359 in 1 : vector<16x8xf32>, vector<16x8xf32>, vector<16x8xf32>, vector<16x8xf32> -> vector<16x32xf32>
    %cst_139 = arith.constant dense<0.000000e+00> : vector<16x32xf32>
    %361 = tpu.matmul %360, %309, %cst_139 {dimension_numbers = #tpu.dot_dimension_numbers<[1], [0], [0], [1], [0, 0, 1, 1], [], []>} : vector<16x32xf32>, vector<32x32xf32>, vector<16x32xf32> -> vector<16x32xf32>
    %362 = vector.broadcast %311 : vector<1x32xf32> to vector<16x32xf32>
    %363 = arith.addf %361, %362 : vector<16x32xf32>
    %364 = arith.addf %1, %363 : vector<16x32xf32>
    %c0_140 = arith.constant 0 : index
    %c0_141 = arith.constant 0 : index
    %c0_142 = arith.constant 0 : index
    %365 = vector.load %arg20[%c0_140, %c0_141, %c0_142] : memref<2x1x32xf32, #tpu.memory_space<vmem>>, vector<1x1x32xf32>
    %366 = vector.shape_cast %365 : vector<1x1x32xf32> to vector<1x32xf32>
    %c0_143 = arith.constant 0 : index
    %c0_144 = arith.constant 0 : index
    %c0_145 = arith.constant 0 : index
    %367 = vector.load %arg21[%c0_143, %c0_144, %c0_145] : memref<2x1x32xf32, #tpu.memory_space<vmem>>, vector<1x1x32xf32>
    %368 = vector.shape_cast %367 : vector<1x1x32xf32> to vector<1x32xf32>
    %cst_146 = arith.constant dense<0.000000e+00> : vector<16xf32>
    %369 = vector.multi_reduction <add>, %364, %cst_146 [1] : vector<16x32xf32> to vector<16xf32>
    %370 = vector.shape_cast %369 : vector<16xf32> to vector<16x1xf32>
    %cst_147 = arith.constant 3.200000e+01 : f32
    %371 = vector.broadcast %cst_147 : f32 to vector<16x1xf32>
    %372 = arith.divf %370, %371 : vector<16x1xf32>
    %373 = vector.broadcast %372 : vector<16x1xf32> to vector<16x32xf32>
    %374 = arith.subf %364, %373 : vector<16x32xf32>
    %375 = arith.mulf %374, %374 : vector<16x32xf32>
    %cst_148 = arith.constant dense<0.000000e+00> : vector<16xf32>
    %376 = vector.multi_reduction <add>, %375, %cst_148 [1] : vector<16x32xf32> to vector<16xf32>
    %377 = vector.shape_cast %376 : vector<16xf32> to vector<16x1xf32>
    %cst_149 = arith.constant 3.200000e+01 : f32
    %378 = vector.broadcast %cst_149 : f32 to vector<16x1xf32>
    %379 = arith.divf %377, %378 : vector<16x1xf32>
    %380 = vector.broadcast %372 : vector<16x1xf32> to vector<16x32xf32>
    %381 = arith.subf %364, %380 : vector<16x32xf32>
    %cst_150 = arith.constant 9.99999974E-6 : f32
    %382 = vector.broadcast %cst_150 : f32 to vector<16x1xf32>
    %383 = arith.addf %379, %382 : vector<16x1xf32>
    %384 = math.rsqrt %383 : vector<16x1xf32>
    %385 = vector.broadcast %384 : vector<16x1xf32> to vector<16x32xf32>
    %386 = arith.mulf %381, %385 : vector<16x32xf32>
    %387 = vector.broadcast %366 : vector<1x32xf32> to vector<16x32xf32>
    %388 = arith.mulf %386, %387 : vector<16x32xf32>
    %389 = vector.broadcast %368 : vector<1x32xf32> to vector<16x32xf32>
    %390 = arith.addf %388, %389 : vector<16x32xf32>
    %c0_151 = arith.constant 0 : index
    %c0_152 = arith.constant 0 : index
    %c0_153 = arith.constant 0 : index
    %391 = vector.load %arg22[%c0_151, %c0_152, %c0_153] : memref<2x32x32xf32, #tpu.memory_space<vmem>>, vector<1x32x32xf32>
    %392 = vector.shape_cast %391 : vector<1x32x32xf32> to vector<32x32xf32>
    %cst_154 = arith.constant dense<0.000000e+00> : vector<16x32xf32>
    %393 = tpu.matmul %390, %392, %cst_154 {dimension_numbers = #tpu.dot_dimension_numbers<[1], [0], [0], [1], [0, 0, 1, 1], [], []>} : vector<16x32xf32>, vector<32x32xf32>, vector<16x32xf32> -> vector<16x32xf32>
    %c0_155 = arith.constant 0 : index
    %c0_156 = arith.constant 0 : index
    %c0_157 = arith.constant 0 : index
    %394 = vector.load %arg23[%c0_155, %c0_156, %c0_157] : memref<2x1x32xf32, #tpu.memory_space<vmem>>, vector<1x1x32xf32>
    %395 = vector.shape_cast %394 : vector<1x1x32xf32> to vector<1x32xf32>
    %396 = vector.broadcast %395 : vector<1x32xf32> to vector<16x32xf32>
    %397 = arith.addf %393, %396 : vector<16x32xf32>
    %c0_158 = arith.constant 0 : index
    %c0_159 = arith.constant 0 : index
    %c0_160 = arith.constant 0 : index
    %398 = vector.load %arg24[%c0_158, %c0_159, %c0_160] : memref<2x32x64xf32, #tpu.memory_space<vmem>>, vector<1x32x64xf32>
    %399 = vector.shape_cast %398 : vector<1x32x64xf32> to vector<32x64xf32>
    %cst_161 = arith.constant dense<0.000000e+00> : vector<16x64xf32>
    %400 = tpu.matmul %297, %399, %cst_161 {dimension_numbers = #tpu.dot_dimension_numbers<[1], [0], [0], [1], [0, 0, 1, 1], [], []>} : vector<16x32xf32>, vector<32x64xf32>, vector<16x64xf32> -> vector<16x64xf32>
    %c0_162 = arith.constant 0 : index
    %c0_163 = arith.constant 0 : index
    %c0_164 = arith.constant 0 : index
    %401 = vector.load %arg25[%c0_162, %c0_163, %c0_164] : memref<2x1x64xf32, #tpu.memory_space<vmem>>, vector<1x1x64xf32>
    %402 = vector.shape_cast %401 : vector<1x1x64xf32> to vector<1x64xf32>
    %403 = vector.broadcast %402 : vector<1x64xf32> to vector<16x64xf32>
    %404 = arith.addf %400, %403 : vector<16x64xf32>
    %405 = vector.extract_strided_slice %404 {offsets = [0, 0], sizes = [16, 32], strides = [1, 1]} : vector<16x64xf32> to vector<16x32xf32>
    %406 = vector.extract_strided_slice %404 {offsets = [0, 32], sizes = [16, 32], strides = [1, 1]} : vector<16x64xf32> to vector<16x32xf32>
    %c0_165 = arith.constant 0 : index
    %c0_166 = arith.constant 0 : index
    %c0_167 = arith.constant 0 : index
    %407 = vector.load %arg26[%c0_165, %c0_166, %c0_167] : memref<2x32x32xf32, #tpu.memory_space<vmem>>, vector<1x32x32xf32>
    %408 = vector.shape_cast %407 : vector<1x32x32xf32> to vector<32x32xf32>
    %c0_168 = arith.constant 0 : index
    %c0_169 = arith.constant 0 : index
    %c0_170 = arith.constant 0 : index
    %409 = vector.load %arg27[%c0_168, %c0_169, %c0_170] : memref<2x1x32xf32, #tpu.memory_space<vmem>>, vector<1x1x32xf32>
    %410 = vector.shape_cast %409 : vector<1x1x32xf32> to vector<1x32xf32>
    %411 = vector.extract_strided_slice %397 {offsets = [0, 0], sizes = [16, 8], strides = [1, 1]} : vector<16x32xf32> to vector<16x8xf32>
    %412 = vector.shape_cast %411 : vector<16x8xf32> to vector<2x8x8xf32>
    %413 = vector.extract_strided_slice %397 {offsets = [0, 8], sizes = [16, 8], strides = [1, 1]} : vector<16x32xf32> to vector<16x8xf32>
    %414 = vector.shape_cast %413 : vector<16x8xf32> to vector<2x8x8xf32>
    %415 = vector.extract_strided_slice %397 {offsets = [0, 16], sizes = [16, 8], strides = [1, 1]} : vector<16x32xf32> to vector<16x8xf32>
    %416 = vector.shape_cast %415 : vector<16x8xf32> to vector<2x8x8xf32>
    %417 = vector.extract_strided_slice %397 {offsets = [0, 24], sizes = [16, 8], strides = [1, 1]} : vector<16x32xf32> to vector<16x8xf32>
    %418 = vector.shape_cast %417 : vector<16x8xf32> to vector<2x8x8xf32>
    %419 = tpu.concatenate %412, %414, %416, %418 in 0 : vector<2x8x8xf32>, vector<2x8x8xf32>, vector<2x8x8xf32>, vector<2x8x8xf32> -> vector<8x8x8xf32>
    %420 = vector.extract_strided_slice %405 {offsets = [0, 0], sizes = [16, 8], strides = [1, 1]} : vector<16x32xf32> to vector<16x8xf32>
    %421 = vector.shape_cast %420 : vector<16x8xf32> to vector<2x8x8xf32>
    %422 = vector.extract_strided_slice %405 {offsets = [0, 8], sizes = [16, 8], strides = [1, 1]} : vector<16x32xf32> to vector<16x8xf32>
    %423 = vector.shape_cast %422 : vector<16x8xf32> to vector<2x8x8xf32>
    %424 = vector.extract_strided_slice %405 {offsets = [0, 16], sizes = [16, 8], strides = [1, 1]} : vector<16x32xf32> to vector<16x8xf32>
    %425 = vector.shape_cast %424 : vector<16x8xf32> to vector<2x8x8xf32>
    %426 = vector.extract_strided_slice %405 {offsets = [0, 24], sizes = [16, 8], strides = [1, 1]} : vector<16x32xf32> to vector<16x8xf32>
    %427 = vector.shape_cast %426 : vector<16x8xf32> to vector<2x8x8xf32>
    %428 = tpu.concatenate %421, %423, %425, %427 in 0 : vector<2x8x8xf32>, vector<2x8x8xf32>, vector<2x8x8xf32>, vector<2x8x8xf32> -> vector<8x8x8xf32>
    %429 = vector.extract_strided_slice %406 {offsets = [0, 0], sizes = [16, 8], strides = [1, 1]} : vector<16x32xf32> to vector<16x8xf32>
    %430 = vector.shape_cast %429 : vector<16x8xf32> to vector<2x8x8xf32>
    %431 = vector.extract_strided_slice %406 {offsets = [0, 8], sizes = [16, 8], strides = [1, 1]} : vector<16x32xf32> to vector<16x8xf32>
    %432 = vector.shape_cast %431 : vector<16x8xf32> to vector<2x8x8xf32>
    %433 = vector.extract_strided_slice %406 {offsets = [0, 16], sizes = [16, 8], strides = [1, 1]} : vector<16x32xf32> to vector<16x8xf32>
    %434 = vector.shape_cast %433 : vector<16x8xf32> to vector<2x8x8xf32>
    %435 = vector.extract_strided_slice %406 {offsets = [0, 24], sizes = [16, 8], strides = [1, 1]} : vector<16x32xf32> to vector<16x8xf32>
    %436 = vector.shape_cast %435 : vector<16x8xf32> to vector<2x8x8xf32>
    %437 = tpu.concatenate %430, %432, %434, %436 in 0 : vector<2x8x8xf32>, vector<2x8x8xf32>, vector<2x8x8xf32>, vector<2x8x8xf32> -> vector<8x8x8xf32>
    "tpu.trace_start"() <{level = 10 : i32, message = "gqd,gkd->gqk"}> : () -> ()
    %cst_171 = arith.constant dense<0.000000e+00> : vector<8x8x8xf32>
    %438 = tpu.matmul %419, %428, %cst_171 {dimension_numbers = #tpu.dot_dimension_numbers<[2], [2], [1], [1], [0, 0, 0, 1, 1, 1], [0], [0]>} : vector<8x8x8xf32>, vector<8x8x8xf32>, vector<8x8x8xf32> -> vector<8x8x8xf32>
    "tpu.trace_stop"() : () -> ()
    %cst_172 = arith.constant 0.353553385 : f32
    %439 = vector.broadcast %cst_172 : f32 to vector<8x8x8xf32>
    %440 = arith.mulf %438, %439 : vector<8x8x8xf32>
    %cst_173 = arith.constant dense<0xFF800000> : vector<8x8xf32>
    %441 = vector.multi_reduction <maximumf>, %440, %cst_173 [2] : vector<8x8x8xf32> to vector<8x8xf32>
    %442 = vector.shape_cast %441 : vector<8x8xf32> to vector<8x8x1xf32>
    %443 = vector.broadcast %442 : vector<8x8x1xf32> to vector<8x8x8xf32>
    %444 = arith.subf %440, %443 : vector<8x8x8xf32>
    %445 = math.exp %444 : vector<8x8x8xf32>
    %cst_174 = arith.constant dense<0.000000e+00> : vector<8x8xf32>
    %446 = vector.multi_reduction <add>, %445, %cst_174 [2] : vector<8x8x8xf32> to vector<8x8xf32>
    %447 = vector.shape_cast %446 : vector<8x8xf32> to vector<8x8x1xf32>
    %448 = vector.broadcast %447 : vector<8x8x1xf32> to vector<8x8x8xf32>
    %449 = arith.divf %445, %448 : vector<8x8x8xf32>
    "tpu.trace_start"() <{level = 10 : i32, message = "gqk,gkd->gqd"}> : () -> ()
    %cst_175 = arith.constant dense<0.000000e+00> : vector<8x8x8xf32>
    %450 = tpu.matmul %449, %437, %cst_175 {dimension_numbers = #tpu.dot_dimension_numbers<[2], [1], [1], [2], [0, 0, 0, 1, 1, 2], [0], [0]>} : vector<8x8x8xf32>, vector<8x8x8xf32>, vector<8x8x8xf32> -> vector<8x8x8xf32>
    "tpu.trace_stop"() : () -> ()
    %451 = vector.extract_strided_slice %450 {offsets = [0, 0, 0], sizes = [2, 8, 8], strides = [1, 1, 1]} : vector<8x8x8xf32> to vector<2x8x8xf32>
    %452 = vector.shape_cast %451 : vector<2x8x8xf32> to vector<16x8xf32>
    %453 = vector.extract_strided_slice %450 {offsets = [2, 0, 0], sizes = [2, 8, 8], strides = [1, 1, 1]} : vector<8x8x8xf32> to vector<2x8x8xf32>
    %454 = vector.shape_cast %453 : vector<2x8x8xf32> to vector<16x8xf32>
    %455 = vector.extract_strided_slice %450 {offsets = [4, 0, 0], sizes = [2, 8, 8], strides = [1, 1, 1]} : vector<8x8x8xf32> to vector<2x8x8xf32>
    %456 = vector.shape_cast %455 : vector<2x8x8xf32> to vector<16x8xf32>
    %457 = vector.extract_strided_slice %450 {offsets = [6, 0, 0], sizes = [2, 8, 8], strides = [1, 1, 1]} : vector<8x8x8xf32> to vector<2x8x8xf32>
    %458 = vector.shape_cast %457 : vector<2x8x8xf32> to vector<16x8xf32>
    %459 = tpu.concatenate %452, %454, %456, %458 in 1 : vector<16x8xf32>, vector<16x8xf32>, vector<16x8xf32>, vector<16x8xf32> -> vector<16x32xf32>
    %cst_176 = arith.constant dense<0.000000e+00> : vector<16x32xf32>
    %460 = tpu.matmul %459, %408, %cst_176 {dimension_numbers = #tpu.dot_dimension_numbers<[1], [0], [0], [1], [0, 0, 1, 1], [], []>} : vector<16x32xf32>, vector<32x32xf32>, vector<16x32xf32> -> vector<16x32xf32>
    %461 = vector.broadcast %410 : vector<1x32xf32> to vector<16x32xf32>
    %462 = arith.addf %460, %461 : vector<16x32xf32>
    %463 = arith.addf %390, %462 : vector<16x32xf32>
    %c0_177 = arith.constant 0 : index
    %c0_178 = arith.constant 0 : index
    %c0_179 = arith.constant 0 : index
    %464 = vector.load %arg28[%c0_177, %c0_178, %c0_179] : memref<2x1x32xf32, #tpu.memory_space<vmem>>, vector<1x1x32xf32>
    %465 = vector.shape_cast %464 : vector<1x1x32xf32> to vector<1x32xf32>
    %c0_180 = arith.constant 0 : index
    %c0_181 = arith.constant 0 : index
    %c0_182 = arith.constant 0 : index
    %466 = vector.load %arg29[%c0_180, %c0_181, %c0_182] : memref<2x1x32xf32, #tpu.memory_space<vmem>>, vector<1x1x32xf32>
    %467 = vector.shape_cast %466 : vector<1x1x32xf32> to vector<1x32xf32>
    %cst_183 = arith.constant dense<0.000000e+00> : vector<16xf32>
    %468 = vector.multi_reduction <add>, %463, %cst_183 [1] : vector<16x32xf32> to vector<16xf32>
    %469 = vector.shape_cast %468 : vector<16xf32> to vector<16x1xf32>
    %cst_184 = arith.constant 3.200000e+01 : f32
    %470 = vector.broadcast %cst_184 : f32 to vector<16x1xf32>
    %471 = arith.divf %469, %470 : vector<16x1xf32>
    %472 = vector.broadcast %471 : vector<16x1xf32> to vector<16x32xf32>
    %473 = arith.subf %463, %472 : vector<16x32xf32>
    %474 = arith.mulf %473, %473 : vector<16x32xf32>
    %cst_185 = arith.constant dense<0.000000e+00> : vector<16xf32>
    %475 = vector.multi_reduction <add>, %474, %cst_185 [1] : vector<16x32xf32> to vector<16xf32>
    %476 = vector.shape_cast %475 : vector<16xf32> to vector<16x1xf32>
    %cst_186 = arith.constant 3.200000e+01 : f32
    %477 = vector.broadcast %cst_186 : f32 to vector<16x1xf32>
    %478 = arith.divf %476, %477 : vector<16x1xf32>
    %479 = vector.broadcast %471 : vector<16x1xf32> to vector<16x32xf32>
    %480 = arith.subf %463, %479 : vector<16x32xf32>
    %cst_187 = arith.constant 9.99999974E-6 : f32
    %481 = vector.broadcast %cst_187 : f32 to vector<16x1xf32>
    %482 = arith.addf %478, %481 : vector<16x1xf32>
    %483 = math.rsqrt %482 : vector<16x1xf32>
    %484 = vector.broadcast %483 : vector<16x1xf32> to vector<16x32xf32>
    %485 = arith.mulf %480, %484 : vector<16x32xf32>
    %486 = vector.broadcast %465 : vector<1x32xf32> to vector<16x32xf32>
    %487 = arith.mulf %485, %486 : vector<16x32xf32>
    %488 = vector.broadcast %467 : vector<1x32xf32> to vector<16x32xf32>
    %489 = arith.addf %487, %488 : vector<16x32xf32>
    %c0_188 = arith.constant 0 : index
    %c0_189 = arith.constant 0 : index
    %c0_190 = arith.constant 0 : index
    %490 = vector.load %arg30[%c0_188, %c0_189, %c0_190] : memref<2x32x64xf32, #tpu.memory_space<vmem>>, vector<1x32x64xf32>
    %491 = vector.shape_cast %490 : vector<1x32x64xf32> to vector<32x64xf32>
    %c0_191 = arith.constant 0 : index
    %c0_192 = arith.constant 0 : index
    %c0_193 = arith.constant 0 : index
    %492 = vector.load %arg31[%c0_191, %c0_192, %c0_193] : memref<2x1x64xf32, #tpu.memory_space<vmem>>, vector<1x1x64xf32>
    %493 = vector.shape_cast %492 : vector<1x1x64xf32> to vector<1x64xf32>
    %c0_194 = arith.constant 0 : index
    %c0_195 = arith.constant 0 : index
    %c0_196 = arith.constant 0 : index
    %494 = vector.load %arg32[%c0_194, %c0_195, %c0_196] : memref<2x64x32xf32, #tpu.memory_space<vmem>>, vector<1x64x32xf32>
    %495 = vector.shape_cast %494 : vector<1x64x32xf32> to vector<64x32xf32>
    %c0_197 = arith.constant 0 : index
    %c0_198 = arith.constant 0 : index
    %c0_199 = arith.constant 0 : index
    %496 = vector.load %arg33[%c0_197, %c0_198, %c0_199] : memref<2x1x32xf32, #tpu.memory_space<vmem>>, vector<1x1x32xf32>
    %497 = vector.shape_cast %496 : vector<1x1x32xf32> to vector<1x32xf32>
    %cst_200 = arith.constant dense<0.000000e+00> : vector<16x64xf32>
    %498 = tpu.matmul %489, %491, %cst_200 {dimension_numbers = #tpu.dot_dimension_numbers<[1], [0], [0], [1], [0, 0, 1, 1], [], []>} : vector<16x32xf32>, vector<32x64xf32>, vector<16x64xf32> -> vector<16x64xf32>
    %499 = vector.broadcast %493 : vector<1x64xf32> to vector<16x64xf32>
    %500 = arith.addf %498, %499 : vector<16x64xf32>
    %cst_201 = arith.constant 0.000000e+00 : f32
    %501 = vector.broadcast %cst_201 : f32 to vector<16x64xf32>
    %502 = arith.maximumf %500, %501 : vector<16x64xf32>
    %cst_202 = arith.constant dense<0.000000e+00> : vector<16x32xf32>
    %503 = tpu.matmul %502, %495, %cst_202 {dimension_numbers = #tpu.dot_dimension_numbers<[1], [0], [0], [1], [0, 0, 1, 1], [], []>} : vector<16x64xf32>, vector<64x32xf32>, vector<16x32xf32> -> vector<16x32xf32>
    %504 = vector.broadcast %497 : vector<1x32xf32> to vector<16x32xf32>
    %505 = arith.addf %503, %504 : vector<16x32xf32>
    %506 = arith.addf %489, %505 : vector<16x32xf32>
    %c0_203 = arith.constant 0 : index
    %c0_204 = arith.constant 0 : index
    %c0_205 = arith.constant 0 : index
    %507 = vector.load %arg34[%c0_203, %c0_204, %c0_205] : memref<2x1x32xf32, #tpu.memory_space<vmem>>, vector<1x1x32xf32>
    %508 = vector.shape_cast %507 : vector<1x1x32xf32> to vector<1x32xf32>
    %c0_206 = arith.constant 0 : index
    %c0_207 = arith.constant 0 : index
    %c0_208 = arith.constant 0 : index
    %509 = vector.load %arg35[%c0_206, %c0_207, %c0_208] : memref<2x1x32xf32, #tpu.memory_space<vmem>>, vector<1x1x32xf32>
    %510 = vector.shape_cast %509 : vector<1x1x32xf32> to vector<1x32xf32>
    %cst_209 = arith.constant dense<0.000000e+00> : vector<16xf32>
    %511 = vector.multi_reduction <add>, %506, %cst_209 [1] : vector<16x32xf32> to vector<16xf32>
    %512 = vector.shape_cast %511 : vector<16xf32> to vector<16x1xf32>
    %cst_210 = arith.constant 3.200000e+01 : f32
    %513 = vector.broadcast %cst_210 : f32 to vector<16x1xf32>
    %514 = arith.divf %512, %513 : vector<16x1xf32>
    %515 = vector.broadcast %514 : vector<16x1xf32> to vector<16x32xf32>
    %516 = arith.subf %506, %515 : vector<16x32xf32>
    %517 = arith.mulf %516, %516 : vector<16x32xf32>
    %cst_211 = arith.constant dense<0.000000e+00> : vector<16xf32>
    %518 = vector.multi_reduction <add>, %517, %cst_211 [1] : vector<16x32xf32> to vector<16xf32>
    %519 = vector.shape_cast %518 : vector<16xf32> to vector<16x1xf32>
    %cst_212 = arith.constant 3.200000e+01 : f32
    %520 = vector.broadcast %cst_212 : f32 to vector<16x1xf32>
    %521 = arith.divf %519, %520 : vector<16x1xf32>
    %522 = vector.broadcast %514 : vector<16x1xf32> to vector<16x32xf32>
    %523 = arith.subf %506, %522 : vector<16x32xf32>
    %cst_213 = arith.constant 9.99999974E-6 : f32
    %524 = vector.broadcast %cst_213 : f32 to vector<16x1xf32>
    %525 = arith.addf %521, %524 : vector<16x1xf32>
    %526 = math.rsqrt %525 : vector<16x1xf32>
    %527 = vector.broadcast %526 : vector<16x1xf32> to vector<16x32xf32>
    %528 = arith.mulf %523, %527 : vector<16x32xf32>
    %529 = vector.broadcast %508 : vector<1x32xf32> to vector<16x32xf32>
    %530 = arith.mulf %528, %529 : vector<16x32xf32>
    %531 = vector.broadcast %510 : vector<1x32xf32> to vector<16x32xf32>
    %532 = arith.addf %530, %531 : vector<16x32xf32>
    %c1_214 = arith.constant 1 : index
    %c0_215 = arith.constant 0 : index
    %c0_216 = arith.constant 0 : index
    %533 = vector.load %arg16[%c1_214, %c0_215, %c0_216] : memref<2x32x96xf32, #tpu.memory_space<vmem>>, vector<1x32x96xf32>
    %534 = vector.shape_cast %533 : vector<1x32x96xf32> to vector<32x96xf32>
    %cst_217 = arith.constant dense<0.000000e+00> : vector<16x96xf32>
    %535 = tpu.matmul %532, %534, %cst_217 {dimension_numbers = #tpu.dot_dimension_numbers<[1], [0], [0], [1], [0, 0, 1, 1], [], []>} : vector<16x32xf32>, vector<32x96xf32>, vector<16x96xf32> -> vector<16x96xf32>
    %c1_218 = arith.constant 1 : index
    %c0_219 = arith.constant 0 : index
    %c0_220 = arith.constant 0 : index
    %536 = vector.load %arg17[%c1_218, %c0_219, %c0_220] : memref<2x1x96xf32, #tpu.memory_space<vmem>>, vector<1x1x96xf32>
    %537 = vector.shape_cast %536 : vector<1x1x96xf32> to vector<1x96xf32>
    %538 = vector.broadcast %537 : vector<1x96xf32> to vector<16x96xf32>
    %539 = arith.addf %535, %538 : vector<16x96xf32>
    %540 = vector.extract_strided_slice %539 {offsets = [0, 0], sizes = [16, 32], strides = [1, 1]} : vector<16x96xf32> to vector<16x32xf32>
    %541 = vector.extract_strided_slice %539 {offsets = [0, 32], sizes = [16, 32], strides = [1, 1]} : vector<16x96xf32> to vector<16x32xf32>
    %542 = vector.extract_strided_slice %539 {offsets = [0, 64], sizes = [16, 32], strides = [1, 1]} : vector<16x96xf32> to vector<16x32xf32>
    %c1_221 = arith.constant 1 : index
    %c0_222 = arith.constant 0 : index
    %c0_223 = arith.constant 0 : index
    %543 = vector.load %arg18[%c1_221, %c0_222, %c0_223] : memref<2x32x32xf32, #tpu.memory_space<vmem>>, vector<1x32x32xf32>
    %544 = vector.shape_cast %543 : vector<1x32x32xf32> to vector<32x32xf32>
    %c1_224 = arith.constant 1 : index
    %c0_225 = arith.constant 0 : index
    %c0_226 = arith.constant 0 : index
    %545 = vector.load %arg19[%c1_224, %c0_225, %c0_226] : memref<2x1x32xf32, #tpu.memory_space<vmem>>, vector<1x1x32xf32>
    %546 = vector.shape_cast %545 : vector<1x1x32xf32> to vector<1x32xf32>
    %547 = vector.extract_strided_slice %540 {offsets = [0, 0], sizes = [16, 8], strides = [1, 1]} : vector<16x32xf32> to vector<16x8xf32>
    %548 = vector.shape_cast %547 : vector<16x8xf32> to vector<2x8x8xf32>
    %549 = vector.extract_strided_slice %540 {offsets = [0, 8], sizes = [16, 8], strides = [1, 1]} : vector<16x32xf32> to vector<16x8xf32>
    %550 = vector.shape_cast %549 : vector<16x8xf32> to vector<2x8x8xf32>
    %551 = vector.extract_strided_slice %540 {offsets = [0, 16], sizes = [16, 8], strides = [1, 1]} : vector<16x32xf32> to vector<16x8xf32>
    %552 = vector.shape_cast %551 : vector<16x8xf32> to vector<2x8x8xf32>
    %553 = vector.extract_strided_slice %540 {offsets = [0, 24], sizes = [16, 8], strides = [1, 1]} : vector<16x32xf32> to vector<16x8xf32>
    %554 = vector.shape_cast %553 : vector<16x8xf32> to vector<2x8x8xf32>
    %555 = tpu.concatenate %548, %550, %552, %554 in 0 : vector<2x8x8xf32>, vector<2x8x8xf32>, vector<2x8x8xf32>, vector<2x8x8xf32> -> vector<8x8x8xf32>
    %556 = vector.extract_strided_slice %541 {offsets = [0, 0], sizes = [16, 8], strides = [1, 1]} : vector<16x32xf32> to vector<16x8xf32>
    %557 = vector.shape_cast %556 : vector<16x8xf32> to vector<2x8x8xf32>
    %558 = vector.extract_strided_slice %541 {offsets = [0, 8], sizes = [16, 8], strides = [1, 1]} : vector<16x32xf32> to vector<16x8xf32>
    %559 = vector.shape_cast %558 : vector<16x8xf32> to vector<2x8x8xf32>
    %560 = vector.extract_strided_slice %541 {offsets = [0, 16], sizes = [16, 8], strides = [1, 1]} : vector<16x32xf32> to vector<16x8xf32>
    %561 = vector.shape_cast %560 : vector<16x8xf32> to vector<2x8x8xf32>
    %562 = vector.extract_strided_slice %541 {offsets = [0, 24], sizes = [16, 8], strides = [1, 1]} : vector<16x32xf32> to vector<16x8xf32>
    %563 = vector.shape_cast %562 : vector<16x8xf32> to vector<2x8x8xf32>
    %564 = tpu.concatenate %557, %559, %561, %563 in 0 : vector<2x8x8xf32>, vector<2x8x8xf32>, vector<2x8x8xf32>, vector<2x8x8xf32> -> vector<8x8x8xf32>
    %565 = vector.extract_strided_slice %542 {offsets = [0, 0], sizes = [16, 8], strides = [1, 1]} : vector<16x32xf32> to vector<16x8xf32>
    %566 = vector.shape_cast %565 : vector<16x8xf32> to vector<2x8x8xf32>
    %567 = vector.extract_strided_slice %542 {offsets = [0, 8], sizes = [16, 8], strides = [1, 1]} : vector<16x32xf32> to vector<16x8xf32>
    %568 = vector.shape_cast %567 : vector<16x8xf32> to vector<2x8x8xf32>
    %569 = vector.extract_strided_slice %542 {offsets = [0, 16], sizes = [16, 8], strides = [1, 1]} : vector<16x32xf32> to vector<16x8xf32>
    %570 = vector.shape_cast %569 : vector<16x8xf32> to vector<2x8x8xf32>
    %571 = vector.extract_strided_slice %542 {offsets = [0, 24], sizes = [16, 8], strides = [1, 1]} : vector<16x32xf32> to vector<16x8xf32>
    %572 = vector.shape_cast %571 : vector<16x8xf32> to vector<2x8x8xf32>
    %573 = tpu.concatenate %566, %568, %570, %572 in 0 : vector<2x8x8xf32>, vector<2x8x8xf32>, vector<2x8x8xf32>, vector<2x8x8xf32> -> vector<8x8x8xf32>
    "tpu.trace_start"() <{level = 10 : i32, message = "gqd,gkd->gqk"}> : () -> ()
    %cst_227 = arith.constant dense<0.000000e+00> : vector<8x8x8xf32>
    %574 = tpu.matmul %555, %564, %cst_227 {dimension_numbers = #tpu.dot_dimension_numbers<[2], [2], [1], [1], [0, 0, 0, 1, 1, 1], [0], [0]>} : vector<8x8x8xf32>, vector<8x8x8xf32>, vector<8x8x8xf32> -> vector<8x8x8xf32>
    "tpu.trace_stop"() : () -> ()
    %cst_228 = arith.constant 0.353553385 : f32
    %575 = vector.broadcast %cst_228 : f32 to vector<8x8x8xf32>
    %576 = arith.mulf %574, %575 : vector<8x8x8xf32>
    %cst_229 = arith.constant dense<0xFF800000> : vector<8x8xf32>
    %577 = vector.multi_reduction <maximumf>, %576, %cst_229 [2] : vector<8x8x8xf32> to vector<8x8xf32>
    %578 = vector.shape_cast %577 : vector<8x8xf32> to vector<8x8x1xf32>
    %579 = vector.broadcast %578 : vector<8x8x1xf32> to vector<8x8x8xf32>
    %580 = arith.subf %576, %579 : vector<8x8x8xf32>
    %581 = math.exp %580 : vector<8x8x8xf32>
    %cst_230 = arith.constant dense<0.000000e+00> : vector<8x8xf32>
    %582 = vector.multi_reduction <add>, %581, %cst_230 [2] : vector<8x8x8xf32> to vector<8x8xf32>
    %583 = vector.shape_cast %582 : vector<8x8xf32> to vector<8x8x1xf32>
    %584 = vector.broadcast %583 : vector<8x8x1xf32> to vector<8x8x8xf32>
    %585 = arith.divf %581, %584 : vector<8x8x8xf32>
    "tpu.trace_start"() <{level = 10 : i32, message = "gqk,gkd->gqd"}> : () -> ()
    %cst_231 = arith.constant dense<0.000000e+00> : vector<8x8x8xf32>
    %586 = tpu.matmul %585, %573, %cst_231 {dimension_numbers = #tpu.dot_dimension_numbers<[2], [1], [1], [2], [0, 0, 0, 1, 1, 2], [0], [0]>} : vector<8x8x8xf32>, vector<8x8x8xf32>, vector<8x8x8xf32> -> vector<8x8x8xf32>
    "tpu.trace_stop"() : () -> ()
    %587 = vector.extract_strided_slice %586 {offsets = [0, 0, 0], sizes = [2, 8, 8], strides = [1, 1, 1]} : vector<8x8x8xf32> to vector<2x8x8xf32>
    %588 = vector.shape_cast %587 : vector<2x8x8xf32> to vector<16x8xf32>
    %589 = vector.extract_strided_slice %586 {offsets = [2, 0, 0], sizes = [2, 8, 8], strides = [1, 1, 1]} : vector<8x8x8xf32> to vector<2x8x8xf32>
    %590 = vector.shape_cast %589 : vector<2x8x8xf32> to vector<16x8xf32>
    %591 = vector.extract_strided_slice %586 {offsets = [4, 0, 0], sizes = [2, 8, 8], strides = [1, 1, 1]} : vector<8x8x8xf32> to vector<2x8x8xf32>
    %592 = vector.shape_cast %591 : vector<2x8x8xf32> to vector<16x8xf32>
    %593 = vector.extract_strided_slice %586 {offsets = [6, 0, 0], sizes = [2, 8, 8], strides = [1, 1, 1]} : vector<8x8x8xf32> to vector<2x8x8xf32>
    %594 = vector.shape_cast %593 : vector<2x8x8xf32> to vector<16x8xf32>
    %595 = tpu.concatenate %588, %590, %592, %594 in 1 : vector<16x8xf32>, vector<16x8xf32>, vector<16x8xf32>, vector<16x8xf32> -> vector<16x32xf32>
    %cst_232 = arith.constant dense<0.000000e+00> : vector<16x32xf32>
    %596 = tpu.matmul %595, %544, %cst_232 {dimension_numbers = #tpu.dot_dimension_numbers<[1], [0], [0], [1], [0, 0, 1, 1], [], []>} : vector<16x32xf32>, vector<32x32xf32>, vector<16x32xf32> -> vector<16x32xf32>
    %597 = vector.broadcast %546 : vector<1x32xf32> to vector<16x32xf32>
    %598 = arith.addf %596, %597 : vector<16x32xf32>
    %599 = arith.addf %532, %598 : vector<16x32xf32>
    %c1_233 = arith.constant 1 : index
    %c0_234 = arith.constant 0 : index
    %c0_235 = arith.constant 0 : index
    %600 = vector.load %arg20[%c1_233, %c0_234, %c0_235] : memref<2x1x32xf32, #tpu.memory_space<vmem>>, vector<1x1x32xf32>
    %601 = vector.shape_cast %600 : vector<1x1x32xf32> to vector<1x32xf32>
    %c1_236 = arith.constant 1 : index
    %c0_237 = arith.constant 0 : index
    %c0_238 = arith.constant 0 : index
    %602 = vector.load %arg21[%c1_236, %c0_237, %c0_238] : memref<2x1x32xf32, #tpu.memory_space<vmem>>, vector<1x1x32xf32>
    %603 = vector.shape_cast %602 : vector<1x1x32xf32> to vector<1x32xf32>
    %cst_239 = arith.constant dense<0.000000e+00> : vector<16xf32>
    %604 = vector.multi_reduction <add>, %599, %cst_239 [1] : vector<16x32xf32> to vector<16xf32>
    %605 = vector.shape_cast %604 : vector<16xf32> to vector<16x1xf32>
    %cst_240 = arith.constant 3.200000e+01 : f32
    %606 = vector.broadcast %cst_240 : f32 to vector<16x1xf32>
    %607 = arith.divf %605, %606 : vector<16x1xf32>
    %608 = vector.broadcast %607 : vector<16x1xf32> to vector<16x32xf32>
    %609 = arith.subf %599, %608 : vector<16x32xf32>
    %610 = arith.mulf %609, %609 : vector<16x32xf32>
    %cst_241 = arith.constant dense<0.000000e+00> : vector<16xf32>
    %611 = vector.multi_reduction <add>, %610, %cst_241 [1] : vector<16x32xf32> to vector<16xf32>
    %612 = vector.shape_cast %611 : vector<16xf32> to vector<16x1xf32>
    %cst_242 = arith.constant 3.200000e+01 : f32
    %613 = vector.broadcast %cst_242 : f32 to vector<16x1xf32>
    %614 = arith.divf %612, %613 : vector<16x1xf32>
    %615 = vector.broadcast %607 : vector<16x1xf32> to vector<16x32xf32>
    %616 = arith.subf %599, %615 : vector<16x32xf32>
    %cst_243 = arith.constant 9.99999974E-6 : f32
    %617 = vector.broadcast %cst_243 : f32 to vector<16x1xf32>
    %618 = arith.addf %614, %617 : vector<16x1xf32>
    %619 = math.rsqrt %618 : vector<16x1xf32>
    %620 = vector.broadcast %619 : vector<16x1xf32> to vector<16x32xf32>
    %621 = arith.mulf %616, %620 : vector<16x32xf32>
    %622 = vector.broadcast %601 : vector<1x32xf32> to vector<16x32xf32>
    %623 = arith.mulf %621, %622 : vector<16x32xf32>
    %624 = vector.broadcast %603 : vector<1x32xf32> to vector<16x32xf32>
    %625 = arith.addf %623, %624 : vector<16x32xf32>
    %c1_244 = arith.constant 1 : index
    %c0_245 = arith.constant 0 : index
    %c0_246 = arith.constant 0 : index
    %626 = vector.load %arg22[%c1_244, %c0_245, %c0_246] : memref<2x32x32xf32, #tpu.memory_space<vmem>>, vector<1x32x32xf32>
    %627 = vector.shape_cast %626 : vector<1x32x32xf32> to vector<32x32xf32>
    %cst_247 = arith.constant dense<0.000000e+00> : vector<16x32xf32>
    %628 = tpu.matmul %625, %627, %cst_247 {dimension_numbers = #tpu.dot_dimension_numbers<[1], [0], [0], [1], [0, 0, 1, 1], [], []>} : vector<16x32xf32>, vector<32x32xf32>, vector<16x32xf32> -> vector<16x32xf32>
    %c1_248 = arith.constant 1 : index
    %c0_249 = arith.constant 0 : index
    %c0_250 = arith.constant 0 : index
    %629 = vector.load %arg23[%c1_248, %c0_249, %c0_250] : memref<2x1x32xf32, #tpu.memory_space<vmem>>, vector<1x1x32xf32>
    %630 = vector.shape_cast %629 : vector<1x1x32xf32> to vector<1x32xf32>
    %631 = vector.broadcast %630 : vector<1x32xf32> to vector<16x32xf32>
    %632 = arith.addf %628, %631 : vector<16x32xf32>
    %c1_251 = arith.constant 1 : index
    %c0_252 = arith.constant 0 : index
    %c0_253 = arith.constant 0 : index
    %633 = vector.load %arg24[%c1_251, %c0_252, %c0_253] : memref<2x32x64xf32, #tpu.memory_space<vmem>>, vector<1x32x64xf32>
    %634 = vector.shape_cast %633 : vector<1x32x64xf32> to vector<32x64xf32>
    %cst_254 = arith.constant dense<0.000000e+00> : vector<16x64xf32>
    %635 = tpu.matmul %297, %634, %cst_254 {dimension_numbers = #tpu.dot_dimension_numbers<[1], [0], [0], [1], [0, 0, 1, 1], [], []>} : vector<16x32xf32>, vector<32x64xf32>, vector<16x64xf32> -> vector<16x64xf32>
    %c1_255 = arith.constant 1 : index
    %c0_256 = arith.constant 0 : index
    %c0_257 = arith.constant 0 : index
    %636 = vector.load %arg25[%c1_255, %c0_256, %c0_257] : memref<2x1x64xf32, #tpu.memory_space<vmem>>, vector<1x1x64xf32>
    %637 = vector.shape_cast %636 : vector<1x1x64xf32> to vector<1x64xf32>
    %638 = vector.broadcast %637 : vector<1x64xf32> to vector<16x64xf32>
    %639 = arith.addf %635, %638 : vector<16x64xf32>
    %640 = vector.extract_strided_slice %639 {offsets = [0, 0], sizes = [16, 32], strides = [1, 1]} : vector<16x64xf32> to vector<16x32xf32>
    %641 = vector.extract_strided_slice %639 {offsets = [0, 32], sizes = [16, 32], strides = [1, 1]} : vector<16x64xf32> to vector<16x32xf32>
    %c1_258 = arith.constant 1 : index
    %c0_259 = arith.constant 0 : index
    %c0_260 = arith.constant 0 : index
    %642 = vector.load %arg26[%c1_258, %c0_259, %c0_260] : memref<2x32x32xf32, #tpu.memory_space<vmem>>, vector<1x32x32xf32>
    %643 = vector.shape_cast %642 : vector<1x32x32xf32> to vector<32x32xf32>
    %c1_261 = arith.constant 1 : index
    %c0_262 = arith.constant 0 : index
    %c0_263 = arith.constant 0 : index
    %644 = vector.load %arg27[%c1_261, %c0_262, %c0_263] : memref<2x1x32xf32, #tpu.memory_space<vmem>>, vector<1x1x32xf32>
    %645 = vector.shape_cast %644 : vector<1x1x32xf32> to vector<1x32xf32>
    %646 = vector.extract_strided_slice %632 {offsets = [0, 0], sizes = [16, 8], strides = [1, 1]} : vector<16x32xf32> to vector<16x8xf32>
    %647 = vector.shape_cast %646 : vector<16x8xf32> to vector<2x8x8xf32>
    %648 = vector.extract_strided_slice %632 {offsets = [0, 8], sizes = [16, 8], strides = [1, 1]} : vector<16x32xf32> to vector<16x8xf32>
    %649 = vector.shape_cast %648 : vector<16x8xf32> to vector<2x8x8xf32>
    %650 = vector.extract_strided_slice %632 {offsets = [0, 16], sizes = [16, 8], strides = [1, 1]} : vector<16x32xf32> to vector<16x8xf32>
    %651 = vector.shape_cast %650 : vector<16x8xf32> to vector<2x8x8xf32>
    %652 = vector.extract_strided_slice %632 {offsets = [0, 24], sizes = [16, 8], strides = [1, 1]} : vector<16x32xf32> to vector<16x8xf32>
    %653 = vector.shape_cast %652 : vector<16x8xf32> to vector<2x8x8xf32>
    %654 = tpu.concatenate %647, %649, %651, %653 in 0 : vector<2x8x8xf32>, vector<2x8x8xf32>, vector<2x8x8xf32>, vector<2x8x8xf32> -> vector<8x8x8xf32>
    %655 = vector.extract_strided_slice %640 {offsets = [0, 0], sizes = [16, 8], strides = [1, 1]} : vector<16x32xf32> to vector<16x8xf32>
    %656 = vector.shape_cast %655 : vector<16x8xf32> to vector<2x8x8xf32>
    %657 = vector.extract_strided_slice %640 {offsets = [0, 8], sizes = [16, 8], strides = [1, 1]} : vector<16x32xf32> to vector<16x8xf32>
    %658 = vector.shape_cast %657 : vector<16x8xf32> to vector<2x8x8xf32>
    %659 = vector.extract_strided_slice %640 {offsets = [0, 16], sizes = [16, 8], strides = [1, 1]} : vector<16x32xf32> to vector<16x8xf32>
    %660 = vector.shape_cast %659 : vector<16x8xf32> to vector<2x8x8xf32>
    %661 = vector.extract_strided_slice %640 {offsets = [0, 24], sizes = [16, 8], strides = [1, 1]} : vector<16x32xf32> to vector<16x8xf32>
    %662 = vector.shape_cast %661 : vector<16x8xf32> to vector<2x8x8xf32>
    %663 = tpu.concatenate %656, %658, %660, %662 in 0 : vector<2x8x8xf32>, vector<2x8x8xf32>, vector<2x8x8xf32>, vector<2x8x8xf32> -> vector<8x8x8xf32>
    %664 = vector.extract_strided_slice %641 {offsets = [0, 0], sizes = [16, 8], strides = [1, 1]} : vector<16x32xf32> to vector<16x8xf32>
    %665 = vector.shape_cast %664 : vector<16x8xf32> to vector<2x8x8xf32>
    %666 = vector.extract_strided_slice %641 {offsets = [0, 8], sizes = [16, 8], strides = [1, 1]} : vector<16x32xf32> to vector<16x8xf32>
    %667 = vector.shape_cast %666 : vector<16x8xf32> to vector<2x8x8xf32>
    %668 = vector.extract_strided_slice %641 {offsets = [0, 16], sizes = [16, 8], strides = [1, 1]} : vector<16x32xf32> to vector<16x8xf32>
    %669 = vector.shape_cast %668 : vector<16x8xf32> to vector<2x8x8xf32>
    %670 = vector.extract_strided_slice %641 {offsets = [0, 24], sizes = [16, 8], strides = [1, 1]} : vector<16x32xf32> to vector<16x8xf32>
    %671 = vector.shape_cast %670 : vector<16x8xf32> to vector<2x8x8xf32>
    %672 = tpu.concatenate %665, %667, %669, %671 in 0 : vector<2x8x8xf32>, vector<2x8x8xf32>, vector<2x8x8xf32>, vector<2x8x8xf32> -> vector<8x8x8xf32>
    "tpu.trace_start"() <{level = 10 : i32, message = "gqd,gkd->gqk"}> : () -> ()
    %cst_264 = arith.constant dense<0.000000e+00> : vector<8x8x8xf32>
    %673 = tpu.matmul %654, %663, %cst_264 {dimension_numbers = #tpu.dot_dimension_numbers<[2], [2], [1], [1], [0, 0, 0, 1, 1, 1], [0], [0]>} : vector<8x8x8xf32>, vector<8x8x8xf32>, vector<8x8x8xf32> -> vector<8x8x8xf32>
    "tpu.trace_stop"() : () -> ()
    %cst_265 = arith.constant 0.353553385 : f32
    %674 = vector.broadcast %cst_265 : f32 to vector<8x8x8xf32>
    %675 = arith.mulf %673, %674 : vector<8x8x8xf32>
    %cst_266 = arith.constant dense<0xFF800000> : vector<8x8xf32>
    %676 = vector.multi_reduction <maximumf>, %675, %cst_266 [2] : vector<8x8x8xf32> to vector<8x8xf32>
    %677 = vector.shape_cast %676 : vector<8x8xf32> to vector<8x8x1xf32>
    %678 = vector.broadcast %677 : vector<8x8x1xf32> to vector<8x8x8xf32>
    %679 = arith.subf %675, %678 : vector<8x8x8xf32>
    %680 = math.exp %679 : vector<8x8x8xf32>
    %cst_267 = arith.constant dense<0.000000e+00> : vector<8x8xf32>
    %681 = vector.multi_reduction <add>, %680, %cst_267 [2] : vector<8x8x8xf32> to vector<8x8xf32>
    %682 = vector.shape_cast %681 : vector<8x8xf32> to vector<8x8x1xf32>
    %683 = vector.broadcast %682 : vector<8x8x1xf32> to vector<8x8x8xf32>
    %684 = arith.divf %680, %683 : vector<8x8x8xf32>
    "tpu.trace_start"() <{level = 10 : i32, message = "gqk,gkd->gqd"}> : () -> ()
    %cst_268 = arith.constant dense<0.000000e+00> : vector<8x8x8xf32>
    %685 = tpu.matmul %684, %672, %cst_268 {dimension_numbers = #tpu.dot_dimension_numbers<[2], [1], [1], [2], [0, 0, 0, 1, 1, 2], [0], [0]>} : vector<8x8x8xf32>, vector<8x8x8xf32>, vector<8x8x8xf32> -> vector<8x8x8xf32>
    "tpu.trace_stop"() : () -> ()
    %686 = vector.extract_strided_slice %685 {offsets = [0, 0, 0], sizes = [2, 8, 8], strides = [1, 1, 1]} : vector<8x8x8xf32> to vector<2x8x8xf32>
    %687 = vector.shape_cast %686 : vector<2x8x8xf32> to vector<16x8xf32>
    %688 = vector.extract_strided_slice %685 {offsets = [2, 0, 0], sizes = [2, 8, 8], strides = [1, 1, 1]} : vector<8x8x8xf32> to vector<2x8x8xf32>
    %689 = vector.shape_cast %688 : vector<2x8x8xf32> to vector<16x8xf32>
    %690 = vector.extract_strided_slice %685 {offsets = [4, 0, 0], sizes = [2, 8, 8], strides = [1, 1, 1]} : vector<8x8x8xf32> to vector<2x8x8xf32>
    %691 = vector.shape_cast %690 : vector<2x8x8xf32> to vector<16x8xf32>
    %692 = vector.extract_strided_slice %685 {offsets = [6, 0, 0], sizes = [2, 8, 8], strides = [1, 1, 1]} : vector<8x8x8xf32> to vector<2x8x8xf32>
    %693 = vector.shape_cast %692 : vector<2x8x8xf32> to vector<16x8xf32>
    %694 = tpu.concatenate %687, %689, %691, %693 in 1 : vector<16x8xf32>, vector<16x8xf32>, vector<16x8xf32>, vector<16x8xf32> -> vector<16x32xf32>
    %cst_269 = arith.constant dense<0.000000e+00> : vector<16x32xf32>
    %695 = tpu.matmul %694, %643, %cst_269 {dimension_numbers = #tpu.dot_dimension_numbers<[1], [0], [0], [1], [0, 0, 1, 1], [], []>} : vector<16x32xf32>, vector<32x32xf32>, vector<16x32xf32> -> vector<16x32xf32>
    %696 = vector.broadcast %645 : vector<1x32xf32> to vector<16x32xf32>
    %697 = arith.addf %695, %696 : vector<16x32xf32>
    %698 = arith.addf %625, %697 : vector<16x32xf32>
    %c1_270 = arith.constant 1 : index
    %c0_271 = arith.constant 0 : index
    %c0_272 = arith.constant 0 : index
    %699 = vector.load %arg28[%c1_270, %c0_271, %c0_272] : memref<2x1x32xf32, #tpu.memory_space<vmem>>, vector<1x1x32xf32>
    %700 = vector.shape_cast %699 : vector<1x1x32xf32> to vector<1x32xf32>
    %c1_273 = arith.constant 1 : index
    %c0_274 = arith.constant 0 : index
    %c0_275 = arith.constant 0 : index
    %701 = vector.load %arg29[%c1_273, %c0_274, %c0_275] : memref<2x1x32xf32, #tpu.memory_space<vmem>>, vector<1x1x32xf32>
    %702 = vector.shape_cast %701 : vector<1x1x32xf32> to vector<1x32xf32>
    %cst_276 = arith.constant dense<0.000000e+00> : vector<16xf32>
    %703 = vector.multi_reduction <add>, %698, %cst_276 [1] : vector<16x32xf32> to vector<16xf32>
    %704 = vector.shape_cast %703 : vector<16xf32> to vector<16x1xf32>
    %cst_277 = arith.constant 3.200000e+01 : f32
    %705 = vector.broadcast %cst_277 : f32 to vector<16x1xf32>
    %706 = arith.divf %704, %705 : vector<16x1xf32>
    %707 = vector.broadcast %706 : vector<16x1xf32> to vector<16x32xf32>
    %708 = arith.subf %698, %707 : vector<16x32xf32>
    %709 = arith.mulf %708, %708 : vector<16x32xf32>
    %cst_278 = arith.constant dense<0.000000e+00> : vector<16xf32>
    %710 = vector.multi_reduction <add>, %709, %cst_278 [1] : vector<16x32xf32> to vector<16xf32>
    %711 = vector.shape_cast %710 : vector<16xf32> to vector<16x1xf32>
    %cst_279 = arith.constant 3.200000e+01 : f32
    %712 = vector.broadcast %cst_279 : f32 to vector<16x1xf32>
    %713 = arith.divf %711, %712 : vector<16x1xf32>
    %714 = vector.broadcast %706 : vector<16x1xf32> to vector<16x32xf32>
    %715 = arith.subf %698, %714 : vector<16x32xf32>
    %cst_280 = arith.constant 9.99999974E-6 : f32
    %716 = vector.broadcast %cst_280 : f32 to vector<16x1xf32>
    %717 = arith.addf %713, %716 : vector<16x1xf32>
    %718 = math.rsqrt %717 : vector<16x1xf32>
    %719 = vector.broadcast %718 : vector<16x1xf32> to vector<16x32xf32>
    %720 = arith.mulf %715, %719 : vector<16x32xf32>
    %721 = vector.broadcast %700 : vector<1x32xf32> to vector<16x32xf32>
    %722 = arith.mulf %720, %721 : vector<16x32xf32>
    %723 = vector.broadcast %702 : vector<1x32xf32> to vector<16x32xf32>
    %724 = arith.addf %722, %723 : vector<16x32xf32>
    %c1_281 = arith.constant 1 : index
    %c0_282 = arith.constant 0 : index
    %c0_283 = arith.constant 0 : index
    %725 = vector.load %arg30[%c1_281, %c0_282, %c0_283] : memref<2x32x64xf32, #tpu.memory_space<vmem>>, vector<1x32x64xf32>
    %726 = vector.shape_cast %725 : vector<1x32x64xf32> to vector<32x64xf32>
    %c1_284 = arith.constant 1 : index
    %c0_285 = arith.constant 0 : index
    %c0_286 = arith.constant 0 : index
    %727 = vector.load %arg31[%c1_284, %c0_285, %c0_286] : memref<2x1x64xf32, #tpu.memory_space<vmem>>, vector<1x1x64xf32>
    %728 = vector.shape_cast %727 : vector<1x1x64xf32> to vector<1x64xf32>
    %c1_287 = arith.constant 1 : index
    %c0_288 = arith.constant 0 : index
    %c0_289 = arith.constant 0 : index
    %729 = vector.load %arg32[%c1_287, %c0_288, %c0_289] : memref<2x64x32xf32, #tpu.memory_space<vmem>>, vector<1x64x32xf32>
    %730 = vector.shape_cast %729 : vector<1x64x32xf32> to vector<64x32xf32>
    %c1_290 = arith.constant 1 : index
    %c0_291 = arith.constant 0 : index
    %c0_292 = arith.constant 0 : index
    %731 = vector.load %arg33[%c1_290, %c0_291, %c0_292] : memref<2x1x32xf32, #tpu.memory_space<vmem>>, vector<1x1x32xf32>
    %732 = vector.shape_cast %731 : vector<1x1x32xf32> to vector<1x32xf32>
    %cst_293 = arith.constant dense<0.000000e+00> : vector<16x64xf32>
    %733 = tpu.matmul %724, %726, %cst_293 {dimension_numbers = #tpu.dot_dimension_numbers<[1], [0], [0], [1], [0, 0, 1, 1], [], []>} : vector<16x32xf32>, vector<32x64xf32>, vector<16x64xf32> -> vector<16x64xf32>
    %734 = vector.broadcast %728 : vector<1x64xf32> to vector<16x64xf32>
    %735 = arith.addf %733, %734 : vector<16x64xf32>
    %cst_294 = arith.constant 0.000000e+00 : f32
    %736 = vector.broadcast %cst_294 : f32 to vector<16x64xf32>
    %737 = arith.maximumf %735, %736 : vector<16x64xf32>
    %cst_295 = arith.constant dense<0.000000e+00> : vector<16x32xf32>
    %738 = tpu.matmul %737, %730, %cst_295 {dimension_numbers = #tpu.dot_dimension_numbers<[1], [0], [0], [1], [0, 0, 1, 1], [], []>} : vector<16x64xf32>, vector<64x32xf32>, vector<16x32xf32> -> vector<16x32xf32>
    %739 = vector.broadcast %732 : vector<1x32xf32> to vector<16x32xf32>
    %740 = arith.addf %738, %739 : vector<16x32xf32>
    %741 = arith.addf %724, %740 : vector<16x32xf32>
    %c1_296 = arith.constant 1 : index
    %c0_297 = arith.constant 0 : index
    %c0_298 = arith.constant 0 : index
    %742 = vector.load %arg34[%c1_296, %c0_297, %c0_298] : memref<2x1x32xf32, #tpu.memory_space<vmem>>, vector<1x1x32xf32>
    %743 = vector.shape_cast %742 : vector<1x1x32xf32> to vector<1x32xf32>
    %c1_299 = arith.constant 1 : index
    %c0_300 = arith.constant 0 : index
    %c0_301 = arith.constant 0 : index
    %744 = vector.load %arg35[%c1_299, %c0_300, %c0_301] : memref<2x1x32xf32, #tpu.memory_space<vmem>>, vector<1x1x32xf32>
    %745 = vector.shape_cast %744 : vector<1x1x32xf32> to vector<1x32xf32>
    %cst_302 = arith.constant dense<0.000000e+00> : vector<16xf32>
    %746 = vector.multi_reduction <add>, %741, %cst_302 [1] : vector<16x32xf32> to vector<16xf32>
    %747 = vector.shape_cast %746 : vector<16xf32> to vector<16x1xf32>
    %cst_303 = arith.constant 3.200000e+01 : f32
    %748 = vector.broadcast %cst_303 : f32 to vector<16x1xf32>
    %749 = arith.divf %747, %748 : vector<16x1xf32>
    %750 = vector.broadcast %749 : vector<16x1xf32> to vector<16x32xf32>
    %751 = arith.subf %741, %750 : vector<16x32xf32>
    %752 = arith.mulf %751, %751 : vector<16x32xf32>
    %cst_304 = arith.constant dense<0.000000e+00> : vector<16xf32>
    %753 = vector.multi_reduction <add>, %752, %cst_304 [1] : vector<16x32xf32> to vector<16xf32>
    %754 = vector.shape_cast %753 : vector<16xf32> to vector<16x1xf32>
    %cst_305 = arith.constant 3.200000e+01 : f32
    %755 = vector.broadcast %cst_305 : f32 to vector<16x1xf32>
    %756 = arith.divf %754, %755 : vector<16x1xf32>
    %757 = vector.broadcast %749 : vector<16x1xf32> to vector<16x32xf32>
    %758 = arith.subf %741, %757 : vector<16x32xf32>
    %cst_306 = arith.constant 9.99999974E-6 : f32
    %759 = vector.broadcast %cst_306 : f32 to vector<16x1xf32>
    %760 = arith.addf %756, %759 : vector<16x1xf32>
    %761 = math.rsqrt %760 : vector<16x1xf32>
    %762 = vector.broadcast %761 : vector<16x1xf32> to vector<16x32xf32>
    %763 = arith.mulf %758, %762 : vector<16x32xf32>
    %764 = vector.broadcast %743 : vector<1x32xf32> to vector<16x32xf32>
    %765 = arith.mulf %763, %764 : vector<16x32xf32>
    %766 = vector.broadcast %745 : vector<1x32xf32> to vector<16x32xf32>
    %767 = arith.addf %765, %766 : vector<16x32xf32>
    %c0_307 = arith.constant 0 : index
    %c0_308 = arith.constant 0 : index
    %768 = vector.load %arg36[%c0_307, %c0_308] : memref<1x32xf32, #tpu.memory_space<vmem>>, vector<1x32xf32>
    %c0_309 = arith.constant 0 : index
    %c0_310 = arith.constant 0 : index
    %769 = vector.load %arg37[%c0_309, %c0_310] : memref<1x32xf32, #tpu.memory_space<vmem>>, vector<1x32xf32>
    %cst_311 = arith.constant dense<0.000000e+00> : vector<16xf32>
    %770 = vector.multi_reduction <add>, %767, %cst_311 [1] : vector<16x32xf32> to vector<16xf32>
    %771 = vector.shape_cast %770 : vector<16xf32> to vector<16x1xf32>
    %cst_312 = arith.constant 3.200000e+01 : f32
    %772 = vector.broadcast %cst_312 : f32 to vector<16x1xf32>
    %773 = arith.divf %771, %772 : vector<16x1xf32>
    %774 = vector.broadcast %773 : vector<16x1xf32> to vector<16x32xf32>
    %775 = arith.subf %767, %774 : vector<16x32xf32>
    %776 = arith.mulf %775, %775 : vector<16x32xf32>
    %cst_313 = arith.constant dense<0.000000e+00> : vector<16xf32>
    %777 = vector.multi_reduction <add>, %776, %cst_313 [1] : vector<16x32xf32> to vector<16xf32>
    %778 = vector.shape_cast %777 : vector<16xf32> to vector<16x1xf32>
    %cst_314 = arith.constant 3.200000e+01 : f32
    %779 = vector.broadcast %cst_314 : f32 to vector<16x1xf32>
    %780 = arith.divf %778, %779 : vector<16x1xf32>
    %781 = vector.broadcast %773 : vector<16x1xf32> to vector<16x32xf32>
    %782 = arith.subf %767, %781 : vector<16x32xf32>
    %cst_315 = arith.constant 9.99999974E-6 : f32
    %783 = vector.broadcast %cst_315 : f32 to vector<16x1xf32>
    %784 = arith.addf %780, %783 : vector<16x1xf32>
    %785 = math.rsqrt %784 : vector<16x1xf32>
    %786 = vector.broadcast %785 : vector<16x1xf32> to vector<16x32xf32>
    %787 = arith.mulf %782, %786 : vector<16x32xf32>
    %788 = vector.broadcast %768 : vector<1x32xf32> to vector<16x32xf32>
    %789 = arith.mulf %787, %788 : vector<16x32xf32>
    %790 = vector.broadcast %769 : vector<1x32xf32> to vector<16x32xf32>
    %791 = arith.addf %789, %790 : vector<16x32xf32>
    %c0_316 = arith.constant 0 : index
    %c0_317 = arith.constant 0 : index
    %792 = vector.load %arg38[%c0_316, %c0_317] : memref<32x128xf32, #tpu.memory_space<vmem>>, vector<32x128xf32>
    %cst_318 = arith.constant dense<0.000000e+00> : vector<16x128xf32>
    %793 = tpu.matmul %791, %792, %cst_318 {dimension_numbers = #tpu.dot_dimension_numbers<[1], [0], [0], [1], [0, 0, 1, 1], [], []>} : vector<16x32xf32>, vector<32x128xf32>, vector<16x128xf32> -> vector<16x128xf32>
    %c0_319 = arith.constant 0 : index
    %c0_320 = arith.constant 0 : index
    %794 = vector.load %arg39[%c0_319, %c0_320] : memref<1x128xf32, #tpu.memory_space<vmem>>, vector<1x128xf32>
    %795 = vector.broadcast %794 : vector<1x128xf32> to vector<16x128xf32>
    %796 = arith.addf %793, %795 : vector<16x128xf32>
    %cst_321 = arith.constant 0.000000e+00 : f32
    %797 = vector.broadcast %cst_321 : f32 to vector<16x128xf32>
    %798 = arith.maximumf %796, %797 : vector<16x128xf32>
    %c0_322 = arith.constant 0 : index
    %c0_323 = arith.constant 0 : index
    %799 = vector.load %arg40[%c0_322, %c0_323] : memref<128x128xf32, #tpu.memory_space<vmem>>, vector<128x128xf32>
    %cst_324 = arith.constant dense<0.000000e+00> : vector<16x128xf32>
    %800 = tpu.matmul %798, %799, %cst_324 {dimension_numbers = #tpu.dot_dimension_numbers<[1], [0], [0], [1], [0, 0, 1, 1], [], []>} : vector<16x128xf32>, vector<128x128xf32>, vector<16x128xf32> -> vector<16x128xf32>
    %c0_325 = arith.constant 0 : index
    %c0_326 = arith.constant 0 : index
    %801 = vector.load %arg41[%c0_325, %c0_326] : memref<1x128xf32, #tpu.memory_space<vmem>>, vector<1x128xf32>
    %802 = vector.broadcast %801 : vector<1x128xf32> to vector<16x128xf32>
    %803 = arith.addf %800, %802 : vector<16x128xf32>
    %804 = vector.shape_cast %803 : vector<16x128xf32> to vector<2x8x128xf32>
    %cst_327 = arith.constant dense<0xFF800000> : vector<8x128xf32>
    %805 = vector.multi_reduction <maximumf>, %804, %cst_327 [0] : vector<2x8x128xf32> to vector<8x128xf32>
    %806 = vector.shape_cast %805 : vector<8x128xf32> to vector<1x8x128xf32>
    %807 = vector.broadcast %806 : vector<1x8x128xf32> to vector<2x8x128xf32>
    %808 = arith.subf %804, %807 : vector<2x8x128xf32>
    %809 = math.exp %808 : vector<2x8x128xf32>
    %cst_328 = arith.constant dense<0.000000e+00> : vector<8x128xf32>
    %810 = vector.multi_reduction <add>, %809, %cst_328 [0] : vector<2x8x128xf32> to vector<8x128xf32>
    %811 = vector.shape_cast %810 : vector<8x128xf32> to vector<1x8x128xf32>
    %812 = math.log %811 : vector<1x8x128xf32>
    %813 = arith.addf %812, %806 : vector<1x8x128xf32>
    %814 = vector.broadcast %813 : vector<1x8x128xf32> to vector<2x8x128xf32>
    %815 = arith.subf %804, %814 : vector<2x8x128xf32>
    %816 = vector.shape_cast %815 : vector<2x8x128xf32> to vector<16x128xf32>
    %c0_329 = arith.constant 0 : index
    %c0_330 = arith.constant 0 : index
    %817 = vector.load %arg42[%c0_329, %c0_330] : memref<16x128xf32, #tpu.memory_space<vmem>>, vector<16x128xf32>
    tpu.vector_store %arg42[%c0_329, %c0_330], %816 {strides = array<i32>} : memref<16x128xf32, #tpu.memory_space<vmem>>, vector<16x128xf32>,
    return
  }
  func.func @transform_0(%arg0: i32) -> (i32, i32, i32) {
    %c0_i32 = arith.constant 0 : i32
    %c0_i32_0 = arith.constant 0 : i32
    %c0_i32_1 = arith.constant 0 : i32
    %c0_i32_2 = arith.constant 0 : i32
    return %c0_i32, %c0_i32_0, %c0_i32_1 : i32, i32, i32
  }
  func.func @transform_1(%arg0: i32) -> (i32, i32, i32) {
    %c0_i32 = arith.constant 0 : i32
    %c0_i32_0 = arith.constant 0 : i32
    %c0_i32_1 = arith.constant 0 : i32
    %c0_i32_2 = arith.constant 0 : i32
    return %c0_i32, %c0_i32_0, %c0_i32_1 : i32, i32, i32
  }
  func.func @transform_2(%arg0: i32) -> (i32, i32, i32) {
    %c0_i32 = arith.constant 0 : i32
    %c0_i32_0 = arith.constant 0 : i32
    %c0_i32_1 = arith.constant 0 : i32
    %c0_i32_2 = arith.constant 0 : i32
    return %c0_i32, %c0_i32_0, %c0_i32_1 : i32, i32, i32
  }
  func.func @transform_3(%arg0: i32) -> (i32, i32, i32) {
    %c0_i32 = arith.constant 0 : i32
    %c0_i32_0 = arith.constant 0 : i32
    %c0_i32_1 = arith.constant 0 : i32
    %c0_i32_2 = arith.constant 0 : i32
    return %c0_i32, %c0_i32_0, %c0_i32_1 : i32, i32, i32
  }
  func.func @transform_4(%arg0: i32) -> (i32, i32, i32) {
    %c0_i32 = arith.constant 0 : i32
    %c0_i32_0 = arith.constant 0 : i32
    %c0_i32_1 = arith.constant 0 : i32
    %c0_i32_2 = arith.constant 0 : i32
    return %c0_i32, %c0_i32_0, %c0_i32_1 : i32, i32, i32
  }
  func.func @transform_5(%arg0: i32) -> (i32, i32, i32) {
    %c0_i32 = arith.constant 0 : i32
    %c0_i32_0 = arith.constant 0 : i32
    %c0_i32_1 = arith.constant 0 : i32
    %c0_i32_2 = arith.constant 0 : i32
    return %c0_i32, %c0_i32_0, %c0_i32_1 : i32, i32, i32
  }
  func.func @transform_6(%arg0: i32) -> (i32, i32, i32) {
    %c0_i32 = arith.constant 0 : i32
    %c0_i32_0 = arith.constant 0 : i32
    %c0_i32_1 = arith.constant 0 : i32
    %c0_i32_2 = arith.constant 0 : i32
    return %c0_i32, %c0_i32_0, %c0_i32_1 : i32, i32, i32
  }
  func.func @transform_7(%arg0: i32) -> (i32, i32, i32) {
    %c0_i32 = arith.constant 0 : i32
    %c0_i32_0 = arith.constant 0 : i32
    %c0_i32_1 = arith.constant 0 : i32
    %c0_i32_2 = arith.constant 0 : i32
    return %c0_i32, %c0_i32_0, %c0_i32_1 : i32, i32, i32
  }
  func.func @transform_8(%arg0: i32) -> (i32, i32, i32) {
    %c0_i32 = arith.constant 0 : i32
    %c0_i32_0 = arith.constant 0 : i32
    %c0_i32_1 = arith.constant 0 : i32
    %c0_i32_2 = arith.constant 0 : i32
    return %c0_i32, %c0_i32_0, %c0_i32_1 : i32, i32, i32
  }
  func.func @transform_9(%arg0: i32) -> (i32, i32, i32) {
    %c0_i32 = arith.constant 0 : i32
    %c0_i32_0 = arith.constant 0 : i32
    %c0_i32_1 = arith.constant 0 : i32
    %c0_i32_2 = arith.constant 0 : i32
    return %c0_i32, %c0_i32_0, %c0_i32_1 : i32, i32, i32
  }
  func.func @transform_10(%arg0: i32) -> (i32, i32, i32) {
    %c0_i32 = arith.constant 0 : i32
    %c0_i32_0 = arith.constant 0 : i32
    %c0_i32_1 = arith.constant 0 : i32
    %c0_i32_2 = arith.constant 0 : i32
    return %c0_i32, %c0_i32_0, %c0_i32_1 : i32, i32, i32
  }
  func.func @transform_11(%arg0: i32) -> (i32, i32, i32) {
    %c0_i32 = arith.constant 0 : i32
    %c0_i32_0 = arith.constant 0 : i32
    %c0_i32_1 = arith.constant 0 : i32
    %c0_i32_2 = arith.constant 0 : i32
    return %c0_i32, %c0_i32_0, %c0_i32_1 : i32, i32, i32
  }
  func.func @transform_12(%arg0: i32) -> (i32, i32, i32) {
    %c0_i32 = arith.constant 0 : i32
    %c0_i32_0 = arith.constant 0 : i32
    %c0_i32_1 = arith.constant 0 : i32
    %c0_i32_2 = arith.constant 0 : i32
    return %c0_i32, %c0_i32_0, %c0_i32_1 : i32, i32, i32
  }
  func.func @transform_13(%arg0: i32) -> (i32, i32) {
    %c0_i32 = arith.constant 0 : i32
    %c0_i32_0 = arith.constant 0 : i32
    %c0_i32_1 = arith.constant 0 : i32
    return %c0_i32, %c0_i32_0 : i32, i32
  }
  func.func @transform_14(%arg0: i32) -> (i32, i32) {
    %c0_i32 = arith.constant 0 : i32
    %c0_i32_0 = arith.constant 0 : i32
    %c0_i32_1 = arith.constant 0 : i32
    return %c0_i32, %c0_i32_0 : i32, i32
  }
  func.func @transform_15(%arg0: i32) -> (i32, i32, i32) {
    %c0_i32 = arith.constant 0 : i32
    %c0_i32_0 = arith.constant 0 : i32
    %c0_i32_1 = arith.constant 0 : i32
    %c0_i32_2 = arith.constant 0 : i32
    return %c0_i32, %c0_i32_0, %c0_i32_1 : i32, i32, i32
  }
  func.func @transform_16(%arg0: i32) -> (i32, i32, i32) {
    %c0_i32 = arith.constant 0 : i32
    %c0_i32_0 = arith.constant 0 : i32
    %c0_i32_1 = arith.constant 0 : i32
    %c0_i32_2 = arith.constant 0 : i32
    return %c0_i32, %c0_i32_0, %c0_i32_1 : i32, i32, i32
  }
  func.func @transform_17(%arg0: i32) -> (i32, i32, i32) {
    %c0_i32 = arith.constant 0 : i32
    %c0_i32_0 = arith.constant 0 : i32
    %c0_i32_1 = arith.constant 0 : i32
    %c0_i32_2 = arith.constant 0 : i32
    return %c0_i32, %c0_i32_0, %c0_i32_1 : i32, i32, i32
  }
  func.func @transform_18(%arg0: i32) -> (i32, i32, i32) {
    %c0_i32 = arith.constant 0 : i32
    %c0_i32_0 = arith.constant 0 : i32
    %c0_i32_1 = arith.constant 0 : i32
    %c0_i32_2 = arith.constant 0 : i32
    return %c0_i32, %c0_i32_0, %c0_i32_1 : i32, i32, i32
  }
  func.func @transform_19(%arg0: i32) -> (i32, i32, i32) {
    %c0_i32 = arith.constant 0 : i32
    %c0_i32_0 = arith.constant 0 : i32
    %c0_i32_1 = arith.constant 0 : i32
    %c0_i32_2 = arith.constant 0 : i32
    return %c0_i32, %c0_i32_0, %c0_i32_1 : i32, i32, i32
  }
  func.func @transform_20(%arg0: i32) -> (i32, i32, i32) {
    %c0_i32 = arith.constant 0 : i32
    %c0_i32_0 = arith.constant 0 : i32
    %c0_i32_1 = arith.constant 0 : i32
    %c0_i32_2 = arith.constant 0 : i32
    return %c0_i32, %c0_i32_0, %c0_i32_1 : i32, i32, i32
  }
  func.func @transform_21(%arg0: i32) -> (i32, i32, i32) {
    %c0_i32 = arith.constant 0 : i32
    %c0_i32_0 = arith.constant 0 : i32
    %c0_i32_1 = arith.constant 0 : i32
    %c0_i32_2 = arith.constant 0 : i32
    return %c0_i32, %c0_i32_0, %c0_i32_1 : i32, i32, i32
  }
  func.func @transform_22(%arg0: i32) -> (i32, i32, i32) {
    %c0_i32 = arith.constant 0 : i32
    %c0_i32_0 = arith.constant 0 : i32
    %c0_i32_1 = arith.constant 0 : i32
    %c0_i32_2 = arith.constant 0 : i32
    return %c0_i32, %c0_i32_0, %c0_i32_1 : i32, i32, i32
  }
  func.func @transform_23(%arg0: i32) -> (i32, i32, i32) {
    %c0_i32 = arith.constant 0 : i32
    %c0_i32_0 = arith.constant 0 : i32
    %c0_i32_1 = arith.constant 0 : i32
    %c0_i32_2 = arith.constant 0 : i32
    return %c0_i32, %c0_i32_0, %c0_i32_1 : i32, i32, i32
  }
  func.func @transform_24(%arg0: i32) -> (i32, i32, i32) {
    %c0_i32 = arith.constant 0 : i32
    %c0_i32_0 = arith.constant 0 : i32
    %c0_i32_1 = arith.constant 0 : i32
    %c0_i32_2 = arith.constant 0 : i32
    return %c0_i32, %c0_i32_0, %c0_i32_1 : i32, i32, i32
  }
  func.func @transform_25(%arg0: i32) -> (i32, i32, i32) {
    %c0_i32 = arith.constant 0 : i32
    %c0_i32_0 = arith.constant 0 : i32
    %c0_i32_1 = arith.constant 0 : i32
    %c0_i32_2 = arith.constant 0 : i32
    return %c0_i32, %c0_i32_0, %c0_i32_1 : i32, i32, i32
  }
  func.func @transform_26(%arg0: i32) -> (i32, i32, i32) {
    %c0_i32 = arith.constant 0 : i32
    %c0_i32_0 = arith.constant 0 : i32
    %c0_i32_1 = arith.constant 0 : i32
    %c0_i32_2 = arith.constant 0 : i32
    return %c0_i32, %c0_i32_0, %c0_i32_1 : i32, i32, i32
  }
  func.func @transform_27(%arg0: i32) -> (i32, i32, i32) {
    %c0_i32 = arith.constant 0 : i32
    %c0_i32_0 = arith.constant 0 : i32
    %c0_i32_1 = arith.constant 0 : i32
    %c0_i32_2 = arith.constant 0 : i32
    return %c0_i32, %c0_i32_0, %c0_i32_1 : i32, i32, i32
  }
  func.func @transform_28(%arg0: i32) -> (i32, i32, i32) {
    %c0_i32 = arith.constant 0 : i32
    %c0_i32_0 = arith.constant 0 : i32
    %c0_i32_1 = arith.constant 0 : i32
    %c0_i32_2 = arith.constant 0 : i32
    return %c0_i32, %c0_i32_0, %c0_i32_1 : i32, i32, i32
  }
  func.func @transform_29(%arg0: i32) -> (i32, i32, i32) {
    %c0_i32 = arith.constant 0 : i32
    %c0_i32_0 = arith.constant 0 : i32
    %c0_i32_1 = arith.constant 0 : i32
    %c0_i32_2 = arith.constant 0 : i32
    return %c0_i32, %c0_i32_0, %c0_i32_1 : i32, i32, i32
  }
  func.func @transform_30(%arg0: i32) -> (i32, i32, i32) {
    %c0_i32 = arith.constant 0 : i32
    %c0_i32_0 = arith.constant 0 : i32
    %c0_i32_1 = arith.constant 0 : i32
    %c0_i32_2 = arith.constant 0 : i32
    return %c0_i32, %c0_i32_0, %c0_i32_1 : i32, i32, i32
  }
  func.func @transform_31(%arg0: i32) -> (i32, i32, i32) {
    %c0_i32 = arith.constant 0 : i32
    %c0_i32_0 = arith.constant 0 : i32
    %c0_i32_1 = arith.constant 0 : i32
    %c0_i32_2 = arith.constant 0 : i32
    return %c0_i32, %c0_i32_0, %c0_i32_1 : i32, i32, i32
  }
  func.func @transform_32(%arg0: i32) -> (i32, i32, i32) {
    %c0_i32 = arith.constant 0 : i32
    %c0_i32_0 = arith.constant 0 : i32
    %c0_i32_1 = arith.constant 0 : i32
    %c0_i32_2 = arith.constant 0 : i32
    return %c0_i32, %c0_i32_0, %c0_i32_1 : i32, i32, i32
  }
  func.func @transform_33(%arg0: i32) -> (i32, i32, i32) {
    %c0_i32 = arith.constant 0 : i32
    %c0_i32_0 = arith.constant 0 : i32
    %c0_i32_1 = arith.constant 0 : i32
    %c0_i32_2 = arith.constant 0 : i32
    return %c0_i32, %c0_i32_0, %c0_i32_1 : i32, i32, i32
  }
  func.func @transform_34(%arg0: i32) -> (i32, i32, i32) {
    %c0_i32 = arith.constant 0 : i32
    %c0_i32_0 = arith.constant 0 : i32
    %c0_i32_1 = arith.constant 0 : i32
    %c0_i32_2 = arith.constant 0 : i32
    return %c0_i32, %c0_i32_0, %c0_i32_1 : i32, i32, i32
  }
  func.func @transform_35(%arg0: i32) -> (i32, i32) {
    %c0_i32 = arith.constant 0 : i32
    %c0_i32_0 = arith.constant 0 : i32
    %c0_i32_1 = arith.constant 0 : i32
    return %c0_i32, %c0_i32_0 : i32, i32
  }
  func.func @transform_36(%arg0: i32) -> (i32, i32) {
    %c0_i32 = arith.constant 0 : i32
    %c0_i32_0 = arith.constant 0 : i32
    %c0_i32_1 = arith.constant 0 : i32
    return %c0_i32, %c0_i32_0 : i32, i32
  }
  func.func @transform_37(%arg0: i32) -> (i32, i32) {
    %c0_i32 = arith.constant 0 : i32
    %c0_i32_0 = arith.constant 0 : i32
    %c0_i32_1 = arith.constant 0 : i32
    return %c0_i32, %c0_i32_0 : i32, i32
  }
  func.func @transform_38(%arg0: i32) -> (i32, i32) {
    %c0_i32 = arith.constant 0 : i32
    %c0_i32_0 = arith.constant 0 : i32
    %c0_i32_1 = arith.constant 0 : i32
    return %c0_i32, %c0_i32_0 : i32, i32
  }
  func.func @transform_39(%arg0: i32) -> (i32, i32) {
    %c0_i32 = arith.constant 0 : i32
    %c0_i32_0 = arith.constant 0 : i32
    %c0_i32_1 = arith.constant 0 : i32
    return %c0_i32, %c0_i32_0 : i32, i32
  }
  func.func @transform_40(%arg0: i32) -> (i32, i32) {
    %c0_i32 = arith.constant 0 : i32
    %c0_i32_0 = arith.constant 0 : i32
    %c0_i32_1 = arith.constant 0 : i32
    return %c0_i32, %c0_i32_0 : i32, i32
  }
  func.func @transform_41(%arg0: i32) -> (i32, i32) {
    %c0_i32 = arith.constant 0 : i32
    %c0_i32_0 = arith.constant 0 : i32
    %c0_i32_1 = arith.constant 0 : i32
    return %c0_i32, %c0_i32_0 : i32, i32
  }
}

</mosaic_0001>

<llo_original>
// kernel: transformer_forward.1
$region0: #{transformer_forward.1}
  #allocation0 [shape = 'u32[]', space=smem, size = 0x4, offset = 0x4, fixed_abs, tag = 'smem constant byte address 0x4 - core index']
  #allocation1 [shape = 'u32[72,128]{1,0:T(1,128)}', space=vmem, size = 0x9000, scoped, tag = 'internal scratch']
  %s0 = inlined_call_operand.smem [shape: u32[42], index: -1, kind: input, shape index: {}]
  %s1 = sld [smem:[%s0]]
  %s2 = scalar_lea.smem %s0, 1
  %s3 = sld [smem:[%s2]]
  %s4 = scalar_lea.smem %s0, 2
  %s5 = sld [smem:[%s4]]
  %s6 = scalar_lea.smem %s0, 3
  %s7 = sld [smem:[%s6]]
  %s8 = scalar_lea.smem %s0, 4
  %s9 = sld [smem:[%s8]]
  %s10 = scalar_lea.smem %s0, 5
  %s11 = sld [smem:[%s10]]
  %s12 = scalar_lea.smem %s0, 6
  %s13 = sld [smem:[%s12]]
  %s14 = scalar_lea.smem %s0, 7
  %s15 = sld [smem:[%s14]]
  %s16 = scalar_lea.smem %s0, 8
  %s17 = sld [smem:[%s16]]
  %s18 = scalar_lea.smem %s0, 9
  %s19 = sld [smem:[%s18]]
  %s20 = scalar_lea.smem %s0, 10
  %s21 = sld [smem:[%s20]]
  %s22 = scalar_lea.smem %s0, 11
  %s23 = sld [smem:[%s22]]
  %s24 = scalar_lea.smem %s0, 12
  %s25 = sld [smem:[%s24]]
  %s26 = scalar_lea.smem %s0, 13
  %s27 = sld [smem:[%s26]]
  %s28 = scalar_lea.smem %s0, 14
  %s29 = sld [smem:[%s28]]
  %s30 = scalar_lea.smem %s0, 15
  %s31 = sld [smem:[%s30]]
  %s32 = scalar_lea.smem %s0, 16
  %s33 = sld [smem:[%s32]]
  %s34 = scalar_lea.smem %s0, 17
  %s35 = sld [smem:[%s34]]
  %s36 = scalar_lea.smem %s0, 18
  %s37 = sld [smem:[%s36]]
  %s38 = scalar_lea.smem %s0, 19
  %s39 = sld [smem:[%s38]]
  %s40 = scalar_lea.smem %s0, 20
  %s41 = sld [smem:[%s40]]
  %s42 = scalar_lea.smem %s0, 21
  %s43 = sld [smem:[%s42]]
  %s44 = scalar_lea.smem %s0, 22
  %s45 = sld [smem:[%s44]]
  %s46 = scalar_lea.smem %s0, 23
  %s47 = sld [smem:[%s46]]
  %s48 = scalar_lea.smem %s0, 24
  %s49 = sld [smem:[%s48]]
  %s50 = scalar_lea.smem %s0, 25
  %s51 = sld [smem:[%s50]]
  %s52 = scalar_lea.smem %s0, 26
  %s53 = sld [smem:[%s52]]
  %s54 = scalar_lea.smem %s0, 27
  %s55 = sld [smem:[%s54]]
  %s56 = scalar_lea.smem %s0, 28
  %s57 = sld [smem:[%s56]]
  %s58 = scalar_lea.smem %s0, 29
  %s59 = sld [smem:[%s58]]
  %s60 = scalar_lea.smem %s0, 30
  %s61 = sld [smem:[%s60]]
  %s62 = scalar_lea.smem %s0, 31
  %s63 = sld [smem:[%s62]]
  %s64 = scalar_lea.smem %s0, 32
  %s65 = sld [smem:[%s64]]
  %s66 = scalar_lea.smem %s0, 33
  %s67 = sld [smem:[%s66]]
  %s68 = scalar_lea.smem %s0, 34
  %s69 = sld [smem:[%s68]]
  %s70 = scalar_lea.smem %s0, 35
  %s71 = sld [smem:[%s70]]
  %s72 = scalar_lea.smem %s0, 36
  %s73 = sld [smem:[%s72]]
  %s74 = scalar_lea.smem %s0, 37
  %s75 = sld [smem:[%s74]]
  %s76 = scalar_lea.smem %s0, 38
  %s77 = sld [smem:[%s76]]
  %s78 = scalar_lea.smem %s0, 39
  %s79 = sld [smem:[%s78]]
  %s80 = scalar_lea.smem %s0, 40
  %s81 = sld [smem:[%s80]]
  %s82 = scalar_lea.smem %s0, 41
  %s83 = sld [smem:[%s82]]
  %s84 = sld [smem:[#allocation0]]
  $region254: #{transformer_forward.1} parent=0
    _
  %s86 = ssub.s32 1, %s84
  %s87 = scalar_select 0, %s86, %s84
  $region1: #{transformer_forward.1} parent=0
    #allocation2 [shape = 'u8[32768]{0}', space=vmem, size = 0x8000, scoped, tag = 'input window, operand 15, single buffered']
    #allocation3 [shape = 's32[1]{0}', space=sflag, size = 0x4, scoped, tag = 'scoped memory for transformer_forward.1']
    #allocation4 [shape = 'u8[1024]{0}', space=vmem, size = 0x400, scoped, tag = 'input window, operand 16, single buffered']
    #allocation5 [shape = 's32[1]{0}', space=sflag, size = 0x4, scoped, tag = 'scoped memory for transformer_forward.1']
    #allocation6 [shape = 'u8[32768]{0}', space=vmem, size = 0x8000, scoped, tag = 'input window, operand 17, single buffered']
    #allocation7 [shape = 'u8[1024]{0}', space=vmem, size = 0x400, scoped, tag = 'input window, operand 18, single buffered']
    #allocation8 [shape = 's32[1]{0}', space=sflag, size = 0x4, scoped, tag = 'scoped memory for transformer_forward.1']
    #allocation9 [shape = 'u8[1024]{0}', space=vmem, size = 0x400, scoped, tag = 'input window, operand 19, single buffered']
    #allocation10 [shape = 'u8[1024]{0}', space=vmem, size = 0x400, scoped, tag = 'input window, operand 20, single buffered']
    #allocation11 [shape = 's32[1]{0}', space=sflag, size = 0x4, scoped, tag = 'scoped memory for transformer_forward.1']
    #allocation12 [shape = 'u8[32768]{0}', space=vmem, size = 0x8000, scoped, tag = 'input window, operand 21, single buffered']
    #allocation13 [shape = 'u8[1024]{0}', space=vmem, size = 0x400, scoped, tag = 'input window, operand 22, single buffered']
    #allocation14 [shape = 's32[1]{0}', space=sflag, size = 0x4, scoped, tag = 'scoped memory for transformer_forward.1']
    #allocation15 [shape = 'u8[32768]{0}', space=vmem, size = 0x8000, scoped, tag = 'input window, operand 23, single buffered']
    #allocation16 [shape = 'u8[1024]{0}', space=vmem, size = 0x400, scoped, tag = 'input window, operand 24, single buffered']
    #allocation17 [shape = 's32[1]{0}', space=sflag, size = 0x4, scoped, tag = 'scoped memory for transformer_forward.1']
    #allocation18 [shape = 'u8[32768]{0}', space=vmem, size = 0x8000, scoped, tag = 'input window, operand 25, single buffered']
    #allocation19 [shape = 'u8[1024]{0}', space=vmem, size = 0x400, scoped, tag = 'input window, operand 26, single buffered']
    #allocation20 [shape = 's32[1]{0}', space=sflag, size = 0x4, scoped, tag = 'scoped memory for transformer_forward.1']
    #allocation21 [shape = 'u8[1024]{0}', space=vmem, size = 0x400, scoped, tag = 'input window, operand 27, single buffered']
    #allocation22 [shape = 'u8[1024]{0}', space=vmem, size = 0x400, scoped, tag = 'input window, operand 28, single buffered']
    #allocation23 [shape = 's32[1]{0}', space=sflag, size = 0x4, scoped, tag = 'scoped memory for transformer_forward.1']
    #allocation24 [shape = 'u8[32768]{0}', space=vmem, size = 0x8000, scoped, tag = 'input window, operand 29, single buffered']
    #allocation25 [shape = 'u8[1024]{0}', space=vmem, size = 0x400, scoped, tag = 'input window, operand 30, single buffered']
    #allocation26 [shape = 's32[1]{0}', space=sflag, size = 0x4, scoped, tag = 'scoped memory for transformer_forward.1']
    #allocation27 [shape = 'u8[1024]{0}', space=vmem, size = 0x400, scoped, tag = 'input window, operand 32, single buffered']
    #allocation28 [shape = 'u8[1024]{0}', space=vmem, size = 0x400, scoped, tag = 'input window, operand 33, single buffered']
    #allocation29 [shape = 's32[1]{0}', space=sflag, size = 0x4, scoped, tag = 'scoped memory for transformer_forward.1']
    #allocation30 [shape = 'u8[1024]{0}', space=vmem, size = 0x400, scoped, tag = 'input window, operand 34, single buffered']
    #allocation31 [shape = 'u8[512]{0}', space=vmem, size = 0x400, scoped, tag = 'input window, operand 36, single buffered']
    #allocation32 [shape = 's32[1]{0}', space=sflag, size = 0x4, scoped, tag = 'scoped memory for transformer_forward.1']
    %88 = vsyncpa [#allocation3], 0
    %89 = vsyncpa [#allocation5], 0
    %90 = vsyncpa [#allocation8], 0
    %91 = vsyncpa [#allocation11], 0
    %92 = vsyncpa [#allocation14], 0
    %93 = vsyncpa [#allocation17], 0
    %94 = vsyncpa [#allocation20], 0
    %95 = vsyncpa [#allocation23], 0
    %96 = vsyncpa [#allocation26], 0
    %97 = vsyncpa [#allocation29], 0
    %98 = vsyncpa [#allocation32], 0
    // Predicated region
    $region2: #{transformer_forward.1} parent=1 // pred_check
      _
    $region3: #{transformer_forward.1} parent=1 // pred_check_branch
      %100 = sbr.rel (0) target = $region5
    $region4: #{transformer_forward.1} parent=1 // pred_region
      _
    $region5: #{transformer_forward.1} parent=1 // pred_fallthru
      _
    // Predicated region
    $region6: #{transformer_forward.1} parent=1 // pred_check
      _
    $region7: #{transformer_forward.1} parent=1 // pred_check_branch
      %102 = sbr.rel (0) target = $region9
    $region8: #{transformer_forward.1} parent=1 // pred_region
      _
    $region9: #{transformer_forward.1} parent=1 // pred_fallthru
      _
    // Predicated region
    $region10: #{transformer_forward.1} parent=1 // pred_check
      _
    $region11: #{transformer_forward.1} parent=1 // pred_check_branch
      %104 = sbr.rel (0) target = $region13
    $region12: #{transformer_forward.1} parent=1 // pred_region
      _
    $region13: #{transformer_forward.1} parent=1 // pred_fallthru
      _
    // Predicated region
    $region14: #{transformer_forward.1} parent=1 // pred_check
      _
    $region15: #{transformer_forward.1} parent=1 // pred_check_branch
      %106 = sbr.rel (0) target = $region17
    $region16: #{transformer_forward.1} parent=1 // pred_region
      _
    $region17: #{transformer_forward.1} parent=1 // pred_fallthru
      _
    // Predicated region
    $region18: #{transformer_forward.1} parent=1 // pred_check
      _
    $region19: #{transformer_forward.1} parent=1 // pred_check_branch
      %108 = sbr.rel (0) target = $region21
    $region20: #{transformer_forward.1} parent=1 // pred_region
      _
    $region21: #{transformer_forward.1} parent=1 // pred_fallthru
      _
    // Predicated region
    $region22: #{transformer_forward.1} parent=1 // pred_check
      _
    $region23: #{transformer_forward.1} parent=1 // pred_check_branch
      %110 = sbr.rel (0) target = $region25
    $region24: #{transformer_forward.1} parent=1 // pred_region
      _
    $region25: #{transformer_forward.1} parent=1 // pred_fallthru
      _
    // Predicated region
    $region26: #{transformer_forward.1} parent=1 // pred_check
      _
    $region27: #{transformer_forward.1} parent=1 // pred_check_branch
      %112 = sbr.rel (0) target = $region29
    $region28: #{transformer_forward.1} parent=1 // pred_region
      _
    $region29: #{transformer_forward.1} parent=1 // pred_fallthru
      _
    // Predicated region
    $region30: #{transformer_forward.1} parent=1 // pred_check
      _
    $region31: #{transformer_forward.1} parent=1 // pred_check_branch
      %114 = sbr.rel (0) target = $region33
    $region32: #{transformer_forward.1} parent=1 // pred_region
      _
    $region33: #{transformer_forward.1} parent=1 // pred_fallthru
      _
    // Predicated region
    $region34: #{transformer_forward.1} parent=1 // pred_check
      _
    $region35: #{transformer_forward.1} parent=1 // pred_check_branch
      %116 = sbr.rel (0) target = $region37
    $region36: #{transformer_forward.1} parent=1 // pred_region
      _
    $region37: #{transformer_forward.1} parent=1 // pred_fallthru
      _
    // Predicated region
    $region38: #{transformer_forward.1} parent=1 // pred_check
      _
    $region39: #{transformer_forward.1} parent=1 // pred_check_branch
      %118 = sbr.rel (0) target = $region41
    $region40: #{transformer_forward.1} parent=1 // pred_region
      _
    $region41: #{transformer_forward.1} parent=1 // pred_fallthru
      _
    // Predicated region
    $region42: #{transformer_forward.1} parent=1 // pred_check
      _
    $region43: #{transformer_forward.1} parent=1 // pred_check_branch
      %120 = sbr.rel (0) target = $region45
    $region44: #{transformer_forward.1} parent=1 // pred_region
      _
    $region45: #{transformer_forward.1} parent=1 // pred_fallthru
      _
    // Predicated region
    $region46: #{transformer_forward.1} parent=1 // pred_check
      _
    $region47: #{transformer_forward.1} parent=1 // pred_check_branch
      %122 = sbr.rel (0) target = $region49
    $region48: #{transformer_forward.1} parent=1 // pred_region
      _
    $region49: #{transformer_forward.1} parent=1 // pred_fallthru
      _
    // Predicated region
    $region50: #{transformer_forward.1} parent=1 // pred_check
      _
    $region51: #{transformer_forward.1} parent=1 // pred_check_branch
      %124 = sbr.rel (0) target = $region53
    $region52: #{transformer_forward.1} parent=1 // pred_region
      _
    $region53: #{transformer_forward.1} parent=1 // pred_fallthru
      _
    // Predicated region
    $region54: #{transformer_forward.1} parent=1 // pred_check
      _
    $region55: #{transformer_forward.1} parent=1 // pred_check_branch
      %126 = sbr.rel (0) target = $region57
    $region56: #{transformer_forward.1} parent=1 // pred_region
      _
    $region57: #{transformer_forward.1} parent=1 // pred_fallthru
      _
    // Predicated region
    $region58: #{transformer_forward.1} parent=1 // pred_check
      _
    $region59: #{transformer_forward.1} parent=1 // pred_check_branch
      %128 = sbr.rel (0) target = $region61
    $region60: #{transformer_forward.1} parent=1 // pred_region
      _
    $region61: #{transformer_forward.1} parent=1 // pred_fallthru
      _
    // Predicated region
    $region62: #{transformer_forward.1} parent=1 // pred_check
      _
    $region63: #{transformer_forward.1} parent=1 // pred_check_branch
      %130 = sbr.rel (0) target = $region65
    $region64: #{transformer_forward.1} parent=1 // pred_region
      %132 = vsyncadd [#allocation3], 0
      %s133 = sshll.u32 %s31, 4
      %s134 = int_to_ptr.hbm [resolvable:$true] %s133
      %s135 = sshll.u32 [#allocation2], 4
      %s136 = int_to_ptr.vmem [resolvable:$true] %s135
      %141 = dma.hbm_to_vmem [thread:$0]  %s134, 1024, %s136, [#allocation3], 128, 128, 8
    $region65: #{transformer_forward.1} parent=1 // pred_fallthru
      _
    // Predicated region
    $region66: #{transformer_forward.1} parent=1 // pred_check
      _
    $region67: #{transformer_forward.1} parent=1 // pred_check_branch
      %143 = sbr.rel (0) target = $region69
    $region68: #{transformer_forward.1} parent=1 // pred_region
      %145 = vsyncadd [#allocation5], 0
      %s146 = sshll.u32 %s33, 4
      %s147 = int_to_ptr.hbm [resolvable:$true] %s146
      %s148 = sshll.u32 [#allocation4], 4
      %s149 = int_to_ptr.vmem [resolvable:$true] %s148
      %154 = dma.hbm_to_vmem [thread:$0]  %s147, 32, %s149, [#allocation5], 16, 16, 1
    $region69: #{transformer_forward.1} parent=1 // pred_fallthru
      _
    // Predicated region
    $region70: #{transformer_forward.1} parent=1 // pred_check
      _
    $region71: #{transformer_forward.1} parent=1 // pred_check_branch
      %156 = sbr.rel (0) target = $region73
    $region72: #{transformer_forward.1} parent=1 // pred_region
      %158 = vsyncadd [#allocation5], 0
      %s159 = sshll.u32 %s35, 4
      %s160 = int_to_ptr.hbm [resolvable:$true] %s159
      %s161 = sshll.u32 [#allocation6], 4
      %s162 = int_to_ptr.vmem [resolvable:$true] %s161
      %167 = dma.hbm_to_vmem [thread:$0]  %s160, 1024, %s162, [#allocation5], 128, 128, 8
    $region73: #{transformer_forward.1} parent=1 // pred_fallthru
      _
    // Predicated region
    $region74: #{transformer_forward.1} parent=1 // pred_check
      _
    $region75: #{transformer_forward.1} parent=1 // pred_check_branch
      %169 = sbr.rel (0) target = $region77
    $region76: #{transformer_forward.1} parent=1 // pred_region
      %171 = vsyncadd [#allocation8], 0
      %s172 = sshll.u32 %s37, 4
      %s173 = int_to_ptr.hbm [resolvable:$true] %s172
      %s174 = sshll.u32 [#allocation7], 4
      %s175 = int_to_ptr.vmem [resolvable:$true] %s174
      %180 = dma.hbm_to_vmem [thread:$0]  %s173, 32, %s175, [#allocation8], 16, 16, 1
    $region77: #{transformer_forward.1} parent=1 // pred_fallthru
      _
    // Predicated region
    $region78: #{transformer_forward.1} parent=1 // pred_check
      _
    $region79: #{transformer_forward.1} parent=1 // pred_check_branch
      %182 = sbr.rel (0) target = $region81
    $region80: #{transformer_forward.1} parent=1 // pred_region
      %184 = vsyncadd [#allocation8], 0
      %s185 = sshll.u32 %s39, 4
      %s186 = int_to_ptr.hbm [resolvable:$true] %s185
      %s187 = sshll.u32 [#allocation9], 4
      %s188 = int_to_ptr.vmem [resolvable:$true] %s187
      %193 = dma.hbm_to_vmem [thread:$0]  %s186, 32, %s188, [#allocation8], 16, 16, 1
    $region81: #{transformer_forward.1} parent=1 // pred_fallthru
      _
    // Predicated region
    $region82: #{transformer_forward.1} parent=1 // pred_check
      _
    $region83: #{transformer_forward.1} parent=1 // pred_check_branch
      %195 = sbr.rel (0) target = $region85
    $region84: #{transformer_forward.1} parent=1 // pred_region
      %197 = vsyncadd [#allocation11], 0
      %s198 = sshll.u32 %s41, 4
      %s199 = int_to_ptr.hbm [resolvable:$true] %s198
      %s200 = sshll.u32 [#allocation10], 4
      %s201 = int_to_ptr.vmem [resolvable:$true] %s200
      %206 = dma.hbm_to_vmem [thread:$0]  %s199, 32, %s201, [#allocation11], 16, 16, 1
    $region85: #{transformer_forward.1} parent=1 // pred_fallthru
      _
    // Predicated region
    $region86: #{transformer_forward.1} parent=1 // pred_check
      _
    $region87: #{transformer_forward.1} parent=1 // pred_check_branch
      %208 = sbr.rel (0) target = $region89
    $region88: #{transformer_forward.1} parent=1 // pred_region
      %210 = vsyncadd [#allocation11], 0
      %s211 = sshll.u32 %s43, 4
      %s212 = int_to_ptr.hbm [resolvable:$true] %s211
      %s213 = sshll.u32 [#allocation12], 4
      %s214 = int_to_ptr.vmem [resolvable:$true] %s213
      %219 = dma.hbm_to_vmem [thread:$0]  %s212, 1024, %s214, [#allocation11], 128, 128, 8
    $region89: #{transformer_forward.1} parent=1 // pred_fallthru
      _
    // Predicated region
    $region90: #{transformer_forward.1} parent=1 // pred_check
      _
    $region91: #{transformer_forward.1} parent=1 // pred_check_branch
      %221 = sbr.rel (0) target = $region93
    $region92: #{transformer_forward.1} parent=1 // pred_region
      %223 = vsyncadd [#allocation14], 0
      %s224 = sshll.u32 %s45, 4
      %s225 = int_to_ptr.hbm [resolvable:$true] %s224
      %s226 = sshll.u32 [#allocation13], 4
      %s227 = int_to_ptr.vmem [resolvable:$true] %s226
      %232 = dma.hbm_to_vmem [thread:$0]  %s225, 32, %s227, [#allocation14], 16, 16, 1
    $region93: #{transformer_forward.1} parent=1 // pred_fallthru
      _
    // Predicated region
    $region94: #{transformer_forward.1} parent=1 // pred_check
      _
    $region95: #{transformer_forward.1} parent=1 // pred_check_branch
      %234 = sbr.rel (0) target = $region97
    $region96: #{transformer_forward.1} parent=1 // pred_region
      %236 = vsyncadd [#allocation14], 0
      %s237 = sshll.u32 %s47, 4
      %s238 = int_to_ptr.hbm [resolvable:$true] %s237
      %s239 = sshll.u32 [#allocation15], 4
      %s240 = int_to_ptr.vmem [resolvable:$true] %s239
      %245 = dma.hbm_to_vmem [thread:$0]  %s238, 1024, %s240, [#allocation14], 128, 128, 8
    $region97: #{transformer_forward.1} parent=1 // pred_fallthru
      _
    // Predicated region
    $region98: #{transformer_forward.1} parent=1 // pred_check
      _
    $region99: #{transformer_forward.1} parent=1 // pred_check_branch
      %247 = sbr.rel (0) target = $region101
    $region100: #{transformer_forward.1} parent=1 // pred_region
      %249 = vsyncadd [#allocation17], 0
      %s250 = sshll.u32 %s49, 4
      %s251 = int_to_ptr.hbm [resolvable:$true] %s250
      %s252 = sshll.u32 [#allocation16], 4
      %s253 = int_to_ptr.vmem [resolvable:$true] %s252
      %258 = dma.hbm_to_vmem [thread:$0]  %s251, 32, %s253, [#allocation17], 16, 16, 1
    $region101: #{transformer_forward.1} parent=1 // pred_fallthru
      _
    // Predicated region
    $region102: #{transformer_forward.1} parent=1 // pred_check
      _
    $region103: #{transformer_forward.1} parent=1 // pred_check_branch
      %260 = sbr.rel (0) target = $region105
    $region104: #{transformer_forward.1} parent=1 // pred_region
      %262 = vsyncadd [#allocation17], 0
      %s263 = sshll.u32 %s51, 4
      %s264 = int_to_ptr.hbm [resolvable:$true] %s263
      %s265 = sshll.u32 [#allocation18], 4
      %s266 = int_to_ptr.vmem [resolvable:$true] %s265
      %271 = dma.hbm_to_vmem [thread:$0]  %s264, 1024, %s266, [#allocation17], 128, 128, 8
    $region105: #{transformer_forward.1} parent=1 // pred_fallthru
      _
    // Predicated region
    $region106: #{transformer_forward.1} parent=1 // pred_check
      _
    $region107: #{transformer_forward.1} parent=1 // pred_check_branch
      %273 = sbr.rel (0) target = $region109
    $region108: #{transformer_forward.1} parent=1 // pred_region
      %275 = vsyncadd [#allocation20], 0
      %s276 = sshll.u32 %s53, 4
      %s277 = int_to_ptr.hbm [resolvable:$true] %s276
      %s278 = sshll.u32 [#allocation19], 4
      %s279 = int_to_ptr.vmem [resolvable:$true] %s278
      %284 = dma.hbm_to_vmem [thread:$0]  %s277, 32, %s279, [#allocation20], 16, 16, 1
    $region109: #{transformer_forward.1} parent=1 // pred_fallthru
      _
    // Predicated region
    $region110: #{transformer_forward.1} parent=1 // pred_check
      _
    $region111: #{transformer_forward.1} parent=1 // pred_check_branch
      %286 = sbr.rel (0) target = $region113
    $region112: #{transformer_forward.1} parent=1 // pred_region
      %288 = vsyncadd [#allocation20], 0
      %s289 = sshll.u32 %s55, 4
      %s290 = int_to_ptr.hbm [resolvable:$true] %s289
      %s291 = sshll.u32 [#allocation21], 4
      %s292 = int_to_ptr.vmem [resolvable:$true] %s291
      %297 = dma.hbm_to_vmem [thread:$0]  %s290, 32, %s292, [#allocation20], 16, 16, 1
    $region113: #{transformer_forward.1} parent=1 // pred_fallthru
      _
    // Predicated region
    $region114: #{transformer_forward.1} parent=1 // pred_check
      _
    $region115: #{transformer_forward.1} parent=1 // pred_check_branch
      %299 = sbr.rel (0) target = $region117
    $region116: #{transformer_forward.1} parent=1 // pred_region
      %301 = vsyncadd [#allocation23], 0
      %s302 = sshll.u32 %s57, 4
      %s303 = int_to_ptr.hbm [resolvable:$true] %s302
      %s304 = sshll.u32 [#allocation22], 4
      %s305 = int_to_ptr.vmem [resolvable:$true] %s304
      %310 = dma.hbm_to_vmem [thread:$0]  %s303, 32, %s305, [#allocation23], 16, 16, 1
    $region117: #{transformer_forward.1} parent=1 // pred_fallthru
      _
    // Predicated region
    $region118: #{transformer_forward.1} parent=1 // pred_check
      _
    $region119: #{transformer_forward.1} parent=1 // pred_check_branch
      %312 = sbr.rel (0) target = $region121
    $region120: #{transformer_forward.1} parent=1 // pred_region
      %314 = vsyncadd [#allocation23], 0
      %s315 = sshll.u32 %s59, 4
      %s316 = int_to_ptr.hbm [resolvable:$true] %s315
      %s317 = sshll.u32 [#allocation24], 4
      %s318 = int_to_ptr.vmem [resolvable:$true] %s317
      %323 = dma.hbm_to_vmem [thread:$0]  %s316, 1024, %s318, [#allocation23], 128, 128, 8
    $region121: #{transformer_forward.1} parent=1 // pred_fallthru
      _
    // Predicated region
    $region122: #{transformer_forward.1} parent=1 // pred_check
      _
    $region123: #{transformer_forward.1} parent=1 // pred_check_branch
      %325 = sbr.rel (0) target = $region125
    $region124: #{transformer_forward.1} parent=1 // pred_region
      %327 = vsyncadd [#allocation26], 0
      %s328 = sshll.u32 %s61, 4
      %s329 = int_to_ptr.hbm [resolvable:$true] %s328
      %s330 = sshll.u32 [#allocation25], 4
      %s331 = int_to_ptr.vmem [resolvable:$true] %s330
      %336 = dma.hbm_to_vmem [thread:$0]  %s329, 32, %s331, [#allocation26], 16, 16, 1
    $region125: #{transformer_forward.1} parent=1 // pred_fallthru
      _
    // Predicated region
    $region126: #{transformer_forward.1} parent=1 // pred_check
      _
    $region127: #{transformer_forward.1} parent=1 // pred_check_branch
      %338 = sbr.rel (0) target = $region129
    $region128: #{transformer_forward.1} parent=1 // pred_region
      _
    $region129: #{transformer_forward.1} parent=1 // pred_fallthru
      _
    // Predicated region
    $region130: #{transformer_forward.1} parent=1 // pred_check
      _
    $region131: #{transformer_forward.1} parent=1 // pred_check_branch
      %340 = sbr.rel (0) target = $region133
    $region132: #{transformer_forward.1} parent=1 // pred_region
      %342 = vsyncadd [#allocation26], 0
      %s343 = sshll.u32 %s65, 4
      %s344 = int_to_ptr.hbm [resolvable:$true] %s343
      %s345 = sshll.u32 [#allocation27], 4
      %s346 = int_to_ptr.vmem [resolvable:$true] %s345
      %351 = dma.hbm_to_vmem [thread:$0]  %s344, 32, %s346, [#allocation26], 16, 16, 1
    $region133: #{transformer_forward.1} parent=1 // pred_fallthru
      _
    // Predicated region
    $region134: #{transformer_forward.1} parent=1 // pred_check
      _
    $region135: #{transformer_forward.1} parent=1 // pred_check_branch
      %353 = sbr.rel (0) target = $region137
    $region136: #{transformer_forward.1} parent=1 // pred_region
      %355 = vsyncadd [#allocation29], 0
      %s356 = sshll.u32 %s67, 4
      %s357 = int_to_ptr.hbm [resolvable:$true] %s356
      %s358 = sshll.u32 [#allocation28], 4
      %s359 = int_to_ptr.vmem [resolvable:$true] %s358
      %364 = dma.hbm_to_vmem [thread:$0]  %s357, 32, %s359, [#allocation29], 16, 16, 1
    $region137: #{transformer_forward.1} parent=1 // pred_fallthru
      _
    // Predicated region
    $region138: #{transformer_forward.1} parent=1 // pred_check
      _
    $region139: #{transformer_forward.1} parent=1 // pred_check_branch
      %366 = sbr.rel (0) target = $region141
    $region140: #{transformer_forward.1} parent=1 // pred_region
      %368 = vsyncadd [#allocation29], 0
      %s369 = sshll.u32 %s69, 4
      %s370 = int_to_ptr.hbm [resolvable:$true] %s369
      %s371 = sshll.u32 [#allocation30], 4
      %s372 = int_to_ptr.vmem [resolvable:$true] %s371
      %377 = dma.hbm_to_vmem [thread:$0]  %s370, 32, %s372, [#allocation29], 16, 16, 1
    $region141: #{transformer_forward.1} parent=1 // pred_fallthru
      _
    // Predicated region
    $region142: #{transformer_forward.1} parent=1 // pred_check
      _
    $region143: #{transformer_forward.1} parent=1 // pred_check_branch
      %379 = sbr.rel (0) target = $region145
    $region144: #{transformer_forward.1} parent=1 // pred_region
      _
    $region145: #{transformer_forward.1} parent=1 // pred_fallthru
      _
    // Predicated region
    $region146: #{transformer_forward.1} parent=1 // pred_check
      _
    $region147: #{transformer_forward.1} parent=1 // pred_check_branch
      %381 = sbr.rel (0) target = $region149
    $region148: #{transformer_forward.1} parent=1 // pred_region
      %383 = vsyncadd [#allocation32], 0
      %s385 = sshll.u32 %s73, 4
      %s386 = int_to_ptr.hbm [resolvable:$true] %s385
      %s387 = sshll.u32 [#allocation31], 4
      %s388 = int_to_ptr.vmem [resolvable:$true] %s387
      %390 = dma.hbm_to_vmem [thread:$0]  %s386, 16, %s388, [#allocation32]
    $region149: #{transformer_forward.1} parent=1 // pred_fallthru
      _
    // Predicated region
    $region150: #{transformer_forward.1} parent=1 // pred_check
      _
    $region151: #{transformer_forward.1} parent=1 // pred_check_branch
      %392 = sbr.rel (0) target = $region153
    $region152: #{transformer_forward.1} parent=1 // pred_region
      _
    $region153: #{transformer_forward.1} parent=1 // pred_fallthru
      _
    // Predicated region
    $region154: #{transformer_forward.1} parent=1 // pred_check
      _
    $region155: #{transformer_forward.1} parent=1 // pred_check_branch
      %394 = sbr.rel (0) target = $region157
    $region156: #{transformer_forward.1} parent=1 // pred_region
      _
    $region157: #{transformer_forward.1} parent=1 // pred_fallthru
      _
    // Predicated region
    $region158: #{transformer_forward.1} parent=1 // pred_check
      _
    $region159: #{transformer_forward.1} parent=1 // pred_check_branch
      %396 = sbr.rel (0) target = $region161
    $region160: #{transformer_forward.1} parent=1 // pred_region
      _
    $region161: #{transformer_forward.1} parent=1 // pred_fallthru
      _
    // Predicated region
    $region162: #{transformer_forward.1} parent=1 // pred_check
      _
    $region163: #{transformer_forward.1} parent=1 // pred_check_branch
      %398 = sbr.rel (0) target = $region165
    $region164: #{transformer_forward.1} parent=1 // pred_region
      _
    $region165: #{transformer_forward.1} parent=1 // pred_fallthru
      _
    // Predicated region
    $region166: #{transformer_forward.1} parent=1 // pred_check
      _
    $region167: #{transformer_forward.1} parent=1 // pred_check_branch
      %400 = sbr.rel (0) target = $region169
    $region168: #{transformer_forward.1} parent=1 // pred_region
      %402 = dma.done [#allocation3], 1024
    $region169: #{transformer_forward.1} parent=1 // pred_fallthru
      _
    // Predicated region
    $region170: #{transformer_forward.1} parent=1 // pred_check
      _
    $region171: #{transformer_forward.1} parent=1 // pred_check_branch
      %404 = sbr.rel (0) target = $region173
    $region172: #{transformer_forward.1} parent=1 // pred_region
      %406 = dma.done [#allocation5], 32
    $region173: #{transformer_forward.1} parent=1 // pred_fallthru
      _
    // Predicated region
    $region174: #{transformer_forward.1} parent=1 // pred_check
      _
    $region175: #{transformer_forward.1} parent=1 // pred_check_branch
      %408 = sbr.rel (0) target = $region177
    $region176: #{transformer_forward.1} parent=1 // pred_region
      %410 = dma.done [#allocation5], 1024
    $region177: #{transformer_forward.1} parent=1 // pred_fallthru
      _
    // Predicated region
    $region178: #{transformer_forward.1} parent=1 // pred_check
      _
    $region179: #{transformer_forward.1} parent=1 // pred_check_branch
      %412 = sbr.rel (0) target = $region181
    $region180: #{transformer_forward.1} parent=1 // pred_region
      %414 = dma.done [#allocation8], 32
    $region181: #{transformer_forward.1} parent=1 // pred_fallthru
      _
    // Predicated region
    $region182: #{transformer_forward.1} parent=1 // pred_check
      _
    $region183: #{transformer_forward.1} parent=1 // pred_check_branch
      %416 = sbr.rel (0) target = $region185
    $region184: #{transformer_forward.1} parent=1 // pred_region
      %418 = dma.done [#allocation8], 32
    $region185: #{transformer_forward.1} parent=1 // pred_fallthru
      _
    // Predicated region
    $region186: #{transformer_forward.1} parent=1 // pred_check
      _
    $region187: #{transformer_forward.1} parent=1 // pred_check_branch
      %420 = sbr.rel (0) target = $region189
    $region188: #{transformer_forward.1} parent=1 // pred_region
      %422 = dma.done [#allocation11], 32
    $region189: #{transformer_forward.1} parent=1 // pred_fallthru
      _
    // Predicated region
    $region190: #{transformer_forward.1} parent=1 // pred_check
      _
    $region191: #{transformer_forward.1} parent=1 // pred_check_branch
      %424 = sbr.rel (0) target = $region193
    $region192: #{transformer_forward.1} parent=1 // pred_region
      %426 = dma.done [#allocation11], 1024
    $region193: #{transformer_forward.1} parent=1 // pred_fallthru
      _
    // Predicated region
    $region194: #{transformer_forward.1} parent=1 // pred_check
      _
    $region195: #{transformer_forward.1} parent=1 // pred_check_branch
      %428 = sbr.rel (0) target = $region197
    $region196: #{transformer_forward.1} parent=1 // pred_region
      %430 = dma.done [#allocation14], 32
    $region197: #{transformer_forward.1} parent=1 // pred_fallthru
      _
    // Predicated region
    $region198: #{transformer_forward.1} parent=1 // pred_check
      _
    $region199: #{transformer_forward.1} parent=1 // pred_check_branch
      %432 = sbr.rel (0) target = $region201
    $region200: #{transformer_forward.1} parent=1 // pred_region
      %434 = dma.done [#allocation14], 1024
    $region201: #{transformer_forward.1} parent=1 // pred_fallthru
      _
    // Predicated region
    $region202: #{transformer_forward.1} parent=1 // pred_check
      _
    $region203: #{transformer_forward.1} parent=1 // pred_check_branch
      %436 = sbr.rel (0) target = $region205
    $region204: #{transformer_forward.1} parent=1 // pred_region
      %438 = dma.done [#allocation17], 32
    $region205: #{transformer_forward.1} parent=1 // pred_fallthru
      _
    // Predicated region
    $region206: #{transformer_forward.1} parent=1 // pred_check
      _
    $region207: #{transformer_forward.1} parent=1 // pred_check_branch
      %440 = sbr.rel (0) target = $region209
    $region208: #{transformer_forward.1} parent=1 // pred_region
      %442 = dma.done [#allocation17], 1024
    $region209: #{transformer_forward.1} parent=1 // pred_fallthru
      _
    // Predicated region
    $region210: #{transformer_forward.1} parent=1 // pred_check
      _
    $region211: #{transformer_forward.1} parent=1 // pred_check_branch
      %444 = sbr.rel (0) target = $region213
    $region212: #{transformer_forward.1} parent=1 // pred_region
      %446 = dma.done [#allocation20], 32
    $region213: #{transformer_forward.1} parent=1 // pred_fallthru
      _
    // Predicated region
    $region214: #{transformer_forward.1} parent=1 // pred_check
      _
    $region215: #{transformer_forward.1} parent=1 // pred_check_branch
      %448 = sbr.rel (0) target = $region217
    $region216: #{transformer_forward.1} parent=1 // pred_region
      %450 = dma.done [#allocation20], 32
    $region217: #{transformer_forward.1} parent=1 // pred_fallthru
      _
    // Predicated region
    $region218: #{transformer_forward.1} parent=1 // pred_check
      _
    $region219: #{transformer_forward.1} parent=1 // pred_check_branch
      %452 = sbr.rel (0) target = $region221
    $region220: #{transformer_forward.1} parent=1 // pred_region
      %454 = dma.done [#allocation23], 32
    $region221: #{transformer_forward.1} parent=1 // pred_fallthru
      _
    // Predicated region
    $region222: #{transformer_forward.1} parent=1 // pred_check
      _
    $region223: #{transformer_forward.1} parent=1 // pred_check_branch
      %456 = sbr.rel (0) target = $region225
    $region224: #{transformer_forward.1} parent=1 // pred_region
      %458 = dma.done [#allocation23], 1024
    $region225: #{transformer_forward.1} parent=1 // pred_fallthru
      _
    // Predicated region
    $region226: #{transformer_forward.1} parent=1 // pred_check
      _
    $region227: #{transformer_forward.1} parent=1 // pred_check_branch
      %460 = sbr.rel (0) target = $region229
    $region228: #{transformer_forward.1} parent=1 // pred_region
      %462 = dma.done [#allocation26], 32
    $region229: #{transformer_forward.1} parent=1 // pred_fallthru
      _
    // Predicated region
    $region230: #{transformer_forward.1} parent=1 // pred_check
      _
    $region231: #{transformer_forward.1} parent=1 // pred_check_branch
      %464 = sbr.rel (0) target = $region233
    $region232: #{transformer_forward.1} parent=1 // pred_region
      %466 = dma.done [#allocation26], 32
    $region233: #{transformer_forward.1} parent=1 // pred_fallthru
      _
    // Predicated region
    $region234: #{transformer_forward.1} parent=1 // pred_check
      _
    $region235: #{transformer_forward.1} parent=1 // pred_check_branch
      %468 = sbr.rel (0) target = $region237
    $region236: #{transformer_forward.1} parent=1 // pred_region
      %470 = dma.done [#allocation29], 32
    $region237: #{transformer_forward.1} parent=1 // pred_fallthru
      _
    // Predicated region
    $region238: #{transformer_forward.1} parent=1 // pred_check
      _
    $region239: #{transformer_forward.1} parent=1 // pred_check_branch
      %472 = sbr.rel (0) target = $region241
    $region240: #{transformer_forward.1} parent=1 // pred_region
      %474 = dma.done [#allocation29], 32
    $region241: #{transformer_forward.1} parent=1 // pred_fallthru
      _
    // Predicated region
    $region242: #{transformer_forward.1} parent=1 // pred_check
      _
    $region243: #{transformer_forward.1} parent=1 // pred_check_branch
      %476 = sbr.rel (0) target = $region245
    $region244: #{transformer_forward.1} parent=1 // pred_region
      %478 = dma.done [#allocation32], 16
    $region245: #{transformer_forward.1} parent=1 // pred_fallthru
      _
    %v479 = vld [vmem:[%s1] sm:$0xff]
    %v480 = vld [vmem:[%s1 + $0x8] sm:$0xff]
    %v481 = vld [vmem:[%s3] sm:$0xff]
    %v482 = vld [vmem:[%s3 + $0x8] sm:$0xff]
    %v483 = vld [vmem:[%s3 + $0x10] sm:$0xff]
    %v484 = vld [vmem:[%s3 + $0x18] sm:$0xff]
    %v485 = vld [vmem:[%s5] sm:$0x1]
    %v487 = vperm.slane %v485, 0
    %vm489 = vcmask 261120
    %v491 = vsel %vm489, %v479, 0
    %v494 = vsel %vm489, %v480, 0
    %496 = vmatpush.msra.mxu0 0.0
    %497 = vmatpush.msra.mxu0 0.0
    %498 = vmatpush.msra.mxu0 0.0
    %499 = vmatpush.msra.mxu0 0.0
    %500 = vmatpush.msra.mxu0 0.0
    %501 = vmatpush.msra.mxu0 0.0
    %502 = vmatpush.msra.mxu0 0.0
    %503 = vmatpush.msra.mxu0 0.0
    %504 = vmatpush.msra.mxu0 0.0
    %505 = vmatpush.msra.mxu0 0.0
    %506 = vmatpush.msra.mxu0 0.0
    %507 = vmatpush.msra.mxu0 0.0
    %508 = vmatpush.msra.mxu0 %v484
    %509 = vmatpush.msra.mxu0 %v483
    %510 = vmatpush.msra.mxu0 %v482
    %511 = vmatpush.msra.mxu0 %v481
    %512 = vmatmul.f32.gmra.mxu0 %v491
    %v513 = vpop.f32.mrf.mxu0
    %v514 = vadd.f32 %v487, %v513
    %515 = vmatmul.f32.gmra.mxu0 %v494
    %v516 = vpop.f32.mrf.mxu0
    %v517 = vadd.f32 %v487, %v516
    %518 = vdwg.mxu0
    %v519 = vld [vmem:[%s7] sm:$0xff]
    %v520 = vld [vmem:[%s7 + $0x8] sm:$0xff]
    %v521 = vld [vmem:[%s7 + $0x10] sm:$0xff]
    %v522 = vld [vmem:[%s7 + $0x18] sm:$0xff]
    %v523 = vld [vmem:[%s9] sm:$0x1]
    %526 = vrot.lane.b32.xlu0 %v514, 120
    %v527 = vpop.permute.xlu0 %526
    %528 = vrot.lane.b32.xlu0 %v517, 120
    %v529 = vpop.permute.xlu0 %528
    %530 = vrot.lane.b32.xlu0 %v514, 112
    %v531 = vpop.permute.xlu0 %530
    %532 = vrot.lane.b32.xlu0 %v517, 112
    %v533 = vpop.permute.xlu0 %532
    %534 = vrot.lane.b32.xlu0 %v514, 104
    %v535 = vpop.permute.xlu0 %534
    %536 = vrot.lane.b32.xlu0 %v517, 104
    %v537 = vpop.permute.xlu0 %536
    %538 = vrot.lane.b32.xlu0 %v514, 96
    %v539 = vpop.permute.xlu0 %538
    %vm540 = vcmask 64512
    %v541 = vsel %vm540, %v514, 0
    %v543 = vsel %vm540, %v539, 0
    %545 = vmatpush.xpose.msra.mxu0 0.0
    %546 = vmatpush.xpose.msra.mxu0 0.0
    %547 = vmatpush.xpose.msra.mxu0 0.0
    %548 = vmatpush.xpose.msra.mxu0 0.0
    %549 = vmatpush.xpose.msra.mxu0 0.0
    %550 = vmatpush.xpose.msra.mxu0 0.0
    %551 = vmatpush.xpose.msra.mxu0 0.0
    %552 = vmatpush.xpose.msra.mxu0 0.0
    %553 = vmatpush.xpose.msra.mxu0 0.0
    %554 = vmatpush.xpose.msra.mxu0 0.0
    %555 = vmatpush.xpose.msra.mxu0 0.0
    %556 = vmatpush.xpose.msra.mxu0 0.0
    %557 = vmatpush.xpose.msra.mxu0 0.0
    %558 = vmatpush.xpose.msra.mxu0 0.0
    %559 = vmatpush.xpose.msra.mxu0 0.0
    %560 = vmatpush.xpose.msra.mxu0 %v543
    %561 = vmatmul.f32.gmra.mxu0 %v541
    %v562 = vpop.f32.mrf.mxu0
    %v563 = vadd.f32 0.0, %v562
    %564 = vdwg.mxu0
    %565 = vrot.lane.b32.xlu0 %v517, 96
    %v566 = vpop.permute.xlu0 %565
    %v567 = vsel %vm540, %v517, 0
    %v569 = vsel %vm540, %v566, 0
    %571 = vmatpush.xpose.msra.mxu0 0.0
    %572 = vmatpush.xpose.msra.mxu0 0.0
    %573 = vmatpush.xpose.msra.mxu0 0.0
    %574 = vmatpush.xpose.msra.mxu0 0.0
    %575 = vmatpush.xpose.msra.mxu0 0.0
    %576 = vmatpush.xpose.msra.mxu0 0.0
    %577 = vmatpush.xpose.msra.mxu0 0.0
    %578 = vmatpush.xpose.msra.mxu0 0.0
    %579 = vmatpush.xpose.msra.mxu0 0.0
    %580 = vmatpush.xpose.msra.mxu0 0.0
    %581 = vmatpush.xpose.msra.mxu0 0.0
    %582 = vmatpush.xpose.msra.mxu0 0.0
    %583 = vmatpush.xpose.msra.mxu0 0.0
    %584 = vmatpush.xpose.msra.mxu0 0.0
    %585 = vmatpush.xpose.msra.mxu0 0.0
    %586 = vmatpush.xpose.msra.mxu0 %v569
    %587 = vmatmul.f32.gmra.mxu0 %v567
    %v588 = vpop.f32.mrf.mxu0
    %v589 = vadd.f32 0.0, %v588
    %590 = vdwg.mxu0
    %591 = vrot.lane.b32.xlu0 %v527, 96
    %v592 = vpop.permute.xlu0 %591
    %v593 = vsel %vm540, %v527, 0
    %v595 = vsel %vm540, %v592, 0
    %597 = vmatpush.xpose.msra.mxu0 0.0
    %598 = vmatpush.xpose.msra.mxu0 0.0
    %599 = vmatpush.xpose.msra.mxu0 0.0
    %600 = vmatpush.xpose.msra.mxu0 0.0
    %601 = vmatpush.xpose.msra.mxu0 0.0
    %602 = vmatpush.xpose.msra.mxu0 0.0
    %603 = vmatpush.xpose.msra.mxu0 0.0
    %604 = vmatpush.xpose.msra.mxu0 0.0
    %605 = vmatpush.xpose.msra.mxu0 0.0
    %606 = vmatpush.xpose.msra.mxu0 0.0
    %607 = vmatpush.xpose.msra.mxu0 0.0
    %608 = vmatpush.xpose.msra.mxu0 0.0
    %609 = vmatpush.xpose.msra.mxu0 0.0
    %610 = vmatpush.xpose.msra.mxu0 0.0
    %611 = vmatpush.xpose.msra.mxu0 0.0
    %612 = vmatpush.xpose.msra.mxu0 %v595
    %613 = vmatmul.f32.gmra.mxu0 %v593
    %v614 = vpop.f32.mrf.mxu0
    %v615 = vadd.f32 0.0, %v614
    %616 = vdwg.mxu0
    %617 = vrot.lane.b32.xlu0 %v529, 96
    %v618 = vpop.permute.xlu0 %617
    %v619 = vsel %vm540, %v529, 0
    %v621 = vsel %vm540, %v618, 0
    %623 = vmatpush.xpose.msra.mxu0 0.0
    %624 = vmatpush.xpose.msra.mxu0 0.0
    %625 = vmatpush.xpose.msra.mxu0 0.0
    %626 = vmatpush.xpose.msra.mxu0 0.0
    %627 = vmatpush.xpose.msra.mxu0 0.0
    %628 = vmatpush.xpose.msra.mxu0 0.0
    %629 = vmatpush.xpose.msra.mxu0 0.0
    %630 = vmatpush.xpose.msra.mxu0 0.0
    %631 = vmatpush.xpose.msra.mxu0 0.0
    %632 = vmatpush.xpose.msra.mxu0 0.0
    %633 = vmatpush.xpose.msra.mxu0 0.0
    %634 = vmatpush.xpose.msra.mxu0 0.0
    %635 = vmatpush.xpose.msra.mxu0 0.0
    %636 = vmatpush.xpose.msra.mxu0 0.0
    %637 = vmatpush.xpose.msra.mxu0 0.0
    %638 = vmatpush.xpose.msra.mxu0 %v621
    %639 = vmatmul.f32.gmra.mxu0 %v619
    %v640 = vpop.f32.mrf.mxu0
    %v641 = vadd.f32 0.0, %v640
    %642 = vdwg.mxu0
    %643 = vrot.lane.b32.xlu0 %v531, 96
    %v644 = vpop.permute.xlu0 %643
    %v645 = vsel %vm540, %v531, 0
    %v647 = vsel %vm540, %v644, 0
    %649 = vmatpush.xpose.msra.mxu0 0.0
    %650 = vmatpush.xpose.msra.mxu0 0.0
    %651 = vmatpush.xpose.msra.mxu0 0.0
    %652 = vmatpush.xpose.msra.mxu0 0.0
    %653 = vmatpush.xpose.msra.mxu0 0.0
    %654 = vmatpush.xpose.msra.mxu0 0.0
    %655 = vmatpush.xpose.msra.mxu0 0.0
    %656 = vmatpush.xpose.msra.mxu0 0.0
    %657 = vmatpush.xpose.msra.mxu0 0.0
    %658 = vmatpush.xpose.msra.mxu0 0.0
    %659 = vmatpush.xpose.msra.mxu0 0.0
    %660 = vmatpush.xpose.msra.mxu0 0.0
    %661 = vmatpush.xpose.msra.mxu0 0.0
    %662 = vmatpush.xpose.msra.mxu0 0.0
    %663 = vmatpush.xpose.msra.mxu0 0.0
    %664 = vmatpush.xpose.msra.mxu0 %v647
    %665 = vmatmul.f32.gmra.mxu0 %v645
    %v666 = vpop.f32.mrf.mxu0
    %v667 = vadd.f32 0.0, %v666
    %668 = vdwg.mxu0
    %669 = vrot.lane.b32.xlu0 %v533, 96
    %v670 = vpop.permute.xlu0 %669
    %v671 = vsel %vm540, %v533, 0
    %v673 = vsel %vm540, %v670, 0
    %675 = vmatpush.xpose.msra.mxu0 0.0
    %676 = vmatpush.xpose.msra.mxu0 0.0
    %677 = vmatpush.xpose.msra.mxu0 0.0
    %678 = vmatpush.xpose.msra.mxu0 0.0
    %679 = vmatpush.xpose.msra.mxu0 0.0
    %680 = vmatpush.xpose.msra.mxu0 0.0
    %681 = vmatpush.xpose.msra.mxu0 0.0
    %682 = vmatpush.xpose.msra.mxu0 0.0
    %683 = vmatpush.xpose.msra.mxu0 0.0
    %684 = vmatpush.xpose.msra.mxu0 0.0
    %685 = vmatpush.xpose.msra.mxu0 0.0
    %686 = vmatpush.xpose.msra.mxu0 0.0
    %687 = vmatpush.xpose.msra.mxu0 0.0
    %688 = vmatpush.xpose.msra.mxu0 0.0
    %689 = vmatpush.xpose.msra.mxu0 0.0
    %690 = vmatpush.xpose.msra.mxu0 %v673
    %691 = vmatmul.f32.gmra.mxu0 %v671
    %v692 = vpop.f32.mrf.mxu0
    %v693 = vadd.f32 0.0, %v692
    %694 = vdwg.mxu0
    %695 = vrot.lane.b32.xlu0 %v535, 96
    %v696 = vpop.permute.xlu0 %695
    %v697 = vsel %vm540, %v535, 0
    %v699 = vsel %vm540, %v696, 0
    %701 = vmatpush.xpose.msra.mxu0 0.0
    %702 = vmatpush.xpose.msra.mxu0 0.0
    %703 = vmatpush.xpose.msra.mxu0 0.0
    %704 = vmatpush.xpose.msra.mxu0 0.0
    %705 = vmatpush.xpose.msra.mxu0 0.0
    %706 = vmatpush.xpose.msra.mxu0 0.0
    %707 = vmatpush.xpose.msra.mxu0 0.0
    %708 = vmatpush.xpose.msra.mxu0 0.0
    %709 = vmatpush.xpose.msra.mxu0 0.0
    %710 = vmatpush.xpose.msra.mxu0 0.0
    %711 = vmatpush.xpose.msra.mxu0 0.0
    %712 = vmatpush.xpose.msra.mxu0 0.0
    %713 = vmatpush.xpose.msra.mxu0 0.0
    %714 = vmatpush.xpose.msra.mxu0 0.0
    %715 = vmatpush.xpose.msra.mxu0 0.0
    %716 = vmatpush.xpose.msra.mxu0 %v699
    %717 = vmatmul.f32.gmra.mxu0 %v697
    %v718 = vpop.f32.mrf.mxu0
    %v719 = vadd.f32 0.0, %v718
    %720 = vdwg.mxu0
    %721 = vrot.lane.b32.xlu0 %v537, 96
    %v722 = vpop.permute.xlu0 %721
    %v723 = vsel %vm540, %v537, 0
    %v725 = vsel %vm540, %v722, 0
    %727 = vmatpush.xpose.msra.mxu0 0.0
    %728 = vmatpush.xpose.msra.mxu0 0.0
    %729 = vmatpush.xpose.msra.mxu0 0.0
    %730 = vmatpush.xpose.msra.mxu0 0.0
    %731 = vmatpush.xpose.msra.mxu0 0.0
    %732 = vmatpush.xpose.msra.mxu0 0.0
    %733 = vmatpush.xpose.msra.mxu0 0.0
    %734 = vmatpush.xpose.msra.mxu0 0.0
    %735 = vmatpush.xpose.msra.mxu0 0.0
    %736 = vmatpush.xpose.msra.mxu0 0.0
    %737 = vmatpush.xpose.msra.mxu0 0.0
    %738 = vmatpush.xpose.msra.mxu0 0.0
    %739 = vmatpush.xpose.msra.mxu0 0.0
    %740 = vmatpush.xpose.msra.mxu0 0.0
    %741 = vmatpush.xpose.msra.mxu0 0.0
    %742 = vmatpush.xpose.msra.mxu0 %v725
    %743 = vmatmul.f32.gmra.mxu0 %v723
    %v744 = vpop.f32.mrf.mxu0
    %v745 = vadd.f32 0.0, %v744
    %746 = vdwg.mxu0
    %v747 = vmul.f32 %v563, 0.35355338
    %v748 = vmul.f32 %v589, 0.35355338
    %v749 = vmul.f32 %v615, 0.35355338
    %v750 = vmul.f32 %v641, 0.35355338
    %v751 = vmul.f32 %v667, 0.35355338
    %v752 = vmul.f32 %v693, 0.35355338
    %v753 = vmul.f32 %v719, 0.35355338
    %v754 = vmul.f32 %v745, 0.35355338
    %v755 = vsel %vm540, %v747, -inf
    %756 = vmax.xlane.f32.xlu0 %v755
    %v757 = vpop.xlane.xlu0 %756
    %v758 = vsel %vm540, %v748, -inf
    %759 = vmax.xlane.f32.xlu0 %v758
    %v760 = vpop.xlane.xlu0 %759
    %v761 = vsel %vm540, %v749, -inf
    %762 = vmax.xlane.f32.xlu0 %v761
    %v763 = vpop.xlane.xlu0 %762
    %v764 = vsel %vm540, %v750, -inf
    %765 = vmax.xlane.f32.xlu0 %v764
    %v766 = vpop.xlane.xlu0 %765
    %v767 = vsel %vm540, %v751, -inf
    %768 = vmax.xlane.f32.xlu0 %v767
    %v769 = vpop.xlane.xlu0 %768
    %v770 = vsel %vm540, %v752, -inf
    %771 = vmax.xlane.f32.xlu0 %v770
    %v772 = vpop.xlane.xlu0 %771
    %v773 = vsel %vm540, %v753, -inf
    %774 = vmax.xlane.f32.xlu0 %v773
    %v775 = vpop.xlane.xlu0 %774
    %v776 = vsel %vm540, %v754, -inf
    %777 = vmax.xlane.f32.xlu0 %v776
    %v778 = vpop.xlane.xlu0 %777
    %v779 = vsub.f32 %v747, %v757
    %v780 = vsub.f32 %v748, %v760
    %v781 = vsub.f32 %v749, %v763
    %v782 = vsub.f32 %v750, %v766
    %v783 = vsub.f32 %v751, %v769
    %v784 = vsub.f32 %v752, %v772
    %v785 = vsub.f32 %v753, %v775
    %v786 = vsub.f32 %v754, %v778
    %v787 = vmul.f32 %v779, 1.442695
    %v788 = vpow.pop %v787
    %v789 = vmul.f32 %v780, 1.442695
    %v790 = vpow.pop %v789
    %v791 = vmul.f32 %v781, 1.442695
    %v792 = vpow.pop %v791
    %v793 = vmul.f32 %v782, 1.442695
    %v794 = vpow.pop %v793
    %v795 = vmul.f32 %v783, 1.442695
    %v796 = vpow.pop %v795
    %v797 = vmul.f32 %v784, 1.442695
    %v798 = vpow.pop %v797
    %v799 = vmul.f32 %v785, 1.442695
    %v800 = vpow.pop %v799
    %v801 = vmul.f32 %v786, 1.442695
    %v802 = vpow.pop %v801
    %v803 = vsel %vm540, %v788, 0.0
    %804 = vadd.xlane.f32.xlu0 %v803
    %v805 = vpop.xlane.xlu0 %804
    %v806 = vsel %vm540, %v790, 0.0
    %807 = vadd.xlane.f32.xlu0 %v806
    %v808 = vpop.xlane.xlu0 %807
    %v809 = vsel %vm540, %v792, 0.0
    %810 = vadd.xlane.f32.xlu0 %v809
    %v811 = vpop.xlane.xlu0 %810
    %v812 = vsel %vm540, %v794, 0.0
    %813 = vadd.xlane.f32.xlu0 %v812
    %v814 = vpop.xlane.xlu0 %813
    %v815 = vsel %vm540, %v796, 0.0
    %816 = vadd.xlane.f32.xlu0 %v815
    %v817 = vpop.xlane.xlu0 %816
    %v818 = vsel %vm540, %v798, 0.0
    %819 = vadd.xlane.f32.xlu0 %v818
    %v820 = vpop.xlane.xlu0 %819
    %v821 = vsel %vm540, %v800, 0.0
    %822 = vadd.xlane.f32.xlu0 %v821
    %v823 = vpop.xlane.xlu0 %822
    %v824 = vsel %vm540, %v802, 0.0
    %825 = vadd.xlane.f32.xlu0 %v824
    %v826 = vpop.xlane.xlu0 %825
    %v827 = vrcp.pop %v805
    %v828 = vmul.f32 %v805, %v827
    %v829 = vsub.f32 1.0, %v828
    %v830 = vmul.f32 %v827, %v829
    %v831 = vadd.f32 %v827, %v830
    %vm832 = vweird.f32 %v805
    %vm833 = vweird.f32 %v827
    %vm834 = vmor %vm832, %vm833
    %v835 = vsel %vm834, %v827, %v831
    %v836 = vand.u32 2147483647, %v805
    %vm837 = vcmp.eq.f32.partialorder %v836, 8.507059e+37
    %v838 = vand.u32 %v805, 2147483648
    %v839 = vor.u32 1.1754944e-38, %v838
    %v840 = vsel %vm837, %v839, %v835
    %v841 = vmul.f32 %v788, %v840
    %v842 = vrcp.pop %v808
    %v843 = vmul.f32 %v808, %v842
    %v844 = vsub.f32 1.0, %v843
    %v845 = vmul.f32 %v842, %v844
    %v846 = vadd.f32 %v842, %v845
    %vm847 = vweird.f32 %v808
    %vm848 = vweird.f32 %v842
    %vm849 = vmor %vm847, %vm848
    %v850 = vsel %vm849, %v842, %v846
    %v851 = vand.u32 2147483647, %v808
    %vm852 = vcmp.eq.f32.partialorder %v851, 8.507059e+37
    %v853 = vand.u32 %v808, 2147483648
    %v854 = vor.u32 1.1754944e-38, %v853
    %v855 = vsel %vm852, %v854, %v850
    %v856 = vmul.f32 %v790, %v855
    %v857 = vrcp.pop %v811
    %v858 = vmul.f32 %v811, %v857
    %v859 = vsub.f32 1.0, %v858
    %v860 = vmul.f32 %v857, %v859
    %v861 = vadd.f32 %v857, %v860
    %vm862 = vweird.f32 %v811
    %vm863 = vweird.f32 %v857
    %vm864 = vmor %vm862, %vm863
    %v865 = vsel %vm864, %v857, %v861
    %v866 = vand.u32 2147483647, %v811
    %vm867 = vcmp.eq.f32.partialorder %v866, 8.507059e+37
    %v868 = vand.u32 %v811, 2147483648
    %v869 = vor.u32 1.1754944e-38, %v868
    %v870 = vsel %vm867, %v869, %v865
    %v871 = vmul.f32 %v792, %v870
    %v872 = vrcp.pop %v814
    %v873 = vmul.f32 %v814, %v872
    %v874 = vsub.f32 1.0, %v873
    %v875 = vmul.f32 %v872, %v874
    %v876 = vadd.f32 %v872, %v875
    %vm877 = vweird.f32 %v814
    %vm878 = vweird.f32 %v872
    %vm879 = vmor %vm877, %vm878
    %v880 = vsel %vm879, %v872, %v876
    %v881 = vand.u32 2147483647, %v814
    %vm882 = vcmp.eq.f32.partialorder %v881, 8.507059e+37
    %v883 = vand.u32 %v814, 2147483648
    %v884 = vor.u32 1.1754944e-38, %v883
    %v885 = vsel %vm882, %v884, %v880
    %v886 = vmul.f32 %v794, %v885
    %v887 = vrcp.pop %v817
    %v888 = vmul.f32 %v817, %v887
    %v889 = vsub.f32 1.0, %v888
    %v890 = vmul.f32 %v887, %v889
    %v891 = vadd.f32 %v887, %v890
    %vm892 = vweird.f32 %v817
    %vm893 = vweird.f32 %v887
    %vm894 = vmor %vm892, %vm893
    %v895 = vsel %vm894, %v887, %v891
    %v896 = vand.u32 2147483647, %v817
    %vm897 = vcmp.eq.f32.partialorder %v896, 8.507059e+37
    %v898 = vand.u32 %v817, 2147483648
    %v899 = vor.u32 1.1754944e-38, %v898
    %v900 = vsel %vm897, %v899, %v895
    %v901 = vmul.f32 %v796, %v900
    %v902 = vrcp.pop %v820
    %v903 = vmul.f32 %v820, %v902
    %v904 = vsub.f32 1.0, %v903
    %v905 = vmul.f32 %v902, %v904
    %v906 = vadd.f32 %v902, %v905
    %vm907 = vweird.f32 %v820
    %vm908 = vweird.f32 %v902
    %vm909 = vmor %vm907, %vm908
    %v910 = vsel %vm909, %v902, %v906
    %v911 = vand.u32 2147483647, %v820
    %vm912 = vcmp.eq.f32.partialorder %v911, 8.507059e+37
    %v913 = vand.u32 %v820, 2147483648
    %v914 = vor.u32 1.1754944e-38, %v913
    %v915 = vsel %vm912, %v914, %v910
    %v916 = vmul.f32 %v798, %v915
    %v917 = vrcp.pop %v823
    %v918 = vmul.f32 %v823, %v917
    %v919 = vsub.f32 1.0, %v918
    %v920 = vmul.f32 %v917, %v919
    %v921 = vadd.f32 %v917, %v920
    %vm922 = vweird.f32 %v823
    %vm923 = vweird.f32 %v917
    %vm924 = vmor %vm922, %vm923
    %v925 = vsel %vm924, %v917, %v921
    %v926 = vand.u32 2147483647, %v823
    %vm927 = vcmp.eq.f32.partialorder %v926, 8.507059e+37
    %v928 = vand.u32 %v823, 2147483648
    %v929 = vor.u32 1.1754944e-38, %v928
    %v930 = vsel %vm927, %v929, %v925
    %v931 = vmul.f32 %v800, %v930
    %v932 = vrcp.pop %v826
    %v933 = vmul.f32 %v826, %v932
    %v934 = vsub.f32 1.0, %v933
    %v935 = vmul.f32 %v932, %v934
    %v936 = vadd.f32 %v932, %v935
    %vm937 = vweird.f32 %v826
    %vm938 = vweird.f32 %v932
    %vm939 = vmor %vm937, %vm938
    %v940 = vsel %vm939, %v932, %v936
    %v941 = vand.u32 2147483647, %v826
    %vm942 = vcmp.eq.f32.partialorder %v941, 8.507059e+37
    %v943 = vand.u32 %v826, 2147483648
    %v944 = vor.u32 1.1754944e-38, %v943
    %v945 = vsel %vm942, %v944, %v940
    %v946 = vmul.f32 %v802, %v945
    %947 = vrot.lane.b32.xlu0 %v514, 64
    %v948 = vpop.permute.xlu0 %947
    %v951 = vsel %vm540, %v841, 0
    %953 = vmatpush.msra.mxu0 0.0
    %954 = vmatpush.msra.mxu0 0.0
    %955 = vmatpush.msra.mxu0 0.0
    %956 = vmatpush.msra.mxu0 0.0
    %957 = vmatpush.msra.mxu0 0.0
    %958 = vmatpush.msra.mxu0 0.0
    %959 = vmatpush.msra.mxu0 0.0
    %960 = vmatpush.msra.mxu0 0.0
    %961 = vmatpush.msra.mxu0 0.0
    %962 = vmatpush.msra.mxu0 0.0
    %963 = vmatpush.msra.mxu0 0.0
    %964 = vmatpush.msra.mxu0 0.0
    %965 = vmatpush.msra.mxu0 0.0
    %966 = vmatpush.msra.mxu0 0.0
    %967 = vmatpush.msra.mxu0 0.0
    %968 = vmatpush.msra.mxu0 %v948
    %969 = vmatmul.f32.gmra.mxu0 %v951
    %v970 = vpop.f32.mrf.mxu0
    %v971 = vadd.f32 0.0, %v970
    %972 = vdwg.mxu0
    %973 = vrot.lane.b32.xlu0 %v517, 64
    %v974 = vpop.permute.xlu0 %973
    %v977 = vsel %vm540, %v856, 0
    %979 = vmatpush.msra.mxu0 0.0
    %980 = vmatpush.msra.mxu0 0.0
    %981 = vmatpush.msra.mxu0 0.0
    %982 = vmatpush.msra.mxu0 0.0
    %983 = vmatpush.msra.mxu0 0.0
    %984 = vmatpush.msra.mxu0 0.0
    %985 = vmatpush.msra.mxu0 0.0
    %986 = vmatpush.msra.mxu0 0.0
    %987 = vmatpush.msra.mxu0 0.0
    %988 = vmatpush.msra.mxu0 0.0
    %989 = vmatpush.msra.mxu0 0.0
    %990 = vmatpush.msra.mxu0 0.0
    %991 = vmatpush.msra.mxu0 0.0
    %992 = vmatpush.msra.mxu0 0.0
    %993 = vmatpush.msra.mxu0 0.0
    %994 = vmatpush.msra.mxu0 %v974
    %995 = vmatmul.f32.gmra.mxu0 %v977
    %v996 = vpop.f32.mrf.mxu0
    %v997 = vadd.f32 0.0, %v996
    %998 = vdwg.mxu0
    %999 = vrot.lane.b32.xlu0 %v527, 64
    %v1000 = vpop.permute.xlu0 %999
    %v1003 = vsel %vm540, %v871, 0
    %1005 = vmatpush.msra.mxu0 0.0
    %1006 = vmatpush.msra.mxu0 0.0
    %1007 = vmatpush.msra.mxu0 0.0
    %1008 = vmatpush.msra.mxu0 0.0
    %1009 = vmatpush.msra.mxu0 0.0
    %1010 = vmatpush.msra.mxu0 0.0
    %1011 = vmatpush.msra.mxu0 0.0
    %1012 = vmatpush.msra.mxu0 0.0
    %1013 = vmatpush.msra.mxu0 0.0
    %1014 = vmatpush.msra.mxu0 0.0
    %1015 = vmatpush.msra.mxu0 0.0
    %1016 = vmatpush.msra.mxu0 0.0
    %1017 = vmatpush.msra.mxu0 0.0
    %1018 = vmatpush.msra.mxu0 0.0
    %1019 = vmatpush.msra.mxu0 0.0
    %1020 = vmatpush.msra.mxu0 %v1000
    %1021 = vmatmul.f32.gmra.mxu0 %v1003
    %v1022 = vpop.f32.mrf.mxu0
    %v1023 = vadd.f32 0.0, %v1022
    %1024 = vdwg.mxu0
    %1025 = vrot.lane.b32.xlu0 %v529, 64
    %v1026 = vpop.permute.xlu0 %1025
    %v1029 = vsel %vm540, %v886, 0
    %1031 = vmatpush.msra.mxu0 0.0
    %1032 = vmatpush.msra.mxu0 0.0
    %1033 = vmatpush.msra.mxu0 0.0
    %1034 = vmatpush.msra.mxu0 0.0
    %1035 = vmatpush.msra.mxu0 0.0
    %1036 = vmatpush.msra.mxu0 0.0
    %1037 = vmatpush.msra.mxu0 0.0
    %1038 = vmatpush.msra.mxu0 0.0
    %1039 = vmatpush.msra.mxu0 0.0
    %1040 = vmatpush.msra.mxu0 0.0
    %1041 = vmatpush.msra.mxu0 0.0
    %1042 = vmatpush.msra.mxu0 0.0
    %1043 = vmatpush.msra.mxu0 0.0
    %1044 = vmatpush.msra.mxu0 0.0
    %1045 = vmatpush.msra.mxu0 0.0
    %1046 = vmatpush.msra.mxu0 %v1026
    %1047 = vmatmul.f32.gmra.mxu0 %v1029
    %v1048 = vpop.f32.mrf.mxu0
    %v1049 = vadd.f32 0.0, %v1048
    %1050 = vdwg.mxu0
    %1051 = vrot.lane.b32.xlu0 %v531, 64
    %v1052 = vpop.permute.xlu0 %1051
    %v1055 = vsel %vm540, %v901, 0
    %1057 = vmatpush.msra.mxu0 0.0
    %1058 = vmatpush.msra.mxu0 0.0
    %1059 = vmatpush.msra.mxu0 0.0
    %1060 = vmatpush.msra.mxu0 0.0
    %1061 = vmatpush.msra.mxu0 0.0
    %1062 = vmatpush.msra.mxu0 0.0
    %1063 = vmatpush.msra.mxu0 0.0
    %1064 = vmatpush.msra.mxu0 0.0
    %1065 = vmatpush.msra.mxu0 0.0
    %1066 = vmatpush.msra.mxu0 0.0
    %1067 = vmatpush.msra.mxu0 0.0
    %1068 = vmatpush.msra.mxu0 0.0
    %1069 = vmatpush.msra.mxu0 0.0
    %1070 = vmatpush.msra.mxu0 0.0
    %1071 = vmatpush.msra.mxu0 0.0
    %1072 = vmatpush.msra.mxu0 %v1052
    %1073 = vmatmul.f32.gmra.mxu0 %v1055
    %v1074 = vpop.f32.mrf.mxu0
    %v1075 = vadd.f32 0.0, %v1074
    %1076 = vdwg.mxu0
    %1077 = vrot.lane.b32.xlu0 %v533, 64
    %v1078 = vpop.permute.xlu0 %1077
    %v1081 = vsel %vm540, %v916, 0
    %1083 = vmatpush.msra.mxu0 0.0
    %1084 = vmatpush.msra.mxu0 0.0
    %1085 = vmatpush.msra.mxu0 0.0
    %1086 = vmatpush.msra.mxu0 0.0
    %1087 = vmatpush.msra.mxu0 0.0
    %1088 = vmatpush.msra.mxu0 0.0
    %1089 = vmatpush.msra.mxu0 0.0
    %1090 = vmatpush.msra.mxu0 0.0
    %1091 = vmatpush.msra.mxu0 0.0
    %1092 = vmatpush.msra.mxu0 0.0
    %1093 = vmatpush.msra.mxu0 0.0
    %1094 = vmatpush.msra.mxu0 0.0
    %1095 = vmatpush.msra.mxu0 0.0
    %1096 = vmatpush.msra.mxu0 0.0
    %1097 = vmatpush.msra.mxu0 0.0
    %1098 = vmatpush.msra.mxu0 %v1078
    %1099 = vmatmul.f32.gmra.mxu0 %v1081
    %v1100 = vpop.f32.mrf.mxu0
    %v1101 = vadd.f32 0.0, %v1100
    %1102 = vdwg.mxu0
    %1103 = vrot.lane.b32.xlu0 %v535, 64
    %v1104 = vpop.permute.xlu0 %1103
    %v1107 = vsel %vm540, %v931, 0
    %1109 = vmatpush.msra.mxu0 0.0
    %1110 = vmatpush.msra.mxu0 0.0
    %1111 = vmatpush.msra.mxu0 0.0
    %1112 = vmatpush.msra.mxu0 0.0
    %1113 = vmatpush.msra.mxu0 0.0
    %1114 = vmatpush.msra.mxu0 0.0
    %1115 = vmatpush.msra.mxu0 0.0
    %1116 = vmatpush.msra.mxu0 0.0
    %1117 = vmatpush.msra.mxu0 0.0
    %1118 = vmatpush.msra.mxu0 0.0
    %1119 = vmatpush.msra.mxu0 0.0
    %1120 = vmatpush.msra.mxu0 0.0
    %1121 = vmatpush.msra.mxu0 0.0
    %1122 = vmatpush.msra.mxu0 0.0
    %1123 = vmatpush.msra.mxu0 0.0
    %1124 = vmatpush.msra.mxu0 %v1104
    %1125 = vmatmul.f32.gmra.mxu0 %v1107
    %v1126 = vpop.f32.mrf.mxu0
    %v1127 = vadd.f32 0.0, %v1126
    %1128 = vdwg.mxu0
    %1129 = vrot.lane.b32.xlu0 %v537, 64
    %v1130 = vpop.permute.xlu0 %1129
    %v1133 = vsel %vm540, %v946, 0
    %1135 = vmatpush.msra.mxu0 0.0
    %1136 = vmatpush.msra.mxu0 0.0
    %1137 = vmatpush.msra.mxu0 0.0
    %1138 = vmatpush.msra.mxu0 0.0
    %1139 = vmatpush.msra.mxu0 0.0
    %1140 = vmatpush.msra.mxu0 0.0
    %1141 = vmatpush.msra.mxu0 0.0
    %1142 = vmatpush.msra.mxu0 0.0
    %1143 = vmatpush.msra.mxu0 0.0
    %1144 = vmatpush.msra.mxu0 0.0
    %1145 = vmatpush.msra.mxu0 0.0
    %1146 = vmatpush.msra.mxu0 0.0
    %1147 = vmatpush.msra.mxu0 0.0
    %1148 = vmatpush.msra.mxu0 0.0
    %1149 = vmatpush.msra.mxu0 0.0
    %1150 = vmatpush.msra.mxu0 %v1130
    %1151 = vmatmul.f32.gmra.mxu0 %v1133
    %v1152 = vpop.f32.mrf.mxu0
    %v1153 = vadd.f32 0.0, %v1152
    %1154 = vdwg.mxu0
    %1157 = vrot.lane.b32.xlu0 %v1023, 8
    %v1158 = vpop.permute.xlu0 %1157
    %1159 = vrot.lane.b32.xlu0 %v1049, 8
    %v1160 = vpop.permute.xlu0 %1159
    %1165 = vrot.lane.b32.xlu0 %v1075, 16
    %v1166 = vpop.permute.xlu0 %1165
    %1167 = vrot.lane.b32.xlu0 %v1101, 16
    %v1168 = vpop.permute.xlu0 %1167
    %1173 = vrot.lane.b32.xlu0 %v1127, 24
    %v1174 = vpop.permute.xlu0 %1173
    %1175 = vrot.lane.b32.xlu0 %v1153, 24
    %v1176 = vpop.permute.xlu0 %1175
    %v1179 = vsel %vm540, %v971, %v1158
    %v1180 = vsel %vm540, %v997, %v1160
    %vm1181 = vcmask 130048
    %v1182 = vsel %vm1181, %v1179, %v1166
    %v1183 = vsel %vm1181, %v1180, %v1168
    %vm1184 = vcmask 195584
    %v1185 = vsel %vm1184, %v1182, %v1174
    %v1186 = vsel %vm1184, %v1183, %v1176
    %v1188 = vperm.slane %v523, 0
    %v1191 = vsel %vm489, %v1185, 0
    %v1194 = vsel %vm489, %v1186, 0
    %1196 = vmatpush.msra.mxu0 0.0
    %1197 = vmatpush.msra.mxu0 0.0
    %1198 = vmatpush.msra.mxu0 0.0
    %1199 = vmatpush.msra.mxu0 0.0
    %1200 = vmatpush.msra.mxu0 0.0
    %1201 = vmatpush.msra.mxu0 0.0
    %1202 = vmatpush.msra.mxu0 0.0
    %1203 = vmatpush.msra.mxu0 0.0
    %1204 = vmatpush.msra.mxu0 0.0
    %1205 = vmatpush.msra.mxu0 0.0
    %1206 = vmatpush.msra.mxu0 0.0
    %1207 = vmatpush.msra.mxu0 0.0
    %1208 = vmatpush.msra.mxu0 %v522
    %1209 = vmatpush.msra.mxu0 %v521
    %1210 = vmatpush.msra.mxu0 %v520
    %1211 = vmatpush.msra.mxu0 %v519
    %1212 = vmatmul.f32.gmra.mxu0 %v1191
    %v1213 = vpop.f32.mrf.mxu0
    %v1214 = vadd.f32 %v1188, %v1213
    %1215 = vmatmul.f32.gmra.mxu0 %v1194
    %v1216 = vpop.f32.mrf.mxu0
    %v1217 = vadd.f32 %v1188, %v1216
    %1218 = vdwg.mxu0
    %v1219 = vadd.f32 %v479, %v1214
    %v1220 = vadd.f32 %v480, %v1217
    %v1221 = vld [vmem:[%s11] sm:$0x1]
    %v1222 = vld [vmem:[%s13] sm:$0x1]
    %v1223 = vsel %vm489, %v1219, 0.0
    %1224 = vadd.xlane.f32.xlu0 %v1223
    %v1225 = vpop.xlane.xlu0 %1224
    %v1226 = vsel %vm489, %v1220, 0.0
    %1227 = vadd.xlane.f32.xlu0 %v1226
    %v1228 = vpop.xlane.xlu0 %1227
    %v1229 = vrcp.pop 32.0
    %v1230 = vmul.f32 32.0, %v1229
    %v1231 = vsub.f32 1.0, %v1230
    %v1232 = vmul.f32 %v1229, %v1231
    %v1233 = vadd.f32 %v1229, %v1232
    %vm1234 = vweird.f32 %v1229
    %v1235 = vsel %vm1234, %v1229, %v1233
    %v1236 = vmul.f32 %v1225, %v1235
    %v1237 = vmul.f32 %v1228, %v1235
    %v1238 = vsub.f32 %v1219, %v1236
    %v1239 = vsub.f32 %v1220, %v1237
    %v1240 = vmul.f32 %v1238, %v1238
    %v1241 = vmul.f32 %v1239, %v1239
    %v1242 = vsel %vm489, %v1240, 0.0
    %1243 = vadd.xlane.f32.xlu0 %v1242
    %v1244 = vpop.xlane.xlu0 %1243
    %v1245 = vsel %vm489, %v1241, 0.0
    %1246 = vadd.xlane.f32.xlu0 %v1245
    %v1247 = vpop.xlane.xlu0 %1246
    %v1248 = vmul.f32 %v1244, %v1235
    %v1249 = vmul.f32 %v1247, %v1235
    %v1250 = vadd.f32 %v1248, 1e-05
    %v1251 = vadd.f32 %v1249, 1e-05
    %v1252 = vrsqrt.pop %v1250
    %v1253 = vmul.f32 %v1252, %v1250
    %v1254 = vmul.f32 %v1253, %v1252
    %v1255 = vmul.f32 0.5, %v1254
    %v1256 = vsub.f32 1.5, %v1255
    %v1257 = vmul.f32 %v1252, %v1256
    %vm1258 = vweird.f32 %v1250
    %vm1259 = vweird.f32 %v1252
    %vm1260 = vmor %vm1258, %vm1259
    %v1261 = vsel %vm1260, %v1252, %v1257
    %v1262 = vrsqrt.pop %v1251
    %v1263 = vmul.f32 %v1262, %v1251
    %v1264 = vmul.f32 %v1263, %v1262
    %v1265 = vmul.f32 0.5, %v1264
    %v1266 = vsub.f32 1.5, %v1265
    %v1267 = vmul.f32 %v1262, %v1266
    %vm1268 = vweird.f32 %v1251
    %vm1269 = vweird.f32 %v1262
    %vm1270 = vmor %vm1268, %vm1269
    %v1271 = vsel %vm1270, %v1262, %v1267
    %v1272 = vmul.f32 %v1238, %v1261
    %v1273 = vmul.f32 %v1239, %v1271
    %v1275 = vperm.slane %v1221, 0
    %v1277 = vmul.f32 %v1272, %v1275
    %v1278 = vmul.f32 %v1273, %v1275
    %v1280 = vperm.slane %v1222, 0
    %v1282 = vadd.f32 %v1277, %v1280
    %v1283 = vadd.f32 %v1278, %v1280
    %v1284 = vld [vmem:[%s15] sm:$0xff]
    %v1285 = vld [vmem:[%s15 + $0x8] sm:$0xff]
    %v1286 = vld [vmem:[%s15 + $0x10] sm:$0xff]
    %v1287 = vld [vmem:[%s15 + $0x18] sm:$0xff]
    %v1288 = vld [vmem:[%s17] sm:$0x1]
    %v1289 = vld [vmem:[%s19] sm:$0xff]
    %v1290 = vld [vmem:[%s19 + $0x8] sm:$0xff]
    %v1291 = vld [vmem:[%s19 + $0x10] sm:$0xff]
    %v1292 = vld [vmem:[%s19 + $0x18] sm:$0xff]
    %v1293 = vld [vmem:[%s19 + $0x20] sm:$0xff]
    %v1294 = vld [vmem:[%s19 + $0x28] sm:$0xff]
    %v1295 = vld [vmem:[%s19 + $0x30] sm:$0xff]
    %v1296 = vld [vmem:[%s19 + $0x38] sm:$0xff]
    %v1297 = vld [vmem:[%s21] sm:$0x1]
    %v1299 = vperm.slane %v1288, 0
    %v1302 = vsel %vm489, %v1282, 0
    %v1305 = vsel %vm489, %v1283, 0
    %1307 = vmatpush.msra.mxu0 0.0
    %1308 = vmatpush.msra.mxu0 0.0
    %1309 = vmatpush.msra.mxu0 0.0
    %1310 = vmatpush.msra.mxu0 0.0
    %1311 = vmatpush.msra.mxu0 0.0
    %1312 = vmatpush.msra.mxu0 0.0
    %1313 = vmatpush.msra.mxu0 0.0
    %1314 = vmatpush.msra.mxu0 0.0
    %1315 = vmatpush.msra.mxu0 0.0
    %1316 = vmatpush.msra.mxu0 0.0
    %1317 = vmatpush.msra.mxu0 0.0
    %1318 = vmatpush.msra.mxu0 0.0
    %1319 = vmatpush.msra.mxu0 %v1287
    %1320 = vmatpush.msra.mxu0 %v1286
    %1321 = vmatpush.msra.mxu0 %v1285
    %1322 = vmatpush.msra.mxu0 %v1284
    %1323 = vmatmul.f32.gmra.mxu0 %v1302
    %v1324 = vpop.f32.mrf.mxu0
    %v1325 = vadd.f32 %v1299, %v1324
    %1326 = vmatmul.f32.gmra.mxu0 %v1305
    %v1327 = vpop.f32.mrf.mxu0
    %v1328 = vadd.f32 %v1299, %v1327
    %1329 = vdwg.mxu0
    %v1330 = vmax.f32 %v1325, 0.0
    %v1331 = vmax.f32 %v1328, 0.0
    %v1333 = vperm.slane %v1297, 0
    %vm1335 = vcmask 523264
    %v1337 = vsel %vm1335, %v1330, 0
    %v1340 = vsel %vm1335, %v1331, 0
    %1342 = vmatpush.msra.mxu0 0.0
    %1343 = vmatpush.msra.mxu0 0.0
    %1344 = vmatpush.msra.mxu0 0.0
    %1345 = vmatpush.msra.mxu0 0.0
    %1346 = vmatpush.msra.mxu0 0.0
    %1347 = vmatpush.msra.mxu0 0.0
    %1348 = vmatpush.msra.mxu0 0.0
    %1349 = vmatpush.msra.mxu0 0.0
    %1350 = vmatpush.msra.mxu0 %v1296
    %1351 = vmatpush.msra.mxu0 %v1295
    %1352 = vmatpush.msra.mxu0 %v1294
    %1353 = vmatpush.msra.mxu0 %v1293
    %1354 = vmatpush.msra.mxu0 %v1292
    %1355 = vmatpush.msra.mxu0 %v1291
    %1356 = vmatpush.msra.mxu0 %v1290
    %1357 = vmatpush.msra.mxu0 %v1289
    %1358 = vmatmul.f32.gmra.mxu0 %v1337
    %v1359 = vpop.f32.mrf.mxu0
    %v1360 = vadd.f32 %v1333, %v1359
    %1361 = vmatmul.f32.gmra.mxu0 %v1340
    %v1362 = vpop.f32.mrf.mxu0
    %v1363 = vadd.f32 %v1333, %v1362
    %1364 = vdwg.mxu0
    %v1365 = vadd.f32 %v1282, %v1360
    %v1366 = vadd.f32 %v1283, %v1363
    %v1367 = vld [vmem:[%s23] sm:$0x1]
    %v1368 = vld [vmem:[%s25] sm:$0x1]
    %v1369 = vsel %vm489, %v1365, 0.0
    %1370 = vadd.xlane.f32.xlu0 %v1369
    %v1371 = vpop.xlane.xlu0 %1370
    %v1372 = vsel %vm489, %v1366, 0.0
    %1373 = vadd.xlane.f32.xlu0 %v1372
    %v1374 = vpop.xlane.xlu0 %1373
    %v1375 = vmul.f32 %v1371, %v1235
    %v1376 = vmul.f32 %v1374, %v1235
    %v1377 = vsub.f32 %v1365, %v1375
    %v1378 = vsub.f32 %v1366, %v1376
    %v1379 = vmul.f32 %v1377, %v1377
    %v1380 = vmul.f32 %v1378, %v1378
    %v1381 = vsel %vm489, %v1379, 0.0
    %1382 = vadd.xlane.f32.xlu0 %v1381
    %v1383 = vpop.xlane.xlu0 %1382
    %v1384 = vsel %vm489, %v1380, 0.0
    %1385 = vadd.xlane.f32.xlu0 %v1384
    %v1386 = vpop.xlane.xlu0 %1385
    %v1387 = vmul.f32 %v1383, %v1235
    %v1388 = vmul.f32 %v1386, %v1235
    %v1389 = vadd.f32 %v1387, 1e-05
    %v1390 = vadd.f32 %v1388, 1e-05
    %v1391 = vrsqrt.pop %v1389
    %v1392 = vmul.f32 %v1391, %v1389
    %v1393 = vmul.f32 %v1392, %v1391
    %v1394 = vmul.f32 0.5, %v1393
    %v1395 = vsub.f32 1.5, %v1394
    %v1396 = vmul.f32 %v1391, %v1395
    %vm1397 = vweird.f32 %v1389
    %vm1398 = vweird.f32 %v1391
    %vm1399 = vmor %vm1397, %vm1398
    %v1400 = vsel %vm1399, %v1391, %v1396
    %v1401 = vrsqrt.pop %v1390
    %v1402 = vmul.f32 %v1401, %v1390
    %v1403 = vmul.f32 %v1402, %v1401
    %v1404 = vmul.f32 0.5, %v1403
    %v1405 = vsub.f32 1.5, %v1404
    %v1406 = vmul.f32 %v1401, %v1405
    %vm1407 = vweird.f32 %v1390
    %vm1408 = vweird.f32 %v1401
    %vm1409 = vmor %vm1407, %vm1408
    %v1410 = vsel %vm1409, %v1401, %v1406
    %v1411 = vmul.f32 %v1377, %v1400
    %v1412 = vmul.f32 %v1378, %v1410
    %v1414 = vperm.slane %v1367, 0
    %v1416 = vmul.f32 %v1411, %v1414
    %v1417 = vmul.f32 %v1412, %v1414
    %v1419 = vperm.slane %v1368, 0
    %v1421 = vadd.f32 %v1416, %v1419
    %v1422 = vadd.f32 %v1417, %v1419
    %s1423 = scalar_lea.vmem %s3, 32
    %v1424 = vld [vmem:[%s1423] sm:$0xff]
    %v1425 = vld [vmem:[%s1423 + $0x8] sm:$0xff]
    %v1426 = vld [vmem:[%s1423 + $0x10] sm:$0xff]
    %v1427 = vld [vmem:[%s1423 + $0x18] sm:$0xff]
    %s1428 = scalar_lea.vmem %s5, 1
    %v1429 = vld [vmem:[%s1428] sm:$0x1]
    %v1431 = vperm.slane %v1429, 0
    %v1434 = vsel %vm489, %v1421, 0
    %v1437 = vsel %vm489, %v1422, 0
    %1439 = vmatpush.msra.mxu0 0.0
    %1440 = vmatpush.msra.mxu0 0.0
    %1441 = vmatpush.msra.mxu0 0.0
    %1442 = vmatpush.msra.mxu0 0.0
    %1443 = vmatpush.msra.mxu0 0.0
    %1444 = vmatpush.msra.mxu0 0.0
    %1445 = vmatpush.msra.mxu0 0.0
    %1446 = vmatpush.msra.mxu0 0.0
    %1447 = vmatpush.msra.mxu0 0.0
    %1448 = vmatpush.msra.mxu0 0.0
    %1449 = vmatpush.msra.mxu0 0.0
    %1450 = vmatpush.msra.mxu0 0.0
    %1451 = vmatpush.msra.mxu0 %v1427
    %1452 = vmatpush.msra.mxu0 %v1426
    %1453 = vmatpush.msra.mxu0 %v1425
    %1454 = vmatpush.msra.mxu0 %v1424
    %1455 = vmatmul.f32.gmra.mxu0 %v1434
    %v1456 = vpop.f32.mrf.mxu0
    %v1457 = vadd.f32 %v1431, %v1456
    %1458 = vmatmul.f32.gmra.mxu0 %v1437
    %v1459 = vpop.f32.mrf.mxu0
    %v1460 = vadd.f32 %v1431, %v1459
    %1461 = vdwg.mxu0
    %s1462 = scalar_lea.vmem %s7, 32
    %v1463 = vld [vmem:[%s1462] sm:$0xff]
    %v1464 = vld [vmem:[%s1462 + $0x8] sm:$0xff]
    %v1465 = vld [vmem:[%s1462 + $0x10] sm:$0xff]
    %v1466 = vld [vmem:[%s1462 + $0x18] sm:$0xff]
    %s1467 = scalar_lea.vmem %s9, 1
    %v1468 = vld [vmem:[%s1467] sm:$0x1]
    %1471 = vrot.lane.b32.xlu0 %v1457, 120
    %v1472 = vpop.permute.xlu0 %1471
    %1473 = vrot.lane.b32.xlu0 %v1460, 120
    %v1474 = vpop.permute.xlu0 %1473
    %1475 = vrot.lane.b32.xlu0 %v1457, 112
    %v1476 = vpop.permute.xlu0 %1475
    %1477 = vrot.lane.b32.xlu0 %v1460, 112
    %v1478 = vpop.permute.xlu0 %1477
    %1479 = vrot.lane.b32.xlu0 %v1457, 104
    %v1480 = vpop.permute.xlu0 %1479
    %1481 = vrot.lane.b32.xlu0 %v1460, 104
    %v1482 = vpop.permute.xlu0 %1481
    %1483 = vrot.lane.b32.xlu0 %v1457, 96
    %v1484 = vpop.permute.xlu0 %1483
    %v1485 = vsel %vm540, %v1457, 0
    %v1487 = vsel %vm540, %v1484, 0
    %1489 = vmatpush.xpose.msra.mxu0 0.0
    %1490 = vmatpush.xpose.msra.mxu0 0.0
    %1491 = vmatpush.xpose.msra.mxu0 0.0
    %1492 = vmatpush.xpose.msra.mxu0 0.0
    %1493 = vmatpush.xpose.msra.mxu0 0.0
    %1494 = vmatpush.xpose.msra.mxu0 0.0
    %1495 = vmatpush.xpose.msra.mxu0 0.0
    %1496 = vmatpush.xpose.msra.mxu0 0.0
    %1497 = vmatpush.xpose.msra.mxu0 0.0
    %1498 = vmatpush.xpose.msra.mxu0 0.0
    %1499 = vmatpush.xpose.msra.mxu0 0.0
    %1500 = vmatpush.xpose.msra.mxu0 0.0
    %1501 = vmatpush.xpose.msra.mxu0 0.0
    %1502 = vmatpush.xpose.msra.mxu0 0.0
    %1503 = vmatpush.xpose.msra.mxu0 0.0
    %1504 = vmatpush.xpose.msra.mxu0 %v1487
    %1505 = vmatmul.f32.gmra.mxu0 %v1485
    %v1506 = vpop.f32.mrf.mxu0
    %v1507 = vadd.f32 0.0, %v1506
    %1508 = vdwg.mxu0
    %1509 = vrot.lane.b32.xlu0 %v1460, 96
    %v1510 = vpop.permute.xlu0 %1509
    %v1511 = vsel %vm540, %v1460, 0
    %v1513 = vsel %vm540, %v1510, 0
    %1515 = vmatpush.xpose.msra.mxu0 0.0
    %1516 = vmatpush.xpose.msra.mxu0 0.0
    %1517 = vmatpush.xpose.msra.mxu0 0.0
    %1518 = vmatpush.xpose.msra.mxu0 0.0
    %1519 = vmatpush.xpose.msra.mxu0 0.0
    %1520 = vmatpush.xpose.msra.mxu0 0.0
    %1521 = vmatpush.xpose.msra.mxu0 0.0
    %1522 = vmatpush.xpose.msra.mxu0 0.0
    %1523 = vmatpush.xpose.msra.mxu0 0.0
    %1524 = vmatpush.xpose.msra.mxu0 0.0
    %1525 = vmatpush.xpose.msra.mxu0 0.0
    %1526 = vmatpush.xpose.msra.mxu0 0.0
    %1527 = vmatpush.xpose.msra.mxu0 0.0
    %1528 = vmatpush.xpose.msra.mxu0 0.0
    %1529 = vmatpush.xpose.msra.mxu0 0.0
    %1530 = vmatpush.xpose.msra.mxu0 %v1513
    %1531 = vmatmul.f32.gmra.mxu0 %v1511
    %v1532 = vpop.f32.mrf.mxu0
    %v1533 = vadd.f32 0.0, %v1532
    %1534 = vdwg.mxu0
    %1535 = vrot.lane.b32.xlu0 %v1472, 96
    %v1536 = vpop.permute.xlu0 %1535
    %v1537 = vsel %vm540, %v1472, 0
    %v1539 = vsel %vm540, %v1536, 0
    %1541 = vmatpush.xpose.msra.mxu0 0.0
    %1542 = vmatpush.xpose.msra.mxu0 0.0
    %1543 = vmatpush.xpose.msra.mxu0 0.0
    %1544 = vmatpush.xpose.msra.mxu0 0.0
    %1545 = vmatpush.xpose.msra.mxu0 0.0
    %1546 = vmatpush.xpose.msra.mxu0 0.0
    %1547 = vmatpush.xpose.msra.mxu0 0.0
    %1548 = vmatpush.xpose.msra.mxu0 0.0
    %1549 = vmatpush.xpose.msra.mxu0 0.0
    %1550 = vmatpush.xpose.msra.mxu0 0.0
    %1551 = vmatpush.xpose.msra.mxu0 0.0
    %1552 = vmatpush.xpose.msra.mxu0 0.0
    %1553 = vmatpush.xpose.msra.mxu0 0.0
    %1554 = vmatpush.xpose.msra.mxu0 0.0
    %1555 = vmatpush.xpose.msra.mxu0 0.0
    %1556 = vmatpush.xpose.msra.mxu0 %v1539
    %1557 = vmatmul.f32.gmra.mxu0 %v1537
    %v1558 = vpop.f32.mrf.mxu0
    %v1559 = vadd.f32 0.0, %v1558
    %1560 = vdwg.mxu0
    %1561 = vrot.lane.b32.xlu0 %v1474, 96
    %v1562 = vpop.permute.xlu0 %1561
    %v1563 = vsel %vm540, %v1474, 0
    %v1565 = vsel %vm540, %v1562, 0
    %1567 = vmatpush.xpose.msra.mxu0 0.0
    %1568 = vmatpush.xpose.msra.mxu0 0.0
    %1569 = vmatpush.xpose.msra.mxu0 0.0
    %1570 = vmatpush.xpose.msra.mxu0 0.0
    %1571 = vmatpush.xpose.msra.mxu0 0.0
    %1572 = vmatpush.xpose.msra.mxu0 0.0
    %1573 = vmatpush.xpose.msra.mxu0 0.0
    %1574 = vmatpush.xpose.msra.mxu0 0.0
    %1575 = vmatpush.xpose.msra.mxu0 0.0
    %1576 = vmatpush.xpose.msra.mxu0 0.0
    %1577 = vmatpush.xpose.msra.mxu0 0.0
    %1578 = vmatpush.xpose.msra.mxu0 0.0
    %1579 = vmatpush.xpose.msra.mxu0 0.0
    %1580 = vmatpush.xpose.msra.mxu0 0.0
    %1581 = vmatpush.xpose.msra.mxu0 0.0
    %1582 = vmatpush.xpose.msra.mxu0 %v1565
    %1583 = vmatmul.f32.gmra.mxu0 %v1563
    %v1584 = vpop.f32.mrf.mxu0
    %v1585 = vadd.f32 0.0, %v1584
    %1586 = vdwg.mxu0
    %1587 = vrot.lane.b32.xlu0 %v1476, 96
    %v1588 = vpop.permute.xlu0 %1587
    %v1589 = vsel %vm540, %v1476, 0
    %v1591 = vsel %vm540, %v1588, 0
    %1593 = vmatpush.xpose.msra.mxu0 0.0
    %1594 = vmatpush.xpose.msra.mxu0 0.0
    %1595 = vmatpush.xpose.msra.mxu0 0.0
    %1596 = vmatpush.xpose.msra.mxu0 0.0
    %1597 = vmatpush.xpose.msra.mxu0 0.0
    %1598 = vmatpush.xpose.msra.mxu0 0.0
    %1599 = vmatpush.xpose.msra.mxu0 0.0
    %1600 = vmatpush.xpose.msra.mxu0 0.0
    %1601 = vmatpush.xpose.msra.mxu0 0.0
    %1602 = vmatpush.xpose.msra.mxu0 0.0
    %1603 = vmatpush.xpose.msra.mxu0 0.0
    %1604 = vmatpush.xpose.msra.mxu0 0.0
    %1605 = vmatpush.xpose.msra.mxu0 0.0
    %1606 = vmatpush.xpose.msra.mxu0 0.0
    %1607 = vmatpush.xpose.msra.mxu0 0.0
    %1608 = vmatpush.xpose.msra.mxu0 %v1591
    %1609 = vmatmul.f32.gmra.mxu0 %v1589
    %v1610 = vpop.f32.mrf.mxu0
    %v1611 = vadd.f32 0.0, %v1610
    %1612 = vdwg.mxu0
    %1613 = vrot.lane.b32.xlu0 %v1478, 96
    %v1614 = vpop.permute.xlu0 %1613
    %v1615 = vsel %vm540, %v1478, 0
    %v1617 = vsel %vm540, %v1614, 0
    %1619 = vmatpush.xpose.msra.mxu0 0.0
    %1620 = vmatpush.xpose.msra.mxu0 0.0
    %1621 = vmatpush.xpose.msra.mxu0 0.0
    %1622 = vmatpush.xpose.msra.mxu0 0.0
    %1623 = vmatpush.xpose.msra.mxu0 0.0
    %1624 = vmatpush.xpose.msra.mxu0 0.0
    %1625 = vmatpush.xpose.msra.mxu0 0.0
    %1626 = vmatpush.xpose.msra.mxu0 0.0
    %1627 = vmatpush.xpose.msra.mxu0 0.0
    %1628 = vmatpush.xpose.msra.mxu0 0.0
    %1629 = vmatpush.xpose.msra.mxu0 0.0
    %1630 = vmatpush.xpose.msra.mxu0 0.0
    %1631 = vmatpush.xpose.msra.mxu0 0.0
    %1632 = vmatpush.xpose.msra.mxu0 0.0
    %1633 = vmatpush.xpose.msra.mxu0 0.0
    %1634 = vmatpush.xpose.msra.mxu0 %v1617
    %1635 = vmatmul.f32.gmra.mxu0 %v1615
    %v1636 = vpop.f32.mrf.mxu0
    %v1637 = vadd.f32 0.0, %v1636
    %1638 = vdwg.mxu0
    %1639 = vrot.lane.b32.xlu0 %v1480, 96
    %v1640 = vpop.permute.xlu0 %1639
    %v1641 = vsel %vm540, %v1480, 0
    %v1643 = vsel %vm540, %v1640, 0
    %1645 = vmatpush.xpose.msra.mxu0 0.0
    %1646 = vmatpush.xpose.msra.mxu0 0.0
    %1647 = vmatpush.xpose.msra.mxu0 0.0
    %1648 = vmatpush.xpose.msra.mxu0 0.0
    %1649 = vmatpush.xpose.msra.mxu0 0.0
    %1650 = vmatpush.xpose.msra.mxu0 0.0
    %1651 = vmatpush.xpose.msra.mxu0 0.0
    %1652 = vmatpush.xpose.msra.mxu0 0.0
    %1653 = vmatpush.xpose.msra.mxu0 0.0
    %1654 = vmatpush.xpose.msra.mxu0 0.0
    %1655 = vmatpush.xpose.msra.mxu0 0.0
    %1656 = vmatpush.xpose.msra.mxu0 0.0
    %1657 = vmatpush.xpose.msra.mxu0 0.0
    %1658 = vmatpush.xpose.msra.mxu0 0.0
    %1659 = vmatpush.xpose.msra.mxu0 0.0
    %1660 = vmatpush.xpose.msra.mxu0 %v1643
    %1661 = vmatmul.f32.gmra.mxu0 %v1641
    %v1662 = vpop.f32.mrf.mxu0
    %v1663 = vadd.f32 0.0, %v1662
    %1664 = vdwg.mxu0
    %1665 = vrot.lane.b32.xlu0 %v1482, 96
    %v1666 = vpop.permute.xlu0 %1665
    %v1667 = vsel %vm540, %v1482, 0
    %v1669 = vsel %vm540, %v1666, 0
    %1671 = vmatpush.xpose.msra.mxu0 0.0
    %1672 = vmatpush.xpose.msra.mxu0 0.0
    %1673 = vmatpush.xpose.msra.mxu0 0.0
    %1674 = vmatpush.xpose.msra.mxu0 0.0
    %1675 = vmatpush.xpose.msra.mxu0 0.0
    %1676 = vmatpush.xpose.msra.mxu0 0.0
    %1677 = vmatpush.xpose.msra.mxu0 0.0
    %1678 = vmatpush.xpose.msra.mxu0 0.0
    %1679 = vmatpush.xpose.msra.mxu0 0.0
    %1680 = vmatpush.xpose.msra.mxu0 0.0
    %1681 = vmatpush.xpose.msra.mxu0 0.0
    %1682 = vmatpush.xpose.msra.mxu0 0.0
    %1683 = vmatpush.xpose.msra.mxu0 0.0
    %1684 = vmatpush.xpose.msra.mxu0 0.0
    %1685 = vmatpush.xpose.msra.mxu0 0.0
    %1686 = vmatpush.xpose.msra.mxu0 %v1669
    %1687 = vmatmul.f32.gmra.mxu0 %v1667
    %v1688 = vpop.f32.mrf.mxu0
    %v1689 = vadd.f32 0.0, %v1688
    %1690 = vdwg.mxu0
    %v1691 = vmul.f32 %v1507, 0.35355338
    %v1692 = vmul.f32 %v1533, 0.35355338
    %v1693 = vmul.f32 %v1559, 0.35355338
    %v1694 = vmul.f32 %v1585, 0.35355338
    %v1695 = vmul.f32 %v1611, 0.35355338
    %v1696 = vmul.f32 %v1637, 0.35355338
    %v1697 = vmul.f32 %v1663, 0.35355338
    %v1698 = vmul.f32 %v1689, 0.35355338
    %v1699 = vsel %vm540, %v1691, -inf
    %1700 = vmax.xlane.f32.xlu0 %v1699
    %v1701 = vpop.xlane.xlu0 %1700
    %v1702 = vsel %vm540, %v1692, -inf
    %1703 = vmax.xlane.f32.xlu0 %v1702
    %v1704 = vpop.xlane.xlu0 %1703
    %v1705 = vsel %vm540, %v1693, -inf
    %1706 = vmax.xlane.f32.xlu0 %v1705
    %v1707 = vpop.xlane.xlu0 %1706
    %v1708 = vsel %vm540, %v1694, -inf
    %1709 = vmax.xlane.f32.xlu0 %v1708
    %v1710 = vpop.xlane.xlu0 %1709
    %v1711 = vsel %vm540, %v1695, -inf
    %1712 = vmax.xlane.f32.xlu0 %v1711
    %v1713 = vpop.xlane.xlu0 %1712
    %v1714 = vsel %vm540, %v1696, -inf
    %1715 = vmax.xlane.f32.xlu0 %v1714
    %v1716 = vpop.xlane.xlu0 %1715
    %v1717 = vsel %vm540, %v1697, -inf
    %1718 = vmax.xlane.f32.xlu0 %v1717
    %v1719 = vpop.xlane.xlu0 %1718
    %v1720 = vsel %vm540, %v1698, -inf
    %1721 = vmax.xlane.f32.xlu0 %v1720
    %v1722 = vpop.xlane.xlu0 %1721
    %v1723 = vsub.f32 %v1691, %v1701
    %v1724 = vsub.f32 %v1692, %v1704
    %v1725 = vsub.f32 %v1693, %v1707
    %v1726 = vsub.f32 %v1694, %v1710
    %v1727 = vsub.f32 %v1695, %v1713
    %v1728 = vsub.f32 %v1696, %v1716
    %v1729 = vsub.f32 %v1697, %v1719
    %v1730 = vsub.f32 %v1698, %v1722
    %v1731 = vmul.f32 %v1723, 1.442695
    %v1732 = vpow.pop %v1731
    %v1733 = vmul.f32 %v1724, 1.442695
    %v1734 = vpow.pop %v1733
    %v1735 = vmul.f32 %v1725, 1.442695
    %v1736 = vpow.pop %v1735
    %v1737 = vmul.f32 %v1726, 1.442695
    %v1738 = vpow.pop %v1737
    %v1739 = vmul.f32 %v1727, 1.442695
    %v1740 = vpow.pop %v1739
    %v1741 = vmul.f32 %v1728, 1.442695
    %v1742 = vpow.pop %v1741
    %v1743 = vmul.f32 %v1729, 1.442695
    %v1744 = vpow.pop %v1743
    %v1745 = vmul.f32 %v1730, 1.442695
    %v1746 = vpow.pop %v1745
    %v1747 = vsel %vm540, %v1732, 0.0
    %1748 = vadd.xlane.f32.xlu0 %v1747
    %v1749 = vpop.xlane.xlu0 %1748
    %v1750 = vsel %vm540, %v1734, 0.0
    %1751 = vadd.xlane.f32.xlu0 %v1750
    %v1752 = vpop.xlane.xlu0 %1751
    %v1753 = vsel %vm540, %v1736, 0.0
    %1754 = vadd.xlane.f32.xlu0 %v1753
    %v1755 = vpop.xlane.xlu0 %1754
    %v1756 = vsel %vm540, %v1738, 0.0
    %1757 = vadd.xlane.f32.xlu0 %v1756
    %v1758 = vpop.xlane.xlu0 %1757
    %v1759 = vsel %vm540, %v1740, 0.0
    %1760 = vadd.xlane.f32.xlu0 %v1759
    %v1761 = vpop.xlane.xlu0 %1760
    %v1762 = vsel %vm540, %v1742, 0.0
    %1763 = vadd.xlane.f32.xlu0 %v1762
    %v1764 = vpop.xlane.xlu0 %1763
    %v1765 = vsel %vm540, %v1744, 0.0
    %1766 = vadd.xlane.f32.xlu0 %v1765
    %v1767 = vpop.xlane.xlu0 %1766
    %v1768 = vsel %vm540, %v1746, 0.0
    %1769 = vadd.xlane.f32.xlu0 %v1768
    %v1770 = vpop.xlane.xlu0 %1769
    %v1771 = vrcp.pop %v1749
    %v1772 = vmul.f32 %v1749, %v1771
    %v1773 = vsub.f32 1.0, %v1772
    %v1774 = vmul.f32 %v1771, %v1773
    %v1775 = vadd.f32 %v1771, %v1774
    %vm1776 = vweird.f32 %v1749
    %vm1777 = vweird.f32 %v1771
    %vm1778 = vmor %vm1776, %vm1777
    %v1779 = vsel %vm1778, %v1771, %v1775
    %v1780 = vand.u32 2147483647, %v1749
    %vm1781 = vcmp.eq.f32.partialorder %v1780, 8.507059e+37
    %v1782 = vand.u32 %v1749, 2147483648
    %v1783 = vor.u32 1.1754944e-38, %v1782
    %v1784 = vsel %vm1781, %v1783, %v1779
    %v1785 = vmul.f32 %v1732, %v1784
    %v1786 = vrcp.pop %v1752
    %v1787 = vmul.f32 %v1752, %v1786
    %v1788 = vsub.f32 1.0, %v1787
    %v1789 = vmul.f32 %v1786, %v1788
    %v1790 = vadd.f32 %v1786, %v1789
    %vm1791 = vweird.f32 %v1752
    %vm1792 = vweird.f32 %v1786
    %vm1793 = vmor %vm1791, %vm1792
    %v1794 = vsel %vm1793, %v1786, %v1790
    %v1795 = vand.u32 2147483647, %v1752
    %vm1796 = vcmp.eq.f32.partialorder %v1795, 8.507059e+37
    %v1797 = vand.u32 %v1752, 2147483648
    %v1798 = vor.u32 1.1754944e-38, %v1797
    %v1799 = vsel %vm1796, %v1798, %v1794
    %v1800 = vmul.f32 %v1734, %v1799
    %v1801 = vrcp.pop %v1755
    %v1802 = vmul.f32 %v1755, %v1801
    %v1803 = vsub.f32 1.0, %v1802
    %v1804 = vmul.f32 %v1801, %v1803
    %v1805 = vadd.f32 %v1801, %v1804
    %vm1806 = vweird.f32 %v1755
    %vm1807 = vweird.f32 %v1801
    %vm1808 = vmor %vm1806, %vm1807
    %v1809 = vsel %vm1808, %v1801, %v1805
    %v1810 = vand.u32 2147483647, %v1755
    %vm1811 = vcmp.eq.f32.partialorder %v1810, 8.507059e+37
    %v1812 = vand.u32 %v1755, 2147483648
    %v1813 = vor.u32 1.1754944e-38, %v1812
    %v1814 = vsel %vm1811, %v1813, %v1809
    %v1815 = vmul.f32 %v1736, %v1814
    %v1816 = vrcp.pop %v1758
    %v1817 = vmul.f32 %v1758, %v1816
    %v1818 = vsub.f32 1.0, %v1817
    %v1819 = vmul.f32 %v1816, %v1818
    %v1820 = vadd.f32 %v1816, %v1819
    %vm1821 = vweird.f32 %v1758
    %vm1822 = vweird.f32 %v1816
    %vm1823 = vmor %vm1821, %vm1822
    %v1824 = vsel %vm1823, %v1816, %v1820
    %v1825 = vand.u32 2147483647, %v1758
    %vm1826 = vcmp.eq.f32.partialorder %v1825, 8.507059e+37
    %v1827 = vand.u32 %v1758, 2147483648
    %v1828 = vor.u32 1.1754944e-38, %v1827
    %v1829 = vsel %vm1826, %v1828, %v1824
    %v1830 = vmul.f32 %v1738, %v1829
    %v1831 = vrcp.pop %v1761
    %v1832 = vmul.f32 %v1761, %v1831
    %v1833 = vsub.f32 1.0, %v1832
    %v1834 = vmul.f32 %v1831, %v1833
    %v1835 = vadd.f32 %v1831, %v1834
    %vm1836 = vweird.f32 %v1761
    %vm1837 = vweird.f32 %v1831
    %vm1838 = vmor %vm1836, %vm1837
    %v1839 = vsel %vm1838, %v1831, %v1835
    %v1840 = vand.u32 2147483647, %v1761
    %vm1841 = vcmp.eq.f32.partialorder %v1840, 8.507059e+37
    %v1842 = vand.u32 %v1761, 2147483648
    %v1843 = vor.u32 1.1754944e-38, %v1842
    %v1844 = vsel %vm1841, %v1843, %v1839
    %v1845 = vmul.f32 %v1740, %v1844
    %v1846 = vrcp.pop %v1764
    %v1847 = vmul.f32 %v1764, %v1846
    %v1848 = vsub.f32 1.0, %v1847
    %v1849 = vmul.f32 %v1846, %v1848
    %v1850 = vadd.f32 %v1846, %v1849
    %vm1851 = vweird.f32 %v1764
    %vm1852 = vweird.f32 %v1846
    %vm1853 = vmor %vm1851, %vm1852
    %v1854 = vsel %vm1853, %v1846, %v1850
    %v1855 = vand.u32 2147483647, %v1764
    %vm1856 = vcmp.eq.f32.partialorder %v1855, 8.507059e+37
    %v1857 = vand.u32 %v1764, 2147483648
    %v1858 = vor.u32 1.1754944e-38, %v1857
    %v1859 = vsel %vm1856, %v1858, %v1854
    %v1860 = vmul.f32 %v1742, %v1859
    %v1861 = vrcp.pop %v1767
    %v1862 = vmul.f32 %v1767, %v1861
    %v1863 = vsub.f32 1.0, %v1862
    %v1864 = vmul.f32 %v1861, %v1863
    %v1865 = vadd.f32 %v1861, %v1864
    %vm1866 = vweird.f32 %v1767
    %vm1867 = vweird.f32 %v1861
    %vm1868 = vmor %vm1866, %vm1867
    %v1869 = vsel %vm1868, %v1861, %v1865
    %v1870 = vand.u32 2147483647, %v1767
    %vm1871 = vcmp.eq.f32.partialorder %v1870, 8.507059e+37
    %v1872 = vand.u32 %v1767, 2147483648
    %v1873 = vor.u32 1.1754944e-38, %v1872
    %v1874 = vsel %vm1871, %v1873, %v1869
    %v1875 = vmul.f32 %v1744, %v1874
    %v1876 = vrcp.pop %v1770
    %v1877 = vmul.f32 %v1770, %v1876
    %v1878 = vsub.f32 1.0, %v1877
    %v1879 = vmul.f32 %v1876, %v1878
    %v1880 = vadd.f32 %v1876, %v1879
    %vm1881 = vweird.f32 %v1770
    %vm1882 = vweird.f32 %v1876
    %vm1883 = vmor %vm1881, %vm1882
    %v1884 = vsel %vm1883, %v1876, %v1880
    %v1885 = vand.u32 2147483647, %v1770
    %vm1886 = vcmp.eq.f32.partialorder %v1885, 8.507059e+37
    %v1887 = vand.u32 %v1770, 2147483648
    %v1888 = vor.u32 1.1754944e-38, %v1887
    %v1889 = vsel %vm1886, %v1888, %v1884
    %v1890 = vmul.f32 %v1746, %v1889
    %1891 = vrot.lane.b32.xlu0 %v1457, 64
    %v1892 = vpop.permute.xlu0 %1891
    %v1895 = vsel %vm540, %v1785, 0
    %1897 = vmatpush.msra.mxu0 0.0
    %1898 = vmatpush.msra.mxu0 0.0
    %1899 = vmatpush.msra.mxu0 0.0
    %1900 = vmatpush.msra.mxu0 0.0
    %1901 = vmatpush.msra.mxu0 0.0
    %1902 = vmatpush.msra.mxu0 0.0
    %1903 = vmatpush.msra.mxu0 0.0
    %1904 = vmatpush.msra.mxu0 0.0
    %1905 = vmatpush.msra.mxu0 0.0
    %1906 = vmatpush.msra.mxu0 0.0
    %1907 = vmatpush.msra.mxu0 0.0
    %1908 = vmatpush.msra.mxu0 0.0
    %1909 = vmatpush.msra.mxu0 0.0
    %1910 = vmatpush.msra.mxu0 0.0
    %1911 = vmatpush.msra.mxu0 0.0
    %1912 = vmatpush.msra.mxu0 %v1892
    %1913 = vmatmul.f32.gmra.mxu0 %v1895
    %v1914 = vpop.f32.mrf.mxu0
    %v1915 = vadd.f32 0.0, %v1914
    %1916 = vdwg.mxu0
    %1917 = vrot.lane.b32.xlu0 %v1460, 64
    %v1918 = vpop.permute.xlu0 %1917
    %v1921 = vsel %vm540, %v1800, 0
    %1923 = vmatpush.msra.mxu0 0.0
    %1924 = vmatpush.msra.mxu0 0.0
    %1925 = vmatpush.msra.mxu0 0.0
    %1926 = vmatpush.msra.mxu0 0.0
    %1927 = vmatpush.msra.mxu0 0.0
    %1928 = vmatpush.msra.mxu0 0.0
    %1929 = vmatpush.msra.mxu0 0.0
    %1930 = vmatpush.msra.mxu0 0.0
    %1931 = vmatpush.msra.mxu0 0.0
    %1932 = vmatpush.msra.mxu0 0.0
    %1933 = vmatpush.msra.mxu0 0.0
    %1934 = vmatpush.msra.mxu0 0.0
    %1935 = vmatpush.msra.mxu0 0.0
    %1936 = vmatpush.msra.mxu0 0.0
    %1937 = vmatpush.msra.mxu0 0.0
    %1938 = vmatpush.msra.mxu0 %v1918
    %1939 = vmatmul.f32.gmra.mxu0 %v1921
    %v1940 = vpop.f32.mrf.mxu0
    %v1941 = vadd.f32 0.0, %v1940
    %1942 = vdwg.mxu0
    %1943 = vrot.lane.b32.xlu0 %v1472, 64
    %v1944 = vpop.permute.xlu0 %1943
    %v1947 = vsel %vm540, %v1815, 0
    %1949 = vmatpush.msra.mxu0 0.0
    %1950 = vmatpush.msra.mxu0 0.0
    %1951 = vmatpush.msra.mxu0 0.0
    %1952 = vmatpush.msra.mxu0 0.0
    %1953 = vmatpush.msra.mxu0 0.0
    %1954 = vmatpush.msra.mxu0 0.0
    %1955 = vmatpush.msra.mxu0 0.0
    %1956 = vmatpush.msra.mxu0 0.0
    %1957 = vmatpush.msra.mxu0 0.0
    %1958 = vmatpush.msra.mxu0 0.0
    %1959 = vmatpush.msra.mxu0 0.0
    %1960 = vmatpush.msra.mxu0 0.0
    %1961 = vmatpush.msra.mxu0 0.0
    %1962 = vmatpush.msra.mxu0 0.0
    %1963 = vmatpush.msra.mxu0 0.0
    %1964 = vmatpush.msra.mxu0 %v1944
    %1965 = vmatmul.f32.gmra.mxu0 %v1947
    %v1966 = vpop.f32.mrf.mxu0
    %v1967 = vadd.f32 0.0, %v1966
    %1968 = vdwg.mxu0
    %1969 = vrot.lane.b32.xlu0 %v1474, 64
    %v1970 = vpop.permute.xlu0 %1969
    %v1973 = vsel %vm540, %v1830, 0
    %1975 = vmatpush.msra.mxu0 0.0
    %1976 = vmatpush.msra.mxu0 0.0
    %1977 = vmatpush.msra.mxu0 0.0
    %1978 = vmatpush.msra.mxu0 0.0
    %1979 = vmatpush.msra.mxu0 0.0
    %1980 = vmatpush.msra.mxu0 0.0
    %1981 = vmatpush.msra.mxu0 0.0
    %1982 = vmatpush.msra.mxu0 0.0
    %1983 = vmatpush.msra.mxu0 0.0
    %1984 = vmatpush.msra.mxu0 0.0
    %1985 = vmatpush.msra.mxu0 0.0
    %1986 = vmatpush.msra.mxu0 0.0
    %1987 = vmatpush.msra.mxu0 0.0
    %1988 = vmatpush.msra.mxu0 0.0
    %1989 = vmatpush.msra.mxu0 0.0
    %1990 = vmatpush.msra.mxu0 %v1970
    %1991 = vmatmul.f32.gmra.mxu0 %v1973
    %v1992 = vpop.f32.mrf.mxu0
    %v1993 = vadd.f32 0.0, %v1992
    %1994 = vdwg.mxu0
    %1995 = vrot.lane.b32.xlu0 %v1476, 64
    %v1996 = vpop.permute.xlu0 %1995
    %v1999 = vsel %vm540, %v1845, 0
    %2001 = vmatpush.msra.mxu0 0.0
    %2002 = vmatpush.msra.mxu0 0.0
    %2003 = vmatpush.msra.mxu0 0.0
    %2004 = vmatpush.msra.mxu0 0.0
    %2005 = vmatpush.msra.mxu0 0.0
    %2006 = vmatpush.msra.mxu0 0.0
    %2007 = vmatpush.msra.mxu0 0.0
    %2008 = vmatpush.msra.mxu0 0.0
    %2009 = vmatpush.msra.mxu0 0.0
    %2010 = vmatpush.msra.mxu0 0.0
    %2011 = vmatpush.msra.mxu0 0.0
    %2012 = vmatpush.msra.mxu0 0.0
    %2013 = vmatpush.msra.mxu0 0.0
    %2014 = vmatpush.msra.mxu0 0.0
    %2015 = vmatpush.msra.mxu0 0.0
    %2016 = vmatpush.msra.mxu0 %v1996
    %2017 = vmatmul.f32.gmra.mxu0 %v1999
    %v2018 = vpop.f32.mrf.mxu0
    %v2019 = vadd.f32 0.0, %v2018
    %2020 = vdwg.mxu0
    %2021 = vrot.lane.b32.xlu0 %v1478, 64
    %v2022 = vpop.permute.xlu0 %2021
    %v2025 = vsel %vm540, %v1860, 0
    %2027 = vmatpush.msra.mxu0 0.0
    %2028 = vmatpush.msra.mxu0 0.0
    %2029 = vmatpush.msra.mxu0 0.0
    %2030 = vmatpush.msra.mxu0 0.0
    %2031 = vmatpush.msra.mxu0 0.0
    %2032 = vmatpush.msra.mxu0 0.0
    %2033 = vmatpush.msra.mxu0 0.0
    %2034 = vmatpush.msra.mxu0 0.0
    %2035 = vmatpush.msra.mxu0 0.0
    %2036 = vmatpush.msra.mxu0 0.0
    %2037 = vmatpush.msra.mxu0 0.0
    %2038 = vmatpush.msra.mxu0 0.0
    %2039 = vmatpush.msra.mxu0 0.0
    %2040 = vmatpush.msra.mxu0 0.0
    %2041 = vmatpush.msra.mxu0 0.0
    %2042 = vmatpush.msra.mxu0 %v2022
    %2043 = vmatmul.f32.gmra.mxu0 %v2025
    %v2044 = vpop.f32.mrf.mxu0
    %v2045 = vadd.f32 0.0, %v2044
    %2046 = vdwg.mxu0
    %2047 = vrot.lane.b32.xlu0 %v1480, 64
    %v2048 = vpop.permute.xlu0 %2047
    %v2051 = vsel %vm540, %v1875, 0
    %2053 = vmatpush.msra.mxu0 0.0
    %2054 = vmatpush.msra.mxu0 0.0
    %2055 = vmatpush.msra.mxu0 0.0
    %2056 = vmatpush.msra.mxu0 0.0
    %2057 = vmatpush.msra.mxu0 0.0
    %2058 = vmatpush.msra.mxu0 0.0
    %2059 = vmatpush.msra.mxu0 0.0
    %2060 = vmatpush.msra.mxu0 0.0
    %2061 = vmatpush.msra.mxu0 0.0
    %2062 = vmatpush.msra.mxu0 0.0
    %2063 = vmatpush.msra.mxu0 0.0
    %2064 = vmatpush.msra.mxu0 0.0
    %2065 = vmatpush.msra.mxu0 0.0
    %2066 = vmatpush.msra.mxu0 0.0
    %2067 = vmatpush.msra.mxu0 0.0
    %2068 = vmatpush.msra.mxu0 %v2048
    %2069 = vmatmul.f32.gmra.mxu0 %v2051
    %v2070 = vpop.f32.mrf.mxu0
    %v2071 = vadd.f32 0.0, %v2070
    %2072 = vdwg.mxu0
    %2073 = vrot.lane.b32.xlu0 %v1482, 64
    %v2074 = vpop.permute.xlu0 %2073
    %v2077 = vsel %vm540, %v1890, 0
    %2079 = vmatpush.msra.mxu0 0.0
    %2080 = vmatpush.msra.mxu0 0.0
    %2081 = vmatpush.msra.mxu0 0.0
    %2082 = vmatpush.msra.mxu0 0.0
    %2083 = vmatpush.msra.mxu0 0.0
    %2084 = vmatpush.msra.mxu0 0.0
    %2085 = vmatpush.msra.mxu0 0.0
    %2086 = vmatpush.msra.mxu0 0.0
    %2087 = vmatpush.msra.mxu0 0.0
    %2088 = vmatpush.msra.mxu0 0.0
    %2089 = vmatpush.msra.mxu0 0.0
    %2090 = vmatpush.msra.mxu0 0.0
    %2091 = vmatpush.msra.mxu0 0.0
    %2092 = vmatpush.msra.mxu0 0.0
    %2093 = vmatpush.msra.mxu0 0.0
    %2094 = vmatpush.msra.mxu0 %v2074
    %2095 = vmatmul.f32.gmra.mxu0 %v2077
    %v2096 = vpop.f32.mrf.mxu0
    %v2097 = vadd.f32 0.0, %v2096
    %2098 = vdwg.mxu0
    %2101 = vrot.lane.b32.xlu0 %v1967, 8
    %v2102 = vpop.permute.xlu0 %2101
    %2103 = vrot.lane.b32.xlu0 %v1993, 8
    %v2104 = vpop.permute.xlu0 %2103
    %2109 = vrot.lane.b32.xlu0 %v2019, 16
    %v2110 = vpop.permute.xlu0 %2109
    %2111 = vrot.lane.b32.xlu0 %v2045, 16
    %v2112 = vpop.permute.xlu0 %2111
    %2117 = vrot.lane.b32.xlu0 %v2071, 24
    %v2118 = vpop.permute.xlu0 %2117
    %2119 = vrot.lane.b32.xlu0 %v2097, 24
    %v2120 = vpop.permute.xlu0 %2119
    %v2123 = vsel %vm540, %v1915, %v2102
    %v2124 = vsel %vm540, %v1941, %v2104
    %v2125 = vsel %vm1181, %v2123, %v2110
    %v2126 = vsel %vm1181, %v2124, %v2112
    %v2127 = vsel %vm1184, %v2125, %v2118
    %v2128 = vsel %vm1184, %v2126, %v2120
    %v2130 = vperm.slane %v1468, 0
    %v2133 = vsel %vm489, %v2127, 0
    %v2136 = vsel %vm489, %v2128, 0
    %2138 = vmatpush.msra.mxu0 0.0
    %2139 = vmatpush.msra.mxu0 0.0
    %2140 = vmatpush.msra.mxu0 0.0
    %2141 = vmatpush.msra.mxu0 0.0
    %2142 = vmatpush.msra.mxu0 0.0
    %2143 = vmatpush.msra.mxu0 0.0
    %2144 = vmatpush.msra.mxu0 0.0
    %2145 = vmatpush.msra.mxu0 0.0
    %2146 = vmatpush.msra.mxu0 0.0
    %2147 = vmatpush.msra.mxu0 0.0
    %2148 = vmatpush.msra.mxu0 0.0
    %2149 = vmatpush.msra.mxu0 0.0
    %2150 = vmatpush.msra.mxu0 %v1466
    %2151 = vmatpush.msra.mxu0 %v1465
    %2152 = vmatpush.msra.mxu0 %v1464
    %2153 = vmatpush.msra.mxu0 %v1463
    %2154 = vmatmul.f32.gmra.mxu0 %v2133
    %v2155 = vpop.f32.mrf.mxu0
    %v2156 = vadd.f32 %v2130, %v2155
    %2157 = vmatmul.f32.gmra.mxu0 %v2136
    %v2158 = vpop.f32.mrf.mxu0
    %v2159 = vadd.f32 %v2130, %v2158
    %2160 = vdwg.mxu0
    %v2161 = vadd.f32 %v1421, %v2156
    %v2162 = vadd.f32 %v1422, %v2159
    %s2163 = scalar_lea.vmem %s11, 1
    %v2164 = vld [vmem:[%s2163] sm:$0x1]
    %s2165 = scalar_lea.vmem %s13, 1
    %v2166 = vld [vmem:[%s2165] sm:$0x1]
    %v2167 = vsel %vm489, %v2161, 0.0
    %2168 = vadd.xlane.f32.xlu0 %v2167
    %v2169 = vpop.xlane.xlu0 %2168
    %v2170 = vsel %vm489, %v2162, 0.0
    %2171 = vadd.xlane.f32.xlu0 %v2170
    %v2172 = vpop.xlane.xlu0 %2171
    %v2173 = vmul.f32 %v2169, %v1235
    %v2174 = vmul.f32 %v2172, %v1235
    %v2175 = vsub.f32 %v2161, %v2173
    %v2176 = vsub.f32 %v2162, %v2174
    %v2177 = vmul.f32 %v2175, %v2175
    %v2178 = vmul.f32 %v2176, %v2176
    %v2179 = vsel %vm489, %v2177, 0.0
    %2180 = vadd.xlane.f32.xlu0 %v2179
    %v2181 = vpop.xlane.xlu0 %2180
    %v2182 = vsel %vm489, %v2178, 0.0
    %2183 = vadd.xlane.f32.xlu0 %v2182
    %v2184 = vpop.xlane.xlu0 %2183
    %v2185 = vmul.f32 %v2181, %v1235
    %v2186 = vmul.f32 %v2184, %v1235
    %v2187 = vadd.f32 %v2185, 1e-05
    %v2188 = vadd.f32 %v2186, 1e-05
    %v2189 = vrsqrt.pop %v2187
    %v2190 = vmul.f32 %v2189, %v2187
    %v2191 = vmul.f32 %v2190, %v2189
    %v2192 = vmul.f32 0.5, %v2191
    %v2193 = vsub.f32 1.5, %v2192
    %v2194 = vmul.f32 %v2189, %v2193
    %vm2195 = vweird.f32 %v2187
    %vm2196 = vweird.f32 %v2189
    %vm2197 = vmor %vm2195, %vm2196
    %v2198 = vsel %vm2197, %v2189, %v2194
    %v2199 = vrsqrt.pop %v2188
    %v2200 = vmul.f32 %v2199, %v2188
    %v2201 = vmul.f32 %v2200, %v2199
    %v2202 = vmul.f32 0.5, %v2201
    %v2203 = vsub.f32 1.5, %v2202
    %v2204 = vmul.f32 %v2199, %v2203
    %vm2205 = vweird.f32 %v2188
    %vm2206 = vweird.f32 %v2199
    %vm2207 = vmor %vm2205, %vm2206
    %v2208 = vsel %vm2207, %v2199, %v2204
    %v2209 = vmul.f32 %v2175, %v2198
    %v2210 = vmul.f32 %v2176, %v2208
    %v2212 = vperm.slane %v2164, 0
    %v2214 = vmul.f32 %v2209, %v2212
    %v2215 = vmul.f32 %v2210, %v2212
    %v2217 = vperm.slane %v2166, 0
    %v2219 = vadd.f32 %v2214, %v2217
    %v2220 = vadd.f32 %v2215, %v2217
    %s2221 = scalar_lea.vmem %s15, 32
    %v2222 = vld [vmem:[%s2221] sm:$0xff]
    %v2223 = vld [vmem:[%s2221 + $0x8] sm:$0xff]
    %v2224 = vld [vmem:[%s2221 + $0x10] sm:$0xff]
    %v2225 = vld [vmem:[%s2221 + $0x18] sm:$0xff]
    %s2226 = scalar_lea.vmem %s17, 1
    %v2227 = vld [vmem:[%s2226] sm:$0x1]
    %s2228 = scalar_lea.vmem %s19, 64
    %v2229 = vld [vmem:[%s2228] sm:$0xff]
    %v2230 = vld [vmem:[%s2228 + $0x8] sm:$0xff]
    %v2231 = vld [vmem:[%s2228 + $0x10] sm:$0xff]
    %v2232 = vld [vmem:[%s2228 + $0x18] sm:$0xff]
    %v2233 = vld [vmem:[%s2228 + $0x20] sm:$0xff]
    %v2234 = vld [vmem:[%s2228 + $0x28] sm:$0xff]
    %v2235 = vld [vmem:[%s2228 + $0x30] sm:$0xff]
    %v2236 = vld [vmem:[%s2228 + $0x38] sm:$0xff]
    %s2237 = scalar_lea.vmem %s21, 1
    %v2238 = vld [vmem:[%s2237] sm:$0x1]
    %v2240 = vperm.slane %v2227, 0
    %v2243 = vsel %vm489, %v2219, 0
    %v2246 = vsel %vm489, %v2220, 0
    %2248 = vmatpush.msra.mxu0 0.0
    %2249 = vmatpush.msra.mxu0 0.0
    %2250 = vmatpush.msra.mxu0 0.0
    %2251 = vmatpush.msra.mxu0 0.0
    %2252 = vmatpush.msra.mxu0 0.0
    %2253 = vmatpush.msra.mxu0 0.0
    %2254 = vmatpush.msra.mxu0 0.0
    %2255 = vmatpush.msra.mxu0 0.0
    %2256 = vmatpush.msra.mxu0 0.0
    %2257 = vmatpush.msra.mxu0 0.0
    %2258 = vmatpush.msra.mxu0 0.0
    %2259 = vmatpush.msra.mxu0 0.0
    %2260 = vmatpush.msra.mxu0 %v2225
    %2261 = vmatpush.msra.mxu0 %v2224
    %2262 = vmatpush.msra.mxu0 %v2223
    %2263 = vmatpush.msra.mxu0 %v2222
    %2264 = vmatmul.f32.gmra.mxu0 %v2243
    %v2265 = vpop.f32.mrf.mxu0
    %v2266 = vadd.f32 %v2240, %v2265
    %2267 = vmatmul.f32.gmra.mxu0 %v2246
    %v2268 = vpop.f32.mrf.mxu0
    %v2269 = vadd.f32 %v2240, %v2268
    %2270 = vdwg.mxu0
    %v2271 = vmax.f32 %v2266, 0.0
    %v2272 = vmax.f32 %v2269, 0.0
    %v2274 = vperm.slane %v2238, 0
    %v2277 = vsel %vm1335, %v2271, 0
    %v2280 = vsel %vm1335, %v2272, 0
    %2282 = vmatpush.msra.mxu0 0.0
    %2283 = vmatpush.msra.mxu0 0.0
    %2284 = vmatpush.msra.mxu0 0.0
    %2285 = vmatpush.msra.mxu0 0.0
    %2286 = vmatpush.msra.mxu0 0.0
    %2287 = vmatpush.msra.mxu0 0.0
    %2288 = vmatpush.msra.mxu0 0.0
    %2289 = vmatpush.msra.mxu0 0.0
    %2290 = vmatpush.msra.mxu0 %v2236
    %2291 = vmatpush.msra.mxu0 %v2235
    %2292 = vmatpush.msra.mxu0 %v2234
    %2293 = vmatpush.msra.mxu0 %v2233
    %2294 = vmatpush.msra.mxu0 %v2232
    %2295 = vmatpush.msra.mxu0 %v2231
    %2296 = vmatpush.msra.mxu0 %v2230
    %2297 = vmatpush.msra.mxu0 %v2229
    %2298 = vmatmul.f32.gmra.mxu0 %v2277
    %v2299 = vpop.f32.mrf.mxu0
    %v2300 = vadd.f32 %v2274, %v2299
    %2301 = vmatmul.f32.gmra.mxu0 %v2280
    %v2302 = vpop.f32.mrf.mxu0
    %v2303 = vadd.f32 %v2274, %v2302
    %2304 = vdwg.mxu0
    %v2305 = vadd.f32 %v2219, %v2300
    %v2306 = vadd.f32 %v2220, %v2303
    %s2307 = scalar_lea.vmem %s23, 1
    %v2308 = vld [vmem:[%s2307] sm:$0x1]
    %s2309 = scalar_lea.vmem %s25, 1
    %v2310 = vld [vmem:[%s2309] sm:$0x1]
    %v2311 = vsel %vm489, %v2305, 0.0
    %2312 = vadd.xlane.f32.xlu0 %v2311
    %v2313 = vpop.xlane.xlu0 %2312
    %v2314 = vsel %vm489, %v2306, 0.0
    %2315 = vadd.xlane.f32.xlu0 %v2314
    %v2316 = vpop.xlane.xlu0 %2315
    %v2317 = vmul.f32 %v2313, %v1235
    %v2318 = vmul.f32 %v2316, %v1235
    %v2319 = vsub.f32 %v2305, %v2317
    %v2320 = vsub.f32 %v2306, %v2318
    %v2321 = vmul.f32 %v2319, %v2319
    %v2322 = vmul.f32 %v2320, %v2320
    %v2323 = vsel %vm489, %v2321, 0.0
    %2324 = vadd.xlane.f32.xlu0 %v2323
    %v2325 = vpop.xlane.xlu0 %2324
    %v2326 = vsel %vm489, %v2322, 0.0
    %2327 = vadd.xlane.f32.xlu0 %v2326
    %v2328 = vpop.xlane.xlu0 %2327
    %v2329 = vmul.f32 %v2325, %v1235
    %v2330 = vmul.f32 %v2328, %v1235
    %v2331 = vadd.f32 %v2329, 1e-05
    %v2332 = vadd.f32 %v2330, 1e-05
    %v2333 = vrsqrt.pop %v2331
    %v2334 = vmul.f32 %v2333, %v2331
    %v2335 = vmul.f32 %v2334, %v2333
    %v2336 = vmul.f32 0.5, %v2335
    %v2337 = vsub.f32 1.5, %v2336
    %v2338 = vmul.f32 %v2333, %v2337
    %vm2339 = vweird.f32 %v2331
    %vm2340 = vweird.f32 %v2333
    %vm2341 = vmor %vm2339, %vm2340
    %v2342 = vsel %vm2341, %v2333, %v2338
    %v2343 = vrsqrt.pop %v2332
    %v2344 = vmul.f32 %v2343, %v2332
    %v2345 = vmul.f32 %v2344, %v2343
    %v2346 = vmul.f32 0.5, %v2345
    %v2347 = vsub.f32 1.5, %v2346
    %v2348 = vmul.f32 %v2343, %v2347
    %vm2349 = vweird.f32 %v2332
    %vm2350 = vweird.f32 %v2343
    %vm2351 = vmor %vm2349, %vm2350
    %v2352 = vsel %vm2351, %v2343, %v2348
    %v2353 = vmul.f32 %v2319, %v2342
    %v2354 = vmul.f32 %v2320, %v2352
    %v2356 = vperm.slane %v2308, 0
    %v2358 = vmul.f32 %v2353, %v2356
    %v2359 = vmul.f32 %v2354, %v2356
    %v2361 = vperm.slane %v2310, 0
    %v2363 = vadd.f32 %v2358, %v2361
    %v2364 = vadd.f32 %v2359, %v2361
    %v2365 = vld [vmem:[%s27] sm:$0x1]
    %v2366 = vld [vmem:[%s29] sm:$0x1]
    %v2367 = vsel %vm489, %v2363, 0.0
    %2368 = vadd.xlane.f32.xlu0 %v2367
    %v2369 = vpop.xlane.xlu0 %2368
    %v2370 = vsel %vm489, %v2364, 0.0
    %2371 = vadd.xlane.f32.xlu0 %v2370
    %v2372 = vpop.xlane.xlu0 %2371
    %v2373 = vmul.f32 %v2369, %v1235
    %v2374 = vmul.f32 %v2372, %v1235
    %v2375 = vsub.f32 %v2363, %v2373
    %v2376 = vsub.f32 %v2364, %v2374
    %v2377 = vmul.f32 %v2375, %v2375
    %v2378 = vmul.f32 %v2376, %v2376
    %v2379 = vsel %vm489, %v2377, 0.0
    %2380 = vadd.xlane.f32.xlu0 %v2379
    %v2381 = vpop.xlane.xlu0 %2380
    %v2382 = vsel %vm489, %v2378, 0.0
    %2383 = vadd.xlane.f32.xlu0 %v2382
    %v2384 = vpop.xlane.xlu0 %2383
    %v2385 = vmul.f32 %v2381, %v1235
    %v2386 = vmul.f32 %v2384, %v1235
    %v2387 = vadd.f32 %v2385, 1e-05
    %v2388 = vadd.f32 %v2386, 1e-05
    %v2389 = vrsqrt.pop %v2387
    %v2390 = vmul.f32 %v2389, %v2387
    %v2391 = vmul.f32 %v2390, %v2389
    %v2392 = vmul.f32 0.5, %v2391
    %v2393 = vsub.f32 1.5, %v2392
    %v2394 = vmul.f32 %v2389, %v2393
    %vm2395 = vweird.f32 %v2387
    %vm2396 = vweird.f32 %v2389
    %vm2397 = vmor %vm2395, %vm2396
    %v2398 = vsel %vm2397, %v2389, %v2394
    %v2399 = vrsqrt.pop %v2388
    %v2400 = vmul.f32 %v2399, %v2388
    %v2401 = vmul.f32 %v2400, %v2399
    %v2402 = vmul.f32 0.5, %v2401
    %v2403 = vsub.f32 1.5, %v2402
    %v2404 = vmul.f32 %v2399, %v2403
    %vm2405 = vweird.f32 %v2388
    %vm2406 = vweird.f32 %v2399
    %vm2407 = vmor %vm2405, %vm2406
    %v2408 = vsel %vm2407, %v2399, %v2404
    %v2409 = vmul.f32 %v2375, %v2398
    %v2410 = vmul.f32 %v2376, %v2408
    %v2412 = vperm.slane %v2365, 0
    %v2414 = vmul.f32 %v2409, %v2412
    %v2415 = vmul.f32 %v2410, %v2412
    %v2417 = vperm.slane %v2366, 0
    %v2419 = vadd.f32 %v2414, %v2417
    %v2420 = vadd.f32 %v2415, %v2417
    %v2421 = vld [vmem:[#allocation2] sm:$0xff]
    %v2422 = vld [vmem:[#allocation2 + $0x8] sm:$0xff]
    %v2423 = vld [vmem:[#allocation2 + $0x10] sm:$0xff]
    %v2424 = vld [vmem:[#allocation2 + $0x18] sm:$0xff]
    %v2425 = vld [vmem:[#allocation4] sm:$0x1]
    %v2427 = vperm.slane %v2425, 0
    %2429 = vmatpush.msra.mxu0 0.0
    %2430 = vmatpush.msra.mxu0 0.0
    %2431 = vmatpush.msra.mxu0 0.0
    %2432 = vmatpush.msra.mxu0 0.0
    %2433 = vmatpush.msra.mxu0 0.0
    %2434 = vmatpush.msra.mxu0 0.0
    %2435 = vmatpush.msra.mxu0 0.0
    %2436 = vmatpush.msra.mxu0 0.0
    %2437 = vmatpush.msra.mxu0 0.0
    %2438 = vmatpush.msra.mxu0 0.0
    %2439 = vmatpush.msra.mxu0 0.0
    %2440 = vmatpush.msra.mxu0 0.0
    %2441 = vmatpush.msra.mxu0 %v2424
    %2442 = vmatpush.msra.mxu0 %v2423
    %2443 = vmatpush.msra.mxu0 %v2422
    %2444 = vmatpush.msra.mxu0 %v2421
    %2445 = vmatmul.f32.gmra.mxu0 %v491
    %v2446 = vpop.f32.mrf.mxu0
    %v2447 = vadd.f32 %v2427, %v2446
    %2448 = vmatmul.f32.gmra.mxu0 %v494
    %v2449 = vpop.f32.mrf.mxu0
    %v2450 = vadd.f32 %v2427, %v2449
    %2451 = vdwg.mxu0
    %v2452 = vld [vmem:[#allocation6] sm:$0xff]
    %v2453 = vld [vmem:[#allocation6 + $0x8] sm:$0xff]
    %v2454 = vld [vmem:[#allocation6 + $0x10] sm:$0xff]
    %v2455 = vld [vmem:[#allocation6 + $0x18] sm:$0xff]
    %v2456 = vld [vmem:[#allocation7] sm:$0x1]
    %2459 = vrot.lane.b32.xlu0 %v2447, 120
    %v2460 = vpop.permute.xlu0 %2459
    %2461 = vrot.lane.b32.xlu0 %v2450, 120
    %v2462 = vpop.permute.xlu0 %2461
    %2463 = vrot.lane.b32.xlu0 %v2447, 112
    %v2464 = vpop.permute.xlu0 %2463
    %2465 = vrot.lane.b32.xlu0 %v2450, 112
    %v2466 = vpop.permute.xlu0 %2465
    %2467 = vrot.lane.b32.xlu0 %v2447, 104
    %v2468 = vpop.permute.xlu0 %2467
    %2469 = vrot.lane.b32.xlu0 %v2450, 104
    %v2470 = vpop.permute.xlu0 %2469
    %2471 = vrot.lane.b32.xlu0 %v2447, 96
    %v2472 = vpop.permute.xlu0 %2471
    %v2473 = vsel %vm540, %v2447, 0
    %v2475 = vsel %vm540, %v2472, 0
    %2477 = vmatpush.xpose.msra.mxu0 0.0
    %2478 = vmatpush.xpose.msra.mxu0 0.0
    %2479 = vmatpush.xpose.msra.mxu0 0.0
    %2480 = vmatpush.xpose.msra.mxu0 0.0
    %2481 = vmatpush.xpose.msra.mxu0 0.0
    %2482 = vmatpush.xpose.msra.mxu0 0.0
    %2483 = vmatpush.xpose.msra.mxu0 0.0
    %2484 = vmatpush.xpose.msra.mxu0 0.0
    %2485 = vmatpush.xpose.msra.mxu0 0.0
    %2486 = vmatpush.xpose.msra.mxu0 0.0
    %2487 = vmatpush.xpose.msra.mxu0 0.0
    %2488 = vmatpush.xpose.msra.mxu0 0.0
    %2489 = vmatpush.xpose.msra.mxu0 0.0
    %2490 = vmatpush.xpose.msra.mxu0 0.0
    %2491 = vmatpush.xpose.msra.mxu0 0.0
    %2492 = vmatpush.xpose.msra.mxu0 %v2475
    %2493 = vmatmul.f32.gmra.mxu0 %v2473
    %v2494 = vpop.f32.mrf.mxu0
    %v2495 = vadd.f32 0.0, %v2494
    %2496 = vdwg.mxu0
    %2497 = vrot.lane.b32.xlu0 %v2450, 96
    %v2498 = vpop.permute.xlu0 %2497
    %v2499 = vsel %vm540, %v2450, 0
    %v2501 = vsel %vm540, %v2498, 0
    %2503 = vmatpush.xpose.msra.mxu0 0.0
    %2504 = vmatpush.xpose.msra.mxu0 0.0
    %2505 = vmatpush.xpose.msra.mxu0 0.0
    %2506 = vmatpush.xpose.msra.mxu0 0.0
    %2507 = vmatpush.xpose.msra.mxu0 0.0
    %2508 = vmatpush.xpose.msra.mxu0 0.0
    %2509 = vmatpush.xpose.msra.mxu0 0.0
    %2510 = vmatpush.xpose.msra.mxu0 0.0
    %2511 = vmatpush.xpose.msra.mxu0 0.0
    %2512 = vmatpush.xpose.msra.mxu0 0.0
    %2513 = vmatpush.xpose.msra.mxu0 0.0
    %2514 = vmatpush.xpose.msra.mxu0 0.0
    %2515 = vmatpush.xpose.msra.mxu0 0.0
    %2516 = vmatpush.xpose.msra.mxu0 0.0
    %2517 = vmatpush.xpose.msra.mxu0 0.0
    %2518 = vmatpush.xpose.msra.mxu0 %v2501
    %2519 = vmatmul.f32.gmra.mxu0 %v2499
    %v2520 = vpop.f32.mrf.mxu0
    %v2521 = vadd.f32 0.0, %v2520
    %2522 = vdwg.mxu0
    %2523 = vrot.lane.b32.xlu0 %v2460, 96
    %v2524 = vpop.permute.xlu0 %2523
    %v2525 = vsel %vm540, %v2460, 0
    %v2527 = vsel %vm540, %v2524, 0
    %2529 = vmatpush.xpose.msra.mxu0 0.0
    %2530 = vmatpush.xpose.msra.mxu0 0.0
    %2531 = vmatpush.xpose.msra.mxu0 0.0
    %2532 = vmatpush.xpose.msra.mxu0 0.0
    %2533 = vmatpush.xpose.msra.mxu0 0.0
    %2534 = vmatpush.xpose.msra.mxu0 0.0
    %2535 = vmatpush.xpose.msra.mxu0 0.0
    %2536 = vmatpush.xpose.msra.mxu0 0.0
    %2537 = vmatpush.xpose.msra.mxu0 0.0
    %2538 = vmatpush.xpose.msra.mxu0 0.0
    %2539 = vmatpush.xpose.msra.mxu0 0.0
    %2540 = vmatpush.xpose.msra.mxu0 0.0
    %2541 = vmatpush.xpose.msra.mxu0 0.0
    %2542 = vmatpush.xpose.msra.mxu0 0.0
    %2543 = vmatpush.xpose.msra.mxu0 0.0
    %2544 = vmatpush.xpose.msra.mxu0 %v2527
    %2545 = vmatmul.f32.gmra.mxu0 %v2525
    %v2546 = vpop.f32.mrf.mxu0
    %v2547 = vadd.f32 0.0, %v2546
    %2548 = vdwg.mxu0
    %2549 = vrot.lane.b32.xlu0 %v2462, 96
    %v2550 = vpop.permute.xlu0 %2549
    %v2551 = vsel %vm540, %v2462, 0
    %v2553 = vsel %vm540, %v2550, 0
    %2555 = vmatpush.xpose.msra.mxu0 0.0
    %2556 = vmatpush.xpose.msra.mxu0 0.0
    %2557 = vmatpush.xpose.msra.mxu0 0.0
    %2558 = vmatpush.xpose.msra.mxu0 0.0
    %2559 = vmatpush.xpose.msra.mxu0 0.0
    %2560 = vmatpush.xpose.msra.mxu0 0.0
    %2561 = vmatpush.xpose.msra.mxu0 0.0
    %2562 = vmatpush.xpose.msra.mxu0 0.0
    %2563 = vmatpush.xpose.msra.mxu0 0.0
    %2564 = vmatpush.xpose.msra.mxu0 0.0
    %2565 = vmatpush.xpose.msra.mxu0 0.0
    %2566 = vmatpush.xpose.msra.mxu0 0.0
    %2567 = vmatpush.xpose.msra.mxu0 0.0
    %2568 = vmatpush.xpose.msra.mxu0 0.0
    %2569 = vmatpush.xpose.msra.mxu0 0.0
    %2570 = vmatpush.xpose.msra.mxu0 %v2553
    %2571 = vmatmul.f32.gmra.mxu0 %v2551
    %v2572 = vpop.f32.mrf.mxu0
    %v2573 = vadd.f32 0.0, %v2572
    %2574 = vdwg.mxu0
    %2575 = vrot.lane.b32.xlu0 %v2464, 96
    %v2576 = vpop.permute.xlu0 %2575
    %v2577 = vsel %vm540, %v2464, 0
    %v2579 = vsel %vm540, %v2576, 0
    %2581 = vmatpush.xpose.msra.mxu0 0.0
    %2582 = vmatpush.xpose.msra.mxu0 0.0
    %2583 = vmatpush.xpose.msra.mxu0 0.0
    %2584 = vmatpush.xpose.msra.mxu0 0.0
    %2585 = vmatpush.xpose.msra.mxu0 0.0
    %2586 = vmatpush.xpose.msra.mxu0 0.0
    %2587 = vmatpush.xpose.msra.mxu0 0.0
    %2588 = vmatpush.xpose.msra.mxu0 0.0
    %2589 = vmatpush.xpose.msra.mxu0 0.0
    %2590 = vmatpush.xpose.msra.mxu0 0.0
    %2591 = vmatpush.xpose.msra.mxu0 0.0
    %2592 = vmatpush.xpose.msra.mxu0 0.0
    %2593 = vmatpush.xpose.msra.mxu0 0.0
    %2594 = vmatpush.xpose.msra.mxu0 0.0
    %2595 = vmatpush.xpose.msra.mxu0 0.0
    %2596 = vmatpush.xpose.msra.mxu0 %v2579
    %2597 = vmatmul.f32.gmra.mxu0 %v2577
    %v2598 = vpop.f32.mrf.mxu0
    %v2599 = vadd.f32 0.0, %v2598
    %2600 = vdwg.mxu0
    %2601 = vrot.lane.b32.xlu0 %v2466, 96
    %v2602 = vpop.permute.xlu0 %2601
    %v2603 = vsel %vm540, %v2466, 0
    %v2605 = vsel %vm540, %v2602, 0
    %2607 = vmatpush.xpose.msra.mxu0 0.0
    %2608 = vmatpush.xpose.msra.mxu0 0.0
    %2609 = vmatpush.xpose.msra.mxu0 0.0
    %2610 = vmatpush.xpose.msra.mxu0 0.0
    %2611 = vmatpush.xpose.msra.mxu0 0.0
    %2612 = vmatpush.xpose.msra.mxu0 0.0
    %2613 = vmatpush.xpose.msra.mxu0 0.0
    %2614 = vmatpush.xpose.msra.mxu0 0.0
    %2615 = vmatpush.xpose.msra.mxu0 0.0
    %2616 = vmatpush.xpose.msra.mxu0 0.0
    %2617 = vmatpush.xpose.msra.mxu0 0.0
    %2618 = vmatpush.xpose.msra.mxu0 0.0
    %2619 = vmatpush.xpose.msra.mxu0 0.0
    %2620 = vmatpush.xpose.msra.mxu0 0.0
    %2621 = vmatpush.xpose.msra.mxu0 0.0
    %2622 = vmatpush.xpose.msra.mxu0 %v2605
    %2623 = vmatmul.f32.gmra.mxu0 %v2603
    %v2624 = vpop.f32.mrf.mxu0
    %v2625 = vadd.f32 0.0, %v2624
    %2626 = vdwg.mxu0
    %2627 = vrot.lane.b32.xlu0 %v2468, 96
    %v2628 = vpop.permute.xlu0 %2627
    %v2629 = vsel %vm540, %v2468, 0
    %v2631 = vsel %vm540, %v2628, 0
    %2633 = vmatpush.xpose.msra.mxu0 0.0
    %2634 = vmatpush.xpose.msra.mxu0 0.0
    %2635 = vmatpush.xpose.msra.mxu0 0.0
    %2636 = vmatpush.xpose.msra.mxu0 0.0
    %2637 = vmatpush.xpose.msra.mxu0 0.0
    %2638 = vmatpush.xpose.msra.mxu0 0.0
    %2639 = vmatpush.xpose.msra.mxu0 0.0
    %2640 = vmatpush.xpose.msra.mxu0 0.0
    %2641 = vmatpush.xpose.msra.mxu0 0.0
    %2642 = vmatpush.xpose.msra.mxu0 0.0
    %2643 = vmatpush.xpose.msra.mxu0 0.0
    %2644 = vmatpush.xpose.msra.mxu0 0.0
    %2645 = vmatpush.xpose.msra.mxu0 0.0
    %2646 = vmatpush.xpose.msra.mxu0 0.0
    %2647 = vmatpush.xpose.msra.mxu0 0.0
    %2648 = vmatpush.xpose.msra.mxu0 %v2631
    %2649 = vmatmul.f32.gmra.mxu0 %v2629
    %v2650 = vpop.f32.mrf.mxu0
    %v2651 = vadd.f32 0.0, %v2650
    %2652 = vdwg.mxu0
    %2653 = vrot.lane.b32.xlu0 %v2470, 96
    %v2654 = vpop.permute.xlu0 %2653
    %v2655 = vsel %vm540, %v2470, 0
    %v2657 = vsel %vm540, %v2654, 0
    %2659 = vmatpush.xpose.msra.mxu0 0.0
    %2660 = vmatpush.xpose.msra.mxu0 0.0
    %2661 = vmatpush.xpose.msra.mxu0 0.0
    %2662 = vmatpush.xpose.msra.mxu0 0.0
    %2663 = vmatpush.xpose.msra.mxu0 0.0
    %2664 = vmatpush.xpose.msra.mxu0 0.0
    %2665 = vmatpush.xpose.msra.mxu0 0.0
    %2666 = vmatpush.xpose.msra.mxu0 0.0
    %2667 = vmatpush.xpose.msra.mxu0 0.0
    %2668 = vmatpush.xpose.msra.mxu0 0.0
    %2669 = vmatpush.xpose.msra.mxu0 0.0
    %2670 = vmatpush.xpose.msra.mxu0 0.0
    %2671 = vmatpush.xpose.msra.mxu0 0.0
    %2672 = vmatpush.xpose.msra.mxu0 0.0
    %2673 = vmatpush.xpose.msra.mxu0 0.0
    %2674 = vmatpush.xpose.msra.mxu0 %v2657
    %2675 = vmatmul.f32.gmra.mxu0 %v2655
    %v2676 = vpop.f32.mrf.mxu0
    %v2677 = vadd.f32 0.0, %v2676
    %2678 = vdwg.mxu0
    %v2679 = vmul.f32 %v2495, 0.35355338
    %v2680 = vmul.f32 %v2521, 0.35355338
    %v2681 = vmul.f32 %v2547, 0.35355338
    %v2682 = vmul.f32 %v2573, 0.35355338
    %v2683 = vmul.f32 %v2599, 0.35355338
    %v2684 = vmul.f32 %v2625, 0.35355338
    %v2685 = vmul.f32 %v2651, 0.35355338
    %v2686 = vmul.f32 %v2677, 0.35355338
    %v2687 = vsel %vm540, %v2679, -inf
    %2688 = vmax.xlane.f32.xlu0 %v2687
    %v2689 = vpop.xlane.xlu0 %2688
    %v2690 = vsel %vm540, %v2680, -inf
    %2691 = vmax.xlane.f32.xlu0 %v2690
    %v2692 = vpop.xlane.xlu0 %2691
    %v2693 = vsel %vm540, %v2681, -inf
    %2694 = vmax.xlane.f32.xlu0 %v2693
    %v2695 = vpop.xlane.xlu0 %2694
    %v2696 = vsel %vm540, %v2682, -inf
    %2697 = vmax.xlane.f32.xlu0 %v2696
    %v2698 = vpop.xlane.xlu0 %2697
    %v2699 = vsel %vm540, %v2683, -inf
    %2700 = vmax.xlane.f32.xlu0 %v2699
    %v2701 = vpop.xlane.xlu0 %2700
    %v2702 = vsel %vm540, %v2684, -inf
    %2703 = vmax.xlane.f32.xlu0 %v2702
    %v2704 = vpop.xlane.xlu0 %2703
    %v2705 = vsel %vm540, %v2685, -inf
    %2706 = vmax.xlane.f32.xlu0 %v2705
    %v2707 = vpop.xlane.xlu0 %2706
    %v2708 = vsel %vm540, %v2686, -inf
    %2709 = vmax.xlane.f32.xlu0 %v2708
    %v2710 = vpop.xlane.xlu0 %2709
    %v2711 = vsub.f32 %v2679, %v2689
    %v2712 = vsub.f32 %v2680, %v2692
    %v2713 = vsub.f32 %v2681, %v2695
    %v2714 = vsub.f32 %v2682, %v2698
    %v2715 = vsub.f32 %v2683, %v2701
    %v2716 = vsub.f32 %v2684, %v2704
    %v2717 = vsub.f32 %v2685, %v2707
    %v2718 = vsub.f32 %v2686, %v2710
    %v2719 = vmul.f32 %v2711, 1.442695
    %v2720 = vpow.pop %v2719
    %v2721 = vmul.f32 %v2712, 1.442695
    %v2722 = vpow.pop %v2721
    %v2723 = vmul.f32 %v2713, 1.442695
    %v2724 = vpow.pop %v2723
    %v2725 = vmul.f32 %v2714, 1.442695
    %v2726 = vpow.pop %v2725
    %v2727 = vmul.f32 %v2715, 1.442695
    %v2728 = vpow.pop %v2727
    %v2729 = vmul.f32 %v2716, 1.442695
    %v2730 = vpow.pop %v2729
    %v2731 = vmul.f32 %v2717, 1.442695
    %v2732 = vpow.pop %v2731
    %v2733 = vmul.f32 %v2718, 1.442695
    %v2734 = vpow.pop %v2733
    %v2735 = vsel %vm540, %v2720, 0.0
    %2736 = vadd.xlane.f32.xlu0 %v2735
    %v2737 = vpop.xlane.xlu0 %2736
    %v2738 = vsel %vm540, %v2722, 0.0
    %2739 = vadd.xlane.f32.xlu0 %v2738
    %v2740 = vpop.xlane.xlu0 %2739
    %v2741 = vsel %vm540, %v2724, 0.0
    %2742 = vadd.xlane.f32.xlu0 %v2741
    %v2743 = vpop.xlane.xlu0 %2742
    %v2744 = vsel %vm540, %v2726, 0.0
    %2745 = vadd.xlane.f32.xlu0 %v2744
    %v2746 = vpop.xlane.xlu0 %2745
    %v2747 = vsel %vm540, %v2728, 0.0
    %2748 = vadd.xlane.f32.xlu0 %v2747
    %v2749 = vpop.xlane.xlu0 %2748
    %v2750 = vsel %vm540, %v2730, 0.0
    %2751 = vadd.xlane.f32.xlu0 %v2750
    %v2752 = vpop.xlane.xlu0 %2751
    %v2753 = vsel %vm540, %v2732, 0.0
    %2754 = vadd.xlane.f32.xlu0 %v2753
    %v2755 = vpop.xlane.xlu0 %2754
    %v2756 = vsel %vm540, %v2734, 0.0
    %2757 = vadd.xlane.f32.xlu0 %v2756
    %v2758 = vpop.xlane.xlu0 %2757
    %v2759 = vrcp.pop %v2737
    %v2760 = vmul.f32 %v2737, %v2759
    %v2761 = vsub.f32 1.0, %v2760
    %v2762 = vmul.f32 %v2759, %v2761
    %v2763 = vadd.f32 %v2759, %v2762
    %vm2764 = vweird.f32 %v2737
    %vm2765 = vweird.f32 %v2759
    %vm2766 = vmor %vm2764, %vm2765
    %v2767 = vsel %vm2766, %v2759, %v2763
    %v2768 = vand.u32 2147483647, %v2737
    %vm2769 = vcmp.eq.f32.partialorder %v2768, 8.507059e+37
    %v2770 = vand.u32 %v2737, 2147483648
    %v2771 = vor.u32 1.1754944e-38, %v2770
    %v2772 = vsel %vm2769, %v2771, %v2767
    %v2773 = vmul.f32 %v2720, %v2772
    %v2774 = vrcp.pop %v2740
    %v2775 = vmul.f32 %v2740, %v2774
    %v2776 = vsub.f32 1.0, %v2775
    %v2777 = vmul.f32 %v2774, %v2776
    %v2778 = vadd.f32 %v2774, %v2777
    %vm2779 = vweird.f32 %v2740
    %vm2780 = vweird.f32 %v2774
    %vm2781 = vmor %vm2779, %vm2780
    %v2782 = vsel %vm2781, %v2774, %v2778
    %v2783 = vand.u32 2147483647, %v2740
    %vm2784 = vcmp.eq.f32.partialorder %v2783, 8.507059e+37
    %v2785 = vand.u32 %v2740, 2147483648
    %v2786 = vor.u32 1.1754944e-38, %v2785
    %v2787 = vsel %vm2784, %v2786, %v2782
    %v2788 = vmul.f32 %v2722, %v2787
    %v2789 = vrcp.pop %v2743
    %v2790 = vmul.f32 %v2743, %v2789
    %v2791 = vsub.f32 1.0, %v2790
    %v2792 = vmul.f32 %v2789, %v2791
    %v2793 = vadd.f32 %v2789, %v2792
    %vm2794 = vweird.f32 %v2743
    %vm2795 = vweird.f32 %v2789
    %vm2796 = vmor %vm2794, %vm2795
    %v2797 = vsel %vm2796, %v2789, %v2793
    %v2798 = vand.u32 2147483647, %v2743
    %vm2799 = vcmp.eq.f32.partialorder %v2798, 8.507059e+37
    %v2800 = vand.u32 %v2743, 2147483648
    %v2801 = vor.u32 1.1754944e-38, %v2800
    %v2802 = vsel %vm2799, %v2801, %v2797
    %v2803 = vmul.f32 %v2724, %v2802
    %v2804 = vrcp.pop %v2746
    %v2805 = vmul.f32 %v2746, %v2804
    %v2806 = vsub.f32 1.0, %v2805
    %v2807 = vmul.f32 %v2804, %v2806
    %v2808 = vadd.f32 %v2804, %v2807
    %vm2809 = vweird.f32 %v2746
    %vm2810 = vweird.f32 %v2804
    %vm2811 = vmor %vm2809, %vm2810
    %v2812 = vsel %vm2811, %v2804, %v2808
    %v2813 = vand.u32 2147483647, %v2746
    %vm2814 = vcmp.eq.f32.partialorder %v2813, 8.507059e+37
    %v2815 = vand.u32 %v2746, 2147483648
    %v2816 = vor.u32 1.1754944e-38, %v2815
    %v2817 = vsel %vm2814, %v2816, %v2812
    %v2818 = vmul.f32 %v2726, %v2817
    %v2819 = vrcp.pop %v2749
    %v2820 = vmul.f32 %v2749, %v2819
    %v2821 = vsub.f32 1.0, %v2820
    %v2822 = vmul.f32 %v2819, %v2821
    %v2823 = vadd.f32 %v2819, %v2822
    %vm2824 = vweird.f32 %v2749
    %vm2825 = vweird.f32 %v2819
    %vm2826 = vmor %vm2824, %vm2825
    %v2827 = vsel %vm2826, %v2819, %v2823
    %v2828 = vand.u32 2147483647, %v2749
    %vm2829 = vcmp.eq.f32.partialorder %v2828, 8.507059e+37
    %v2830 = vand.u32 %v2749, 2147483648
    %v2831 = vor.u32 1.1754944e-38, %v2830
    %v2832 = vsel %vm2829, %v2831, %v2827
    %v2833 = vmul.f32 %v2728, %v2832
    %v2834 = vrcp.pop %v2752
    %v2835 = vmul.f32 %v2752, %v2834
    %v2836 = vsub.f32 1.0, %v2835
    %v2837 = vmul.f32 %v2834, %v2836
    %v2838 = vadd.f32 %v2834, %v2837
    %vm2839 = vweird.f32 %v2752
    %vm2840 = vweird.f32 %v2834
    %vm2841 = vmor %vm2839, %vm2840
    %v2842 = vsel %vm2841, %v2834, %v2838
    %v2843 = vand.u32 2147483647, %v2752
    %vm2844 = vcmp.eq.f32.partialorder %v2843, 8.507059e+37
    %v2845 = vand.u32 %v2752, 2147483648
    %v2846 = vor.u32 1.1754944e-38, %v2845
    %v2847 = vsel %vm2844, %v2846, %v2842
    %v2848 = vmul.f32 %v2730, %v2847
    %v2849 = vrcp.pop %v2755
    %v2850 = vmul.f32 %v2755, %v2849
    %v2851 = vsub.f32 1.0, %v2850
    %v2852 = vmul.f32 %v2849, %v2851
    %v2853 = vadd.f32 %v2849, %v2852
    %vm2854 = vweird.f32 %v2755
    %vm2855 = vweird.f32 %v2849
    %vm2856 = vmor %vm2854, %vm2855
    %v2857 = vsel %vm2856, %v2849, %v2853
    %v2858 = vand.u32 2147483647, %v2755
    %vm2859 = vcmp.eq.f32.partialorder %v2858, 8.507059e+37
    %v2860 = vand.u32 %v2755, 2147483648
    %v2861 = vor.u32 1.1754944e-38, %v2860
    %v2862 = vsel %vm2859, %v2861, %v2857
    %v2863 = vmul.f32 %v2732, %v2862
    %v2864 = vrcp.pop %v2758
    %v2865 = vmul.f32 %v2758, %v2864
    %v2866 = vsub.f32 1.0, %v2865
    %v2867 = vmul.f32 %v2864, %v2866
    %v2868 = vadd.f32 %v2864, %v2867
    %vm2869 = vweird.f32 %v2758
    %vm2870 = vweird.f32 %v2864
    %vm2871 = vmor %vm2869, %vm2870
    %v2872 = vsel %vm2871, %v2864, %v2868
    %v2873 = vand.u32 2147483647, %v2758
    %vm2874 = vcmp.eq.f32.partialorder %v2873, 8.507059e+37
    %v2875 = vand.u32 %v2758, 2147483648
    %v2876 = vor.u32 1.1754944e-38, %v2875
    %v2877 = vsel %vm2874, %v2876, %v2872
    %v2878 = vmul.f32 %v2734, %v2877
    %2879 = vrot.lane.b32.xlu0 %v2447, 64
    %v2880 = vpop.permute.xlu0 %2879
    %v2883 = vsel %vm540, %v2773, 0
    %2885 = vmatpush.msra.mxu0 0.0
    %2886 = vmatpush.msra.mxu0 0.0
    %2887 = vmatpush.msra.mxu0 0.0
    %2888 = vmatpush.msra.mxu0 0.0
    %2889 = vmatpush.msra.mxu0 0.0
    %2890 = vmatpush.msra.mxu0 0.0
    %2891 = vmatpush.msra.mxu0 0.0
    %2892 = vmatpush.msra.mxu0 0.0
    %2893 = vmatpush.msra.mxu0 0.0
    %2894 = vmatpush.msra.mxu0 0.0
    %2895 = vmatpush.msra.mxu0 0.0
    %2896 = vmatpush.msra.mxu0 0.0
    %2897 = vmatpush.msra.mxu0 0.0
    %2898 = vmatpush.msra.mxu0 0.0
    %2899 = vmatpush.msra.mxu0 0.0
    %2900 = vmatpush.msra.mxu0 %v2880
    %2901 = vmatmul.f32.gmra.mxu0 %v2883
    %v2902 = vpop.f32.mrf.mxu0
    %v2903 = vadd.f32 0.0, %v2902
    %2904 = vdwg.mxu0
    %2905 = vrot.lane.b32.xlu0 %v2450, 64
    %v2906 = vpop.permute.xlu0 %2905
    %v2909 = vsel %vm540, %v2788, 0
    %2911 = vmatpush.msra.mxu0 0.0
    %2912 = vmatpush.msra.mxu0 0.0
    %2913 = vmatpush.msra.mxu0 0.0
    %2914 = vmatpush.msra.mxu0 0.0
    %2915 = vmatpush.msra.mxu0 0.0
    %2916 = vmatpush.msra.mxu0 0.0
    %2917 = vmatpush.msra.mxu0 0.0
    %2918 = vmatpush.msra.mxu0 0.0
    %2919 = vmatpush.msra.mxu0 0.0
    %2920 = vmatpush.msra.mxu0 0.0
    %2921 = vmatpush.msra.mxu0 0.0
    %2922 = vmatpush.msra.mxu0 0.0
    %2923 = vmatpush.msra.mxu0 0.0
    %2924 = vmatpush.msra.mxu0 0.0
    %2925 = vmatpush.msra.mxu0 0.0
    %2926 = vmatpush.msra.mxu0 %v2906
    %2927 = vmatmul.f32.gmra.mxu0 %v2909
    %v2928 = vpop.f32.mrf.mxu0
    %v2929 = vadd.f32 0.0, %v2928
    %2930 = vdwg.mxu0
    %2931 = vrot.lane.b32.xlu0 %v2460, 64
    %v2932 = vpop.permute.xlu0 %2931
    %v2935 = vsel %vm540, %v2803, 0
    %2937 = vmatpush.msra.mxu0 0.0
    %2938 = vmatpush.msra.mxu0 0.0
    %2939 = vmatpush.msra.mxu0 0.0
    %2940 = vmatpush.msra.mxu0 0.0
    %2941 = vmatpush.msra.mxu0 0.0
    %2942 = vmatpush.msra.mxu0 0.0
    %2943 = vmatpush.msra.mxu0 0.0
    %2944 = vmatpush.msra.mxu0 0.0
    %2945 = vmatpush.msra.mxu0 0.0
    %2946 = vmatpush.msra.mxu0 0.0
    %2947 = vmatpush.msra.mxu0 0.0
    %2948 = vmatpush.msra.mxu0 0.0
    %2949 = vmatpush.msra.mxu0 0.0
    %2950 = vmatpush.msra.mxu0 0.0
    %2951 = vmatpush.msra.mxu0 0.0
    %2952 = vmatpush.msra.mxu0 %v2932
    %2953 = vmatmul.f32.gmra.mxu0 %v2935
    %v2954 = vpop.f32.mrf.mxu0
    %v2955 = vadd.f32 0.0, %v2954
    %2956 = vdwg.mxu0
    %2957 = vrot.lane.b32.xlu0 %v2462, 64
    %v2958 = vpop.permute.xlu0 %2957
    %v2961 = vsel %vm540, %v2818, 0
    %2963 = vmatpush.msra.mxu0 0.0
    %2964 = vmatpush.msra.mxu0 0.0
    %2965 = vmatpush.msra.mxu0 0.0
    %2966 = vmatpush.msra.mxu0 0.0
    %2967 = vmatpush.msra.mxu0 0.0
    %2968 = vmatpush.msra.mxu0 0.0
    %2969 = vmatpush.msra.mxu0 0.0
    %2970 = vmatpush.msra.mxu0 0.0
    %2971 = vmatpush.msra.mxu0 0.0
    %2972 = vmatpush.msra.mxu0 0.0
    %2973 = vmatpush.msra.mxu0 0.0
    %2974 = vmatpush.msra.mxu0 0.0
    %2975 = vmatpush.msra.mxu0 0.0
    %2976 = vmatpush.msra.mxu0 0.0
    %2977 = vmatpush.msra.mxu0 0.0
    %2978 = vmatpush.msra.mxu0 %v2958
    %2979 = vmatmul.f32.gmra.mxu0 %v2961
    %v2980 = vpop.f32.mrf.mxu0
    %v2981 = vadd.f32 0.0, %v2980
    %2982 = vdwg.mxu0
    %2983 = vrot.lane.b32.xlu0 %v2464, 64
    %v2984 = vpop.permute.xlu0 %2983
    %v2987 = vsel %vm540, %v2833, 0
    %2989 = vmatpush.msra.mxu0 0.0
    %2990 = vmatpush.msra.mxu0 0.0
    %2991 = vmatpush.msra.mxu0 0.0
    %2992 = vmatpush.msra.mxu0 0.0
    %2993 = vmatpush.msra.mxu0 0.0
    %2994 = vmatpush.msra.mxu0 0.0
    %2995 = vmatpush.msra.mxu0 0.0
    %2996 = vmatpush.msra.mxu0 0.0
    %2997 = vmatpush.msra.mxu0 0.0
    %2998 = vmatpush.msra.mxu0 0.0
    %2999 = vmatpush.msra.mxu0 0.0
    %3000 = vmatpush.msra.mxu0 0.0
    %3001 = vmatpush.msra.mxu0 0.0
    %3002 = vmatpush.msra.mxu0 0.0
    %3003 = vmatpush.msra.mxu0 0.0
    %3004 = vmatpush.msra.mxu0 %v2984
    %3005 = vmatmul.f32.gmra.mxu0 %v2987
    %v3006 = vpop.f32.mrf.mxu0
    %v3007 = vadd.f32 0.0, %v3006
    %3008 = vdwg.mxu0
    %3009 = vrot.lane.b32.xlu0 %v2466, 64
    %v3010 = vpop.permute.xlu0 %3009
    %v3013 = vsel %vm540, %v2848, 0
    %3015 = vmatpush.msra.mxu0 0.0
    %3016 = vmatpush.msra.mxu0 0.0
    %3017 = vmatpush.msra.mxu0 0.0
    %3018 = vmatpush.msra.mxu0 0.0
    %3019 = vmatpush.msra.mxu0 0.0
    %3020 = vmatpush.msra.mxu0 0.0
    %3021 = vmatpush.msra.mxu0 0.0
    %3022 = vmatpush.msra.mxu0 0.0
    %3023 = vmatpush.msra.mxu0 0.0
    %3024 = vmatpush.msra.mxu0 0.0
    %3025 = vmatpush.msra.mxu0 0.0
    %3026 = vmatpush.msra.mxu0 0.0
    %3027 = vmatpush.msra.mxu0 0.0
    %3028 = vmatpush.msra.mxu0 0.0
    %3029 = vmatpush.msra.mxu0 0.0
    %3030 = vmatpush.msra.mxu0 %v3010
    %3031 = vmatmul.f32.gmra.mxu0 %v3013
    %v3032 = vpop.f32.mrf.mxu0
    %v3033 = vadd.f32 0.0, %v3032
    %3034 = vdwg.mxu0
    %3035 = vrot.lane.b32.xlu0 %v2468, 64
    %v3036 = vpop.permute.xlu0 %3035
    %v3039 = vsel %vm540, %v2863, 0
    %3041 = vmatpush.msra.mxu0 0.0
    %3042 = vmatpush.msra.mxu0 0.0
    %3043 = vmatpush.msra.mxu0 0.0
    %3044 = vmatpush.msra.mxu0 0.0
    %3045 = vmatpush.msra.mxu0 0.0
    %3046 = vmatpush.msra.mxu0 0.0
    %3047 = vmatpush.msra.mxu0 0.0
    %3048 = vmatpush.msra.mxu0 0.0
    %3049 = vmatpush.msra.mxu0 0.0
    %3050 = vmatpush.msra.mxu0 0.0
    %3051 = vmatpush.msra.mxu0 0.0
    %3052 = vmatpush.msra.mxu0 0.0
    %3053 = vmatpush.msra.mxu0 0.0
    %3054 = vmatpush.msra.mxu0 0.0
    %3055 = vmatpush.msra.mxu0 0.0
    %3056 = vmatpush.msra.mxu0 %v3036
    %3057 = vmatmul.f32.gmra.mxu0 %v3039
    %v3058 = vpop.f32.mrf.mxu0
    %v3059 = vadd.f32 0.0, %v3058
    %3060 = vdwg.mxu0
    %3061 = vrot.lane.b32.xlu0 %v2470, 64
    %v3062 = vpop.permute.xlu0 %3061
    %v3065 = vsel %vm540, %v2878, 0
    %3067 = vmatpush.msra.mxu0 0.0
    %3068 = vmatpush.msra.mxu0 0.0
    %3069 = vmatpush.msra.mxu0 0.0
    %3070 = vmatpush.msra.mxu0 0.0
    %3071 = vmatpush.msra.mxu0 0.0
    %3072 = vmatpush.msra.mxu0 0.0
    %3073 = vmatpush.msra.mxu0 0.0
    %3074 = vmatpush.msra.mxu0 0.0
    %3075 = vmatpush.msra.mxu0 0.0
    %3076 = vmatpush.msra.mxu0 0.0
    %3077 = vmatpush.msra.mxu0 0.0
    %3078 = vmatpush.msra.mxu0 0.0
    %3079 = vmatpush.msra.mxu0 0.0
    %3080 = vmatpush.msra.mxu0 0.0
    %3081 = vmatpush.msra.mxu0 0.0
    %3082 = vmatpush.msra.mxu0 %v3062
    %3083 = vmatmul.f32.gmra.mxu0 %v3065
    %v3084 = vpop.f32.mrf.mxu0
    %v3085 = vadd.f32 0.0, %v3084
    %3086 = vdwg.mxu0
    %3089 = vrot.lane.b32.xlu0 %v2955, 8
    %v3090 = vpop.permute.xlu0 %3089
    %3091 = vrot.lane.b32.xlu0 %v2981, 8
    %v3092 = vpop.permute.xlu0 %3091
    %3097 = vrot.lane.b32.xlu0 %v3007, 16
    %v3098 = vpop.permute.xlu0 %3097
    %3099 = vrot.lane.b32.xlu0 %v3033, 16
    %v3100 = vpop.permute.xlu0 %3099
    %3105 = vrot.lane.b32.xlu0 %v3059, 24
    %v3106 = vpop.permute.xlu0 %3105
    %3107 = vrot.lane.b32.xlu0 %v3085, 24
    %v3108 = vpop.permute.xlu0 %3107
    %v3111 = vsel %vm540, %v2903, %v3090
    %v3112 = vsel %vm540, %v2929, %v3092
    %v3113 = vsel %vm1181, %v3111, %v3098
    %v3114 = vsel %vm1181, %v3112, %v3100
    %v3115 = vsel %vm1184, %v3113, %v3106
    %v3116 = vsel %vm1184, %v3114, %v3108
    %v3118 = vperm.slane %v2456, 0
    %v3121 = vsel %vm489, %v3115, 0
    %v3124 = vsel %vm489, %v3116, 0
    %3126 = vmatpush.msra.mxu0 0.0
    %3127 = vmatpush.msra.mxu0 0.0
    %3128 = vmatpush.msra.mxu0 0.0
    %3129 = vmatpush.msra.mxu0 0.0
    %3130 = vmatpush.msra.mxu0 0.0
    %3131 = vmatpush.msra.mxu0 0.0
    %3132 = vmatpush.msra.mxu0 0.0
    %3133 = vmatpush.msra.mxu0 0.0
    %3134 = vmatpush.msra.mxu0 0.0
    %3135 = vmatpush.msra.mxu0 0.0
    %3136 = vmatpush.msra.mxu0 0.0
    %3137 = vmatpush.msra.mxu0 0.0
    %3138 = vmatpush.msra.mxu0 %v2455
    %3139 = vmatpush.msra.mxu0 %v2454
    %3140 = vmatpush.msra.mxu0 %v2453
    %3141 = vmatpush.msra.mxu0 %v2452
    %3142 = vmatmul.f32.gmra.mxu0 %v3121
    %v3143 = vpop.f32.mrf.mxu0
    %v3144 = vadd.f32 %v3118, %v3143
    %3145 = vmatmul.f32.gmra.mxu0 %v3124
    %v3146 = vpop.f32.mrf.mxu0
    %v3147 = vadd.f32 %v3118, %v3146
    %3148 = vdwg.mxu0
    %v3149 = vadd.f32 %v479, %v3144
    %v3150 = vadd.f32 %v480, %v3147
    %v3151 = vld [vmem:[#allocation9] sm:$0x1]
    %v3152 = vld [vmem:[#allocation10] sm:$0x1]
    %v3153 = vsel %vm489, %v3149, 0.0
    %3154 = vadd.xlane.f32.xlu0 %v3153
    %v3155 = vpop.xlane.xlu0 %3154
    %v3156 = vsel %vm489, %v3150, 0.0
    %3157 = vadd.xlane.f32.xlu0 %v3156
    %v3158 = vpop.xlane.xlu0 %3157
    %v3159 = vmul.f32 %v3155, %v1235
    %v3160 = vmul.f32 %v3158, %v1235
    %v3161 = vsub.f32 %v3149, %v3159
    %v3162 = vsub.f32 %v3150, %v3160
    %v3163 = vmul.f32 %v3161, %v3161
    %v3164 = vmul.f32 %v3162, %v3162
    %v3165 = vsel %vm489, %v3163, 0.0
    %3166 = vadd.xlane.f32.xlu0 %v3165
    %v3167 = vpop.xlane.xlu0 %3166
    %v3168 = vsel %vm489, %v3164, 0.0
    %3169 = vadd.xlane.f32.xlu0 %v3168
    %v3170 = vpop.xlane.xlu0 %3169
    %v3171 = vmul.f32 %v3167, %v1235
    %v3172 = vmul.f32 %v3170, %v1235
    %v3173 = vadd.f32 %v3171, 1e-05
    %v3174 = vadd.f32 %v3172, 1e-05
    %v3175 = vrsqrt.pop %v3173
    %v3176 = vmul.f32 %v3175, %v3173
    %v3177 = vmul.f32 %v3176, %v3175
    %v3178 = vmul.f32 0.5, %v3177
    %v3179 = vsub.f32 1.5, %v3178
    %v3180 = vmul.f32 %v3175, %v3179
    %vm3181 = vweird.f32 %v3173
    %vm3182 = vweird.f32 %v3175
    %vm3183 = vmor %vm3181, %vm3182
    %v3184 = vsel %vm3183, %v3175, %v3180
    %v3185 = vrsqrt.pop %v3174
    %v3186 = vmul.f32 %v3185, %v3174
    %v3187 = vmul.f32 %v3186, %v3185
    %v3188 = vmul.f32 0.5, %v3187
    %v3189 = vsub.f32 1.5, %v3188
    %v3190 = vmul.f32 %v3185, %v3189
    %vm3191 = vweird.f32 %v3174
    %vm3192 = vweird.f32 %v3185
    %vm3193 = vmor %vm3191, %vm3192
    %v3194 = vsel %vm3193, %v3185, %v3190
    %v3195 = vmul.f32 %v3161, %v3184
    %v3196 = vmul.f32 %v3162, %v3194
    %v3198 = vperm.slane %v3151, 0
    %v3200 = vmul.f32 %v3195, %v3198
    %v3201 = vmul.f32 %v3196, %v3198
    %v3203 = vperm.slane %v3152, 0
    %v3205 = vadd.f32 %v3200, %v3203
    %v3206 = vadd.f32 %v3201, %v3203
    %v3207 = vld [vmem:[#allocation12] sm:$0xff]
    %v3208 = vld [vmem:[#allocation12 + $0x8] sm:$0xff]
    %v3209 = vld [vmem:[#allocation12 + $0x10] sm:$0xff]
    %v3210 = vld [vmem:[#allocation12 + $0x18] sm:$0xff]
    %v3211 = vld [vmem:[#allocation13] sm:$0x1]
    %v3213 = vperm.slane %v3211, 0
    %v3216 = vsel %vm489, %v3205, 0
    %v3219 = vsel %vm489, %v3206, 0
    %3221 = vmatpush.msra.mxu0 0.0
    %3222 = vmatpush.msra.mxu0 0.0
    %3223 = vmatpush.msra.mxu0 0.0
    %3224 = vmatpush.msra.mxu0 0.0
    %3225 = vmatpush.msra.mxu0 0.0
    %3226 = vmatpush.msra.mxu0 0.0
    %3227 = vmatpush.msra.mxu0 0.0
    %3228 = vmatpush.msra.mxu0 0.0
    %3229 = vmatpush.msra.mxu0 0.0
    %3230 = vmatpush.msra.mxu0 0.0
    %3231 = vmatpush.msra.mxu0 0.0
    %3232 = vmatpush.msra.mxu0 0.0
    %3233 = vmatpush.msra.mxu0 %v3210
    %3234 = vmatpush.msra.mxu0 %v3209
    %3235 = vmatpush.msra.mxu0 %v3208
    %3236 = vmatpush.msra.mxu0 %v3207
    %3237 = vmatmul.f32.gmra.mxu0 %v3216
    %v3238 = vpop.f32.mrf.mxu0
    %v3239 = vadd.f32 %v3213, %v3238
    %3240 = vmatmul.f32.gmra.mxu0 %v3219
    %v3241 = vpop.f32.mrf.mxu0
    %v3242 = vadd.f32 %v3213, %v3241
    %3243 = vdwg.mxu0
    %v3244 = vld [vmem:[#allocation15] sm:$0xff]
    %v3245 = vld [vmem:[#allocation15 + $0x8] sm:$0xff]
    %v3246 = vld [vmem:[#allocation15 + $0x10] sm:$0xff]
    %v3247 = vld [vmem:[#allocation15 + $0x18] sm:$0xff]
    %v3248 = vld [vmem:[#allocation16] sm:$0x1]
    %v3250 = vperm.slane %v3248, 0
    %v3253 = vsel %vm489, %v2419, 0
    %v3256 = vsel %vm489, %v2420, 0
    %3258 = vmatpush.msra.mxu0 0.0
    %3259 = vmatpush.msra.mxu0 0.0
    %3260 = vmatpush.msra.mxu0 0.0
    %3261 = vmatpush.msra.mxu0 0.0
    %3262 = vmatpush.msra.mxu0 0.0
    %3263 = vmatpush.msra.mxu0 0.0
    %3264 = vmatpush.msra.mxu0 0.0
    %3265 = vmatpush.msra.mxu0 0.0
    %3266 = vmatpush.msra.mxu0 0.0
    %3267 = vmatpush.msra.mxu0 0.0
    %3268 = vmatpush.msra.mxu0 0.0
    %3269 = vmatpush.msra.mxu0 0.0
    %3270 = vmatpush.msra.mxu0 %v3247
    %3271 = vmatpush.msra.mxu0 %v3246
    %3272 = vmatpush.msra.mxu0 %v3245
    %3273 = vmatpush.msra.mxu0 %v3244
    %3274 = vmatmul.f32.gmra.mxu0 %v3253
    %v3275 = vpop.f32.mrf.mxu0
    %v3276 = vadd.f32 %v3250, %v3275
    %3277 = vmatmul.f32.gmra.mxu0 %v3256
    %v3278 = vpop.f32.mrf.mxu0
    %v3279 = vadd.f32 %v3250, %v3278
    %3280 = vdwg.mxu0
    %v3281 = vld [vmem:[#allocation18] sm:$0xff]
    %v3282 = vld [vmem:[#allocation18 + $0x8] sm:$0xff]
    %v3283 = vld [vmem:[#allocation18 + $0x10] sm:$0xff]
    %v3284 = vld [vmem:[#allocation18 + $0x18] sm:$0xff]
    %v3285 = vld [vmem:[#allocation19] sm:$0x1]
    %3288 = vrot.lane.b32.xlu0 %v3239, 120
    %v3289 = vpop.permute.xlu0 %3288
    %3290 = vrot.lane.b32.xlu0 %v3242, 120
    %v3291 = vpop.permute.xlu0 %3290
    %3292 = vrot.lane.b32.xlu0 %v3239, 112
    %v3293 = vpop.permute.xlu0 %3292
    %3294 = vrot.lane.b32.xlu0 %v3242, 112
    %v3295 = vpop.permute.xlu0 %3294
    %3296 = vrot.lane.b32.xlu0 %v3239, 104
    %v3297 = vpop.permute.xlu0 %3296
    %3298 = vrot.lane.b32.xlu0 %v3242, 104
    %v3299 = vpop.permute.xlu0 %3298
    %3302 = vrot.lane.b32.xlu0 %v3276, 120
    %v3303 = vpop.permute.xlu0 %3302
    %3304 = vrot.lane.b32.xlu0 %v3279, 120
    %v3305 = vpop.permute.xlu0 %3304
    %3306 = vrot.lane.b32.xlu0 %v3276, 112
    %v3307 = vpop.permute.xlu0 %3306
    %3308 = vrot.lane.b32.xlu0 %v3279, 112
    %v3309 = vpop.permute.xlu0 %3308
    %3310 = vrot.lane.b32.xlu0 %v3276, 104
    %v3311 = vpop.permute.xlu0 %3310
    %3312 = vrot.lane.b32.xlu0 %v3279, 104
    %v3313 = vpop.permute.xlu0 %3312
    %v3314 = vsel %vm540, %v3239, 0
    %v3316 = vsel %vm540, %v3276, 0
    %3318 = vmatpush.xpose.msra.mxu0 0.0
    %3319 = vmatpush.xpose.msra.mxu0 0.0
    %3320 = vmatpush.xpose.msra.mxu0 0.0
    %3321 = vmatpush.xpose.msra.mxu0 0.0
    %3322 = vmatpush.xpose.msra.mxu0 0.0
    %3323 = vmatpush.xpose.msra.mxu0 0.0
    %3324 = vmatpush.xpose.msra.mxu0 0.0
    %3325 = vmatpush.xpose.msra.mxu0 0.0
    %3326 = vmatpush.xpose.msra.mxu0 0.0
    %3327 = vmatpush.xpose.msra.mxu0 0.0
    %3328 = vmatpush.xpose.msra.mxu0 0.0
    %3329 = vmatpush.xpose.msra.mxu0 0.0
    %3330 = vmatpush.xpose.msra.mxu0 0.0
    %3331 = vmatpush.xpose.msra.mxu0 0.0
    %3332 = vmatpush.xpose.msra.mxu0 0.0
    %3333 = vmatpush.xpose.msra.mxu0 %v3316
    %3334 = vmatmul.f32.gmra.mxu0 %v3314
    %v3335 = vpop.f32.mrf.mxu0
    %v3336 = vadd.f32 0.0, %v3335
    %3337 = vdwg.mxu0
    %v3338 = vsel %vm540, %v3242, 0
    %v3340 = vsel %vm540, %v3279, 0
    %3342 = vmatpush.xpose.msra.mxu0 0.0
    %3343 = vmatpush.xpose.msra.mxu0 0.0
    %3344 = vmatpush.xpose.msra.mxu0 0.0
    %3345 = vmatpush.xpose.msra.mxu0 0.0
    %3346 = vmatpush.xpose.msra.mxu0 0.0
    %3347 = vmatpush.xpose.msra.mxu0 0.0
    %3348 = vmatpush.xpose.msra.mxu0 0.0
    %3349 = vmatpush.xpose.msra.mxu0 0.0
    %3350 = vmatpush.xpose.msra.mxu0 0.0
    %3351 = vmatpush.xpose.msra.mxu0 0.0
    %3352 = vmatpush.xpose.msra.mxu0 0.0
    %3353 = vmatpush.xpose.msra.mxu0 0.0
    %3354 = vmatpush.xpose.msra.mxu0 0.0
    %3355 = vmatpush.xpose.msra.mxu0 0.0
    %3356 = vmatpush.xpose.msra.mxu0 0.0
    %3357 = vmatpush.xpose.msra.mxu0 %v3340
    %3358 = vmatmul.f32.gmra.mxu0 %v3338
    %v3359 = vpop.f32.mrf.mxu0
    %v3360 = vadd.f32 0.0, %v3359
    %3361 = vdwg.mxu0
    %v3362 = vsel %vm540, %v3289, 0
    %v3364 = vsel %vm540, %v3303, 0
    %3366 = vmatpush.xpose.msra.mxu0 0.0
    %3367 = vmatpush.xpose.msra.mxu0 0.0
    %3368 = vmatpush.xpose.msra.mxu0 0.0
    %3369 = vmatpush.xpose.msra.mxu0 0.0
    %3370 = vmatpush.xpose.msra.mxu0 0.0
    %3371 = vmatpush.xpose.msra.mxu0 0.0
    %3372 = vmatpush.xpose.msra.mxu0 0.0
    %3373 = vmatpush.xpose.msra.mxu0 0.0
    %3374 = vmatpush.xpose.msra.mxu0 0.0
    %3375 = vmatpush.xpose.msra.mxu0 0.0
    %3376 = vmatpush.xpose.msra.mxu0 0.0
    %3377 = vmatpush.xpose.msra.mxu0 0.0
    %3378 = vmatpush.xpose.msra.mxu0 0.0
    %3379 = vmatpush.xpose.msra.mxu0 0.0
    %3380 = vmatpush.xpose.msra.mxu0 0.0
    %3381 = vmatpush.xpose.msra.mxu0 %v3364
    %3382 = vmatmul.f32.gmra.mxu0 %v3362
    %v3383 = vpop.f32.mrf.mxu0
    %v3384 = vadd.f32 0.0, %v3383
    %3385 = vdwg.mxu0
    %v3386 = vsel %vm540, %v3291, 0
    %v3388 = vsel %vm540, %v3305, 0
    %3390 = vmatpush.xpose.msra.mxu0 0.0
    %3391 = vmatpush.xpose.msra.mxu0 0.0
    %3392 = vmatpush.xpose.msra.mxu0 0.0
    %3393 = vmatpush.xpose.msra.mxu0 0.0
    %3394 = vmatpush.xpose.msra.mxu0 0.0
    %3395 = vmatpush.xpose.msra.mxu0 0.0
    %3396 = vmatpush.xpose.msra.mxu0 0.0
    %3397 = vmatpush.xpose.msra.mxu0 0.0
    %3398 = vmatpush.xpose.msra.mxu0 0.0
    %3399 = vmatpush.xpose.msra.mxu0 0.0
    %3400 = vmatpush.xpose.msra.mxu0 0.0
    %3401 = vmatpush.xpose.msra.mxu0 0.0
    %3402 = vmatpush.xpose.msra.mxu0 0.0
    %3403 = vmatpush.xpose.msra.mxu0 0.0
    %3404 = vmatpush.xpose.msra.mxu0 0.0
    %3405 = vmatpush.xpose.msra.mxu0 %v3388
    %3406 = vmatmul.f32.gmra.mxu0 %v3386
    %v3407 = vpop.f32.mrf.mxu0
    %v3408 = vadd.f32 0.0, %v3407
    %3409 = vdwg.mxu0
    %v3410 = vsel %vm540, %v3293, 0
    %v3412 = vsel %vm540, %v3307, 0
    %3414 = vmatpush.xpose.msra.mxu0 0.0
    %3415 = vmatpush.xpose.msra.mxu0 0.0
    %3416 = vmatpush.xpose.msra.mxu0 0.0
    %3417 = vmatpush.xpose.msra.mxu0 0.0
    %3418 = vmatpush.xpose.msra.mxu0 0.0
    %3419 = vmatpush.xpose.msra.mxu0 0.0
    %3420 = vmatpush.xpose.msra.mxu0 0.0
    %3421 = vmatpush.xpose.msra.mxu0 0.0
    %3422 = vmatpush.xpose.msra.mxu0 0.0
    %3423 = vmatpush.xpose.msra.mxu0 0.0
    %3424 = vmatpush.xpose.msra.mxu0 0.0
    %3425 = vmatpush.xpose.msra.mxu0 0.0
    %3426 = vmatpush.xpose.msra.mxu0 0.0
    %3427 = vmatpush.xpose.msra.mxu0 0.0
    %3428 = vmatpush.xpose.msra.mxu0 0.0
    %3429 = vmatpush.xpose.msra.mxu0 %v3412
    %3430 = vmatmul.f32.gmra.mxu0 %v3410
    %v3431 = vpop.f32.mrf.mxu0
    %v3432 = vadd.f32 0.0, %v3431
    %3433 = vdwg.mxu0
    %v3434 = vsel %vm540, %v3295, 0
    %v3436 = vsel %vm540, %v3309, 0
    %3438 = vmatpush.xpose.msra.mxu0 0.0
    %3439 = vmatpush.xpose.msra.mxu0 0.0
    %3440 = vmatpush.xpose.msra.mxu0 0.0
    %3441 = vmatpush.xpose.msra.mxu0 0.0
    %3442 = vmatpush.xpose.msra.mxu0 0.0
    %3443 = vmatpush.xpose.msra.mxu0 0.0
    %3444 = vmatpush.xpose.msra.mxu0 0.0
    %3445 = vmatpush.xpose.msra.mxu0 0.0
    %3446 = vmatpush.xpose.msra.mxu0 0.0
    %3447 = vmatpush.xpose.msra.mxu0 0.0
    %3448 = vmatpush.xpose.msra.mxu0 0.0
    %3449 = vmatpush.xpose.msra.mxu0 0.0
    %3450 = vmatpush.xpose.msra.mxu0 0.0
    %3451 = vmatpush.xpose.msra.mxu0 0.0
    %3452 = vmatpush.xpose.msra.mxu0 0.0
    %3453 = vmatpush.xpose.msra.mxu0 %v3436
    %3454 = vmatmul.f32.gmra.mxu0 %v3434
    %v3455 = vpop.f32.mrf.mxu0
    %v3456 = vadd.f32 0.0, %v3455
    %3457 = vdwg.mxu0
    %v3458 = vsel %vm540, %v3297, 0
    %v3460 = vsel %vm540, %v3311, 0
    %3462 = vmatpush.xpose.msra.mxu0 0.0
    %3463 = vmatpush.xpose.msra.mxu0 0.0
    %3464 = vmatpush.xpose.msra.mxu0 0.0
    %3465 = vmatpush.xpose.msra.mxu0 0.0
    %3466 = vmatpush.xpose.msra.mxu0 0.0
    %3467 = vmatpush.xpose.msra.mxu0 0.0
    %3468 = vmatpush.xpose.msra.mxu0 0.0
    %3469 = vmatpush.xpose.msra.mxu0 0.0
    %3470 = vmatpush.xpose.msra.mxu0 0.0
    %3471 = vmatpush.xpose.msra.mxu0 0.0
    %3472 = vmatpush.xpose.msra.mxu0 0.0
    %3473 = vmatpush.xpose.msra.mxu0 0.0
    %3474 = vmatpush.xpose.msra.mxu0 0.0
    %3475 = vmatpush.xpose.msra.mxu0 0.0
    %3476 = vmatpush.xpose.msra.mxu0 0.0
    %3477 = vmatpush.xpose.msra.mxu0 %v3460
    %3478 = vmatmul.f32.gmra.mxu0 %v3458
    %v3479 = vpop.f32.mrf.mxu0
    %v3480 = vadd.f32 0.0, %v3479
    %3481 = vdwg.mxu0
    %v3482 = vsel %vm540, %v3299, 0
    %v3484 = vsel %vm540, %v3313, 0
    %3486 = vmatpush.xpose.msra.mxu0 0.0
    %3487 = vmatpush.xpose.msra.mxu0 0.0
    %3488 = vmatpush.xpose.msra.mxu0 0.0
    %3489 = vmatpush.xpose.msra.mxu0 0.0
    %3490 = vmatpush.xpose.msra.mxu0 0.0
    %3491 = vmatpush.xpose.msra.mxu0 0.0
    %3492 = vmatpush.xpose.msra.mxu0 0.0
    %3493 = vmatpush.xpose.msra.mxu0 0.0
    %3494 = vmatpush.xpose.msra.mxu0 0.0
    %3495 = vmatpush.xpose.msra.mxu0 0.0
    %3496 = vmatpush.xpose.msra.mxu0 0.0
    %3497 = vmatpush.xpose.msra.mxu0 0.0
    %3498 = vmatpush.xpose.msra.mxu0 0.0
    %3499 = vmatpush.xpose.msra.mxu0 0.0
    %3500 = vmatpush.xpose.msra.mxu0 0.0
    %3501 = vmatpush.xpose.msra.mxu0 %v3484
    %3502 = vmatmul.f32.gmra.mxu0 %v3482
    %v3503 = vpop.f32.mrf.mxu0
    %v3504 = vadd.f32 0.0, %v3503
    %3505 = vdwg.mxu0
    %v3506 = vmul.f32 %v3336, 0.35355338
    %v3507 = vmul.f32 %v3360, 0.35355338
    %v3508 = vmul.f32 %v3384, 0.35355338
    %v3509 = vmul.f32 %v3408, 0.35355338
    %v3510 = vmul.f32 %v3432, 0.35355338
    %v3511 = vmul.f32 %v3456, 0.35355338
    %v3512 = vmul.f32 %v3480, 0.35355338
    %v3513 = vmul.f32 %v3504, 0.35355338
    %v3514 = vsel %vm540, %v3506, -inf
    %3515 = vmax.xlane.f32.xlu0 %v3514
    %v3516 = vpop.xlane.xlu0 %3515
    %v3517 = vsel %vm540, %v3507, -inf
    %3518 = vmax.xlane.f32.xlu0 %v3517
    %v3519 = vpop.xlane.xlu0 %3518
    %v3520 = vsel %vm540, %v3508, -inf
    %3521 = vmax.xlane.f32.xlu0 %v3520
    %v3522 = vpop.xlane.xlu0 %3521
    %v3523 = vsel %vm540, %v3509, -inf
    %3524 = vmax.xlane.f32.xlu0 %v3523
    %v3525 = vpop.xlane.xlu0 %3524
    %v3526 = vsel %vm540, %v3510, -inf
    %3527 = vmax.xlane.f32.xlu0 %v3526
    %v3528 = vpop.xlane.xlu0 %3527
    %v3529 = vsel %vm540, %v3511, -inf
    %3530 = vmax.xlane.f32.xlu0 %v3529
    %v3531 = vpop.xlane.xlu0 %3530
    %v3532 = vsel %vm540, %v3512, -inf
    %3533 = vmax.xlane.f32.xlu0 %v3532
    %v3534 = vpop.xlane.xlu0 %3533
    %v3535 = vsel %vm540, %v3513, -inf
    %3536 = vmax.xlane.f32.xlu0 %v3535
    %v3537 = vpop.xlane.xlu0 %3536
    %v3538 = vsub.f32 %v3506, %v3516
    %v3539 = vsub.f32 %v3507, %v3519
    %v3540 = vsub.f32 %v3508, %v3522
    %v3541 = vsub.f32 %v3509, %v3525
    %v3542 = vsub.f32 %v3510, %v3528
    %v3543 = vsub.f32 %v3511, %v3531
    %v3544 = vsub.f32 %v3512, %v3534
    %v3545 = vsub.f32 %v3513, %v3537
    %v3546 = vmul.f32 %v3538, 1.442695
    %v3547 = vpow.pop %v3546
    %v3548 = vmul.f32 %v3539, 1.442695
    %v3549 = vpow.pop %v3548
    %v3550 = vmul.f32 %v3540, 1.442695
    %v3551 = vpow.pop %v3550
    %v3552 = vmul.f32 %v3541, 1.442695
    %v3553 = vpow.pop %v3552
    %v3554 = vmul.f32 %v3542, 1.442695
    %v3555 = vpow.pop %v3554
    %v3556 = vmul.f32 %v3543, 1.442695
    %v3557 = vpow.pop %v3556
    %v3558 = vmul.f32 %v3544, 1.442695
    %v3559 = vpow.pop %v3558
    %v3560 = vmul.f32 %v3545, 1.442695
    %v3561 = vpow.pop %v3560
    %v3562 = vsel %vm540, %v3547, 0.0
    %3563 = vadd.xlane.f32.xlu0 %v3562
    %v3564 = vpop.xlane.xlu0 %3563
    %v3565 = vsel %vm540, %v3549, 0.0
    %3566 = vadd.xlane.f32.xlu0 %v3565
    %v3567 = vpop.xlane.xlu0 %3566
    %v3568 = vsel %vm540, %v3551, 0.0
    %3569 = vadd.xlane.f32.xlu0 %v3568
    %v3570 = vpop.xlane.xlu0 %3569
    %v3571 = vsel %vm540, %v3553, 0.0
    %3572 = vadd.xlane.f32.xlu0 %v3571
    %v3573 = vpop.xlane.xlu0 %3572
    %v3574 = vsel %vm540, %v3555, 0.0
    %3575 = vadd.xlane.f32.xlu0 %v3574
    %v3576 = vpop.xlane.xlu0 %3575
    %v3577 = vsel %vm540, %v3557, 0.0
    %3578 = vadd.xlane.f32.xlu0 %v3577
    %v3579 = vpop.xlane.xlu0 %3578
    %v3580 = vsel %vm540, %v3559, 0.0
    %3581 = vadd.xlane.f32.xlu0 %v3580
    %v3582 = vpop.xlane.xlu0 %3581
    %v3583 = vsel %vm540, %v3561, 0.0
    %3584 = vadd.xlane.f32.xlu0 %v3583
    %v3585 = vpop.xlane.xlu0 %3584
    %v3586 = vrcp.pop %v3564
    %v3587 = vmul.f32 %v3564, %v3586
    %v3588 = vsub.f32 1.0, %v3587
    %v3589 = vmul.f32 %v3586, %v3588
    %v3590 = vadd.f32 %v3586, %v3589
    %vm3591 = vweird.f32 %v3564
    %vm3592 = vweird.f32 %v3586
    %vm3593 = vmor %vm3591, %vm3592
    %v3594 = vsel %vm3593, %v3586, %v3590
    %v3595 = vand.u32 2147483647, %v3564
    %vm3596 = vcmp.eq.f32.partialorder %v3595, 8.507059e+37
    %v3597 = vand.u32 %v3564, 2147483648
    %v3598 = vor.u32 1.1754944e-38, %v3597
    %v3599 = vsel %vm3596, %v3598, %v3594
    %v3600 = vmul.f32 %v3547, %v3599
    %v3601 = vrcp.pop %v3567
    %v3602 = vmul.f32 %v3567, %v3601
    %v3603 = vsub.f32 1.0, %v3602
    %v3604 = vmul.f32 %v3601, %v3603
    %v3605 = vadd.f32 %v3601, %v3604
    %vm3606 = vweird.f32 %v3567
    %vm3607 = vweird.f32 %v3601
    %vm3608 = vmor %vm3606, %vm3607
    %v3609 = vsel %vm3608, %v3601, %v3605
    %v3610 = vand.u32 2147483647, %v3567
    %vm3611 = vcmp.eq.f32.partialorder %v3610, 8.507059e+37
    %v3612 = vand.u32 %v3567, 2147483648
    %v3613 = vor.u32 1.1754944e-38, %v3612
    %v3614 = vsel %vm3611, %v3613, %v3609
    %v3615 = vmul.f32 %v3549, %v3614
    %v3616 = vrcp.pop %v3570
    %v3617 = vmul.f32 %v3570, %v3616
    %v3618 = vsub.f32 1.0, %v3617
    %v3619 = vmul.f32 %v3616, %v3618
    %v3620 = vadd.f32 %v3616, %v3619
    %vm3621 = vweird.f32 %v3570
    %vm3622 = vweird.f32 %v3616
    %vm3623 = vmor %vm3621, %vm3622
    %v3624 = vsel %vm3623, %v3616, %v3620
    %v3625 = vand.u32 2147483647, %v3570
    %vm3626 = vcmp.eq.f32.partialorder %v3625, 8.507059e+37
    %v3627 = vand.u32 %v3570, 2147483648
    %v3628 = vor.u32 1.1754944e-38, %v3627
    %v3629 = vsel %vm3626, %v3628, %v3624
    %v3630 = vmul.f32 %v3551, %v3629
    %v3631 = vrcp.pop %v3573
    %v3632 = vmul.f32 %v3573, %v3631
    %v3633 = vsub.f32 1.0, %v3632
    %v3634 = vmul.f32 %v3631, %v3633
    %v3635 = vadd.f32 %v3631, %v3634
    %vm3636 = vweird.f32 %v3573
    %vm3637 = vweird.f32 %v3631
    %vm3638 = vmor %vm3636, %vm3637
    %v3639 = vsel %vm3638, %v3631, %v3635
    %v3640 = vand.u32 2147483647, %v3573
    %vm3641 = vcmp.eq.f32.partialorder %v3640, 8.507059e+37
    %v3642 = vand.u32 %v3573, 2147483648
    %v3643 = vor.u32 1.1754944e-38, %v3642
    %v3644 = vsel %vm3641, %v3643, %v3639
    %v3645 = vmul.f32 %v3553, %v3644
    %v3646 = vrcp.pop %v3576
    %v3647 = vmul.f32 %v3576, %v3646
    %v3648 = vsub.f32 1.0, %v3647
    %v3649 = vmul.f32 %v3646, %v3648
    %v3650 = vadd.f32 %v3646, %v3649
    %vm3651 = vweird.f32 %v3576
    %vm3652 = vweird.f32 %v3646
    %vm3653 = vmor %vm3651, %vm3652
    %v3654 = vsel %vm3653, %v3646, %v3650
    %v3655 = vand.u32 2147483647, %v3576
    %vm3656 = vcmp.eq.f32.partialorder %v3655, 8.507059e+37
    %v3657 = vand.u32 %v3576, 2147483648
    %v3658 = vor.u32 1.1754944e-38, %v3657
    %v3659 = vsel %vm3656, %v3658, %v3654
    %v3660 = vmul.f32 %v3555, %v3659
    %v3661 = vrcp.pop %v3579
    %v3662 = vmul.f32 %v3579, %v3661
    %v3663 = vsub.f32 1.0, %v3662
    %v3664 = vmul.f32 %v3661, %v3663
    %v3665 = vadd.f32 %v3661, %v3664
    %vm3666 = vweird.f32 %v3579
    %vm3667 = vweird.f32 %v3661
    %vm3668 = vmor %vm3666, %vm3667
    %v3669 = vsel %vm3668, %v3661, %v3665
    %v3670 = vand.u32 2147483647, %v3579
    %vm3671 = vcmp.eq.f32.partialorder %v3670, 8.507059e+37
    %v3672 = vand.u32 %v3579, 2147483648
    %v3673 = vor.u32 1.1754944e-38, %v3672
    %v3674 = vsel %vm3671, %v3673, %v3669
    %v3675 = vmul.f32 %v3557, %v3674
    %v3676 = vrcp.pop %v3582
    %v3677 = vmul.f32 %v3582, %v3676
    %v3678 = vsub.f32 1.0, %v3677
    %v3679 = vmul.f32 %v3676, %v3678
    %v3680 = vadd.f32 %v3676, %v3679
    %vm3681 = vweird.f32 %v3582
    %vm3682 = vweird.f32 %v3676
    %vm3683 = vmor %vm3681, %vm3682
    %v3684 = vsel %vm3683, %v3676, %v3680
    %v3685 = vand.u32 2147483647, %v3582
    %vm3686 = vcmp.eq.f32.partialorder %v3685, 8.507059e+37
    %v3687 = vand.u32 %v3582, 2147483648
    %v3688 = vor.u32 1.1754944e-38, %v3687
    %v3689 = vsel %vm3686, %v3688, %v3684
    %v3690 = vmul.f32 %v3559, %v3689
    %v3691 = vrcp.pop %v3585
    %v3692 = vmul.f32 %v3585, %v3691
    %v3693 = vsub.f32 1.0, %v3692
    %v3694 = vmul.f32 %v3691, %v3693
    %v3695 = vadd.f32 %v3691, %v3694
    %vm3696 = vweird.f32 %v3585
    %vm3697 = vweird.f32 %v3691
    %vm3698 = vmor %vm3696, %vm3697
    %v3699 = vsel %vm3698, %v3691, %v3695
    %v3700 = vand.u32 2147483647, %v3585
    %vm3701 = vcmp.eq.f32.partialorder %v3700, 8.507059e+37
    %v3702 = vand.u32 %v3585, 2147483648
    %v3703 = vor.u32 1.1754944e-38, %v3702
    %v3704 = vsel %vm3701, %v3703, %v3699
    %v3705 = vmul.f32 %v3561, %v3704
    %3706 = vrot.lane.b32.xlu0 %v3276, 96
    %v3707 = vpop.permute.xlu0 %3706
    %v3710 = vsel %vm540, %v3600, 0
    %3712 = vmatpush.msra.mxu0 0.0
    %3713 = vmatpush.msra.mxu0 0.0
    %3714 = vmatpush.msra.mxu0 0.0
    %3715 = vmatpush.msra.mxu0 0.0
    %3716 = vmatpush.msra.mxu0 0.0
    %3717 = vmatpush.msra.mxu0 0.0
    %3718 = vmatpush.msra.mxu0 0.0
    %3719 = vmatpush.msra.mxu0 0.0
    %3720 = vmatpush.msra.mxu0 0.0
    %3721 = vmatpush.msra.mxu0 0.0
    %3722 = vmatpush.msra.mxu0 0.0
    %3723 = vmatpush.msra.mxu0 0.0
    %3724 = vmatpush.msra.mxu0 0.0
    %3725 = vmatpush.msra.mxu0 0.0
    %3726 = vmatpush.msra.mxu0 0.0
    %3727 = vmatpush.msra.mxu0 %v3707
    %3728 = vmatmul.f32.gmra.mxu0 %v3710
    %v3729 = vpop.f32.mrf.mxu0
    %v3730 = vadd.f32 0.0, %v3729
    %3731 = vdwg.mxu0
    %3732 = vrot.lane.b32.xlu0 %v3279, 96
    %v3733 = vpop.permute.xlu0 %3732
    %v3736 = vsel %vm540, %v3615, 0
    %3738 = vmatpush.msra.mxu0 0.0
    %3739 = vmatpush.msra.mxu0 0.0
    %3740 = vmatpush.msra.mxu0 0.0
    %3741 = vmatpush.msra.mxu0 0.0
    %3742 = vmatpush.msra.mxu0 0.0
    %3743 = vmatpush.msra.mxu0 0.0
    %3744 = vmatpush.msra.mxu0 0.0
    %3745 = vmatpush.msra.mxu0 0.0
    %3746 = vmatpush.msra.mxu0 0.0
    %3747 = vmatpush.msra.mxu0 0.0
    %3748 = vmatpush.msra.mxu0 0.0
    %3749 = vmatpush.msra.mxu0 0.0
    %3750 = vmatpush.msra.mxu0 0.0
    %3751 = vmatpush.msra.mxu0 0.0
    %3752 = vmatpush.msra.mxu0 0.0
    %3753 = vmatpush.msra.mxu0 %v3733
    %3754 = vmatmul.f32.gmra.mxu0 %v3736
    %v3755 = vpop.f32.mrf.mxu0
    %v3756 = vadd.f32 0.0, %v3755
    %3757 = vdwg.mxu0
    %3758 = vrot.lane.b32.xlu0 %v3303, 96
    %v3759 = vpop.permute.xlu0 %3758
    %v3762 = vsel %vm540, %v3630, 0
    %3764 = vmatpush.msra.mxu0 0.0
    %3765 = vmatpush.msra.mxu0 0.0
    %3766 = vmatpush.msra.mxu0 0.0
    %3767 = vmatpush.msra.mxu0 0.0
    %3768 = vmatpush.msra.mxu0 0.0
    %3769 = vmatpush.msra.mxu0 0.0
    %3770 = vmatpush.msra.mxu0 0.0
    %3771 = vmatpush.msra.mxu0 0.0
    %3772 = vmatpush.msra.mxu0 0.0
    %3773 = vmatpush.msra.mxu0 0.0
    %3774 = vmatpush.msra.mxu0 0.0
    %3775 = vmatpush.msra.mxu0 0.0
    %3776 = vmatpush.msra.mxu0 0.0
    %3777 = vmatpush.msra.mxu0 0.0
    %3778 = vmatpush.msra.mxu0 0.0
    %3779 = vmatpush.msra.mxu0 %v3759
    %3780 = vmatmul.f32.gmra.mxu0 %v3762
    %v3781 = vpop.f32.mrf.mxu0
    %v3782 = vadd.f32 0.0, %v3781
    %3783 = vdwg.mxu0
    %3784 = vrot.lane.b32.xlu0 %v3305, 96
    %v3785 = vpop.permute.xlu0 %3784
    %v3788 = vsel %vm540, %v3645, 0
    %3790 = vmatpush.msra.mxu0 0.0
    %3791 = vmatpush.msra.mxu0 0.0
    %3792 = vmatpush.msra.mxu0 0.0
    %3793 = vmatpush.msra.mxu0 0.0
    %3794 = vmatpush.msra.mxu0 0.0
    %3795 = vmatpush.msra.mxu0 0.0
    %3796 = vmatpush.msra.mxu0 0.0
    %3797 = vmatpush.msra.mxu0 0.0
    %3798 = vmatpush.msra.mxu0 0.0
    %3799 = vmatpush.msra.mxu0 0.0
    %3800 = vmatpush.msra.mxu0 0.0
    %3801 = vmatpush.msra.mxu0 0.0
    %3802 = vmatpush.msra.mxu0 0.0
    %3803 = vmatpush.msra.mxu0 0.0
    %3804 = vmatpush.msra.mxu0 0.0
    %3805 = vmatpush.msra.mxu0 %v3785
    %3806 = vmatmul.f32.gmra.mxu0 %v3788
    %v3807 = vpop.f32.mrf.mxu0
    %v3808 = vadd.f32 0.0, %v3807
    %3809 = vdwg.mxu0
    %3810 = vrot.lane.b32.xlu0 %v3307, 96
    %v3811 = vpop.permute.xlu0 %3810
    %v3814 = vsel %vm540, %v3660, 0
    %3816 = vmatpush.msra.mxu0 0.0
    %3817 = vmatpush.msra.mxu0 0.0
    %3818 = vmatpush.msra.mxu0 0.0
    %3819 = vmatpush.msra.mxu0 0.0
    %3820 = vmatpush.msra.mxu0 0.0
    %3821 = vmatpush.msra.mxu0 0.0
    %3822 = vmatpush.msra.mxu0 0.0
    %3823 = vmatpush.msra.mxu0 0.0
    %3824 = vmatpush.msra.mxu0 0.0
    %3825 = vmatpush.msra.mxu0 0.0
    %3826 = vmatpush.msra.mxu0 0.0
    %3827 = vmatpush.msra.mxu0 0.0
    %3828 = vmatpush.msra.mxu0 0.0
    %3829 = vmatpush.msra.mxu0 0.0
    %3830 = vmatpush.msra.mxu0 0.0
    %3831 = vmatpush.msra.mxu0 %v3811
    %3832 = vmatmul.f32.gmra.mxu0 %v3814
    %v3833 = vpop.f32.mrf.mxu0
    %v3834 = vadd.f32 0.0, %v3833
    %3835 = vdwg.mxu0
    %3836 = vrot.lane.b32.xlu0 %v3309, 96
    %v3837 = vpop.permute.xlu0 %3836
    %v3840 = vsel %vm540, %v3675, 0
    %3842 = vmatpush.msra.mxu0 0.0
    %3843 = vmatpush.msra.mxu0 0.0
    %3844 = vmatpush.msra.mxu0 0.0
    %3845 = vmatpush.msra.mxu0 0.0
    %3846 = vmatpush.msra.mxu0 0.0
    %3847 = vmatpush.msra.mxu0 0.0
    %3848 = vmatpush.msra.mxu0 0.0
    %3849 = vmatpush.msra.mxu0 0.0
    %3850 = vmatpush.msra.mxu0 0.0
    %3851 = vmatpush.msra.mxu0 0.0
    %3852 = vmatpush.msra.mxu0 0.0
    %3853 = vmatpush.msra.mxu0 0.0
    %3854 = vmatpush.msra.mxu0 0.0
    %3855 = vmatpush.msra.mxu0 0.0
    %3856 = vmatpush.msra.mxu0 0.0
    %3857 = vmatpush.msra.mxu0 %v3837
    %3858 = vmatmul.f32.gmra.mxu0 %v3840
    %v3859 = vpop.f32.mrf.mxu0
    %v3860 = vadd.f32 0.0, %v3859
    %3861 = vdwg.mxu0
    %3862 = vrot.lane.b32.xlu0 %v3311, 96
    %v3863 = vpop.permute.xlu0 %3862
    %v3866 = vsel %vm540, %v3690, 0
    %3868 = vmatpush.msra.mxu0 0.0
    %3869 = vmatpush.msra.mxu0 0.0
    %3870 = vmatpush.msra.mxu0 0.0
    %3871 = vmatpush.msra.mxu0 0.0
    %3872 = vmatpush.msra.mxu0 0.0
    %3873 = vmatpush.msra.mxu0 0.0
    %3874 = vmatpush.msra.mxu0 0.0
    %3875 = vmatpush.msra.mxu0 0.0
    %3876 = vmatpush.msra.mxu0 0.0
    %3877 = vmatpush.msra.mxu0 0.0
    %3878 = vmatpush.msra.mxu0 0.0
    %3879 = vmatpush.msra.mxu0 0.0
    %3880 = vmatpush.msra.mxu0 0.0
    %3881 = vmatpush.msra.mxu0 0.0
    %3882 = vmatpush.msra.mxu0 0.0
    %3883 = vmatpush.msra.mxu0 %v3863
    %3884 = vmatmul.f32.gmra.mxu0 %v3866
    %v3885 = vpop.f32.mrf.mxu0
    %v3886 = vadd.f32 0.0, %v3885
    %3887 = vdwg.mxu0
    %3888 = vrot.lane.b32.xlu0 %v3313, 96
    %v3889 = vpop.permute.xlu0 %3888
    %v3892 = vsel %vm540, %v3705, 0
    %3894 = vmatpush.msra.mxu0 0.0
    %3895 = vmatpush.msra.mxu0 0.0
    %3896 = vmatpush.msra.mxu0 0.0
    %3897 = vmatpush.msra.mxu0 0.0
    %3898 = vmatpush.msra.mxu0 0.0
    %3899 = vmatpush.msra.mxu0 0.0
    %3900 = vmatpush.msra.mxu0 0.0
    %3901 = vmatpush.msra.mxu0 0.0
    %3902 = vmatpush.msra.mxu0 0.0
    %3903 = vmatpush.msra.mxu0 0.0
    %3904 = vmatpush.msra.mxu0 0.0
    %3905 = vmatpush.msra.mxu0 0.0
    %3906 = vmatpush.msra.mxu0 0.0
    %3907 = vmatpush.msra.mxu0 0.0
    %3908 = vmatpush.msra.mxu0 0.0
    %3909 = vmatpush.msra.mxu0 %v3889
    %3910 = vmatmul.f32.gmra.mxu0 %v3892
    %v3911 = vpop.f32.mrf.mxu0
    %v3912 = vadd.f32 0.0, %v3911
    %3913 = vdwg.mxu0
    %3916 = vrot.lane.b32.xlu0 %v3782, 8
    %v3917 = vpop.permute.xlu0 %3916
    %3918 = vrot.lane.b32.xlu0 %v3808, 8
    %v3919 = vpop.permute.xlu0 %3918
    %3924 = vrot.lane.b32.xlu0 %v3834, 16
    %v3925 = vpop.permute.xlu0 %3924
    %3926 = vrot.lane.b32.xlu0 %v3860, 16
    %v3927 = vpop.permute.xlu0 %3926
    %3932 = vrot.lane.b32.xlu0 %v3886, 24
    %v3933 = vpop.permute.xlu0 %3932
    %3934 = vrot.lane.b32.xlu0 %v3912, 24
    %v3935 = vpop.permute.xlu0 %3934
    %v3938 = vsel %vm540, %v3730, %v3917
    %v3939 = vsel %vm540, %v3756, %v3919
    %v3940 = vsel %vm1181, %v3938, %v3925
    %v3941 = vsel %vm1181, %v3939, %v3927
    %v3942 = vsel %vm1184, %v3940, %v3933
    %v3943 = vsel %vm1184, %v3941, %v3935
    %v3945 = vperm.slane %v3285, 0
    %v3948 = vsel %vm489, %v3942, 0
    %v3951 = vsel %vm489, %v3943, 0
    %3953 = vmatpush.msra.mxu0 0.0
    %3954 = vmatpush.msra.mxu0 0.0
    %3955 = vmatpush.msra.mxu0 0.0
    %3956 = vmatpush.msra.mxu0 0.0
    %3957 = vmatpush.msra.mxu0 0.0
    %3958 = vmatpush.msra.mxu0 0.0
    %3959 = vmatpush.msra.mxu0 0.0
    %3960 = vmatpush.msra.mxu0 0.0
    %3961 = vmatpush.msra.mxu0 0.0
    %3962 = vmatpush.msra.mxu0 0.0
    %3963 = vmatpush.msra.mxu0 0.0
    %3964 = vmatpush.msra.mxu0 0.0
    %3965 = vmatpush.msra.mxu0 %v3284
    %3966 = vmatpush.msra.mxu0 %v3283
    %3967 = vmatpush.msra.mxu0 %v3282
    %3968 = vmatpush.msra.mxu0 %v3281
    %3969 = vmatmul.f32.gmra.mxu0 %v3948
    %v3970 = vpop.f32.mrf.mxu0
    %v3971 = vadd.f32 %v3945, %v3970
    %3972 = vmatmul.f32.gmra.mxu0 %v3951
    %v3973 = vpop.f32.mrf.mxu0
    %v3974 = vadd.f32 %v3945, %v3973
    %3975 = vdwg.mxu0
    %v3976 = vadd.f32 %v3205, %v3971
    %v3977 = vadd.f32 %v3206, %v3974
    %v3978 = vld [vmem:[#allocation21] sm:$0x1]
    %v3979 = vld [vmem:[#allocation22] sm:$0x1]
    %v3980 = vsel %vm489, %v3976, 0.0
    %3981 = vadd.xlane.f32.xlu0 %v3980
    %v3982 = vpop.xlane.xlu0 %3981
    %v3983 = vsel %vm489, %v3977, 0.0
    %3984 = vadd.xlane.f32.xlu0 %v3983
    %v3985 = vpop.xlane.xlu0 %3984
    %v3986 = vmul.f32 %v3982, %v1235
    %v3987 = vmul.f32 %v3985, %v1235
    %v3988 = vsub.f32 %v3976, %v3986
    %v3989 = vsub.f32 %v3977, %v3987
    %v3990 = vmul.f32 %v3988, %v3988
    %v3991 = vmul.f32 %v3989, %v3989
    %v3992 = vsel %vm489, %v3990, 0.0
    %3993 = vadd.xlane.f32.xlu0 %v3992
    %v3994 = vpop.xlane.xlu0 %3993
    %v3995 = vsel %vm489, %v3991, 0.0
    %3996 = vadd.xlane.f32.xlu0 %v3995
    %v3997 = vpop.xlane.xlu0 %3996
    %v3998 = vmul.f32 %v3994, %v1235
    %v3999 = vmul.f32 %v3997, %v1235
    %v4000 = vadd.f32 %v3998, 1e-05
    %v4001 = vadd.f32 %v3999, 1e-05
    %v4002 = vrsqrt.pop %v4000
    %v4003 = vmul.f32 %v4002, %v4000
    %v4004 = vmul.f32 %v4003, %v4002
    %v4005 = vmul.f32 0.5, %v4004
    %v4006 = vsub.f32 1.5, %v4005
    %v4007 = vmul.f32 %v4002, %v4006
    %vm4008 = vweird.f32 %v4000
    %vm4009 = vweird.f32 %v4002
    %vm4010 = vmor %vm4008, %vm4009
    %v4011 = vsel %vm4010, %v4002, %v4007
    %v4012 = vrsqrt.pop %v4001
    %v4013 = vmul.f32 %v4012, %v4001
    %v4014 = vmul.f32 %v4013, %v4012
    %v4015 = vmul.f32 0.5, %v4014
    %v4016 = vsub.f32 1.5, %v4015
    %v4017 = vmul.f32 %v4012, %v4016
    %vm4018 = vweird.f32 %v4001
    %vm4019 = vweird.f32 %v4012
    %vm4020 = vmor %vm4018, %vm4019
    %v4021 = vsel %vm4020, %v4012, %v4017
    %v4022 = vmul.f32 %v3988, %v4011
    %v4023 = vmul.f32 %v3989, %v4021
    %v4025 = vperm.slane %v3978, 0
    %v4027 = vmul.f32 %v4022, %v4025
    %v4028 = vmul.f32 %v4023, %v4025
    %v4030 = vperm.slane %v3979, 0
    %v4032 = vadd.f32 %v4027, %v4030
    %v4033 = vadd.f32 %v4028, %v4030
    %v4034 = vld [vmem:[#allocation24] sm:$0xff]
    %v4035 = vld [vmem:[#allocation24 + $0x8] sm:$0xff]
    %v4036 = vld [vmem:[#allocation24 + $0x10] sm:$0xff]
    %v4037 = vld [vmem:[#allocation24 + $0x18] sm:$0xff]
    %v4038 = vld [vmem:[#allocation25] sm:$0x1]
    %v4039 = vld [vmem:[%s63] sm:$0xff]
    %v4040 = vld [vmem:[%s63 + $0x8] sm:$0xff]
    %v4041 = vld [vmem:[%s63 + $0x10] sm:$0xff]
    %v4042 = vld [vmem:[%s63 + $0x18] sm:$0xff]
    %v4043 = vld [vmem:[%s63 + $0x20] sm:$0xff]
    %v4044 = vld [vmem:[%s63 + $0x28] sm:$0xff]
    %v4045 = vld [vmem:[%s63 + $0x30] sm:$0xff]
    %v4046 = vld [vmem:[%s63 + $0x38] sm:$0xff]
    %v4047 = vld [vmem:[#allocation27] sm:$0x1]
    %v4049 = vperm.slane %v4038, 0
    %v4052 = vsel %vm489, %v4032, 0
    %v4055 = vsel %vm489, %v4033, 0
    %4057 = vmatpush.msra.mxu0 0.0
    %4058 = vmatpush.msra.mxu0 0.0
    %4059 = vmatpush.msra.mxu0 0.0
    %4060 = vmatpush.msra.mxu0 0.0
    %4061 = vmatpush.msra.mxu0 0.0
    %4062 = vmatpush.msra.mxu0 0.0
    %4063 = vmatpush.msra.mxu0 0.0
    %4064 = vmatpush.msra.mxu0 0.0
    %4065 = vmatpush.msra.mxu0 0.0
    %4066 = vmatpush.msra.mxu0 0.0
    %4067 = vmatpush.msra.mxu0 0.0
    %4068 = vmatpush.msra.mxu0 0.0
    %4069 = vmatpush.msra.mxu0 %v4037
    %4070 = vmatpush.msra.mxu0 %v4036
    %4071 = vmatpush.msra.mxu0 %v4035
    %4072 = vmatpush.msra.mxu0 %v4034
    %4073 = vmatmul.f32.gmra.mxu0 %v4052
    %v4074 = vpop.f32.mrf.mxu0
    %v4075 = vadd.f32 %v4049, %v4074
    %4076 = vmatmul.f32.gmra.mxu0 %v4055
    %v4077 = vpop.f32.mrf.mxu0
    %v4078 = vadd.f32 %v4049, %v4077
    %4079 = vdwg.mxu0
    %v4080 = vmax.f32 %v4075, 0.0
    %v4081 = vmax.f32 %v4078, 0.0
    %v4083 = vperm.slane %v4047, 0
    %v4086 = vsel %vm1335, %v4080, 0
    %v4089 = vsel %vm1335, %v4081, 0
    %4091 = vmatpush.msra.mxu0 0.0
    %4092 = vmatpush.msra.mxu0 0.0
    %4093 = vmatpush.msra.mxu0 0.0
    %4094 = vmatpush.msra.mxu0 0.0
    %4095 = vmatpush.msra.mxu0 0.0
    %4096 = vmatpush.msra.mxu0 0.0
    %4097 = vmatpush.msra.mxu0 0.0
    %4098 = vmatpush.msra.mxu0 0.0
    %4099 = vmatpush.msra.mxu0 %v4046
    %4100 = vmatpush.msra.mxu0 %v4045
    %4101 = vmatpush.msra.mxu0 %v4044
    %4102 = vmatpush.msra.mxu0 %v4043
    %4103 = vmatpush.msra.mxu0 %v4042
    %4104 = vmatpush.msra.mxu0 %v4041
    %4105 = vmatpush.msra.mxu0 %v4040
    %4106 = vmatpush.msra.mxu0 %v4039
    %4107 = vmatmul.f32.gmra.mxu0 %v4086
    %v4108 = vpop.f32.mrf.mxu0
    %v4109 = vadd.f32 %v4083, %v4108
    %4110 = vmatmul.f32.gmra.mxu0 %v4089
    %v4111 = vpop.f32.mrf.mxu0
    %v4112 = vadd.f32 %v4083, %v4111
    %4113 = vdwg.mxu0
    %v4114 = vadd.f32 %v4032, %v4109
    %v4115 = vadd.f32 %v4033, %v4112
    %v4116 = vld [vmem:[#allocation28] sm:$0x1]
    %v4117 = vld [vmem:[#allocation30] sm:$0x1]
    %v4118 = vsel %vm489, %v4114, 0.0
    %4119 = vadd.xlane.f32.xlu0 %v4118
    %v4120 = vpop.xlane.xlu0 %4119
    %v4121 = vsel %vm489, %v4115, 0.0
    %4122 = vadd.xlane.f32.xlu0 %v4121
    %v4123 = vpop.xlane.xlu0 %4122
    %v4124 = vmul.f32 %v4120, %v1235
    %v4125 = vmul.f32 %v4123, %v1235
    %v4126 = vsub.f32 %v4114, %v4124
    %v4127 = vsub.f32 %v4115, %v4125
    %v4128 = vmul.f32 %v4126, %v4126
    %v4129 = vmul.f32 %v4127, %v4127
    %v4130 = vsel %vm489, %v4128, 0.0
    %4131 = vadd.xlane.f32.xlu0 %v4130
    %v4132 = vpop.xlane.xlu0 %4131
    %v4133 = vsel %vm489, %v4129, 0.0
    %4134 = vadd.xlane.f32.xlu0 %v4133
    %v4135 = vpop.xlane.xlu0 %4134
    %v4136 = vmul.f32 %v4132, %v1235
    %v4137 = vmul.f32 %v4135, %v1235
    %v4138 = vadd.f32 %v4136, 1e-05
    %v4139 = vadd.f32 %v4137, 1e-05
    %v4140 = vrsqrt.pop %v4138
    %v4141 = vmul.f32 %v4140, %v4138
    %v4142 = vmul.f32 %v4141, %v4140
    %v4143 = vmul.f32 0.5, %v4142
    %v4144 = vsub.f32 1.5, %v4143
    %v4145 = vmul.f32 %v4140, %v4144
    %vm4146 = vweird.f32 %v4138
    %vm4147 = vweird.f32 %v4140
    %vm4148 = vmor %vm4146, %vm4147
    %v4149 = vsel %vm4148, %v4140, %v4145
    %v4150 = vrsqrt.pop %v4139
    %v4151 = vmul.f32 %v4150, %v4139
    %v4152 = vmul.f32 %v4151, %v4150
    %v4153 = vmul.f32 0.5, %v4152
    %v4154 = vsub.f32 1.5, %v4153
    %v4155 = vmul.f32 %v4150, %v4154
    %vm4156 = vweird.f32 %v4139
    %vm4157 = vweird.f32 %v4150
    %vm4158 = vmor %vm4156, %vm4157
    %v4159 = vsel %vm4158, %v4150, %v4155
    %v4160 = vmul.f32 %v4126, %v4149
    %v4161 = vmul.f32 %v4127, %v4159
    %v4163 = vperm.slane %v4116, 0
    %v4165 = vmul.f32 %v4160, %v4163
    %v4166 = vmul.f32 %v4161, %v4163
    %v4168 = vperm.slane %v4117, 0
    %v4170 = vadd.f32 %v4165, %v4168
    %v4171 = vadd.f32 %v4166, %v4168
    %s4172 = scalar_lea.vmem [#allocation2], 32
    %v4173 = vld [vmem:[%s4172] sm:$0xff]
    %v4174 = vld [vmem:[%s4172 + $0x8] sm:$0xff]
    %v4175 = vld [vmem:[%s4172 + $0x10] sm:$0xff]
    %v4176 = vld [vmem:[%s4172 + $0x18] sm:$0xff]
    %s4177 = scalar_lea.vmem [#allocation4], 1
    %v4178 = vld [vmem:[%s4177] sm:$0x1]
    %v4180 = vperm.slane %v4178, 0
    %v4183 = vsel %vm489, %v4170, 0
    %v4186 = vsel %vm489, %v4171, 0
    %4188 = vmatpush.msra.mxu0 0.0
    %4189 = vmatpush.msra.mxu0 0.0
    %4190 = vmatpush.msra.mxu0 0.0
    %4191 = vmatpush.msra.mxu0 0.0
    %4192 = vmatpush.msra.mxu0 0.0
    %4193 = vmatpush.msra.mxu0 0.0
    %4194 = vmatpush.msra.mxu0 0.0
    %4195 = vmatpush.msra.mxu0 0.0
    %4196 = vmatpush.msra.mxu0 0.0
    %4197 = vmatpush.msra.mxu0 0.0
    %4198 = vmatpush.msra.mxu0 0.0
    %4199 = vmatpush.msra.mxu0 0.0
    %4200 = vmatpush.msra.mxu0 %v4176
    %4201 = vmatpush.msra.mxu0 %v4175
    %4202 = vmatpush.msra.mxu0 %v4174
    %4203 = vmatpush.msra.mxu0 %v4173
    %4204 = vmatmul.f32.gmra.mxu0 %v4183
    %v4205 = vpop.f32.mrf.mxu0
    %v4206 = vadd.f32 %v4180, %v4205
    %4207 = vmatmul.f32.gmra.mxu0 %v4186
    %v4208 = vpop.f32.mrf.mxu0
    %v4209 = vadd.f32 %v4180, %v4208
    %4210 = vdwg.mxu0
    %s4211 = scalar_lea.vmem [#allocation6], 32
    %v4212 = vld [vmem:[%s4211] sm:$0xff]
    %v4213 = vld [vmem:[%s4211 + $0x8] sm:$0xff]
    %v4214 = vld [vmem:[%s4211 + $0x10] sm:$0xff]
    %v4215 = vld [vmem:[%s4211 + $0x18] sm:$0xff]
    %s4216 = scalar_lea.vmem [#allocation7], 1
    %v4217 = vld [vmem:[%s4216] sm:$0x1]
    %4220 = vrot.lane.b32.xlu0 %v4206, 120
    %v4221 = vpop.permute.xlu0 %4220
    %4222 = vrot.lane.b32.xlu0 %v4209, 120
    %v4223 = vpop.permute.xlu0 %4222
    %4224 = vrot.lane.b32.xlu0 %v4206, 112
    %v4225 = vpop.permute.xlu0 %4224
    %4226 = vrot.lane.b32.xlu0 %v4209, 112
    %v4227 = vpop.permute.xlu0 %4226
    %4228 = vrot.lane.b32.xlu0 %v4206, 104
    %v4229 = vpop.permute.xlu0 %4228
    %4230 = vrot.lane.b32.xlu0 %v4209, 104
    %v4231 = vpop.permute.xlu0 %4230
    %4232 = vrot.lane.b32.xlu0 %v4206, 96
    %v4233 = vpop.permute.xlu0 %4232
    %v4234 = vsel %vm540, %v4206, 0
    %v4236 = vsel %vm540, %v4233, 0
    %4238 = vmatpush.xpose.msra.mxu0 0.0
    %4239 = vmatpush.xpose.msra.mxu0 0.0
    %4240 = vmatpush.xpose.msra.mxu0 0.0
    %4241 = vmatpush.xpose.msra.mxu0 0.0
    %4242 = vmatpush.xpose.msra.mxu0 0.0
    %4243 = vmatpush.xpose.msra.mxu0 0.0
    %4244 = vmatpush.xpose.msra.mxu0 0.0
    %4245 = vmatpush.xpose.msra.mxu0 0.0
    %4246 = vmatpush.xpose.msra.mxu0 0.0
    %4247 = vmatpush.xpose.msra.mxu0 0.0
    %4248 = vmatpush.xpose.msra.mxu0 0.0
    %4249 = vmatpush.xpose.msra.mxu0 0.0
    %4250 = vmatpush.xpose.msra.mxu0 0.0
    %4251 = vmatpush.xpose.msra.mxu0 0.0
    %4252 = vmatpush.xpose.msra.mxu0 0.0
    %4253 = vmatpush.xpose.msra.mxu0 %v4236
    %4254 = vmatmul.f32.gmra.mxu0 %v4234
    %v4255 = vpop.f32.mrf.mxu0
    %v4256 = vadd.f32 0.0, %v4255
    %4257 = vdwg.mxu0
    %4258 = vrot.lane.b32.xlu0 %v4209, 96
    %v4259 = vpop.permute.xlu0 %4258
    %v4260 = vsel %vm540, %v4209, 0
    %v4262 = vsel %vm540, %v4259, 0
    %4264 = vmatpush.xpose.msra.mxu0 0.0
    %4265 = vmatpush.xpose.msra.mxu0 0.0
    %4266 = vmatpush.xpose.msra.mxu0 0.0
    %4267 = vmatpush.xpose.msra.mxu0 0.0
    %4268 = vmatpush.xpose.msra.mxu0 0.0
    %4269 = vmatpush.xpose.msra.mxu0 0.0
    %4270 = vmatpush.xpose.msra.mxu0 0.0
    %4271 = vmatpush.xpose.msra.mxu0 0.0
    %4272 = vmatpush.xpose.msra.mxu0 0.0
    %4273 = vmatpush.xpose.msra.mxu0 0.0
    %4274 = vmatpush.xpose.msra.mxu0 0.0
    %4275 = vmatpush.xpose.msra.mxu0 0.0
    %4276 = vmatpush.xpose.msra.mxu0 0.0
    %4277 = vmatpush.xpose.msra.mxu0 0.0
    %4278 = vmatpush.xpose.msra.mxu0 0.0
    %4279 = vmatpush.xpose.msra.mxu0 %v4262
    %4280 = vmatmul.f32.gmra.mxu0 %v4260
    %v4281 = vpop.f32.mrf.mxu0
    %v4282 = vadd.f32 0.0, %v4281
    %4283 = vdwg.mxu0
    %4284 = vrot.lane.b32.xlu0 %v4221, 96
    %v4285 = vpop.permute.xlu0 %4284
    %v4286 = vsel %vm540, %v4221, 0
    %v4288 = vsel %vm540, %v4285, 0
    %4290 = vmatpush.xpose.msra.mxu0 0.0
    %4291 = vmatpush.xpose.msra.mxu0 0.0
    %4292 = vmatpush.xpose.msra.mxu0 0.0
    %4293 = vmatpush.xpose.msra.mxu0 0.0
    %4294 = vmatpush.xpose.msra.mxu0 0.0
    %4295 = vmatpush.xpose.msra.mxu0 0.0
    %4296 = vmatpush.xpose.msra.mxu0 0.0
    %4297 = vmatpush.xpose.msra.mxu0 0.0
    %4298 = vmatpush.xpose.msra.mxu0 0.0
    %4299 = vmatpush.xpose.msra.mxu0 0.0
    %4300 = vmatpush.xpose.msra.mxu0 0.0
    %4301 = vmatpush.xpose.msra.mxu0 0.0
    %4302 = vmatpush.xpose.msra.mxu0 0.0
    %4303 = vmatpush.xpose.msra.mxu0 0.0
    %4304 = vmatpush.xpose.msra.mxu0 0.0
    %4305 = vmatpush.xpose.msra.mxu0 %v4288
    %4306 = vmatmul.f32.gmra.mxu0 %v4286
    %v4307 = vpop.f32.mrf.mxu0
    %v4308 = vadd.f32 0.0, %v4307
    %4309 = vdwg.mxu0
    %4310 = vrot.lane.b32.xlu0 %v4223, 96
    %v4311 = vpop.permute.xlu0 %4310
    %v4312 = vsel %vm540, %v4223, 0
    %v4314 = vsel %vm540, %v4311, 0
    %4316 = vmatpush.xpose.msra.mxu0 0.0
    %4317 = vmatpush.xpose.msra.mxu0 0.0
    %4318 = vmatpush.xpose.msra.mxu0 0.0
    %4319 = vmatpush.xpose.msra.mxu0 0.0
    %4320 = vmatpush.xpose.msra.mxu0 0.0
    %4321 = vmatpush.xpose.msra.mxu0 0.0
    %4322 = vmatpush.xpose.msra.mxu0 0.0
    %4323 = vmatpush.xpose.msra.mxu0 0.0
    %4324 = vmatpush.xpose.msra.mxu0 0.0
    %4325 = vmatpush.xpose.msra.mxu0 0.0
    %4326 = vmatpush.xpose.msra.mxu0 0.0
    %4327 = vmatpush.xpose.msra.mxu0 0.0
    %4328 = vmatpush.xpose.msra.mxu0 0.0
    %4329 = vmatpush.xpose.msra.mxu0 0.0
    %4330 = vmatpush.xpose.msra.mxu0 0.0
    %4331 = vmatpush.xpose.msra.mxu0 %v4314
    %4332 = vmatmul.f32.gmra.mxu0 %v4312
    %v4333 = vpop.f32.mrf.mxu0
    %v4334 = vadd.f32 0.0, %v4333
    %4335 = vdwg.mxu0
    %4336 = vrot.lane.b32.xlu0 %v4225, 96
    %v4337 = vpop.permute.xlu0 %4336
    %v4338 = vsel %vm540, %v4225, 0
    %v4340 = vsel %vm540, %v4337, 0
    %4342 = vmatpush.xpose.msra.mxu0 0.0
    %4343 = vmatpush.xpose.msra.mxu0 0.0
    %4344 = vmatpush.xpose.msra.mxu0 0.0
    %4345 = vmatpush.xpose.msra.mxu0 0.0
    %4346 = vmatpush.xpose.msra.mxu0 0.0
    %4347 = vmatpush.xpose.msra.mxu0 0.0
    %4348 = vmatpush.xpose.msra.mxu0 0.0
    %4349 = vmatpush.xpose.msra.mxu0 0.0
    %4350 = vmatpush.xpose.msra.mxu0 0.0
    %4351 = vmatpush.xpose.msra.mxu0 0.0
    %4352 = vmatpush.xpose.msra.mxu0 0.0
    %4353 = vmatpush.xpose.msra.mxu0 0.0
    %4354 = vmatpush.xpose.msra.mxu0 0.0
    %4355 = vmatpush.xpose.msra.mxu0 0.0
    %4356 = vmatpush.xpose.msra.mxu0 0.0
    %4357 = vmatpush.xpose.msra.mxu0 %v4340
    %4358 = vmatmul.f32.gmra.mxu0 %v4338
    %v4359 = vpop.f32.mrf.mxu0
    %v4360 = vadd.f32 0.0, %v4359
    %4361 = vdwg.mxu0
    %4362 = vrot.lane.b32.xlu0 %v4227, 96
    %v4363 = vpop.permute.xlu0 %4362
    %v4364 = vsel %vm540, %v4227, 0
    %v4366 = vsel %vm540, %v4363, 0
    %4368 = vmatpush.xpose.msra.mxu0 0.0
    %4369 = vmatpush.xpose.msra.mxu0 0.0
    %4370 = vmatpush.xpose.msra.mxu0 0.0
    %4371 = vmatpush.xpose.msra.mxu0 0.0
    %4372 = vmatpush.xpose.msra.mxu0 0.0
    %4373 = vmatpush.xpose.msra.mxu0 0.0
    %4374 = vmatpush.xpose.msra.mxu0 0.0
    %4375 = vmatpush.xpose.msra.mxu0 0.0
    %4376 = vmatpush.xpose.msra.mxu0 0.0
    %4377 = vmatpush.xpose.msra.mxu0 0.0
    %4378 = vmatpush.xpose.msra.mxu0 0.0
    %4379 = vmatpush.xpose.msra.mxu0 0.0
    %4380 = vmatpush.xpose.msra.mxu0 0.0
    %4381 = vmatpush.xpose.msra.mxu0 0.0
    %4382 = vmatpush.xpose.msra.mxu0 0.0
    %4383 = vmatpush.xpose.msra.mxu0 %v4366
    %4384 = vmatmul.f32.gmra.mxu0 %v4364
    %v4385 = vpop.f32.mrf.mxu0
    %v4386 = vadd.f32 0.0, %v4385
    %4387 = vdwg.mxu0
    %4388 = vrot.lane.b32.xlu0 %v4229, 96
    %v4389 = vpop.permute.xlu0 %4388
    %v4390 = vsel %vm540, %v4229, 0
    %v4392 = vsel %vm540, %v4389, 0
    %4394 = vmatpush.xpose.msra.mxu0 0.0
    %4395 = vmatpush.xpose.msra.mxu0 0.0
    %4396 = vmatpush.xpose.msra.mxu0 0.0
    %4397 = vmatpush.xpose.msra.mxu0 0.0
    %4398 = vmatpush.xpose.msra.mxu0 0.0
    %4399 = vmatpush.xpose.msra.mxu0 0.0
    %4400 = vmatpush.xpose.msra.mxu0 0.0
    %4401 = vmatpush.xpose.msra.mxu0 0.0
    %4402 = vmatpush.xpose.msra.mxu0 0.0
    %4403 = vmatpush.xpose.msra.mxu0 0.0
    %4404 = vmatpush.xpose.msra.mxu0 0.0
    %4405 = vmatpush.xpose.msra.mxu0 0.0
    %4406 = vmatpush.xpose.msra.mxu0 0.0
    %4407 = vmatpush.xpose.msra.mxu0 0.0
    %4408 = vmatpush.xpose.msra.mxu0 0.0
    %4409 = vmatpush.xpose.msra.mxu0 %v4392
    %4410 = vmatmul.f32.gmra.mxu0 %v4390
    %v4411 = vpop.f32.mrf.mxu0
    %v4412 = vadd.f32 0.0, %v4411
    %4413 = vdwg.mxu0
    %4414 = vrot.lane.b32.xlu0 %v4231, 96
    %v4415 = vpop.permute.xlu0 %4414
    %v4416 = vsel %vm540, %v4231, 0
    %v4418 = vsel %vm540, %v4415, 0
    %4420 = vmatpush.xpose.msra.mxu0 0.0
    %4421 = vmatpush.xpose.msra.mxu0 0.0
    %4422 = vmatpush.xpose.msra.mxu0 0.0
    %4423 = vmatpush.xpose.msra.mxu0 0.0
    %4424 = vmatpush.xpose.msra.mxu0 0.0
    %4425 = vmatpush.xpose.msra.mxu0 0.0
    %4426 = vmatpush.xpose.msra.mxu0 0.0
    %4427 = vmatpush.xpose.msra.mxu0 0.0
    %4428 = vmatpush.xpose.msra.mxu0 0.0
    %4429 = vmatpush.xpose.msra.mxu0 0.0
    %4430 = vmatpush.xpose.msra.mxu0 0.0
    %4431 = vmatpush.xpose.msra.mxu0 0.0
    %4432 = vmatpush.xpose.msra.mxu0 0.0
    %4433 = vmatpush.xpose.msra.mxu0 0.0
    %4434 = vmatpush.xpose.msra.mxu0 0.0
    %4435 = vmatpush.xpose.msra.mxu0 %v4418
    %4436 = vmatmul.f32.gmra.mxu0 %v4416
    %v4437 = vpop.f32.mrf.mxu0
    %v4438 = vadd.f32 0.0, %v4437
    %4439 = vdwg.mxu0
    %v4440 = vmul.f32 %v4256, 0.35355338
    %v4441 = vmul.f32 %v4282, 0.35355338
    %v4442 = vmul.f32 %v4308, 0.35355338
    %v4443 = vmul.f32 %v4334, 0.35355338
    %v4444 = vmul.f32 %v4360, 0.35355338
    %v4445 = vmul.f32 %v4386, 0.35355338
    %v4446 = vmul.f32 %v4412, 0.35355338
    %v4447 = vmul.f32 %v4438, 0.35355338
    %v4448 = vsel %vm540, %v4440, -inf
    %4449 = vmax.xlane.f32.xlu0 %v4448
    %v4450 = vpop.xlane.xlu0 %4449
    %v4451 = vsel %vm540, %v4441, -inf
    %4452 = vmax.xlane.f32.xlu0 %v4451
    %v4453 = vpop.xlane.xlu0 %4452
    %v4454 = vsel %vm540, %v4442, -inf
    %4455 = vmax.xlane.f32.xlu0 %v4454
    %v4456 = vpop.xlane.xlu0 %4455
    %v4457 = vsel %vm540, %v4443, -inf
    %4458 = vmax.xlane.f32.xlu0 %v4457
    %v4459 = vpop.xlane.xlu0 %4458
    %v4460 = vsel %vm540, %v4444, -inf
    %4461 = vmax.xlane.f32.xlu0 %v4460
    %v4462 = vpop.xlane.xlu0 %4461
    %v4463 = vsel %vm540, %v4445, -inf
    %4464 = vmax.xlane.f32.xlu0 %v4463
    %v4465 = vpop.xlane.xlu0 %4464
    %v4466 = vsel %vm540, %v4446, -inf
    %4467 = vmax.xlane.f32.xlu0 %v4466
    %v4468 = vpop.xlane.xlu0 %4467
    %v4469 = vsel %vm540, %v4447, -inf
    %4470 = vmax.xlane.f32.xlu0 %v4469
    %v4471 = vpop.xlane.xlu0 %4470
    %v4472 = vsub.f32 %v4440, %v4450
    %v4473 = vsub.f32 %v4441, %v4453
    %v4474 = vsub.f32 %v4442, %v4456
    %v4475 = vsub.f32 %v4443, %v4459
    %v4476 = vsub.f32 %v4444, %v4462
    %v4477 = vsub.f32 %v4445, %v4465
    %v4478 = vsub.f32 %v4446, %v4468
    %v4479 = vsub.f32 %v4447, %v4471
    %v4480 = vmul.f32 %v4472, 1.442695
    %v4481 = vpow.pop %v4480
    %v4482 = vmul.f32 %v4473, 1.442695
    %v4483 = vpow.pop %v4482
    %v4484 = vmul.f32 %v4474, 1.442695
    %v4485 = vpow.pop %v4484
    %v4486 = vmul.f32 %v4475, 1.442695
    %v4487 = vpow.pop %v4486
    %v4488 = vmul.f32 %v4476, 1.442695
    %v4489 = vpow.pop %v4488
    %v4490 = vmul.f32 %v4477, 1.442695
    %v4491 = vpow.pop %v4490
    %v4492 = vmul.f32 %v4478, 1.442695
    %v4493 = vpow.pop %v4492
    %v4494 = vmul.f32 %v4479, 1.442695
    %v4495 = vpow.pop %v4494
    %v4496 = vsel %vm540, %v4481, 0.0
    %4497 = vadd.xlane.f32.xlu0 %v4496
    %v4498 = vpop.xlane.xlu0 %4497
    %v4499 = vsel %vm540, %v4483, 0.0
    %4500 = vadd.xlane.f32.xlu0 %v4499
    %v4501 = vpop.xlane.xlu0 %4500
    %v4502 = vsel %vm540, %v4485, 0.0
    %4503 = vadd.xlane.f32.xlu0 %v4502
    %v4504 = vpop.xlane.xlu0 %4503
    %v4505 = vsel %vm540, %v4487, 0.0
    %4506 = vadd.xlane.f32.xlu0 %v4505
    %v4507 = vpop.xlane.xlu0 %4506
    %v4508 = vsel %vm540, %v4489, 0.0
    %4509 = vadd.xlane.f32.xlu0 %v4508
    %v4510 = vpop.xlane.xlu0 %4509
    %v4511 = vsel %vm540, %v4491, 0.0
    %4512 = vadd.xlane.f32.xlu0 %v4511
    %v4513 = vpop.xlane.xlu0 %4512
    %v4514 = vsel %vm540, %v4493, 0.0
    %4515 = vadd.xlane.f32.xlu0 %v4514
    %v4516 = vpop.xlane.xlu0 %4515
    %v4517 = vsel %vm540, %v4495, 0.0
    %4518 = vadd.xlane.f32.xlu0 %v4517
    %v4519 = vpop.xlane.xlu0 %4518
    %v4520 = vrcp.pop %v4498
    %v4521 = vmul.f32 %v4498, %v4520
    %v4522 = vsub.f32 1.0, %v4521
    %v4523 = vmul.f32 %v4520, %v4522
    %v4524 = vadd.f32 %v4520, %v4523
    %vm4525 = vweird.f32 %v4498
    %vm4526 = vweird.f32 %v4520
    %vm4527 = vmor %vm4525, %vm4526
    %v4528 = vsel %vm4527, %v4520, %v4524
    %v4529 = vand.u32 2147483647, %v4498
    %vm4530 = vcmp.eq.f32.partialorder %v4529, 8.507059e+37
    %v4531 = vand.u32 %v4498, 2147483648
    %v4532 = vor.u32 1.1754944e-38, %v4531
    %v4533 = vsel %vm4530, %v4532, %v4528
    %v4534 = vmul.f32 %v4481, %v4533
    %v4535 = vrcp.pop %v4501
    %v4536 = vmul.f32 %v4501, %v4535
    %v4537 = vsub.f32 1.0, %v4536
    %v4538 = vmul.f32 %v4535, %v4537
    %v4539 = vadd.f32 %v4535, %v4538
    %vm4540 = vweird.f32 %v4501
    %vm4541 = vweird.f32 %v4535
    %vm4542 = vmor %vm4540, %vm4541
    %v4543 = vsel %vm4542, %v4535, %v4539
    %v4544 = vand.u32 2147483647, %v4501
    %vm4545 = vcmp.eq.f32.partialorder %v4544, 8.507059e+37
    %v4546 = vand.u32 %v4501, 2147483648
    %v4547 = vor.u32 1.1754944e-38, %v4546
    %v4548 = vsel %vm4545, %v4547, %v4543
    %v4549 = vmul.f32 %v4483, %v4548
    %v4550 = vrcp.pop %v4504
    %v4551 = vmul.f32 %v4504, %v4550
    %v4552 = vsub.f32 1.0, %v4551
    %v4553 = vmul.f32 %v4550, %v4552
    %v4554 = vadd.f32 %v4550, %v4553
    %vm4555 = vweird.f32 %v4504
    %vm4556 = vweird.f32 %v4550
    %vm4557 = vmor %vm4555, %vm4556
    %v4558 = vsel %vm4557, %v4550, %v4554
    %v4559 = vand.u32 2147483647, %v4504
    %vm4560 = vcmp.eq.f32.partialorder %v4559, 8.507059e+37
    %v4561 = vand.u32 %v4504, 2147483648
    %v4562 = vor.u32 1.1754944e-38, %v4561
    %v4563 = vsel %vm4560, %v4562, %v4558
    %v4564 = vmul.f32 %v4485, %v4563
    %v4565 = vrcp.pop %v4507
    %v4566 = vmul.f32 %v4507, %v4565
    %v4567 = vsub.f32 1.0, %v4566
    %v4568 = vmul.f32 %v4565, %v4567
    %v4569 = vadd.f32 %v4565, %v4568
    %vm4570 = vweird.f32 %v4507
    %vm4571 = vweird.f32 %v4565
    %vm4572 = vmor %vm4570, %vm4571
    %v4573 = vsel %vm4572, %v4565, %v4569
    %v4574 = vand.u32 2147483647, %v4507
    %vm4575 = vcmp.eq.f32.partialorder %v4574, 8.507059e+37
    %v4576 = vand.u32 %v4507, 2147483648
    %v4577 = vor.u32 1.1754944e-38, %v4576
    %v4578 = vsel %vm4575, %v4577, %v4573
    %v4579 = vmul.f32 %v4487, %v4578
    %v4580 = vrcp.pop %v4510
    %v4581 = vmul.f32 %v4510, %v4580
    %v4582 = vsub.f32 1.0, %v4581
    %v4583 = vmul.f32 %v4580, %v4582
    %v4584 = vadd.f32 %v4580, %v4583
    %vm4585 = vweird.f32 %v4510
    %vm4586 = vweird.f32 %v4580
    %vm4587 = vmor %vm4585, %vm4586
    %v4588 = vsel %vm4587, %v4580, %v4584
    %v4589 = vand.u32 2147483647, %v4510
    %vm4590 = vcmp.eq.f32.partialorder %v4589, 8.507059e+37
    %v4591 = vand.u32 %v4510, 2147483648
    %v4592 = vor.u32 1.1754944e-38, %v4591
    %v4593 = vsel %vm4590, %v4592, %v4588
    %v4594 = vmul.f32 %v4489, %v4593
    %v4595 = vrcp.pop %v4513
    %v4596 = vmul.f32 %v4513, %v4595
    %v4597 = vsub.f32 1.0, %v4596
    %v4598 = vmul.f32 %v4595, %v4597
    %v4599 = vadd.f32 %v4595, %v4598
    %vm4600 = vweird.f32 %v4513
    %vm4601 = vweird.f32 %v4595
    %vm4602 = vmor %vm4600, %vm4601
    %v4603 = vsel %vm4602, %v4595, %v4599
    %v4604 = vand.u32 2147483647, %v4513
    %vm4605 = vcmp.eq.f32.partialorder %v4604, 8.507059e+37
    %v4606 = vand.u32 %v4513, 2147483648
    %v4607 = vor.u32 1.1754944e-38, %v4606
    %v4608 = vsel %vm4605, %v4607, %v4603
    %v4609 = vmul.f32 %v4491, %v4608
    %v4610 = vrcp.pop %v4516
    %v4611 = vmul.f32 %v4516, %v4610
    %v4612 = vsub.f32 1.0, %v4611
    %v4613 = vmul.f32 %v4610, %v4612
    %v4614 = vadd.f32 %v4610, %v4613
    %vm4615 = vweird.f32 %v4516
    %vm4616 = vweird.f32 %v4610
    %vm4617 = vmor %vm4615, %vm4616
    %v4618 = vsel %vm4617, %v4610, %v4614
    %v4619 = vand.u32 2147483647, %v4516
    %vm4620 = vcmp.eq.f32.partialorder %v4619, 8.507059e+37
    %v4621 = vand.u32 %v4516, 2147483648
    %v4622 = vor.u32 1.1754944e-38, %v4621
    %v4623 = vsel %vm4620, %v4622, %v4618
    %v4624 = vmul.f32 %v4493, %v4623
    %v4625 = vrcp.pop %v4519
    %v4626 = vmul.f32 %v4519, %v4625
    %v4627 = vsub.f32 1.0, %v4626
    %v4628 = vmul.f32 %v4625, %v4627
    %v4629 = vadd.f32 %v4625, %v4628
    %vm4630 = vweird.f32 %v4519
    %vm4631 = vweird.f32 %v4625
    %vm4632 = vmor %vm4630, %vm4631
    %v4633 = vsel %vm4632, %v4625, %v4629
    %v4634 = vand.u32 2147483647, %v4519
    %vm4635 = vcmp.eq.f32.partialorder %v4634, 8.507059e+37
    %v4636 = vand.u32 %v4519, 2147483648
    %v4637 = vor.u32 1.1754944e-38, %v4636
    %v4638 = vsel %vm4635, %v4637, %v4633
    %v4639 = vmul.f32 %v4495, %v4638
    %4640 = vrot.lane.b32.xlu0 %v4206, 64
    %v4641 = vpop.permute.xlu0 %4640
    %v4644 = vsel %vm540, %v4534, 0
    %4646 = vmatpush.msra.mxu0 0.0
    %4647 = vmatpush.msra.mxu0 0.0
    %4648 = vmatpush.msra.mxu0 0.0
    %4649 = vmatpush.msra.mxu0 0.0
    %4650 = vmatpush.msra.mxu0 0.0
    %4651 = vmatpush.msra.mxu0 0.0
    %4652 = vmatpush.msra.mxu0 0.0
    %4653 = vmatpush.msra.mxu0 0.0
    %4654 = vmatpush.msra.mxu0 0.0
    %4655 = vmatpush.msra.mxu0 0.0
    %4656 = vmatpush.msra.mxu0 0.0
    %4657 = vmatpush.msra.mxu0 0.0
    %4658 = vmatpush.msra.mxu0 0.0
    %4659 = vmatpush.msra.mxu0 0.0
    %4660 = vmatpush.msra.mxu0 0.0
    %4661 = vmatpush.msra.mxu0 %v4641
    %4662 = vmatmul.f32.gmra.mxu0 %v4644
    %v4663 = vpop.f32.mrf.mxu0
    %v4664 = vadd.f32 0.0, %v4663
    %4665 = vdwg.mxu0
    %4666 = vrot.lane.b32.xlu0 %v4209, 64
    %v4667 = vpop.permute.xlu0 %4666
    %v4670 = vsel %vm540, %v4549, 0
    %4672 = vmatpush.msra.mxu0 0.0
    %4673 = vmatpush.msra.mxu0 0.0
    %4674 = vmatpush.msra.mxu0 0.0
    %4675 = vmatpush.msra.mxu0 0.0
    %4676 = vmatpush.msra.mxu0 0.0
    %4677 = vmatpush.msra.mxu0 0.0
    %4678 = vmatpush.msra.mxu0 0.0
    %4679 = vmatpush.msra.mxu0 0.0
    %4680 = vmatpush.msra.mxu0 0.0
    %4681 = vmatpush.msra.mxu0 0.0
    %4682 = vmatpush.msra.mxu0 0.0
    %4683 = vmatpush.msra.mxu0 0.0
    %4684 = vmatpush.msra.mxu0 0.0
    %4685 = vmatpush.msra.mxu0 0.0
    %4686 = vmatpush.msra.mxu0 0.0
    %4687 = vmatpush.msra.mxu0 %v4667
    %4688 = vmatmul.f32.gmra.mxu0 %v4670
    %v4689 = vpop.f32.mrf.mxu0
    %v4690 = vadd.f32 0.0, %v4689
    %4691 = vdwg.mxu0
    %4692 = vrot.lane.b32.xlu0 %v4221, 64
    %v4693 = vpop.permute.xlu0 %4692
    %v4696 = vsel %vm540, %v4564, 0
    %4698 = vmatpush.msra.mxu0 0.0
    %4699 = vmatpush.msra.mxu0 0.0
    %4700 = vmatpush.msra.mxu0 0.0
    %4701 = vmatpush.msra.mxu0 0.0
    %4702 = vmatpush.msra.mxu0 0.0
    %4703 = vmatpush.msra.mxu0 0.0
    %4704 = vmatpush.msra.mxu0 0.0
    %4705 = vmatpush.msra.mxu0 0.0
    %4706 = vmatpush.msra.mxu0 0.0
    %4707 = vmatpush.msra.mxu0 0.0
    %4708 = vmatpush.msra.mxu0 0.0
    %4709 = vmatpush.msra.mxu0 0.0
    %4710 = vmatpush.msra.mxu0 0.0
    %4711 = vmatpush.msra.mxu0 0.0
    %4712 = vmatpush.msra.mxu0 0.0
    %4713 = vmatpush.msra.mxu0 %v4693
    %4714 = vmatmul.f32.gmra.mxu0 %v4696
    %v4715 = vpop.f32.mrf.mxu0
    %v4716 = vadd.f32 0.0, %v4715
    %4717 = vdwg.mxu0
    %4718 = vrot.lane.b32.xlu0 %v4223, 64
    %v4719 = vpop.permute.xlu0 %4718
    %v4722 = vsel %vm540, %v4579, 0
    %4724 = vmatpush.msra.mxu0 0.0
    %4725 = vmatpush.msra.mxu0 0.0
    %4726 = vmatpush.msra.mxu0 0.0
    %4727 = vmatpush.msra.mxu0 0.0
    %4728 = vmatpush.msra.mxu0 0.0
    %4729 = vmatpush.msra.mxu0 0.0
    %4730 = vmatpush.msra.mxu0 0.0
    %4731 = vmatpush.msra.mxu0 0.0
    %4732 = vmatpush.msra.mxu0 0.0
    %4733 = vmatpush.msra.mxu0 0.0
    %4734 = vmatpush.msra.mxu0 0.0
    %4735 = vmatpush.msra.mxu0 0.0
    %4736 = vmatpush.msra.mxu0 0.0
    %4737 = vmatpush.msra.mxu0 0.0
    %4738 = vmatpush.msra.mxu0 0.0
    %4739 = vmatpush.msra.mxu0 %v4719
    %4740 = vmatmul.f32.gmra.mxu0 %v4722
    %v4741 = vpop.f32.mrf.mxu0
    %v4742 = vadd.f32 0.0, %v4741
    %4743 = vdwg.mxu0
    %4744 = vrot.lane.b32.xlu0 %v4225, 64
    %v4745 = vpop.permute.xlu0 %4744
    %v4748 = vsel %vm540, %v4594, 0
    %4750 = vmatpush.msra.mxu0 0.0
    %4751 = vmatpush.msra.mxu0 0.0
    %4752 = vmatpush.msra.mxu0 0.0
    %4753 = vmatpush.msra.mxu0 0.0
    %4754 = vmatpush.msra.mxu0 0.0
    %4755 = vmatpush.msra.mxu0 0.0
    %4756 = vmatpush.msra.mxu0 0.0
    %4757 = vmatpush.msra.mxu0 0.0
    %4758 = vmatpush.msra.mxu0 0.0
    %4759 = vmatpush.msra.mxu0 0.0
    %4760 = vmatpush.msra.mxu0 0.0
    %4761 = vmatpush.msra.mxu0 0.0
    %4762 = vmatpush.msra.mxu0 0.0
    %4763 = vmatpush.msra.mxu0 0.0
    %4764 = vmatpush.msra.mxu0 0.0
    %4765 = vmatpush.msra.mxu0 %v4745
    %4766 = vmatmul.f32.gmra.mxu0 %v4748
    %v4767 = vpop.f32.mrf.mxu0
    %v4768 = vadd.f32 0.0, %v4767
    %4769 = vdwg.mxu0
    %4770 = vrot.lane.b32.xlu0 %v4227, 64
    %v4771 = vpop.permute.xlu0 %4770
    %v4774 = vsel %vm540, %v4609, 0
    %4776 = vmatpush.msra.mxu0 0.0
    %4777 = vmatpush.msra.mxu0 0.0
    %4778 = vmatpush.msra.mxu0 0.0
    %4779 = vmatpush.msra.mxu0 0.0
    %4780 = vmatpush.msra.mxu0 0.0
    %4781 = vmatpush.msra.mxu0 0.0
    %4782 = vmatpush.msra.mxu0 0.0
    %4783 = vmatpush.msra.mxu0 0.0
    %4784 = vmatpush.msra.mxu0 0.0
    %4785 = vmatpush.msra.mxu0 0.0
    %4786 = vmatpush.msra.mxu0 0.0
    %4787 = vmatpush.msra.mxu0 0.0
    %4788 = vmatpush.msra.mxu0 0.0
    %4789 = vmatpush.msra.mxu0 0.0
    %4790 = vmatpush.msra.mxu0 0.0
    %4791 = vmatpush.msra.mxu0 %v4771
    %4792 = vmatmul.f32.gmra.mxu0 %v4774
    %v4793 = vpop.f32.mrf.mxu0
    %v4794 = vadd.f32 0.0, %v4793
    %4795 = vdwg.mxu0
    %4796 = vrot.lane.b32.xlu0 %v4229, 64
    %v4797 = vpop.permute.xlu0 %4796
    %v4800 = vsel %vm540, %v4624, 0
    %4802 = vmatpush.msra.mxu0 0.0
    %4803 = vmatpush.msra.mxu0 0.0
    %4804 = vmatpush.msra.mxu0 0.0
    %4805 = vmatpush.msra.mxu0 0.0
    %4806 = vmatpush.msra.mxu0 0.0
    %4807 = vmatpush.msra.mxu0 0.0
    %4808 = vmatpush.msra.mxu0 0.0
    %4809 = vmatpush.msra.mxu0 0.0
    %4810 = vmatpush.msra.mxu0 0.0
    %4811 = vmatpush.msra.mxu0 0.0
    %4812 = vmatpush.msra.mxu0 0.0
    %4813 = vmatpush.msra.mxu0 0.0
    %4814 = vmatpush.msra.mxu0 0.0
    %4815 = vmatpush.msra.mxu0 0.0
    %4816 = vmatpush.msra.mxu0 0.0
    %4817 = vmatpush.msra.mxu0 %v4797
    %4818 = vmatmul.f32.gmra.mxu0 %v4800
    %v4819 = vpop.f32.mrf.mxu0
    %v4820 = vadd.f32 0.0, %v4819
    %4821 = vdwg.mxu0
    %4822 = vrot.lane.b32.xlu0 %v4231, 64
    %v4823 = vpop.permute.xlu0 %4822
    %v4826 = vsel %vm540, %v4639, 0
    %4828 = vmatpush.msra.mxu0 0.0
    %4829 = vmatpush.msra.mxu0 0.0
    %4830 = vmatpush.msra.mxu0 0.0
    %4831 = vmatpush.msra.mxu0 0.0
    %4832 = vmatpush.msra.mxu0 0.0
    %4833 = vmatpush.msra.mxu0 0.0
    %4834 = vmatpush.msra.mxu0 0.0
    %4835 = vmatpush.msra.mxu0 0.0
    %4836 = vmatpush.msra.mxu0 0.0
    %4837 = vmatpush.msra.mxu0 0.0
    %4838 = vmatpush.msra.mxu0 0.0
    %4839 = vmatpush.msra.mxu0 0.0
    %4840 = vmatpush.msra.mxu0 0.0
    %4841 = vmatpush.msra.mxu0 0.0
    %4842 = vmatpush.msra.mxu0 0.0
    %4843 = vmatpush.msra.mxu0 %v4823
    %4844 = vmatmul.f32.gmra.mxu0 %v4826
    %v4845 = vpop.f32.mrf.mxu0
    %v4846 = vadd.f32 0.0, %v4845
    %4847 = vdwg.mxu0
    %4850 = vrot.lane.b32.xlu0 %v4716, 8
    %v4851 = vpop.permute.xlu0 %4850
    %4852 = vrot.lane.b32.xlu0 %v4742, 8
    %v4853 = vpop.permute.xlu0 %4852
    %4858 = vrot.lane.b32.xlu0 %v4768, 16
    %v4859 = vpop.permute.xlu0 %4858
    %4860 = vrot.lane.b32.xlu0 %v4794, 16
    %v4861 = vpop.permute.xlu0 %4860
    %4866 = vrot.lane.b32.xlu0 %v4820, 24
    %v4867 = vpop.permute.xlu0 %4866
    %4868 = vrot.lane.b32.xlu0 %v4846, 24
    %v4869 = vpop.permute.xlu0 %4868
    %v4872 = vsel %vm540, %v4664, %v4851
    %v4873 = vsel %vm540, %v4690, %v4853
    %v4874 = vsel %vm1181, %v4872, %v4859
    %v4875 = vsel %vm1181, %v4873, %v4861
    %v4876 = vsel %vm1184, %v4874, %v4867
    %v4877 = vsel %vm1184, %v4875, %v4869
    %v4879 = vperm.slane %v4217, 0
    %v4882 = vsel %vm489, %v4876, 0
    %v4885 = vsel %vm489, %v4877, 0
    %4887 = vmatpush.msra.mxu0 0.0
    %4888 = vmatpush.msra.mxu0 0.0
    %4889 = vmatpush.msra.mxu0 0.0
    %4890 = vmatpush.msra.mxu0 0.0
    %4891 = vmatpush.msra.mxu0 0.0
    %4892 = vmatpush.msra.mxu0 0.0
    %4893 = vmatpush.msra.mxu0 0.0
    %4894 = vmatpush.msra.mxu0 0.0
    %4895 = vmatpush.msra.mxu0 0.0
    %4896 = vmatpush.msra.mxu0 0.0
    %4897 = vmatpush.msra.mxu0 0.0
    %4898 = vmatpush.msra.mxu0 0.0
    %4899 = vmatpush.msra.mxu0 %v4215
    %4900 = vmatpush.msra.mxu0 %v4214
    %4901 = vmatpush.msra.mxu0 %v4213
    %4902 = vmatpush.msra.mxu0 %v4212
    %4903 = vmatmul.f32.gmra.mxu0 %v4882
    %v4904 = vpop.f32.mrf.mxu0
    %v4905 = vadd.f32 %v4879, %v4904
    %4906 = vmatmul.f32.gmra.mxu0 %v4885
    %v4907 = vpop.f32.mrf.mxu0
    %v4908 = vadd.f32 %v4879, %v4907
    %4909 = vdwg.mxu0
    %v4910 = vadd.f32 %v4170, %v4905
    %v4911 = vadd.f32 %v4171, %v4908
    %s4912 = scalar_lea.vmem [#allocation9], 1
    %v4913 = vld [vmem:[%s4912] sm:$0x1]
    %s4914 = scalar_lea.vmem [#allocation10], 1
    %v4915 = vld [vmem:[%s4914] sm:$0x1]
    %v4916 = vsel %vm489, %v4910, 0.0
    %4917 = vadd.xlane.f32.xlu0 %v4916
    %v4918 = vpop.xlane.xlu0 %4917
    %v4919 = vsel %vm489, %v4911, 0.0
    %4920 = vadd.xlane.f32.xlu0 %v4919
    %v4921 = vpop.xlane.xlu0 %4920
    %v4922 = vmul.f32 %v4918, %v1235
    %v4923 = vmul.f32 %v4921, %v1235
    %v4924 = vsub.f32 %v4910, %v4922
    %v4925 = vsub.f32 %v4911, %v4923
    %v4926 = vmul.f32 %v4924, %v4924
    %v4927 = vmul.f32 %v4925, %v4925
    %v4928 = vsel %vm489, %v4926, 0.0
    %4929 = vadd.xlane.f32.xlu0 %v4928
    %v4930 = vpop.xlane.xlu0 %4929
    %v4931 = vsel %vm489, %v4927, 0.0
    %4932 = vadd.xlane.f32.xlu0 %v4931
    %v4933 = vpop.xlane.xlu0 %4932
    %v4934 = vmul.f32 %v4930, %v1235
    %v4935 = vmul.f32 %v4933, %v1235
    %v4936 = vadd.f32 %v4934, 1e-05
    %v4937 = vadd.f32 %v4935, 1e-05
    %v4938 = vrsqrt.pop %v4936
    %v4939 = vmul.f32 %v4938, %v4936
    %v4940 = vmul.f32 %v4939, %v4938
    %v4941 = vmul.f32 0.5, %v4940
    %v4942 = vsub.f32 1.5, %v4941
    %v4943 = vmul.f32 %v4938, %v4942
    %vm4944 = vweird.f32 %v4936
    %vm4945 = vweird.f32 %v4938
    %vm4946 = vmor %vm4944, %vm4945
    %v4947 = vsel %vm4946, %v4938, %v4943
    %v4948 = vrsqrt.pop %v4937
    %v4949 = vmul.f32 %v4948, %v4937
    %v4950 = vmul.f32 %v4949, %v4948
    %v4951 = vmul.f32 0.5, %v4950
    %v4952 = vsub.f32 1.5, %v4951
    %v4953 = vmul.f32 %v4948, %v4952
    %vm4954 = vweird.f32 %v4937
    %vm4955 = vweird.f32 %v4948
    %vm4956 = vmor %vm4954, %vm4955
    %v4957 = vsel %vm4956, %v4948, %v4953
    %v4958 = vmul.f32 %v4924, %v4947
    %v4959 = vmul.f32 %v4925, %v4957
    %v4961 = vperm.slane %v4913, 0
    %v4963 = vmul.f32 %v4958, %v4961
    %v4964 = vmul.f32 %v4959, %v4961
    %v4966 = vperm.slane %v4915, 0
    %v4968 = vadd.f32 %v4963, %v4966
    %v4969 = vadd.f32 %v4964, %v4966
    %s4970 = scalar_lea.vmem [#allocation12], 32
    %v4971 = vld [vmem:[%s4970] sm:$0xff]
    %v4972 = vld [vmem:[%s4970 + $0x8] sm:$0xff]
    %v4973 = vld [vmem:[%s4970 + $0x10] sm:$0xff]
    %v4974 = vld [vmem:[%s4970 + $0x18] sm:$0xff]
    %s4975 = scalar_lea.vmem [#allocation13], 1
    %v4976 = vld [vmem:[%s4975] sm:$0x1]
    %v4978 = vperm.slane %v4976, 0
    %v4981 = vsel %vm489, %v4968, 0
    %v4984 = vsel %vm489, %v4969, 0
    %4986 = vmatpush.msra.mxu0 0.0
    %4987 = vmatpush.msra.mxu0 0.0
    %4988 = vmatpush.msra.mxu0 0.0
    %4989 = vmatpush.msra.mxu0 0.0
    %4990 = vmatpush.msra.mxu0 0.0
    %4991 = vmatpush.msra.mxu0 0.0
    %4992 = vmatpush.msra.mxu0 0.0
    %4993 = vmatpush.msra.mxu0 0.0
    %4994 = vmatpush.msra.mxu0 0.0
    %4995 = vmatpush.msra.mxu0 0.0
    %4996 = vmatpush.msra.mxu0 0.0
    %4997 = vmatpush.msra.mxu0 0.0
    %4998 = vmatpush.msra.mxu0 %v4974
    %4999 = vmatpush.msra.mxu0 %v4973
    %5000 = vmatpush.msra.mxu0 %v4972
    %5001 = vmatpush.msra.mxu0 %v4971
    %5002 = vmatmul.f32.gmra.mxu0 %v4981
    %v5003 = vpop.f32.mrf.mxu0
    %v5004 = vadd.f32 %v4978, %v5003
    %5005 = vmatmul.f32.gmra.mxu0 %v4984
    %v5006 = vpop.f32.mrf.mxu0
    %v5007 = vadd.f32 %v4978, %v5006
    %5008 = vdwg.mxu0
    %s5009 = scalar_lea.vmem [#allocation15], 32
    %v5010 = vld [vmem:[%s5009] sm:$0xff]
    %v5011 = vld [vmem:[%s5009 + $0x8] sm:$0xff]
    %v5012 = vld [vmem:[%s5009 + $0x10] sm:$0xff]
    %v5013 = vld [vmem:[%s5009 + $0x18] sm:$0xff]
    %s5014 = scalar_lea.vmem [#allocation16], 1
    %v5015 = vld [vmem:[%s5014] sm:$0x1]
    %v5017 = vperm.slane %v5015, 0
    %5019 = vmatpush.msra.mxu0 0.0
    %5020 = vmatpush.msra.mxu0 0.0
    %5021 = vmatpush.msra.mxu0 0.0
    %5022 = vmatpush.msra.mxu0 0.0
    %5023 = vmatpush.msra.mxu0 0.0
    %5024 = vmatpush.msra.mxu0 0.0
    %5025 = vmatpush.msra.mxu0 0.0
    %5026 = vmatpush.msra.mxu0 0.0
    %5027 = vmatpush.msra.mxu0 0.0
    %5028 = vmatpush.msra.mxu0 0.0
    %5029 = vmatpush.msra.mxu0 0.0
    %5030 = vmatpush.msra.mxu0 0.0
    %5031 = vmatpush.msra.mxu0 %v5013
    %5032 = vmatpush.msra.mxu0 %v5012
    %5033 = vmatpush.msra.mxu0 %v5011
    %5034 = vmatpush.msra.mxu0 %v5010
    %5035 = vmatmul.f32.gmra.mxu0 %v3253
    %v5036 = vpop.f32.mrf.mxu0
    %v5037 = vadd.f32 %v5017, %v5036
    %5038 = vmatmul.f32.gmra.mxu0 %v3256
    %v5039 = vpop.f32.mrf.mxu0
    %v5040 = vadd.f32 %v5017, %v5039
    %5041 = vdwg.mxu0
    %s5042 = scalar_lea.vmem [#allocation18], 32
    %v5043 = vld [vmem:[%s5042] sm:$0xff]
    %v5044 = vld [vmem:[%s5042 + $0x8] sm:$0xff]
    %v5045 = vld [vmem:[%s5042 + $0x10] sm:$0xff]
    %v5046 = vld [vmem:[%s5042 + $0x18] sm:$0xff]
    %s5047 = scalar_lea.vmem [#allocation19], 1
    %v5048 = vld [vmem:[%s5047] sm:$0x1]
    %5051 = vrot.lane.b32.xlu0 %v5004, 120
    %v5052 = vpop.permute.xlu0 %5051
    %5053 = vrot.lane.b32.xlu0 %v5007, 120
    %v5054 = vpop.permute.xlu0 %5053
    %5055 = vrot.lane.b32.xlu0 %v5004, 112
    %v5056 = vpop.permute.xlu0 %5055
    %5057 = vrot.lane.b32.xlu0 %v5007, 112
    %v5058 = vpop.permute.xlu0 %5057
    %5059 = vrot.lane.b32.xlu0 %v5004, 104
    %v5060 = vpop.permute.xlu0 %5059
    %5061 = vrot.lane.b32.xlu0 %v5007, 104
    %v5062 = vpop.permute.xlu0 %5061
    %5065 = vrot.lane.b32.xlu0 %v5037, 120
    %v5066 = vpop.permute.xlu0 %5065
    %5067 = vrot.lane.b32.xlu0 %v5040, 120
    %v5068 = vpop.permute.xlu0 %5067
    %5069 = vrot.lane.b32.xlu0 %v5037, 112
    %v5070 = vpop.permute.xlu0 %5069
    %5071 = vrot.lane.b32.xlu0 %v5040, 112
    %v5072 = vpop.permute.xlu0 %5071
    %5073 = vrot.lane.b32.xlu0 %v5037, 104
    %v5074 = vpop.permute.xlu0 %5073
    %5075 = vrot.lane.b32.xlu0 %v5040, 104
    %v5076 = vpop.permute.xlu0 %5075
    %v5077 = vsel %vm540, %v5004, 0
    %v5079 = vsel %vm540, %v5037, 0
    %5081 = vmatpush.xpose.msra.mxu0 0.0
    %5082 = vmatpush.xpose.msra.mxu0 0.0
    %5083 = vmatpush.xpose.msra.mxu0 0.0
    %5084 = vmatpush.xpose.msra.mxu0 0.0
    %5085 = vmatpush.xpose.msra.mxu0 0.0
    %5086 = vmatpush.xpose.msra.mxu0 0.0
    %5087 = vmatpush.xpose.msra.mxu0 0.0
    %5088 = vmatpush.xpose.msra.mxu0 0.0
    %5089 = vmatpush.xpose.msra.mxu0 0.0
    %5090 = vmatpush.xpose.msra.mxu0 0.0
    %5091 = vmatpush.xpose.msra.mxu0 0.0
    %5092 = vmatpush.xpose.msra.mxu0 0.0
    %5093 = vmatpush.xpose.msra.mxu0 0.0
    %5094 = vmatpush.xpose.msra.mxu0 0.0
    %5095 = vmatpush.xpose.msra.mxu0 0.0
    %5096 = vmatpush.xpose.msra.mxu0 %v5079
    %5097 = vmatmul.f32.gmra.mxu0 %v5077
    %v5098 = vpop.f32.mrf.mxu0
    %v5099 = vadd.f32 0.0, %v5098
    %5100 = vdwg.mxu0
    %v5101 = vsel %vm540, %v5007, 0
    %v5103 = vsel %vm540, %v5040, 0
    %5105 = vmatpush.xpose.msra.mxu0 0.0
    %5106 = vmatpush.xpose.msra.mxu0 0.0
    %5107 = vmatpush.xpose.msra.mxu0 0.0
    %5108 = vmatpush.xpose.msra.mxu0 0.0
    %5109 = vmatpush.xpose.msra.mxu0 0.0
    %5110 = vmatpush.xpose.msra.mxu0 0.0
    %5111 = vmatpush.xpose.msra.mxu0 0.0
    %5112 = vmatpush.xpose.msra.mxu0 0.0
    %5113 = vmatpush.xpose.msra.mxu0 0.0
    %5114 = vmatpush.xpose.msra.mxu0 0.0
    %5115 = vmatpush.xpose.msra.mxu0 0.0
    %5116 = vmatpush.xpose.msra.mxu0 0.0
    %5117 = vmatpush.xpose.msra.mxu0 0.0
    %5118 = vmatpush.xpose.msra.mxu0 0.0
    %5119 = vmatpush.xpose.msra.mxu0 0.0
    %5120 = vmatpush.xpose.msra.mxu0 %v5103
    %5121 = vmatmul.f32.gmra.mxu0 %v5101
    %v5122 = vpop.f32.mrf.mxu0
    %v5123 = vadd.f32 0.0, %v5122
    %5124 = vdwg.mxu0
    %v5125 = vsel %vm540, %v5052, 0
    %v5127 = vsel %vm540, %v5066, 0
    %5129 = vmatpush.xpose.msra.mxu0 0.0
    %5130 = vmatpush.xpose.msra.mxu0 0.0
    %5131 = vmatpush.xpose.msra.mxu0 0.0
    %5132 = vmatpush.xpose.msra.mxu0 0.0
    %5133 = vmatpush.xpose.msra.mxu0 0.0
    %5134 = vmatpush.xpose.msra.mxu0 0.0
    %5135 = vmatpush.xpose.msra.mxu0 0.0
    %5136 = vmatpush.xpose.msra.mxu0 0.0
    %5137 = vmatpush.xpose.msra.mxu0 0.0
    %5138 = vmatpush.xpose.msra.mxu0 0.0
    %5139 = vmatpush.xpose.msra.mxu0 0.0
    %5140 = vmatpush.xpose.msra.mxu0 0.0
    %5141 = vmatpush.xpose.msra.mxu0 0.0
    %5142 = vmatpush.xpose.msra.mxu0 0.0
    %5143 = vmatpush.xpose.msra.mxu0 0.0
    %5144 = vmatpush.xpose.msra.mxu0 %v5127
    %5145 = vmatmul.f32.gmra.mxu0 %v5125
    %v5146 = vpop.f32.mrf.mxu0
    %v5147 = vadd.f32 0.0, %v5146
    %5148 = vdwg.mxu0
    %v5149 = vsel %vm540, %v5054, 0
    %v5151 = vsel %vm540, %v5068, 0
    %5153 = vmatpush.xpose.msra.mxu0 0.0
    %5154 = vmatpush.xpose.msra.mxu0 0.0
    %5155 = vmatpush.xpose.msra.mxu0 0.0
    %5156 = vmatpush.xpose.msra.mxu0 0.0
    %5157 = vmatpush.xpose.msra.mxu0 0.0
    %5158 = vmatpush.xpose.msra.mxu0 0.0
    %5159 = vmatpush.xpose.msra.mxu0 0.0
    %5160 = vmatpush.xpose.msra.mxu0 0.0
    %5161 = vmatpush.xpose.msra.mxu0 0.0
    %5162 = vmatpush.xpose.msra.mxu0 0.0
    %5163 = vmatpush.xpose.msra.mxu0 0.0
    %5164 = vmatpush.xpose.msra.mxu0 0.0
    %5165 = vmatpush.xpose.msra.mxu0 0.0
    %5166 = vmatpush.xpose.msra.mxu0 0.0
    %5167 = vmatpush.xpose.msra.mxu0 0.0
    %5168 = vmatpush.xpose.msra.mxu0 %v5151
    %5169 = vmatmul.f32.gmra.mxu0 %v5149
    %v5170 = vpop.f32.mrf.mxu0
    %v5171 = vadd.f32 0.0, %v5170
    %5172 = vdwg.mxu0
    %v5173 = vsel %vm540, %v5056, 0
    %v5175 = vsel %vm540, %v5070, 0
    %5177 = vmatpush.xpose.msra.mxu0 0.0
    %5178 = vmatpush.xpose.msra.mxu0 0.0
    %5179 = vmatpush.xpose.msra.mxu0 0.0
    %5180 = vmatpush.xpose.msra.mxu0 0.0
    %5181 = vmatpush.xpose.msra.mxu0 0.0
    %5182 = vmatpush.xpose.msra.mxu0 0.0
    %5183 = vmatpush.xpose.msra.mxu0 0.0
    %5184 = vmatpush.xpose.msra.mxu0 0.0
    %5185 = vmatpush.xpose.msra.mxu0 0.0
    %5186 = vmatpush.xpose.msra.mxu0 0.0
    %5187 = vmatpush.xpose.msra.mxu0 0.0
    %5188 = vmatpush.xpose.msra.mxu0 0.0
    %5189 = vmatpush.xpose.msra.mxu0 0.0
    %5190 = vmatpush.xpose.msra.mxu0 0.0
    %5191 = vmatpush.xpose.msra.mxu0 0.0
    %5192 = vmatpush.xpose.msra.mxu0 %v5175
    %5193 = vmatmul.f32.gmra.mxu0 %v5173
    %v5194 = vpop.f32.mrf.mxu0
    %v5195 = vadd.f32 0.0, %v5194
    %5196 = vdwg.mxu0
    %v5197 = vsel %vm540, %v5058, 0
    %v5199 = vsel %vm540, %v5072, 0
    %5201 = vmatpush.xpose.msra.mxu0 0.0
    %5202 = vmatpush.xpose.msra.mxu0 0.0
    %5203 = vmatpush.xpose.msra.mxu0 0.0
    %5204 = vmatpush.xpose.msra.mxu0 0.0
    %5205 = vmatpush.xpose.msra.mxu0 0.0
    %5206 = vmatpush.xpose.msra.mxu0 0.0
    %5207 = vmatpush.xpose.msra.mxu0 0.0
    %5208 = vmatpush.xpose.msra.mxu0 0.0
    %5209 = vmatpush.xpose.msra.mxu0 0.0
    %5210 = vmatpush.xpose.msra.mxu0 0.0
    %5211 = vmatpush.xpose.msra.mxu0 0.0
    %5212 = vmatpush.xpose.msra.mxu0 0.0
    %5213 = vmatpush.xpose.msra.mxu0 0.0
    %5214 = vmatpush.xpose.msra.mxu0 0.0
    %5215 = vmatpush.xpose.msra.mxu0 0.0
    %5216 = vmatpush.xpose.msra.mxu0 %v5199
    %5217 = vmatmul.f32.gmra.mxu0 %v5197
    %v5218 = vpop.f32.mrf.mxu0
    %v5219 = vadd.f32 0.0, %v5218
    %5220 = vdwg.mxu0
    %v5221 = vsel %vm540, %v5060, 0
    %v5223 = vsel %vm540, %v5074, 0
    %5225 = vmatpush.xpose.msra.mxu0 0.0
    %5226 = vmatpush.xpose.msra.mxu0 0.0
    %5227 = vmatpush.xpose.msra.mxu0 0.0
    %5228 = vmatpush.xpose.msra.mxu0 0.0
    %5229 = vmatpush.xpose.msra.mxu0 0.0
    %5230 = vmatpush.xpose.msra.mxu0 0.0
    %5231 = vmatpush.xpose.msra.mxu0 0.0
    %5232 = vmatpush.xpose.msra.mxu0 0.0
    %5233 = vmatpush.xpose.msra.mxu0 0.0
    %5234 = vmatpush.xpose.msra.mxu0 0.0
    %5235 = vmatpush.xpose.msra.mxu0 0.0
    %5236 = vmatpush.xpose.msra.mxu0 0.0
    %5237 = vmatpush.xpose.msra.mxu0 0.0
    %5238 = vmatpush.xpose.msra.mxu0 0.0
    %5239 = vmatpush.xpose.msra.mxu0 0.0
    %5240 = vmatpush.xpose.msra.mxu0 %v5223
    %5241 = vmatmul.f32.gmra.mxu0 %v5221
    %v5242 = vpop.f32.mrf.mxu0
    %v5243 = vadd.f32 0.0, %v5242
    %5244 = vdwg.mxu0
    %v5245 = vsel %vm540, %v5062, 0
    %v5247 = vsel %vm540, %v5076, 0
    %5249 = vmatpush.xpose.msra.mxu0 0.0
    %5250 = vmatpush.xpose.msra.mxu0 0.0
    %5251 = vmatpush.xpose.msra.mxu0 0.0
    %5252 = vmatpush.xpose.msra.mxu0 0.0
    %5253 = vmatpush.xpose.msra.mxu0 0.0
    %5254 = vmatpush.xpose.msra.mxu0 0.0
    %5255 = vmatpush.xpose.msra.mxu0 0.0
    %5256 = vmatpush.xpose.msra.mxu0 0.0
    %5257 = vmatpush.xpose.msra.mxu0 0.0
    %5258 = vmatpush.xpose.msra.mxu0 0.0
    %5259 = vmatpush.xpose.msra.mxu0 0.0
    %5260 = vmatpush.xpose.msra.mxu0 0.0
    %5261 = vmatpush.xpose.msra.mxu0 0.0
    %5262 = vmatpush.xpose.msra.mxu0 0.0
    %5263 = vmatpush.xpose.msra.mxu0 0.0
    %5264 = vmatpush.xpose.msra.mxu0 %v5247
    %5265 = vmatmul.f32.gmra.mxu0 %v5245
    %v5266 = vpop.f32.mrf.mxu0
    %v5267 = vadd.f32 0.0, %v5266
    %5268 = vdwg.mxu0
    %v5269 = vmul.f32 %v5099, 0.35355338
    %v5270 = vmul.f32 %v5123, 0.35355338
    %v5271 = vmul.f32 %v5147, 0.35355338
    %v5272 = vmul.f32 %v5171, 0.35355338
    %v5273 = vmul.f32 %v5195, 0.35355338
    %v5274 = vmul.f32 %v5219, 0.35355338
    %v5275 = vmul.f32 %v5243, 0.35355338
    %v5276 = vmul.f32 %v5267, 0.35355338
    %v5277 = vsel %vm540, %v5269, -inf
    %5278 = vmax.xlane.f32.xlu0 %v5277
    %v5279 = vpop.xlane.xlu0 %5278
    %v5280 = vsel %vm540, %v5270, -inf
    %5281 = vmax.xlane.f32.xlu0 %v5280
    %v5282 = vpop.xlane.xlu0 %5281
    %v5283 = vsel %vm540, %v5271, -inf
    %5284 = vmax.xlane.f32.xlu0 %v5283
    %v5285 = vpop.xlane.xlu0 %5284
    %v5286 = vsel %vm540, %v5272, -inf
    %5287 = vmax.xlane.f32.xlu0 %v5286
    %v5288 = vpop.xlane.xlu0 %5287
    %v5289 = vsel %vm540, %v5273, -inf
    %5290 = vmax.xlane.f32.xlu0 %v5289
    %v5291 = vpop.xlane.xlu0 %5290
    %v5292 = vsel %vm540, %v5274, -inf
    %5293 = vmax.xlane.f32.xlu0 %v5292
    %v5294 = vpop.xlane.xlu0 %5293
    %v5295 = vsel %vm540, %v5275, -inf
    %5296 = vmax.xlane.f32.xlu0 %v5295
    %v5297 = vpop.xlane.xlu0 %5296
    %v5298 = vsel %vm540, %v5276, -inf
    %5299 = vmax.xlane.f32.xlu0 %v5298
    %v5300 = vpop.xlane.xlu0 %5299
    %v5301 = vsub.f32 %v5269, %v5279
    %v5302 = vsub.f32 %v5270, %v5282
    %v5303 = vsub.f32 %v5271, %v5285
    %v5304 = vsub.f32 %v5272, %v5288
    %v5305 = vsub.f32 %v5273, %v5291
    %v5306 = vsub.f32 %v5274, %v5294
    %v5307 = vsub.f32 %v5275, %v5297
    %v5308 = vsub.f32 %v5276, %v5300
    %v5309 = vmul.f32 %v5301, 1.442695
    %v5310 = vpow.pop %v5309
    %v5311 = vmul.f32 %v5302, 1.442695
    %v5312 = vpow.pop %v5311
    %v5313 = vmul.f32 %v5303, 1.442695
    %v5314 = vpow.pop %v5313
    %v5315 = vmul.f32 %v5304, 1.442695
    %v5316 = vpow.pop %v5315
    %v5317 = vmul.f32 %v5305, 1.442695
    %v5318 = vpow.pop %v5317
    %v5319 = vmul.f32 %v5306, 1.442695
    %v5320 = vpow.pop %v5319
    %v5321 = vmul.f32 %v5307, 1.442695
    %v5322 = vpow.pop %v5321
    %v5323 = vmul.f32 %v5308, 1.442695
    %v5324 = vpow.pop %v5323
    %v5325 = vsel %vm540, %v5310, 0.0
    %5326 = vadd.xlane.f32.xlu0 %v5325
    %v5327 = vpop.xlane.xlu0 %5326
    %v5328 = vsel %vm540, %v5312, 0.0
    %5329 = vadd.xlane.f32.xlu0 %v5328
    %v5330 = vpop.xlane.xlu0 %5329
    %v5331 = vsel %vm540, %v5314, 0.0
    %5332 = vadd.xlane.f32.xlu0 %v5331
    %v5333 = vpop.xlane.xlu0 %5332
    %v5334 = vsel %vm540, %v5316, 0.0
    %5335 = vadd.xlane.f32.xlu0 %v5334
    %v5336 = vpop.xlane.xlu0 %5335
    %v5337 = vsel %vm540, %v5318, 0.0
    %5338 = vadd.xlane.f32.xlu0 %v5337
    %v5339 = vpop.xlane.xlu0 %5338
    %v5340 = vsel %vm540, %v5320, 0.0
    %5341 = vadd.xlane.f32.xlu0 %v5340
    %v5342 = vpop.xlane.xlu0 %5341
    %v5343 = vsel %vm540, %v5322, 0.0
    %5344 = vadd.xlane.f32.xlu0 %v5343
    %v5345 = vpop.xlane.xlu0 %5344
    %v5346 = vsel %vm540, %v5324, 0.0
    %5347 = vadd.xlane.f32.xlu0 %v5346
    %v5348 = vpop.xlane.xlu0 %5347
    %v5349 = vrcp.pop %v5327
    %v5350 = vmul.f32 %v5327, %v5349
    %v5351 = vsub.f32 1.0, %v5350
    %v5352 = vmul.f32 %v5349, %v5351
    %v5353 = vadd.f32 %v5349, %v5352
    %vm5354 = vweird.f32 %v5327
    %vm5355 = vweird.f32 %v5349
    %vm5356 = vmor %vm5354, %vm5355
    %v5357 = vsel %vm5356, %v5349, %v5353
    %v5358 = vand.u32 2147483647, %v5327
    %vm5359 = vcmp.eq.f32.partialorder %v5358, 8.507059e+37
    %v5360 = vand.u32 %v5327, 2147483648
    %v5361 = vor.u32 1.1754944e-38, %v5360
    %v5362 = vsel %vm5359, %v5361, %v5357
    %v5363 = vmul.f32 %v5310, %v5362
    %v5364 = vrcp.pop %v5330
    %v5365 = vmul.f32 %v5330, %v5364
    %v5366 = vsub.f32 1.0, %v5365
    %v5367 = vmul.f32 %v5364, %v5366
    %v5368 = vadd.f32 %v5364, %v5367
    %vm5369 = vweird.f32 %v5330
    %vm5370 = vweird.f32 %v5364
    %vm5371 = vmor %vm5369, %vm5370
    %v5372 = vsel %vm5371, %v5364, %v5368
    %v5373 = vand.u32 2147483647, %v5330
    %vm5374 = vcmp.eq.f32.partialorder %v5373, 8.507059e+37
    %v5375 = vand.u32 %v5330, 2147483648
    %v5376 = vor.u32 1.1754944e-38, %v5375
    %v5377 = vsel %vm5374, %v5376, %v5372
    %v5378 = vmul.f32 %v5312, %v5377
    %v5379 = vrcp.pop %v5333
    %v5380 = vmul.f32 %v5333, %v5379
    %v5381 = vsub.f32 1.0, %v5380
    %v5382 = vmul.f32 %v5379, %v5381
    %v5383 = vadd.f32 %v5379, %v5382
    %vm5384 = vweird.f32 %v5333
    %vm5385 = vweird.f32 %v5379
    %vm5386 = vmor %vm5384, %vm5385
    %v5387 = vsel %vm5386, %v5379, %v5383
    %v5388 = vand.u32 2147483647, %v5333
    %vm5389 = vcmp.eq.f32.partialorder %v5388, 8.507059e+37
    %v5390 = vand.u32 %v5333, 2147483648
    %v5391 = vor.u32 1.1754944e-38, %v5390
    %v5392 = vsel %vm5389, %v5391, %v5387
    %v5393 = vmul.f32 %v5314, %v5392
    %v5394 = vrcp.pop %v5336
    %v5395 = vmul.f32 %v5336, %v5394
    %v5396 = vsub.f32 1.0, %v5395
    %v5397 = vmul.f32 %v5394, %v5396
    %v5398 = vadd.f32 %v5394, %v5397
    %vm5399 = vweird.f32 %v5336
    %vm5400 = vweird.f32 %v5394
    %vm5401 = vmor %vm5399, %vm5400
    %v5402 = vsel %vm5401, %v5394, %v5398
    %v5403 = vand.u32 2147483647, %v5336
    %vm5404 = vcmp.eq.f32.partialorder %v5403, 8.507059e+37
    %v5405 = vand.u32 %v5336, 2147483648
    %v5406 = vor.u32 1.1754944e-38, %v5405
    %v5407 = vsel %vm5404, %v5406, %v5402
    %v5408 = vmul.f32 %v5316, %v5407
    %v5409 = vrcp.pop %v5339
    %v5410 = vmul.f32 %v5339, %v5409
    %v5411 = vsub.f32 1.0, %v5410
    %v5412 = vmul.f32 %v5409, %v5411
    %v5413 = vadd.f32 %v5409, %v5412
    %vm5414 = vweird.f32 %v5339
    %vm5415 = vweird.f32 %v5409
    %vm5416 = vmor %vm5414, %vm5415
    %v5417 = vsel %vm5416, %v5409, %v5413
    %v5418 = vand.u32 2147483647, %v5339
    %vm5419 = vcmp.eq.f32.partialorder %v5418, 8.507059e+37
    %v5420 = vand.u32 %v5339, 2147483648
    %v5421 = vor.u32 1.1754944e-38, %v5420
    %v5422 = vsel %vm5419, %v5421, %v5417
    %v5423 = vmul.f32 %v5318, %v5422
    %v5424 = vrcp.pop %v5342
    %v5425 = vmul.f32 %v5342, %v5424
    %v5426 = vsub.f32 1.0, %v5425
    %v5427 = vmul.f32 %v5424, %v5426
    %v5428 = vadd.f32 %v5424, %v5427
    %vm5429 = vweird.f32 %v5342
    %vm5430 = vweird.f32 %v5424
    %vm5431 = vmor %vm5429, %vm5430
    %v5432 = vsel %vm5431, %v5424, %v5428
    %v5433 = vand.u32 2147483647, %v5342
    %vm5434 = vcmp.eq.f32.partialorder %v5433, 8.507059e+37
    %v5435 = vand.u32 %v5342, 2147483648
    %v5436 = vor.u32 1.1754944e-38, %v5435
    %v5437 = vsel %vm5434, %v5436, %v5432
    %v5438 = vmul.f32 %v5320, %v5437
    %v5439 = vrcp.pop %v5345
    %v5440 = vmul.f32 %v5345, %v5439
    %v5441 = vsub.f32 1.0, %v5440
    %v5442 = vmul.f32 %v5439, %v5441
    %v5443 = vadd.f32 %v5439, %v5442
    %vm5444 = vweird.f32 %v5345
    %vm5445 = vweird.f32 %v5439
    %vm5446 = vmor %vm5444, %vm5445
    %v5447 = vsel %vm5446, %v5439, %v5443
    %v5448 = vand.u32 2147483647, %v5345
    %vm5449 = vcmp.eq.f32.partialorder %v5448, 8.507059e+37
    %v5450 = vand.u32 %v5345, 2147483648
    %v5451 = vor.u32 1.1754944e-38, %v5450
    %v5452 = vsel %vm5449, %v5451, %v5447
    %v5453 = vmul.f32 %v5322, %v5452
    %v5454 = vrcp.pop %v5348
    %v5455 = vmul.f32 %v5348, %v5454
    %v5456 = vsub.f32 1.0, %v5455
    %v5457 = vmul.f32 %v5454, %v5456
    %v5458 = vadd.f32 %v5454, %v5457
    %vm5459 = vweird.f32 %v5348
    %vm5460 = vweird.f32 %v5454
    %vm5461 = vmor %vm5459, %vm5460
    %v5462 = vsel %vm5461, %v5454, %v5458
    %v5463 = vand.u32 2147483647, %v5348
    %vm5464 = vcmp.eq.f32.partialorder %v5463, 8.507059e+37
    %v5465 = vand.u32 %v5348, 2147483648
    %v5466 = vor.u32 1.1754944e-38, %v5465
    %v5467 = vsel %vm5464, %v5466, %v5462
    %v5468 = vmul.f32 %v5324, %v5467
    %5469 = vrot.lane.b32.xlu0 %v5037, 96
    %v5470 = vpop.permute.xlu0 %5469
    %v5473 = vsel %vm540, %v5363, 0
    %5475 = vmatpush.msra.mxu0 0.0
    %5476 = vmatpush.msra.mxu0 0.0
    %5477 = vmatpush.msra.mxu0 0.0
    %5478 = vmatpush.msra.mxu0 0.0
    %5479 = vmatpush.msra.mxu0 0.0
    %5480 = vmatpush.msra.mxu0 0.0
    %5481 = vmatpush.msra.mxu0 0.0
    %5482 = vmatpush.msra.mxu0 0.0
    %5483 = vmatpush.msra.mxu0 0.0
    %5484 = vmatpush.msra.mxu0 0.0
    %5485 = vmatpush.msra.mxu0 0.0
    %5486 = vmatpush.msra.mxu0 0.0
    %5487 = vmatpush.msra.mxu0 0.0
    %5488 = vmatpush.msra.mxu0 0.0
    %5489 = vmatpush.msra.mxu0 0.0
    %5490 = vmatpush.msra.mxu0 %v5470
    %5491 = vmatmul.f32.gmra.mxu0 %v5473
    %v5492 = vpop.f32.mrf.mxu0
    %v5493 = vadd.f32 0.0, %v5492
    %5494 = vdwg.mxu0
    %5495 = vrot.lane.b32.xlu0 %v5040, 96
    %v5496 = vpop.permute.xlu0 %5495
    %v5499 = vsel %vm540, %v5378, 0
    %5501 = vmatpush.msra.mxu0 0.0
    %5502 = vmatpush.msra.mxu0 0.0
    %5503 = vmatpush.msra.mxu0 0.0
    %5504 = vmatpush.msra.mxu0 0.0
    %5505 = vmatpush.msra.mxu0 0.0
    %5506 = vmatpush.msra.mxu0 0.0
    %5507 = vmatpush.msra.mxu0 0.0
    %5508 = vmatpush.msra.mxu0 0.0
    %5509 = vmatpush.msra.mxu0 0.0
    %5510 = vmatpush.msra.mxu0 0.0
    %5511 = vmatpush.msra.mxu0 0.0
    %5512 = vmatpush.msra.mxu0 0.0
    %5513 = vmatpush.msra.mxu0 0.0
    %5514 = vmatpush.msra.mxu0 0.0
    %5515 = vmatpush.msra.mxu0 0.0
    %5516 = vmatpush.msra.mxu0 %v5496
    %5517 = vmatmul.f32.gmra.mxu0 %v5499
    %v5518 = vpop.f32.mrf.mxu0
    %v5519 = vadd.f32 0.0, %v5518
    %5520 = vdwg.mxu0
    %5521 = vrot.lane.b32.xlu0 %v5066, 96
    %v5522 = vpop.permute.xlu0 %5521
    %v5525 = vsel %vm540, %v5393, 0
    %5527 = vmatpush.msra.mxu0 0.0
    %5528 = vmatpush.msra.mxu0 0.0
    %5529 = vmatpush.msra.mxu0 0.0
    %5530 = vmatpush.msra.mxu0 0.0
    %5531 = vmatpush.msra.mxu0 0.0
    %5532 = vmatpush.msra.mxu0 0.0
    %5533 = vmatpush.msra.mxu0 0.0
    %5534 = vmatpush.msra.mxu0 0.0
    %5535 = vmatpush.msra.mxu0 0.0
    %5536 = vmatpush.msra.mxu0 0.0
    %5537 = vmatpush.msra.mxu0 0.0
    %5538 = vmatpush.msra.mxu0 0.0
    %5539 = vmatpush.msra.mxu0 0.0
    %5540 = vmatpush.msra.mxu0 0.0
    %5541 = vmatpush.msra.mxu0 0.0
    %5542 = vmatpush.msra.mxu0 %v5522
    %5543 = vmatmul.f32.gmra.mxu0 %v5525
    %v5544 = vpop.f32.mrf.mxu0
    %v5545 = vadd.f32 0.0, %v5544
    %5546 = vdwg.mxu0
    %5547 = vrot.lane.b32.xlu0 %v5068, 96
    %v5548 = vpop.permute.xlu0 %5547
    %v5551 = vsel %vm540, %v5408, 0
    %5553 = vmatpush.msra.mxu0 0.0
    %5554 = vmatpush.msra.mxu0 0.0
    %5555 = vmatpush.msra.mxu0 0.0
    %5556 = vmatpush.msra.mxu0 0.0
    %5557 = vmatpush.msra.mxu0 0.0
    %5558 = vmatpush.msra.mxu0 0.0
    %5559 = vmatpush.msra.mxu0 0.0
    %5560 = vmatpush.msra.mxu0 0.0
    %5561 = vmatpush.msra.mxu0 0.0
    %5562 = vmatpush.msra.mxu0 0.0
    %5563 = vmatpush.msra.mxu0 0.0
    %5564 = vmatpush.msra.mxu0 0.0
    %5565 = vmatpush.msra.mxu0 0.0
    %5566 = vmatpush.msra.mxu0 0.0
    %5567 = vmatpush.msra.mxu0 0.0
    %5568 = vmatpush.msra.mxu0 %v5548
    %5569 = vmatmul.f32.gmra.mxu0 %v5551
    %v5570 = vpop.f32.mrf.mxu0
    %v5571 = vadd.f32 0.0, %v5570
    %5572 = vdwg.mxu0
    %5573 = vrot.lane.b32.xlu0 %v5070, 96
    %v5574 = vpop.permute.xlu0 %5573
    %v5577 = vsel %vm540, %v5423, 0
    %5579 = vmatpush.msra.mxu0 0.0
    %5580 = vmatpush.msra.mxu0 0.0
    %5581 = vmatpush.msra.mxu0 0.0
    %5582 = vmatpush.msra.mxu0 0.0
    %5583 = vmatpush.msra.mxu0 0.0
    %5584 = vmatpush.msra.mxu0 0.0
    %5585 = vmatpush.msra.mxu0 0.0
    %5586 = vmatpush.msra.mxu0 0.0
    %5587 = vmatpush.msra.mxu0 0.0
    %5588 = vmatpush.msra.mxu0 0.0
    %5589 = vmatpush.msra.mxu0 0.0
    %5590 = vmatpush.msra.mxu0 0.0
    %5591 = vmatpush.msra.mxu0 0.0
    %5592 = vmatpush.msra.mxu0 0.0
    %5593 = vmatpush.msra.mxu0 0.0
    %5594 = vmatpush.msra.mxu0 %v5574
    %5595 = vmatmul.f32.gmra.mxu0 %v5577
    %v5596 = vpop.f32.mrf.mxu0
    %v5597 = vadd.f32 0.0, %v5596
    %5598 = vdwg.mxu0
    %5599 = vrot.lane.b32.xlu0 %v5072, 96
    %v5600 = vpop.permute.xlu0 %5599
    %v5603 = vsel %vm540, %v5438, 0
    %5605 = vmatpush.msra.mxu0 0.0
    %5606 = vmatpush.msra.mxu0 0.0
    %5607 = vmatpush.msra.mxu0 0.0
    %5608 = vmatpush.msra.mxu0 0.0
    %5609 = vmatpush.msra.mxu0 0.0
    %5610 = vmatpush.msra.mxu0 0.0
    %5611 = vmatpush.msra.mxu0 0.0
    %5612 = vmatpush.msra.mxu0 0.0
    %5613 = vmatpush.msra.mxu0 0.0
    %5614 = vmatpush.msra.mxu0 0.0
    %5615 = vmatpush.msra.mxu0 0.0
    %5616 = vmatpush.msra.mxu0 0.0
    %5617 = vmatpush.msra.mxu0 0.0
    %5618 = vmatpush.msra.mxu0 0.0
    %5619 = vmatpush.msra.mxu0 0.0
    %5620 = vmatpush.msra.mxu0 %v5600
    %5621 = vmatmul.f32.gmra.mxu0 %v5603
    %v5622 = vpop.f32.mrf.mxu0
    %v5623 = vadd.f32 0.0, %v5622
    %5624 = vdwg.mxu0
    %5625 = vrot.lane.b32.xlu0 %v5074, 96
    %v5626 = vpop.permute.xlu0 %5625
    %v5629 = vsel %vm540, %v5453, 0
    %5631 = vmatpush.msra.mxu0 0.0
    %5632 = vmatpush.msra.mxu0 0.0
    %5633 = vmatpush.msra.mxu0 0.0
    %5634 = vmatpush.msra.mxu0 0.0
    %5635 = vmatpush.msra.mxu0 0.0
    %5636 = vmatpush.msra.mxu0 0.0
    %5637 = vmatpush.msra.mxu0 0.0
    %5638 = vmatpush.msra.mxu0 0.0
    %5639 = vmatpush.msra.mxu0 0.0
    %5640 = vmatpush.msra.mxu0 0.0
    %5641 = vmatpush.msra.mxu0 0.0
    %5642 = vmatpush.msra.mxu0 0.0
    %5643 = vmatpush.msra.mxu0 0.0
    %5644 = vmatpush.msra.mxu0 0.0
    %5645 = vmatpush.msra.mxu0 0.0
    %5646 = vmatpush.msra.mxu0 %v5626
    %5647 = vmatmul.f32.gmra.mxu0 %v5629
    %v5648 = vpop.f32.mrf.mxu0
    %v5649 = vadd.f32 0.0, %v5648
    %5650 = vdwg.mxu0
    %5651 = vrot.lane.b32.xlu0 %v5076, 96
    %v5652 = vpop.permute.xlu0 %5651
    %v5655 = vsel %vm540, %v5468, 0
    %5657 = vmatpush.msra.mxu0 0.0
    %5658 = vmatpush.msra.mxu0 0.0
    %5659 = vmatpush.msra.mxu0 0.0
    %5660 = vmatpush.msra.mxu0 0.0
    %5661 = vmatpush.msra.mxu0 0.0
    %5662 = vmatpush.msra.mxu0 0.0
    %5663 = vmatpush.msra.mxu0 0.0
    %5664 = vmatpush.msra.mxu0 0.0
    %5665 = vmatpush.msra.mxu0 0.0
    %5666 = vmatpush.msra.mxu0 0.0
    %5667 = vmatpush.msra.mxu0 0.0
    %5668 = vmatpush.msra.mxu0 0.0
    %5669 = vmatpush.msra.mxu0 0.0
    %5670 = vmatpush.msra.mxu0 0.0
    %5671 = vmatpush.msra.mxu0 0.0
    %5672 = vmatpush.msra.mxu0 %v5652
    %5673 = vmatmul.f32.gmra.mxu0 %v5655
    %v5674 = vpop.f32.mrf.mxu0
    %v5675 = vadd.f32 0.0, %v5674
    %5676 = vdwg.mxu0
    %5679 = vrot.lane.b32.xlu0 %v5545, 8
    %v5680 = vpop.permute.xlu0 %5679
    %5681 = vrot.lane.b32.xlu0 %v5571, 8
    %v5682 = vpop.permute.xlu0 %5681
    %5687 = vrot.lane.b32.xlu0 %v5597, 16
    %v5688 = vpop.permute.xlu0 %5687
    %5689 = vrot.lane.b32.xlu0 %v5623, 16
    %v5690 = vpop.permute.xlu0 %5689
    %5695 = vrot.lane.b32.xlu0 %v5649, 24
    %v5696 = vpop.permute.xlu0 %5695
    %5697 = vrot.lane.b32.xlu0 %v5675, 24
    %v5698 = vpop.permute.xlu0 %5697
    %v5701 = vsel %vm540, %v5493, %v5680
    %v5702 = vsel %vm540, %v5519, %v5682
    %v5703 = vsel %vm1181, %v5701, %v5688
    %v5704 = vsel %vm1181, %v5702, %v5690
    %v5705 = vsel %vm1184, %v5703, %v5696
    %v5706 = vsel %vm1184, %v5704, %v5698
    %v5708 = vperm.slane %v5048, 0
    %v5711 = vsel %vm489, %v5705, 0
    %v5714 = vsel %vm489, %v5706, 0
    %5716 = vmatpush.msra.mxu0 0.0
    %5717 = vmatpush.msra.mxu0 0.0
    %5718 = vmatpush.msra.mxu0 0.0
    %5719 = vmatpush.msra.mxu0 0.0
    %5720 = vmatpush.msra.mxu0 0.0
    %5721 = vmatpush.msra.mxu0 0.0
    %5722 = vmatpush.msra.mxu0 0.0
    %5723 = vmatpush.msra.mxu0 0.0
    %5724 = vmatpush.msra.mxu0 0.0
    %5725 = vmatpush.msra.mxu0 0.0
    %5726 = vmatpush.msra.mxu0 0.0
    %5727 = vmatpush.msra.mxu0 0.0
    %5728 = vmatpush.msra.mxu0 %v5046
    %5729 = vmatpush.msra.mxu0 %v5045
    %5730 = vmatpush.msra.mxu0 %v5044
    %5731 = vmatpush.msra.mxu0 %v5043
    %5732 = vmatmul.f32.gmra.mxu0 %v5711
    %v5733 = vpop.f32.mrf.mxu0
    %v5734 = vadd.f32 %v5708, %v5733
    %5735 = vmatmul.f32.gmra.mxu0 %v5714
    %v5736 = vpop.f32.mrf.mxu0
    %v5737 = vadd.f32 %v5708, %v5736
    %5738 = vdwg.mxu0
    %v5739 = vadd.f32 %v4968, %v5734
    %v5740 = vadd.f32 %v4969, %v5737
    %s5741 = scalar_lea.vmem [#allocation21], 1
    %v5742 = vld [vmem:[%s5741] sm:$0x1]
    %s5743 = scalar_lea.vmem [#allocation22], 1
    %v5744 = vld [vmem:[%s5743] sm:$0x1]
    %v5745 = vsel %vm489, %v5739, 0.0
    %5746 = vadd.xlane.f32.xlu0 %v5745
    %v5747 = vpop.xlane.xlu0 %5746
    %v5748 = vsel %vm489, %v5740, 0.0
    %5749 = vadd.xlane.f32.xlu0 %v5748
    %v5750 = vpop.xlane.xlu0 %5749
    %v5751 = vmul.f32 %v5747, %v1235
    %v5752 = vmul.f32 %v5750, %v1235
    %v5753 = vsub.f32 %v5739, %v5751
    %v5754 = vsub.f32 %v5740, %v5752
    %v5755 = vmul.f32 %v5753, %v5753
    %v5756 = vmul.f32 %v5754, %v5754
    %v5757 = vsel %vm489, %v5755, 0.0
    %5758 = vadd.xlane.f32.xlu0 %v5757
    %v5759 = vpop.xlane.xlu0 %5758
    %v5760 = vsel %vm489, %v5756, 0.0
    %5761 = vadd.xlane.f32.xlu0 %v5760
    %v5762 = vpop.xlane.xlu0 %5761
    %v5763 = vmul.f32 %v5759, %v1235
    %v5764 = vmul.f32 %v5762, %v1235
    %v5765 = vadd.f32 %v5763, 1e-05
    %v5766 = vadd.f32 %v5764, 1e-05
    %v5767 = vrsqrt.pop %v5765
    %v5768 = vmul.f32 %v5767, %v5765
    %v5769 = vmul.f32 %v5768, %v5767
    %v5770 = vmul.f32 0.5, %v5769
    %v5771 = vsub.f32 1.5, %v5770
    %v5772 = vmul.f32 %v5767, %v5771
    %vm5773 = vweird.f32 %v5765
    %vm5774 = vweird.f32 %v5767
    %vm5775 = vmor %vm5773, %vm5774
    %v5776 = vsel %vm5775, %v5767, %v5772
    %v5777 = vrsqrt.pop %v5766
    %v5778 = vmul.f32 %v5777, %v5766
    %v5779 = vmul.f32 %v5778, %v5777
    %v5780 = vmul.f32 0.5, %v5779
    %v5781 = vsub.f32 1.5, %v5780
    %v5782 = vmul.f32 %v5777, %v5781
    %vm5783 = vweird.f32 %v5766
    %vm5784 = vweird.f32 %v5777
    %vm5785 = vmor %vm5783, %vm5784
    %v5786 = vsel %vm5785, %v5777, %v5782
    %v5787 = vmul.f32 %v5753, %v5776
    %v5788 = vmul.f32 %v5754, %v5786
    %v5790 = vperm.slane %v5742, 0
    %v5792 = vmul.f32 %v5787, %v5790
    %v5793 = vmul.f32 %v5788, %v5790
    %v5795 = vperm.slane %v5744, 0
    %v5797 = vadd.f32 %v5792, %v5795
    %v5798 = vadd.f32 %v5793, %v5795
    %s5799 = scalar_lea.vmem [#allocation24], 32
    %v5800 = vld [vmem:[%s5799] sm:$0xff]
    %v5801 = vld [vmem:[%s5799 + $0x8] sm:$0xff]
    %v5802 = vld [vmem:[%s5799 + $0x10] sm:$0xff]
    %v5803 = vld [vmem:[%s5799 + $0x18] sm:$0xff]
    %s5804 = scalar_lea.vmem [#allocation25], 1
    %v5805 = vld [vmem:[%s5804] sm:$0x1]
    %s5806 = scalar_lea.vmem %s63, 64
    %v5807 = vld [vmem:[%s5806] sm:$0xff]
    %v5808 = vld [vmem:[%s5806 + $0x8] sm:$0xff]
    %v5809 = vld [vmem:[%s5806 + $0x10] sm:$0xff]
    %v5810 = vld [vmem:[%s5806 + $0x18] sm:$0xff]
    %v5811 = vld [vmem:[%s5806 + $0x20] sm:$0xff]
    %v5812 = vld [vmem:[%s5806 + $0x28] sm:$0xff]
    %v5813 = vld [vmem:[%s5806 + $0x30] sm:$0xff]
    %v5814 = vld [vmem:[%s5806 + $0x38] sm:$0xff]
    %s5815 = scalar_lea.vmem [#allocation27], 1
    %v5816 = vld [vmem:[%s5815] sm:$0x1]
    %v5818 = vperm.slane %v5805, 0
    %v5821 = vsel %vm489, %v5797, 0
    %v5824 = vsel %vm489, %v5798, 0
    %5826 = vmatpush.msra.mxu0 0.0
    %5827 = vmatpush.msra.mxu0 0.0
    %5828 = vmatpush.msra.mxu0 0.0
    %5829 = vmatpush.msra.mxu0 0.0
    %5830 = vmatpush.msra.mxu0 0.0
    %5831 = vmatpush.msra.mxu0 0.0
    %5832 = vmatpush.msra.mxu0 0.0
    %5833 = vmatpush.msra.mxu0 0.0
    %5834 = vmatpush.msra.mxu0 0.0
    %5835 = vmatpush.msra.mxu0 0.0
    %5836 = vmatpush.msra.mxu0 0.0
    %5837 = vmatpush.msra.mxu0 0.0
    %5838 = vmatpush.msra.mxu0 %v5803
    %5839 = vmatpush.msra.mxu0 %v5802
    %5840 = vmatpush.msra.mxu0 %v5801
    %5841 = vmatpush.msra.mxu0 %v5800
    %5842 = vmatmul.f32.gmra.mxu0 %v5821
    %v5843 = vpop.f32.mrf.mxu0
    %v5844 = vadd.f32 %v5818, %v5843
    %5845 = vmatmul.f32.gmra.mxu0 %v5824
    %v5846 = vpop.f32.mrf.mxu0
    %v5847 = vadd.f32 %v5818, %v5846
    %5848 = vdwg.mxu0
    %v5849 = vmax.f32 %v5844, 0.0
    %v5850 = vmax.f32 %v5847, 0.0
    %v5852 = vperm.slane %v5816, 0
    %v5855 = vsel %vm1335, %v5849, 0
    %v5858 = vsel %vm1335, %v5850, 0
    %5860 = vmatpush.msra.mxu0 0.0
    %5861 = vmatpush.msra.mxu0 0.0
    %5862 = vmatpush.msra.mxu0 0.0
    %5863 = vmatpush.msra.mxu0 0.0
    %5864 = vmatpush.msra.mxu0 0.0
    %5865 = vmatpush.msra.mxu0 0.0
    %5866 = vmatpush.msra.mxu0 0.0
    %5867 = vmatpush.msra.mxu0 0.0
    %5868 = vmatpush.msra.mxu0 %v5814
    %5869 = vmatpush.msra.mxu0 %v5813
    %5870 = vmatpush.msra.mxu0 %v5812
    %5871 = vmatpush.msra.mxu0 %v5811
    %5872 = vmatpush.msra.mxu0 %v5810
    %5873 = vmatpush.msra.mxu0 %v5809
    %5874 = vmatpush.msra.mxu0 %v5808
    %5875 = vmatpush.msra.mxu0 %v5807
    %5876 = vmatmul.f32.gmra.mxu0 %v5855
    %v5877 = vpop.f32.mrf.mxu0
    %v5878 = vadd.f32 %v5852, %v5877
    %5879 = vmatmul.f32.gmra.mxu0 %v5858
    %v5880 = vpop.f32.mrf.mxu0
    %v5881 = vadd.f32 %v5852, %v5880
    %5882 = vdwg.mxu0
    %v5883 = vadd.f32 %v5797, %v5878
    %v5884 = vadd.f32 %v5798, %v5881
    %s5885 = scalar_lea.vmem [#allocation28], 1
    %v5886 = vld [vmem:[%s5885] sm:$0x1]
    %s5887 = scalar_lea.vmem [#allocation30], 1
    %v5888 = vld [vmem:[%s5887] sm:$0x1]
    %v5889 = vsel %vm489, %v5883, 0.0
    %5890 = vadd.xlane.f32.xlu0 %v5889
    %v5891 = vpop.xlane.xlu0 %5890
    %v5892 = vsel %vm489, %v5884, 0.0
    %5893 = vadd.xlane.f32.xlu0 %v5892
    %v5894 = vpop.xlane.xlu0 %5893
    %v5895 = vmul.f32 %v5891, %v1235
    %v5896 = vmul.f32 %v5894, %v1235
    %v5897 = vsub.f32 %v5883, %v5895
    %v5898 = vsub.f32 %v5884, %v5896
    %v5899 = vmul.f32 %v5897, %v5897
    %v5900 = vmul.f32 %v5898, %v5898
    %v5901 = vsel %vm489, %v5899, 0.0
    %5902 = vadd.xlane.f32.xlu0 %v5901
    %v5903 = vpop.xlane.xlu0 %5902
    %v5904 = vsel %vm489, %v5900, 0.0
    %5905 = vadd.xlane.f32.xlu0 %v5904
    %v5906 = vpop.xlane.xlu0 %5905
    %v5907 = vmul.f32 %v5903, %v1235
    %v5908 = vmul.f32 %v5906, %v1235
    %v5909 = vadd.f32 %v5907, 1e-05
    %v5910 = vadd.f32 %v5908, 1e-05
    %v5911 = vrsqrt.pop %v5909
    %v5912 = vmul.f32 %v5911, %v5909
    %v5913 = vmul.f32 %v5912, %v5911
    %v5914 = vmul.f32 0.5, %v5913
    %v5915 = vsub.f32 1.5, %v5914
    %v5916 = vmul.f32 %v5911, %v5915
    %vm5917 = vweird.f32 %v5909
    %vm5918 = vweird.f32 %v5911
    %vm5919 = vmor %vm5917, %vm5918
    %v5920 = vsel %vm5919, %v5911, %v5916
    %v5921 = vrsqrt.pop %v5910
    %v5922 = vmul.f32 %v5921, %v5910
    %v5923 = vmul.f32 %v5922, %v5921
    %v5924 = vmul.f32 0.5, %v5923
    %v5925 = vsub.f32 1.5, %v5924
    %v5926 = vmul.f32 %v5921, %v5925
    %vm5927 = vweird.f32 %v5910
    %vm5928 = vweird.f32 %v5921
    %vm5929 = vmor %vm5927, %vm5928
    %v5930 = vsel %vm5929, %v5921, %v5926
    %v5931 = vmul.f32 %v5897, %v5920
    %v5932 = vmul.f32 %v5898, %v5930
    %v5934 = vperm.slane %v5886, 0
    %v5936 = vmul.f32 %v5931, %v5934
    %v5937 = vmul.f32 %v5932, %v5934
    %v5939 = vperm.slane %v5888, 0
    %v5941 = vadd.f32 %v5936, %v5939
    %v5942 = vadd.f32 %v5937, %v5939
    %v5943 = vld [vmem:[%s71] sm:$0x1]
    %v5944 = vld [vmem:[#allocation31] sm:$0x1]
    %v5945 = vsel %vm489, %v5941, 0.0
    %5946 = vadd.xlane.f32.xlu0 %v5945
    %v5947 = vpop.xlane.xlu0 %5946
    %v5948 = vsel %vm489, %v5942, 0.0
    %5949 = vadd.xlane.f32.xlu0 %v5948
    %v5950 = vpop.xlane.xlu0 %5949
    %v5951 = vmul.f32 %v5947, %v1235
    %v5952 = vmul.f32 %v5950, %v1235
    %v5953 = vsub.f32 %v5941, %v5951
    %v5954 = vsub.f32 %v5942, %v5952
    %v5955 = vmul.f32 %v5953, %v5953
    %v5956 = vmul.f32 %v5954, %v5954
    %v5957 = vsel %vm489, %v5955, 0.0
    %5958 = vadd.xlane.f32.xlu0 %v5957
    %v5959 = vpop.xlane.xlu0 %5958
    %v5960 = vsel %vm489, %v5956, 0.0
    %5961 = vadd.xlane.f32.xlu0 %v5960
    %v5962 = vpop.xlane.xlu0 %5961
    %v5963 = vmul.f32 %v5959, %v1235
    %v5964 = vmul.f32 %v5962, %v1235
    %v5965 = vadd.f32 %v5963, 1e-05
    %v5966 = vadd.f32 %v5964, 1e-05
    %v5967 = vrsqrt.pop %v5965
    %v5968 = vmul.f32 %v5967, %v5965
    %v5969 = vmul.f32 %v5968, %v5967
    %v5970 = vmul.f32 0.5, %v5969
    %v5971 = vsub.f32 1.5, %v5970
    %v5972 = vmul.f32 %v5967, %v5971
    %vm5973 = vweird.f32 %v5965
    %vm5974 = vweird.f32 %v5967
    %vm5975 = vmor %vm5973, %vm5974
    %v5976 = vsel %vm5975, %v5967, %v5972
    %v5977 = vrsqrt.pop %v5966
    %v5978 = vmul.f32 %v5977, %v5966
    %v5979 = vmul.f32 %v5978, %v5977
    %v5980 = vmul.f32 0.5, %v5979
    %v5981 = vsub.f32 1.5, %v5980
    %v5982 = vmul.f32 %v5977, %v5981
    %vm5983 = vweird.f32 %v5966
    %vm5984 = vweird.f32 %v5977
    %vm5985 = vmor %vm5983, %vm5984
    %v5986 = vsel %vm5985, %v5977, %v5982
    %v5987 = vmul.f32 %v5953, %v5976
    %v5988 = vmul.f32 %v5954, %v5986
    %v5990 = vperm.slane %v5943, 0
    %v5992 = vmul.f32 %v5987, %v5990
    %v5993 = vmul.f32 %v5988, %v5990
    %v5995 = vperm.slane %v5944, 0
    %v5997 = vadd.f32 %v5992, %v5995
    %v5998 = vadd.f32 %v5993, %v5995
    %v5999 = vld [vmem:[%s75] sm:$0xff]
    %v6000 = vld [vmem:[%s75 + $0x8] sm:$0xff]
    %v6001 = vld [vmem:[%s75 + $0x10] sm:$0xff]
    %v6002 = vld [vmem:[%s75 + $0x18] sm:$0xff]
    %v6003 = vld [vmem:[%s77] sm:$0x1]
    %v6005 = vperm.slane %v6003, 0
    %v6008 = vsel %vm489, %v5997, 0
    %v6011 = vsel %vm489, %v5998, 0
    %6013 = vmatpush.msra.mxu0 0.0
    %6014 = vmatpush.msra.mxu0 0.0
    %6015 = vmatpush.msra.mxu0 0.0
    %6016 = vmatpush.msra.mxu0 0.0
    %6017 = vmatpush.msra.mxu0 0.0
    %6018 = vmatpush.msra.mxu0 0.0
    %6019 = vmatpush.msra.mxu0 0.0
    %6020 = vmatpush.msra.mxu0 0.0
    %6021 = vmatpush.msra.mxu0 0.0
    %6022 = vmatpush.msra.mxu0 0.0
    %6023 = vmatpush.msra.mxu0 0.0
    %6024 = vmatpush.msra.mxu0 0.0
    %6025 = vmatpush.msra.mxu0 %v6002
    %6026 = vmatpush.msra.mxu0 %v6001
    %6027 = vmatpush.msra.mxu0 %v6000
    %6028 = vmatpush.msra.mxu0 %v5999
    %6029 = vmatmul.f32.gmra.mxu0 %v6008
    %v6030 = vpop.f32.mrf.mxu0
    %v6031 = vadd.f32 %v6005, %v6030
    %6032 = vmatmul.f32.gmra.mxu0 %v6011
    %v6033 = vpop.f32.mrf.mxu0
    %v6034 = vadd.f32 %v6005, %v6033
    %6035 = vdwg.mxu0
    %v6036 = vmax.f32 %v6031, 0.0
    %v6037 = vmax.f32 %v6034, 0.0
    %v6038 = vld [vmem:[%s79] sm:$0xff]
    %v6039 = vld [vmem:[%s79 + $0x8] sm:$0xff]
    %v6040 = vld [vmem:[%s79 + $0x10] sm:$0xff]
    %v6041 = vld [vmem:[%s79 + $0x18] sm:$0xff]
    %v6042 = vld [vmem:[%s79 + $0x20] sm:$0xff]
    %v6043 = vld [vmem:[%s79 + $0x28] sm:$0xff]
    %v6044 = vld [vmem:[%s79 + $0x30] sm:$0xff]
    %v6045 = vld [vmem:[%s79 + $0x38] sm:$0xff]
    %v6046 = vld [vmem:[%s79 + $0x40] sm:$0xff]
    %v6047 = vld [vmem:[%s79 + $0x48] sm:$0xff]
    %v6048 = vld [vmem:[%s79 + $0x50] sm:$0xff]
    %v6049 = vld [vmem:[%s79 + $0x58] sm:$0xff]
    %v6050 = vld [vmem:[%s79 + $0x60] sm:$0xff]
    %v6051 = vld [vmem:[%s79 + $0x68] sm:$0xff]
    %v6052 = vld [vmem:[%s79 + $0x70] sm:$0xff]
    %v6053 = vld [vmem:[%s79 + $0x78] sm:$0xff]
    %v6054 = vld [vmem:[%s81] sm:$0x1]
    %v6056 = vperm.slane %v6054, 0
    %6058 = vmatpush.msra.mxu0 %v6053
    %6059 = vmatpush.msra.mxu0 %v6052
    %6060 = vmatpush.msra.mxu0 %v6051
    %6061 = vmatpush.msra.mxu0 %v6050
    %6062 = vmatpush.msra.mxu0 %v6049
    %6063 = vmatpush.msra.mxu0 %v6048
    %6064 = vmatpush.msra.mxu0 %v6047
    %6065 = vmatpush.msra.mxu0 %v6046
    %6066 = vmatpush.msra.mxu0 %v6045
    %6067 = vmatpush.msra.mxu0 %v6044
    %6068 = vmatpush.msra.mxu0 %v6043
    %6069 = vmatpush.msra.mxu0 %v6042
    %6070 = vmatpush.msra.mxu0 %v6041
    %6071 = vmatpush.msra.mxu0 %v6040
    %6072 = vmatpush.msra.mxu0 %v6039
    %6073 = vmatpush.msra.mxu0 %v6038
    %6074 = vmatmul.f32.gmra.mxu0 %v6036
    %v6075 = vpop.f32.mrf.mxu0
    %v6076 = vadd.f32 %v6056, %v6075
    %6077 = vmatmul.f32.gmra.mxu0 %v6037
    %v6078 = vpop.f32.mrf.mxu0
    %v6079 = vadd.f32 %v6056, %v6078
    %6080 = vdwg.mxu0
    %v6081 = vmax.f32 %v6076, %v6079
    %v6082 = vsub.f32 %v6076, %v6081
    %v6083 = vsub.f32 %v6079, %v6081
    %v6084 = vmul.f32 %v6082, 1.442695
    %v6085 = vpow.pop %v6084
    %v6086 = vmul.f32 %v6083, 1.442695
    %v6087 = vpow.pop %v6086
    %v6088 = vadd.f32 %v6085, %v6087
    %v6089 = vlog2.pop %v6088
    %v6090 = vmul.f32 %v6089, 0.6931472
    %v6091 = vadd.f32 %v6090, %v6081
    %v6092 = vsub.f32 %v6076, %v6091
    %v6093 = vsub.f32 %v6079, %v6091
    %6094 = vst [vmem:[%s83] sm:$0xff] %v6092
    %6095 = vst [vmem:[%s83 + $0x8] sm:$0xff] %v6093
    // Predicated region
    $region246: #{transformer_forward.1} parent=1 // pred_check
      _
    $region247: #{transformer_forward.1} parent=1 // pred_check_branch
      %6097 = sbr.rel (0) target = $region249
    $region248: #{transformer_forward.1} parent=1 // pred_region
      _
    $region249: #{transformer_forward.1} parent=1 // pred_fallthru
      _
    // Predicated region
    $region250: #{transformer_forward.1} parent=1 // pred_check
      _
    $region251: #{transformer_forward.1} parent=1 // pred_check_branch
      %6099 = sbr.rel (0) target = $region253
    $region252: #{transformer_forward.1} parent=1 // pred_region
      _
    $region253: #{transformer_forward.1} parent=1 // pred_fallthru
      _
    %6100 = vsyncpa [#allocation3], 1
    %6101 = vsyncpa [#allocation5], 1
    %6102 = vsyncpa [#allocation8], 1
    %6103 = vsyncpa [#allocation11], 1
    %6104 = vsyncpa [#allocation14], 1
    %6105 = vsyncpa [#allocation17], 1
    %6106 = vsyncpa [#allocation20], 1
    %6107 = vsyncpa [#allocation23], 1
    %6108 = vsyncpa [#allocation26], 1
    %6109 = vsyncpa [#allocation29], 1
    %6110 = vsyncpa [#allocation32], 1

</llo_original>
